<compile_context>
chip_gen: v5e
topology: v5e:2x2
jax: 0.10.0
libtpu: 0.0.40
codegen_flags: <defaults>
</compile_context>

<pallas_src>
import math

import jax
import jax.numpy as jnp
from jax.experimental import pallas as pl
from jax.experimental.pallas import tpu as pltpu


# ----------------------------------------------------------------------------
# Fused forward kernel (everything VMEM-resident)
# ----------------------------------------------------------------------------
def _fused_kernel(x_ref,
                  w1_ref, b1_ref, w2_ref, b2_ref, w3_ref, b3_ref,
                  w4_ref, b4_ref, w5_ref, b5_ref, w6_ref, b6_ref,
                  wl_ref, bl_ref,
                  o_ref,
                  s1, t2, s2, s3, t4, s4, s5):
    f32 = jnp.float32
    bf16 = jnp.bfloat16

    def conv_relu(src_ref, start, l_out, w_ref, b_ref):
        """y[l] = relu(b + sum_k src[start + l + k] @ W[k])   (stride 1)."""
        k_taps, _, c_out = w_ref.shape
        acc = jnp.zeros((l_out, c_out), f32)
        for k in range(k_taps):
            xs = src_ref[start + k:start + k + l_out, :].astype(bf16)
            acc = acc + jnp.dot(xs, w_ref[k], preferred_element_type=f32)
        return jnp.maximum(acc + b_ref[...], 0.0)

    # --- conv1: Conv1d(1, 64, 21, stride=5, pad=5) ---------------------------
    # Input arrives pre-folded as (82, 5): element [l, r] == x_pad[5*l + r],
    # so y[l] = sum_q x2[l+q, :] @ W1[q]  with W1[q, r, :] = w[:, 0, 5q + r].
    acc1 = jnp.zeros((78, 128), f32)
    for q in range(5):
        acc1 = acc1 + jnp.dot(x_ref[q:q + 78, :].astype(bf16), w1_ref[q],
                              preferred_element_type=f32)
    a1 = jnp.maximum(acc1 + b1_ref[...], 0.0)                        # (78, 128)

    # --- conv2: Conv1d(64, 64, 21, stride=1, pad=5) --------------------------
    # Zero-padded VMEM buffer; a1 is stored at sublane-aligned offset 8, so the
    # logical pad-5 sequence starts at row 3.
    s1[...] = jnp.zeros_like(s1)
    s1[8:86, :] = a1
    a2 = conv_relu(s1, 3, 68, w2_ref, b2_ref)                        # (68, 128)

    # --- pool1: MaxPool1d(2, 2) -> strided row reads -------------------------
    t2[0:68, :] = a2
    p1 = jnp.maximum(t2[pl.ds(0, 34, stride=2), :],
                     t2[pl.ds(1, 34, stride=2), :])                  # (34, 128)

    # --- conv3 / conv4 (no padding) ------------------------------------------
    s2[0:34, :] = p1
    a3 = conv_relu(s2, 0, 30, w3_ref, b3_ref)                        # (30, 128)
    s3[0:30, :] = a3
    a4 = conv_relu(s3, 0, 26, w4_ref, b4_ref)                        # (26, 128)

    # --- pool2: MaxPool1d(2, 2) ----------------------------------------------
    t4[0:26, :] = a4
    p2 = jnp.maximum(t4[pl.ds(0, 13, stride=2), :],
                     t4[pl.ds(1, 13, stride=2), :])                  # (13, 128)

    # --- conv5 / conv6 --------------------------------------------------------
    s4[0:13, :] = p2
    a5 = conv_relu(s4, 0, 8, w5_ref, b5_ref)                         # (8, 256)
    s5[0:8, :] = a5
    a6 = conv_relu(s5, 0, 3, w6_ref, b6_ref)                         # (3, 256)

    # --- pool3: AvgPool1d(3) + flatten ---------------------------------------
    feat = jnp.sum(a6, axis=0, keepdims=True) * (1.0 / 3.0)          # (1, 256)

    # --- linear1 + sigmoid (output lane-padded to 128; column 0 = real logit)
    logit = jnp.dot(feat.astype(bf16), wl_ref[...],
                    preferred_element_type=f32) + bl_ref[...]
    o_ref[...] = jax.nn.sigmoid(logit)


def _full_block(a):
    nd = a.ndim
    return pl.BlockSpec(a.shape, lambda i, nd=nd: (0,) * nd)


def ann_forward(x_ncl, p):
    """Mirrors ann_model.forward for a (1, 1, 400) NCL input."""
    assert x_ncl.shape == (1, 1, 400), "ann_model requires NCL input (1, 1, 400)"
    # Fold conv1's pad=5 / stride=5 into a (82, 5) view of the padded signal
    # (a pure reshape of the raw input; all real work happens in the kernel).
    xp = jnp.pad(x_ncl.reshape(-1), (5, 5)).reshape(82, 5)

    args = (xp,
            p["w1"], p["b1"], p["w2"], p["b2"], p["w3"], p["b3"],
            p["w4"], p["b4"], p["w5"], p["b5"], p["w6"], p["b6"],
            p["wl"], p["bl"])

    out = pl.pallas_call(
        _fused_kernel,
        out_shape=jax.ShapeDtypeStruct((1, 128), jnp.float32),
        grid=(1,),
        in_specs=[_full_block(a) for a in args],
        out_specs=pl.BlockSpec((1, 128), lambda i: (0, 0)),
        scratch_shapes=[
            pltpu.VMEM((96, 128), jnp.float32),   # s1: zero-padded conv2 input
            pltpu.VMEM((72, 128), jnp.float32),   # t2: conv2 out (pool1 src)
            pltpu.VMEM((40, 128), jnp.float32),   # s2: pool1 out / conv3 in
            pltpu.VMEM((32, 128), jnp.float32),   # s3: conv4 in
            pltpu.VMEM((32, 128), jnp.float32),   # t4: conv4 out (pool2 src)
            pltpu.VMEM((16, 128), jnp.float32),   # s4: pool2 out / conv5 in
            pltpu.VMEM((8, 256), jnp.float32),    # s5: conv6 in
        ],
        compiler_params=pltpu.CompilerParams(
            dimension_semantics=("arbitrary",),
            vmem_limit_bytes=32 * 1024 * 1024),
    )(*args)

    return out[0, 0].reshape(1)


# ----------------------------------------------------------------------------
# Parameters: PyTorch-style init, packed ONCE into the kernel layout
# ----------------------------------------------------------------------------
def _uniform(key, shape, fan_in):
    bound = 1.0 / math.sqrt(fan_in)
    return jax.random.uniform(key, shape, jnp.float32, -bound, bound)


def pack_params(raw):
    """Hoisted one-time relayout: (Cout, Cin, K) -> (K, Cin, Cout) bf16,
    channels zero-padded to 128/256 so activations stay lane-dense."""
    def conv_w(w, cin_p, cout_p):
        co, ci, _ = w.shape
        wt = jnp.transpose(w, (2, 1, 0))                              # (K, Cin, Cout)
        wt = jnp.pad(wt, ((0, 0), (0, cin_p - ci), (0, cout_p - co)))
        return wt.astype(jnp.bfloat16)

    def conv_b(b, c_p):
        return jnp.pad(b, (0, c_p - b.shape[0])).reshape(1, c_p).astype(jnp.float32)

    p = {}
    # conv1: zero-pad K 21->25 and fold into (5 shifts, 5 phases, Cout).
    w1 = jnp.pad(raw["conv1_w"], ((0, 0), (0, 0), (0, 4)))            # (64, 1, 25)
    w1 = jnp.transpose(w1, (2, 1, 0)).reshape(5, 5, 64)               # (q, r, Cout)
    p["w1"] = jnp.pad(w1, ((0, 0), (0, 0), (0, 64))).astype(jnp.bfloat16)
    p["b1"] = conv_b(raw["conv1_b"], 128)

    p["w2"] = conv_w(raw["conv2_w"], 128, 128); p["b2"] = conv_b(raw["conv2_b"], 128)
    p["w3"] = conv_w(raw["conv3_w"], 128, 128); p["b3"] = conv_b(raw["conv3_b"], 128)
    p["w4"] = conv_w(raw["conv4_w"], 128, 128); p["b4"] = conv_b(raw["conv4_b"], 128)
    p["w5"] = conv_w(raw["conv5_w"], 128, 256); p["b5"] = conv_b(raw["conv5_b"], 256)
    p["w6"] = conv_w(raw["conv6_w"], 256, 256); p["b6"] = conv_b(raw["conv6_b"], 256)

    # linear1: (1, 256) -> (256, 128); the real logit lives in output column 0.
    wl = jnp.transpose(raw["linear1_w"], (1, 0))                      # (256, 1)
    p["wl"] = jnp.pad(wl, ((0, 0), (0, 127))).astype(jnp.bfloat16)
    p["bl"] = jnp.pad(raw["linear1_b"], (0, 127)).reshape(1, 128).astype(jnp.float32)
    return p


def init_params(key):
    conv_shapes = {
        "conv1": (64, 1, 21),
        "conv2": (64, 64, 21),
        "conv3": (128, 64, 5),
        "conv4": (128, 128, 5),
        "conv5": (256, 128, 6),
        "conv6": (256, 256, 6),
    }
    keys = jax.random.split(key, 14)
    raw = {}
    i = 0
    for name, (co, ci, k) in conv_shapes.items():
        fan_in = ci * k
        raw[name + "_w"] = _uniform(keys[i], (co, ci, k), fan_in); i += 1
        raw[name + "_b"] = _uniform(keys[i], (co,), fan_in); i += 1
    raw["linear1_w"] = _uniform(keys[i], (1, 256), 256); i += 1
    raw["linear1_b"] = _uniform(keys[i], (1,), 256); i += 1
    return pack_params(raw)


if __name__ == "__main__":
    key = jax.random.PRNGKey(0)
    pkey, xkey = jax.random.split(key)
    params = init_params(pkey)

    # PyTorch NCL input: batch=1, channels=1, length=400 (the length for which
    # the final avg-pool output is exactly 1, as the model's view(-1)+Linear
    # requires).
    x = jax.random.normal(xkey, (1, 1, 400), dtype=jnp.float32)

    y = jax.jit(ann_forward)(x, params)
    jax.block_until_ready(y)

    assert y.shape == (1,)
    assert bool(jnp.all((y >= 0.0) & (y <= 1.0)))
    print("KERNEL_OK")
</pallas_src>

<mosaic_0001>
module attributes {stable_mosaic.version = 11 : i64} {
  func.func @_fused_kernel(%arg0: i32, %arg1: memref<82x5xf32, #tpu.memory_space<vmem>>, %arg2: memref<5x5x128xbf16, #tpu.memory_space<vmem>>, %arg3: memref<1x128xf32, #tpu.memory_space<vmem>>, %arg4: memref<21x128x128xbf16, #tpu.memory_space<vmem>>, %arg5: memref<1x128xf32, #tpu.memory_space<vmem>>, %arg6: memref<5x128x128xbf16, #tpu.memory_space<vmem>>, %arg7: memref<1x128xf32, #tpu.memory_space<vmem>>, %arg8: memref<5x128x128xbf16, #tpu.memory_space<vmem>>, %arg9: memref<1x128xf32, #tpu.memory_space<vmem>>, %arg10: memref<6x128x256xbf16, #tpu.memory_space<vmem>>, %arg11: memref<1x256xf32, #tpu.memory_space<vmem>>, %arg12: memref<6x256x256xbf16, #tpu.memory_space<vmem>>, %arg13: memref<1x256xf32, #tpu.memory_space<vmem>>, %arg14: memref<256x128xbf16, #tpu.memory_space<vmem>>, %arg15: memref<1x128xf32, #tpu.memory_space<vmem>>, %arg16: memref<1x128xf32, #tpu.memory_space<vmem>>, %arg17: memref<96x128xf32, #tpu.memory_space<vmem>>, %arg18: memref<72x128xf32, #tpu.memory_space<vmem>>, %arg19: memref<40x128xf32, #tpu.memory_space<vmem>>, %arg20: memref<32x128xf32, #tpu.memory_space<vmem>>, %arg21: memref<32x128xf32, #tpu.memory_space<vmem>>, %arg22: memref<16x128xf32, #tpu.memory_space<vmem>>, %arg23: memref<8x256xf32, #tpu.memory_space<vmem>>) attributes {dimension_semantics = [#tpu.dimension_semantics<arbitrary>], iteration_bounds = array<i64: 1>, scalar_prefetch = 0 : i64, scratch_operands = 7 : i64, tpu.core_type = #tpu.core_type<tc>, window_params = [{pipeline_mode = #tpu.pipeline_mode<synchronous>, transform_indices = @transform_0, window_bounds = array<i64: 82, 5>}, {pipeline_mode = #tpu.pipeline_mode<synchronous>, transform_indices = @transform_1, window_bounds = array<i64: 5, 5, 128>}, {pipeline_mode = #tpu.pipeline_mode<synchronous>, transform_indices = @transform_2, window_bounds = array<i64: 1, 128>}, {pipeline_mode = #tpu.pipeline_mode<synchronous>, transform_indices = @transform_3, window_bounds = array<i64: 21, 128, 128>}, {pipeline_mode = #tpu.pipeline_mode<synchronous>, transform_indices = @transform_4, window_bounds = array<i64: 1, 128>}, {pipeline_mode = #tpu.pipeline_mode<synchronous>, transform_indices = @transform_5, window_bounds = array<i64: 5, 128, 128>}, {pipeline_mode = #tpu.pipeline_mode<synchronous>, transform_indices = @transform_6, window_bounds = array<i64: 1, 128>}, {pipeline_mode = #tpu.pipeline_mode<synchronous>, transform_indices = @transform_7, window_bounds = array<i64: 5, 128, 128>}, {pipeline_mode = #tpu.pipeline_mode<synchronous>, transform_indices = @transform_8, window_bounds = array<i64: 1, 128>}, {pipeline_mode = #tpu.pipeline_mode<synchronous>, transform_indices = @transform_9, window_bounds = array<i64: 6, 128, 256>}, {pipeline_mode = #tpu.pipeline_mode<synchronous>, transform_indices = @transform_10, window_bounds = array<i64: 1, 256>}, {pipeline_mode = #tpu.pipeline_mode<synchronous>, transform_indices = @transform_11, window_bounds = array<i64: 6, 256, 256>}, {pipeline_mode = #tpu.pipeline_mode<synchronous>, transform_indices = @transform_12, window_bounds = array<i64: 1, 256>}, {pipeline_mode = #tpu.pipeline_mode<synchronous>, transform_indices = @transform_13, window_bounds = array<i64: 256, 128>}, {pipeline_mode = #tpu.pipeline_mode<synchronous>, transform_indices = @transform_14, window_bounds = array<i64: 1, 128>}, {pipeline_mode = #tpu.pipeline_mode<synchronous>, transform_indices = @transform_15, window_bounds = array<i64: 1, 128>}]} {
    %cst = arith.constant 0.000000e+00 : f32
    %0 = vector.broadcast %cst : f32 to vector<78x128xf32>
    %c0 = arith.constant 0 : index
    %c0_0 = arith.constant 0 : index
    %1 = vector.load %arg1[%c0, %c0_0] : memref<82x5xf32, #tpu.memory_space<vmem>>, vector<78x5xf32>
    %2 = arith.truncf %1 : vector<78x5xf32> to vector<78x5xbf16>
    %c0_1 = arith.constant 0 : index
    %c0_2 = arith.constant 0 : index
    %c0_3 = arith.constant 0 : index
    %3 = vector.load %arg2[%c0_1, %c0_2, %c0_3] : memref<5x5x128xbf16, #tpu.memory_space<vmem>>, vector<1x5x128xbf16>
    %4 = vector.shape_cast %3 : vector<1x5x128xbf16> to vector<5x128xbf16>
    %cst_4 = arith.constant dense<0.000000e+00> : vector<78x128xf32>
    %5 = tpu.matmul %2, %4, %cst_4 {dimension_numbers = #tpu.dot_dimension_numbers<[1], [0], [0], [1], [0, 0, 1, 1], [], []>} : vector<78x5xbf16>, vector<5x128xbf16>, vector<78x128xf32> -> vector<78x128xf32>
    %6 = arith.addf %0, %5 : vector<78x128xf32>
    %c1 = arith.constant 1 : index
    %c0_5 = arith.constant 0 : index
    %7 = vector.load %arg1[%c1, %c0_5] : memref<82x5xf32, #tpu.memory_space<vmem>>, vector<78x5xf32>
    %8 = arith.truncf %7 : vector<78x5xf32> to vector<78x5xbf16>
    %c1_6 = arith.constant 1 : index
    %c0_7 = arith.constant 0 : index
    %c0_8 = arith.constant 0 : index
    %9 = vector.load %arg2[%c1_6, %c0_7, %c0_8] : memref<5x5x128xbf16, #tpu.memory_space<vmem>>, vector<1x5x128xbf16>
    %10 = vector.shape_cast %9 : vector<1x5x128xbf16> to vector<5x128xbf16>
    %cst_9 = arith.constant dense<0.000000e+00> : vector<78x128xf32>
    %11 = tpu.matmul %8, %10, %cst_9 {dimension_numbers = #tpu.dot_dimension_numbers<[1], [0], [0], [1], [0, 0, 1, 1], [], []>} : vector<78x5xbf16>, vector<5x128xbf16>, vector<78x128xf32> -> vector<78x128xf32>
    %12 = arith.addf %6, %11 : vector<78x128xf32>
    %c2 = arith.constant 2 : index
    %c0_10 = arith.constant 0 : index
    %13 = vector.load %arg1[%c2, %c0_10] : memref<82x5xf32, #tpu.memory_space<vmem>>, vector<78x5xf32>
    %14 = arith.truncf %13 : vector<78x5xf32> to vector<78x5xbf16>
    %c2_11 = arith.constant 2 : index
    %c0_12 = arith.constant 0 : index
    %c0_13 = arith.constant 0 : index
    %15 = vector.load %arg2[%c2_11, %c0_12, %c0_13] : memref<5x5x128xbf16, #tpu.memory_space<vmem>>, vector<1x5x128xbf16>
    %16 = vector.shape_cast %15 : vector<1x5x128xbf16> to vector<5x128xbf16>
    %cst_14 = arith.constant dense<0.000000e+00> : vector<78x128xf32>
    %17 = tpu.matmul %14, %16, %cst_14 {dimension_numbers = #tpu.dot_dimension_numbers<[1], [0], [0], [1], [0, 0, 1, 1], [], []>} : vector<78x5xbf16>, vector<5x128xbf16>, vector<78x128xf32> -> vector<78x128xf32>
    %18 = arith.addf %12, %17 : vector<78x128xf32>
    %c3 = arith.constant 3 : index
    %c0_15 = arith.constant 0 : index
    %19 = vector.load %arg1[%c3, %c0_15] : memref<82x5xf32, #tpu.memory_space<vmem>>, vector<78x5xf32>
    %20 = arith.truncf %19 : vector<78x5xf32> to vector<78x5xbf16>
    %c3_16 = arith.constant 3 : index
    %c0_17 = arith.constant 0 : index
    %c0_18 = arith.constant 0 : index
    %21 = vector.load %arg2[%c3_16, %c0_17, %c0_18] : memref<5x5x128xbf16, #tpu.memory_space<vmem>>, vector<1x5x128xbf16>
    %22 = vector.shape_cast %21 : vector<1x5x128xbf16> to vector<5x128xbf16>
    %cst_19 = arith.constant dense<0.000000e+00> : vector<78x128xf32>
    %23 = tpu.matmul %20, %22, %cst_19 {dimension_numbers = #tpu.dot_dimension_numbers<[1], [0], [0], [1], [0, 0, 1, 1], [], []>} : vector<78x5xbf16>, vector<5x128xbf16>, vector<78x128xf32> -> vector<78x128xf32>
    %24 = arith.addf %18, %23 : vector<78x128xf32>
    %c4 = arith.constant 4 : index
    %c0_20 = arith.constant 0 : index
    %25 = vector.load %arg1[%c4, %c0_20] : memref<82x5xf32, #tpu.memory_space<vmem>>, vector<78x5xf32>
    %26 = arith.truncf %25 : vector<78x5xf32> to vector<78x5xbf16>
    %c4_21 = arith.constant 4 : index
    %c0_22 = arith.constant 0 : index
    %c0_23 = arith.constant 0 : index
    %27 = vector.load %arg2[%c4_21, %c0_22, %c0_23] : memref<5x5x128xbf16, #tpu.memory_space<vmem>>, vector<1x5x128xbf16>
    %28 = vector.shape_cast %27 : vector<1x5x128xbf16> to vector<5x128xbf16>
    %cst_24 = arith.constant dense<0.000000e+00> : vector<78x128xf32>
    %29 = tpu.matmul %26, %28, %cst_24 {dimension_numbers = #tpu.dot_dimension_numbers<[1], [0], [0], [1], [0, 0, 1, 1], [], []>} : vector<78x5xbf16>, vector<5x128xbf16>, vector<78x128xf32> -> vector<78x128xf32>
    %30 = arith.addf %24, %29 : vector<78x128xf32>
    %c0_25 = arith.constant 0 : index
    %c0_26 = arith.constant 0 : index
    %31 = vector.load %arg3[%c0_25, %c0_26] : memref<1x128xf32, #tpu.memory_space<vmem>>, vector<1x128xf32>
    %32 = vector.broadcast %31 : vector<1x128xf32> to vector<78x128xf32>
    %33 = arith.addf %30, %32 : vector<78x128xf32>
    %cst_27 = arith.constant 0.000000e+00 : f32
    %34 = vector.broadcast %cst_27 : f32 to vector<78x128xf32>
    %35 = arith.maximumf %33, %34 : vector<78x128xf32>
    %cst_28 = arith.constant 0.000000e+00 : f32
    %36 = vector.broadcast %cst_28 : f32 to vector<96x128xf32>
    %c0_29 = arith.constant 0 : index
    %c0_30 = arith.constant 0 : index
    %37 = vector.load %arg17[%c0_29, %c0_30] : memref<96x128xf32, #tpu.memory_space<vmem>>, vector<96x128xf32>
    tpu.vector_store %arg17[%c0_29, %c0_30], %36 {strides = array<i32>} : memref<96x128xf32, #tpu.memory_space<vmem>>, vector<96x128xf32>,
    %c8 = arith.constant 8 : index
    %c0_31 = arith.constant 0 : index
    %38 = vector.load %arg17[%c8, %c0_31] : memref<96x128xf32, #tpu.memory_space<vmem>>, vector<78x128xf32>
    tpu.vector_store %arg17[%c8, %c0_31], %35 {strides = array<i32>} : memref<96x128xf32, #tpu.memory_space<vmem>>, vector<78x128xf32>,
    %cst_32 = arith.constant 0.000000e+00 : f32
    %39 = vector.broadcast %cst_32 : f32 to vector<68x128xf32>
    %c3_33 = arith.constant 3 : index
    %c0_34 = arith.constant 0 : index
    %40 = vector.load %arg17[%c3_33, %c0_34] : memref<96x128xf32, #tpu.memory_space<vmem>>, vector<68x128xf32>
    %41 = arith.truncf %40 : vector<68x128xf32> to vector<68x128xbf16>
    %c0_35 = arith.constant 0 : index
    %c0_36 = arith.constant 0 : index
    %c0_37 = arith.constant 0 : index
    %42 = vector.load %arg4[%c0_35, %c0_36, %c0_37] : memref<21x128x128xbf16, #tpu.memory_space<vmem>>, vector<1x128x128xbf16>
    %43 = vector.shape_cast %42 : vector<1x128x128xbf16> to vector<128x128xbf16>
    %cst_38 = arith.constant dense<0.000000e+00> : vector<68x128xf32>
    %44 = tpu.matmul %41, %43, %cst_38 {dimension_numbers = #tpu.dot_dimension_numbers<[1], [0], [0], [1], [0, 0, 1, 1], [], []>} : vector<68x128xbf16>, vector<128x128xbf16>, vector<68x128xf32> -> vector<68x128xf32>
    %45 = arith.addf %39, %44 : vector<68x128xf32>
    %c4_39 = arith.constant 4 : index
    %c0_40 = arith.constant 0 : index
    %46 = vector.load %arg17[%c4_39, %c0_40] : memref<96x128xf32, #tpu.memory_space<vmem>>, vector<68x128xf32>
    %47 = arith.truncf %46 : vector<68x128xf32> to vector<68x128xbf16>
    %c1_41 = arith.constant 1 : index
    %c0_42 = arith.constant 0 : index
    %c0_43 = arith.constant 0 : index
    %48 = vector.load %arg4[%c1_41, %c0_42, %c0_43] : memref<21x128x128xbf16, #tpu.memory_space<vmem>>, vector<1x128x128xbf16>
    %49 = vector.shape_cast %48 : vector<1x128x128xbf16> to vector<128x128xbf16>
    %cst_44 = arith.constant dense<0.000000e+00> : vector<68x128xf32>
    %50 = tpu.matmul %47, %49, %cst_44 {dimension_numbers = #tpu.dot_dimension_numbers<[1], [0], [0], [1], [0, 0, 1, 1], [], []>} : vector<68x128xbf16>, vector<128x128xbf16>, vector<68x128xf32> -> vector<68x128xf32>
    %51 = arith.addf %45, %50 : vector<68x128xf32>
    %c5 = arith.constant 5 : index
    %c0_45 = arith.constant 0 : index
    %52 = vector.load %arg17[%c5, %c0_45] : memref<96x128xf32, #tpu.memory_space<vmem>>, vector<68x128xf32>
    %53 = arith.truncf %52 : vector<68x128xf32> to vector<68x128xbf16>
    %c2_46 = arith.constant 2 : index
    %c0_47 = arith.constant 0 : index
    %c0_48 = arith.constant 0 : index
    %54 = vector.load %arg4[%c2_46, %c0_47, %c0_48] : memref<21x128x128xbf16, #tpu.memory_space<vmem>>, vector<1x128x128xbf16>
    %55 = vector.shape_cast %54 : vector<1x128x128xbf16> to vector<128x128xbf16>
    %cst_49 = arith.constant dense<0.000000e+00> : vector<68x128xf32>
    %56 = tpu.matmul %53, %55, %cst_49 {dimension_numbers = #tpu.dot_dimension_numbers<[1], [0], [0], [1], [0, 0, 1, 1], [], []>} : vector<68x128xbf16>, vector<128x128xbf16>, vector<68x128xf32> -> vector<68x128xf32>
    %57 = arith.addf %51, %56 : vector<68x128xf32>
    %c6 = arith.constant 6 : index
    %c0_50 = arith.constant 0 : index
    %58 = vector.load %arg17[%c6, %c0_50] : memref<96x128xf32, #tpu.memory_space<vmem>>, vector<68x128xf32>
    %59 = arith.truncf %58 : vector<68x128xf32> to vector<68x128xbf16>
    %c3_51 = arith.constant 3 : index
    %c0_52 = arith.constant 0 : index
    %c0_53 = arith.constant 0 : index
    %60 = vector.load %arg4[%c3_51, %c0_52, %c0_53] : memref<21x128x128xbf16, #tpu.memory_space<vmem>>, vector<1x128x128xbf16>
    %61 = vector.shape_cast %60 : vector<1x128x128xbf16> to vector<128x128xbf16>
    %cst_54 = arith.constant dense<0.000000e+00> : vector<68x128xf32>
    %62 = tpu.matmul %59, %61, %cst_54 {dimension_numbers = #tpu.dot_dimension_numbers<[1], [0], [0], [1], [0, 0, 1, 1], [], []>} : vector<68x128xbf16>, vector<128x128xbf16>, vector<68x128xf32> -> vector<68x128xf32>
    %63 = arith.addf %57, %62 : vector<68x128xf32>
    %c7 = arith.constant 7 : index
    %c0_55 = arith.constant 0 : index
    %64 = vector.load %arg17[%c7, %c0_55] : memref<96x128xf32, #tpu.memory_space<vmem>>, vector<68x128xf32>
    %65 = arith.truncf %64 : vector<68x128xf32> to vector<68x128xbf16>
    %c4_56 = arith.constant 4 : index
    %c0_57 = arith.constant 0 : index
    %c0_58 = arith.constant 0 : index
    %66 = vector.load %arg4[%c4_56, %c0_57, %c0_58] : memref<21x128x128xbf16, #tpu.memory_space<vmem>>, vector<1x128x128xbf16>
    %67 = vector.shape_cast %66 : vector<1x128x128xbf16> to vector<128x128xbf16>
    %cst_59 = arith.constant dense<0.000000e+00> : vector<68x128xf32>
    %68 = tpu.matmul %65, %67, %cst_59 {dimension_numbers = #tpu.dot_dimension_numbers<[1], [0], [0], [1], [0, 0, 1, 1], [], []>} : vector<68x128xbf16>, vector<128x128xbf16>, vector<68x128xf32> -> vector<68x128xf32>
    %69 = arith.addf %63, %68 : vector<68x128xf32>
    %c8_60 = arith.constant 8 : index
    %c0_61 = arith.constant 0 : index
    %70 = vector.load %arg17[%c8_60, %c0_61] : memref<96x128xf32, #tpu.memory_space<vmem>>, vector<68x128xf32>
    %71 = arith.truncf %70 : vector<68x128xf32> to vector<68x128xbf16>
    %c5_62 = arith.constant 5 : index
    %c0_63 = arith.constant 0 : index
    %c0_64 = arith.constant 0 : index
    %72 = vector.load %arg4[%c5_62, %c0_63, %c0_64] : memref<21x128x128xbf16, #tpu.memory_space<vmem>>, vector<1x128x128xbf16>
    %73 = vector.shape_cast %72 : vector<1x128x128xbf16> to vector<128x128xbf16>
    %cst_65 = arith.constant dense<0.000000e+00> : vector<68x128xf32>
    %74 = tpu.matmul %71, %73, %cst_65 {dimension_numbers = #tpu.dot_dimension_numbers<[1], [0], [0], [1], [0, 0, 1, 1], [], []>} : vector<68x128xbf16>, vector<128x128xbf16>, vector<68x128xf32> -> vector<68x128xf32>
    %75 = arith.addf %69, %74 : vector<68x128xf32>
    %c9 = arith.constant 9 : index
    %c0_66 = arith.constant 0 : index
    %76 = vector.load %arg17[%c9, %c0_66] : memref<96x128xf32, #tpu.memory_space<vmem>>, vector<68x128xf32>
    %77 = arith.truncf %76 : vector<68x128xf32> to vector<68x128xbf16>
    %c6_67 = arith.constant 6 : index
    %c0_68 = arith.constant 0 : index
    %c0_69 = arith.constant 0 : index
    %78 = vector.load %arg4[%c6_67, %c0_68, %c0_69] : memref<21x128x128xbf16, #tpu.memory_space<vmem>>, vector<1x128x128xbf16>
    %79 = vector.shape_cast %78 : vector<1x128x128xbf16> to vector<128x128xbf16>
    %cst_70 = arith.constant dense<0.000000e+00> : vector<68x128xf32>
    %80 = tpu.matmul %77, %79, %cst_70 {dimension_numbers = #tpu.dot_dimension_numbers<[1], [0], [0], [1], [0, 0, 1, 1], [], []>} : vector<68x128xbf16>, vector<128x128xbf16>, vector<68x128xf32> -> vector<68x128xf32>
    %81 = arith.addf %75, %80 : vector<68x128xf32>
    %c10 = arith.constant 10 : index
    %c0_71 = arith.constant 0 : index
    %82 = vector.load %arg17[%c10, %c0_71] : memref<96x128xf32, #tpu.memory_space<vmem>>, vector<68x128xf32>
    %83 = arith.truncf %82 : vector<68x128xf32> to vector<68x128xbf16>
    %c7_72 = arith.constant 7 : index
    %c0_73 = arith.constant 0 : index
    %c0_74 = arith.constant 0 : index
    %84 = vector.load %arg4[%c7_72, %c0_73, %c0_74] : memref<21x128x128xbf16, #tpu.memory_space<vmem>>, vector<1x128x128xbf16>
    %85 = vector.shape_cast %84 : vector<1x128x128xbf16> to vector<128x128xbf16>
    %cst_75 = arith.constant dense<0.000000e+00> : vector<68x128xf32>
    %86 = tpu.matmul %83, %85, %cst_75 {dimension_numbers = #tpu.dot_dimension_numbers<[1], [0], [0], [1], [0, 0, 1, 1], [], []>} : vector<68x128xbf16>, vector<128x128xbf16>, vector<68x128xf32> -> vector<68x128xf32>
    %87 = arith.addf %81, %86 : vector<68x128xf32>
    %c11 = arith.constant 11 : index
    %c0_76 = arith.constant 0 : index
    %88 = vector.load %arg17[%c11, %c0_76] : memref<96x128xf32, #tpu.memory_space<vmem>>, vector<68x128xf32>
    %89 = arith.truncf %88 : vector<68x128xf32> to vector<68x128xbf16>
    %c8_77 = arith.constant 8 : index
    %c0_78 = arith.constant 0 : index
    %c0_79 = arith.constant 0 : index
    %90 = vector.load %arg4[%c8_77, %c0_78, %c0_79] : memref<21x128x128xbf16, #tpu.memory_space<vmem>>, vector<1x128x128xbf16>
    %91 = vector.shape_cast %90 : vector<1x128x128xbf16> to vector<128x128xbf16>
    %cst_80 = arith.constant dense<0.000000e+00> : vector<68x128xf32>
    %92 = tpu.matmul %89, %91, %cst_80 {dimension_numbers = #tpu.dot_dimension_numbers<[1], [0], [0], [1], [0, 0, 1, 1], [], []>} : vector<68x128xbf16>, vector<128x128xbf16>, vector<68x128xf32> -> vector<68x128xf32>
    %93 = arith.addf %87, %92 : vector<68x128xf32>
    %c12 = arith.constant 12 : index
    %c0_81 = arith.constant 0 : index
    %94 = vector.load %arg17[%c12, %c0_81] : memref<96x128xf32, #tpu.memory_space<vmem>>, vector<68x128xf32>
    %95 = arith.truncf %94 : vector<68x128xf32> to vector<68x128xbf16>
    %c9_82 = arith.constant 9 : index
    %c0_83 = arith.constant 0 : index
    %c0_84 = arith.constant 0 : index
    %96 = vector.load %arg4[%c9_82, %c0_83, %c0_84] : memref<21x128x128xbf16, #tpu.memory_space<vmem>>, vector<1x128x128xbf16>
    %97 = vector.shape_cast %96 : vector<1x128x128xbf16> to vector<128x128xbf16>
    %cst_85 = arith.constant dense<0.000000e+00> : vector<68x128xf32>
    %98 = tpu.matmul %95, %97, %cst_85 {dimension_numbers = #tpu.dot_dimension_numbers<[1], [0], [0], [1], [0, 0, 1, 1], [], []>} : vector<68x128xbf16>, vector<128x128xbf16>, vector<68x128xf32> -> vector<68x128xf32>
    %99 = arith.addf %93, %98 : vector<68x128xf32>
    %c13 = arith.constant 13 : index
    %c0_86 = arith.constant 0 : index
    %100 = vector.load %arg17[%c13, %c0_86] : memref<96x128xf32, #tpu.memory_space<vmem>>, vector<68x128xf32>
    %101 = arith.truncf %100 : vector<68x128xf32> to vector<68x128xbf16>
    %c10_87 = arith.constant 10 : index
    %c0_88 = arith.constant 0 : index
    %c0_89 = arith.constant 0 : index
    %102 = vector.load %arg4[%c10_87, %c0_88, %c0_89] : memref<21x128x128xbf16, #tpu.memory_space<vmem>>, vector<1x128x128xbf16>
    %103 = vector.shape_cast %102 : vector<1x128x128xbf16> to vector<128x128xbf16>
    %cst_90 = arith.constant dense<0.000000e+00> : vector<68x128xf32>
    %104 = tpu.matmul %101, %103, %cst_90 {dimension_numbers = #tpu.dot_dimension_numbers<[1], [0], [0], [1], [0, 0, 1, 1], [], []>} : vector<68x128xbf16>, vector<128x128xbf16>, vector<68x128xf32> -> vector<68x128xf32>
    %105 = arith.addf %99, %104 : vector<68x128xf32>
    %c14 = arith.constant 14 : index
    %c0_91 = arith.constant 0 : index
    %106 = vector.load %arg17[%c14, %c0_91] : memref<96x128xf32, #tpu.memory_space<vmem>>, vector<68x128xf32>
    %107 = arith.truncf %106 : vector<68x128xf32> to vector<68x128xbf16>
    %c11_92 = arith.constant 11 : index
    %c0_93 = arith.constant 0 : index
    %c0_94 = arith.constant 0 : index
    %108 = vector.load %arg4[%c11_92, %c0_93, %c0_94] : memref<21x128x128xbf16, #tpu.memory_space<vmem>>, vector<1x128x128xbf16>
    %109 = vector.shape_cast %108 : vector<1x128x128xbf16> to vector<128x128xbf16>
    %cst_95 = arith.constant dense<0.000000e+00> : vector<68x128xf32>
    %110 = tpu.matmul %107, %109, %cst_95 {dimension_numbers = #tpu.dot_dimension_numbers<[1], [0], [0], [1], [0, 0, 1, 1], [], []>} : vector<68x128xbf16>, vector<128x128xbf16>, vector<68x128xf32> -> vector<68x128xf32>
    %111 = arith.addf %105, %110 : vector<68x128xf32>
    %c15 = arith.constant 15 : index
    %c0_96 = arith.constant 0 : index
    %112 = vector.load %arg17[%c15, %c0_96] : memref<96x128xf32, #tpu.memory_space<vmem>>, vector<68x128xf32>
    %113 = arith.truncf %112 : vector<68x128xf32> to vector<68x128xbf16>
    %c12_97 = arith.constant 12 : index
    %c0_98 = arith.constant 0 : index
    %c0_99 = arith.constant 0 : index
    %114 = vector.load %arg4[%c12_97, %c0_98, %c0_99] : memref<21x128x128xbf16, #tpu.memory_space<vmem>>, vector<1x128x128xbf16>
    %115 = vector.shape_cast %114 : vector<1x128x128xbf16> to vector<128x128xbf16>
    %cst_100 = arith.constant dense<0.000000e+00> : vector<68x128xf32>
    %116 = tpu.matmul %113, %115, %cst_100 {dimension_numbers = #tpu.dot_dimension_numbers<[1], [0], [0], [1], [0, 0, 1, 1], [], []>} : vector<68x128xbf16>, vector<128x128xbf16>, vector<68x128xf32> -> vector<68x128xf32>
    %117 = arith.addf %111, %116 : vector<68x128xf32>
    %c16 = arith.constant 16 : index
    %c0_101 = arith.constant 0 : index
    %118 = vector.load %arg17[%c16, %c0_101] : memref<96x128xf32, #tpu.memory_space<vmem>>, vector<68x128xf32>
    %119 = arith.truncf %118 : vector<68x128xf32> to vector<68x128xbf16>
    %c13_102 = arith.constant 13 : index
    %c0_103 = arith.constant 0 : index
    %c0_104 = arith.constant 0 : index
    %120 = vector.load %arg4[%c13_102, %c0_103, %c0_104] : memref<21x128x128xbf16, #tpu.memory_space<vmem>>, vector<1x128x128xbf16>
    %121 = vector.shape_cast %120 : vector<1x128x128xbf16> to vector<128x128xbf16>
    %cst_105 = arith.constant dense<0.000000e+00> : vector<68x128xf32>
    %122 = tpu.matmul %119, %121, %cst_105 {dimension_numbers = #tpu.dot_dimension_numbers<[1], [0], [0], [1], [0, 0, 1, 1], [], []>} : vector<68x128xbf16>, vector<128x128xbf16>, vector<68x128xf32> -> vector<68x128xf32>
    %123 = arith.addf %117, %122 : vector<68x128xf32>
    %c17 = arith.constant 17 : index
    %c0_106 = arith.constant 0 : index
    %124 = vector.load %arg17[%c17, %c0_106] : memref<96x128xf32, #tpu.memory_space<vmem>>, vector<68x128xf32>
    %125 = arith.truncf %124 : vector<68x128xf32> to vector<68x128xbf16>
    %c14_107 = arith.constant 14 : index
    %c0_108 = arith.constant 0 : index
    %c0_109 = arith.constant 0 : index
    %126 = vector.load %arg4[%c14_107, %c0_108, %c0_109] : memref<21x128x128xbf16, #tpu.memory_space<vmem>>, vector<1x128x128xbf16>
    %127 = vector.shape_cast %126 : vector<1x128x128xbf16> to vector<128x128xbf16>
    %cst_110 = arith.constant dense<0.000000e+00> : vector<68x128xf32>
    %128 = tpu.matmul %125, %127, %cst_110 {dimension_numbers = #tpu.dot_dimension_numbers<[1], [0], [0], [1], [0, 0, 1, 1], [], []>} : vector<68x128xbf16>, vector<128x128xbf16>, vector<68x128xf32> -> vector<68x128xf32>
    %129 = arith.addf %123, %128 : vector<68x128xf32>
    %c18 = arith.constant 18 : index
    %c0_111 = arith.constant 0 : index
    %130 = vector.load %arg17[%c18, %c0_111] : memref<96x128xf32, #tpu.memory_space<vmem>>, vector<68x128xf32>
    %131 = arith.truncf %130 : vector<68x128xf32> to vector<68x128xbf16>
    %c15_112 = arith.constant 15 : index
    %c0_113 = arith.constant 0 : index
    %c0_114 = arith.constant 0 : index
    %132 = vector.load %arg4[%c15_112, %c0_113, %c0_114] : memref<21x128x128xbf16, #tpu.memory_space<vmem>>, vector<1x128x128xbf16>
    %133 = vector.shape_cast %132 : vector<1x128x128xbf16> to vector<128x128xbf16>
    %cst_115 = arith.constant dense<0.000000e+00> : vector<68x128xf32>
    %134 = tpu.matmul %131, %133, %cst_115 {dimension_numbers = #tpu.dot_dimension_numbers<[1], [0], [0], [1], [0, 0, 1, 1], [], []>} : vector<68x128xbf16>, vector<128x128xbf16>, vector<68x128xf32> -> vector<68x128xf32>
    %135 = arith.addf %129, %134 : vector<68x128xf32>
    %c19 = arith.constant 19 : index
    %c0_116 = arith.constant 0 : index
    %136 = vector.load %arg17[%c19, %c0_116] : memref<96x128xf32, #tpu.memory_space<vmem>>, vector<68x128xf32>
    %137 = arith.truncf %136 : vector<68x128xf32> to vector<68x128xbf16>
    %c16_117 = arith.constant 16 : index
    %c0_118 = arith.constant 0 : index
    %c0_119 = arith.constant 0 : index
    %138 = vector.load %arg4[%c16_117, %c0_118, %c0_119] : memref<21x128x128xbf16, #tpu.memory_space<vmem>>, vector<1x128x128xbf16>
    %139 = vector.shape_cast %138 : vector<1x128x128xbf16> to vector<128x128xbf16>
    %cst_120 = arith.constant dense<0.000000e+00> : vector<68x128xf32>
    %140 = tpu.matmul %137, %139, %cst_120 {dimension_numbers = #tpu.dot_dimension_numbers<[1], [0], [0], [1], [0, 0, 1, 1], [], []>} : vector<68x128xbf16>, vector<128x128xbf16>, vector<68x128xf32> -> vector<68x128xf32>
    %141 = arith.addf %135, %140 : vector<68x128xf32>
    %c20 = arith.constant 20 : index
    %c0_121 = arith.constant 0 : index
    %142 = vector.load %arg17[%c20, %c0_121] : memref<96x128xf32, #tpu.memory_space<vmem>>, vector<68x128xf32>
    %143 = arith.truncf %142 : vector<68x128xf32> to vector<68x128xbf16>
    %c17_122 = arith.constant 17 : index
    %c0_123 = arith.constant 0 : index
    %c0_124 = arith.constant 0 : index
    %144 = vector.load %arg4[%c17_122, %c0_123, %c0_124] : memref<21x128x128xbf16, #tpu.memory_space<vmem>>, vector<1x128x128xbf16>
    %145 = vector.shape_cast %144 : vector<1x128x128xbf16> to vector<128x128xbf16>
    %cst_125 = arith.constant dense<0.000000e+00> : vector<68x128xf32>
    %146 = tpu.matmul %143, %145, %cst_125 {dimension_numbers = #tpu.dot_dimension_numbers<[1], [0], [0], [1], [0, 0, 1, 1], [], []>} : vector<68x128xbf16>, vector<128x128xbf16>, vector<68x128xf32> -> vector<68x128xf32>
    %147 = arith.addf %141, %146 : vector<68x128xf32>
    %c21 = arith.constant 21 : index
    %c0_126 = arith.constant 0 : index
    %148 = vector.load %arg17[%c21, %c0_126] : memref<96x128xf32, #tpu.memory_space<vmem>>, vector<68x128xf32>
    %149 = arith.truncf %148 : vector<68x128xf32> to vector<68x128xbf16>
    %c18_127 = arith.constant 18 : index
    %c0_128 = arith.constant 0 : index
    %c0_129 = arith.constant 0 : index
    %150 = vector.load %arg4[%c18_127, %c0_128, %c0_129] : memref<21x128x128xbf16, #tpu.memory_space<vmem>>, vector<1x128x128xbf16>
    %151 = vector.shape_cast %150 : vector<1x128x128xbf16> to vector<128x128xbf16>
    %cst_130 = arith.constant dense<0.000000e+00> : vector<68x128xf32>
    %152 = tpu.matmul %149, %151, %cst_130 {dimension_numbers = #tpu.dot_dimension_numbers<[1], [0], [0], [1], [0, 0, 1, 1], [], []>} : vector<68x128xbf16>, vector<128x128xbf16>, vector<68x128xf32> -> vector<68x128xf32>
    %153 = arith.addf %147, %152 : vector<68x128xf32>
    %c22 = arith.constant 22 : index
    %c0_131 = arith.constant 0 : index
    %154 = vector.load %arg17[%c22, %c0_131] : memref<96x128xf32, #tpu.memory_space<vmem>>, vector<68x128xf32>
    %155 = arith.truncf %154 : vector<68x128xf32> to vector<68x128xbf16>
    %c19_132 = arith.constant 19 : index
    %c0_133 = arith.constant 0 : index
    %c0_134 = arith.constant 0 : index
    %156 = vector.load %arg4[%c19_132, %c0_133, %c0_134] : memref<21x128x128xbf16, #tpu.memory_space<vmem>>, vector<1x128x128xbf16>
    %157 = vector.shape_cast %156 : vector<1x128x128xbf16> to vector<128x128xbf16>
    %cst_135 = arith.constant dense<0.000000e+00> : vector<68x128xf32>
    %158 = tpu.matmul %155, %157, %cst_135 {dimension_numbers = #tpu.dot_dimension_numbers<[1], [0], [0], [1], [0, 0, 1, 1], [], []>} : vector<68x128xbf16>, vector<128x128xbf16>, vector<68x128xf32> -> vector<68x128xf32>
    %159 = arith.addf %153, %158 : vector<68x128xf32>
    %c23 = arith.constant 23 : index
    %c0_136 = arith.constant 0 : index
    %160 = vector.load %arg17[%c23, %c0_136] : memref<96x128xf32, #tpu.memory_space<vmem>>, vector<68x128xf32>
    %161 = arith.truncf %160 : vector<68x128xf32> to vector<68x128xbf16>
    %c20_137 = arith.constant 20 : index
    %c0_138 = arith.constant 0 : index
    %c0_139 = arith.constant 0 : index
    %162 = vector.load %arg4[%c20_137, %c0_138, %c0_139] : memref<21x128x128xbf16, #tpu.memory_space<vmem>>, vector<1x128x128xbf16>
    %163 = vector.shape_cast %162 : vector<1x128x128xbf16> to vector<128x128xbf16>
    %cst_140 = arith.constant dense<0.000000e+00> : vector<68x128xf32>
    %164 = tpu.matmul %161, %163, %cst_140 {dimension_numbers = #tpu.dot_dimension_numbers<[1], [0], [0], [1], [0, 0, 1, 1], [], []>} : vector<68x128xbf16>, vector<128x128xbf16>, vector<68x128xf32> -> vector<68x128xf32>
    %165 = arith.addf %159, %164 : vector<68x128xf32>
    %c0_141 = arith.constant 0 : index
    %c0_142 = arith.constant 0 : index
    %166 = vector.load %arg5[%c0_141, %c0_142] : memref<1x128xf32, #tpu.memory_space<vmem>>, vector<1x128xf32>
    %167 = vector.broadcast %166 : vector<1x128xf32> to vector<68x128xf32>
    %168 = arith.addf %165, %167 : vector<68x128xf32>
    %cst_143 = arith.constant 0.000000e+00 : f32
    %169 = vector.broadcast %cst_143 : f32 to vector<68x128xf32>
    %170 = arith.maximumf %168, %169 : vector<68x128xf32>
    %c0_144 = arith.constant 0 : index
    %c0_145 = arith.constant 0 : index
    %171 = vector.load %arg18[%c0_144, %c0_145] : memref<72x128xf32, #tpu.memory_space<vmem>>, vector<68x128xf32>
    tpu.vector_store %arg18[%c0_144, %c0_145], %170 {strides = array<i32>} : memref<72x128xf32, #tpu.memory_space<vmem>>, vector<68x128xf32>,
    %c0_146 = arith.constant 0 : index
    %c0_147 = arith.constant 0 : index
    %172 = tpu.strided_load %arg18[%c0_146, %c0_147] {strides = array<i32: 2, 1>} : memref<72x128xf32, #tpu.memory_space<vmem>>, vector<34x128xf32>
    %c1_148 = arith.constant 1 : index
    %c0_149 = arith.constant 0 : index
    %173 = tpu.strided_load %arg18[%c1_148, %c0_149] {strides = array<i32: 2, 1>} : memref<72x128xf32, #tpu.memory_space<vmem>>, vector<34x128xf32>
    %174 = arith.maximumf %172, %173 : vector<34x128xf32>
    %c0_150 = arith.constant 0 : index
    %c0_151 = arith.constant 0 : index
    %175 = vector.load %arg19[%c0_150, %c0_151] : memref<40x128xf32, #tpu.memory_space<vmem>>, vector<34x128xf32>
    tpu.vector_store %arg19[%c0_150, %c0_151], %174 {strides = array<i32>} : memref<40x128xf32, #tpu.memory_space<vmem>>, vector<34x128xf32>,
    %cst_152 = arith.constant 0.000000e+00 : f32
    %176 = vector.broadcast %cst_152 : f32 to vector<30x128xf32>
    %c0_153 = arith.constant 0 : index
    %c0_154 = arith.constant 0 : index
    %177 = vector.load %arg19[%c0_153, %c0_154] : memref<40x128xf32, #tpu.memory_space<vmem>>, vector<30x128xf32>
    %178 = arith.truncf %177 : vector<30x128xf32> to vector<30x128xbf16>
    %c0_155 = arith.constant 0 : index
    %c0_156 = arith.constant 0 : index
    %c0_157 = arith.constant 0 : index
    %179 = vector.load %arg6[%c0_155, %c0_156, %c0_157] : memref<5x128x128xbf16, #tpu.memory_space<vmem>>, vector<1x128x128xbf16>
    %180 = vector.shape_cast %179 : vector<1x128x128xbf16> to vector<128x128xbf16>
    %cst_158 = arith.constant dense<0.000000e+00> : vector<30x128xf32>
    %181 = tpu.matmul %178, %180, %cst_158 {dimension_numbers = #tpu.dot_dimension_numbers<[1], [0], [0], [1], [0, 0, 1, 1], [], []>} : vector<30x128xbf16>, vector<128x128xbf16>, vector<30x128xf32> -> vector<30x128xf32>
    %182 = arith.addf %176, %181 : vector<30x128xf32>
    %c1_159 = arith.constant 1 : index
    %c0_160 = arith.constant 0 : index
    %183 = vector.load %arg19[%c1_159, %c0_160] : memref<40x128xf32, #tpu.memory_space<vmem>>, vector<30x128xf32>
    %184 = arith.truncf %183 : vector<30x128xf32> to vector<30x128xbf16>
    %c1_161 = arith.constant 1 : index
    %c0_162 = arith.constant 0 : index
    %c0_163 = arith.constant 0 : index
    %185 = vector.load %arg6[%c1_161, %c0_162, %c0_163] : memref<5x128x128xbf16, #tpu.memory_space<vmem>>, vector<1x128x128xbf16>
    %186 = vector.shape_cast %185 : vector<1x128x128xbf16> to vector<128x128xbf16>
    %cst_164 = arith.constant dense<0.000000e+00> : vector<30x128xf32>
    %187 = tpu.matmul %184, %186, %cst_164 {dimension_numbers = #tpu.dot_dimension_numbers<[1], [0], [0], [1], [0, 0, 1, 1], [], []>} : vector<30x128xbf16>, vector<128x128xbf16>, vector<30x128xf32> -> vector<30x128xf32>
    %188 = arith.addf %182, %187 : vector<30x128xf32>
    %c2_165 = arith.constant 2 : index
    %c0_166 = arith.constant 0 : index
    %189 = vector.load %arg19[%c2_165, %c0_166] : memref<40x128xf32, #tpu.memory_space<vmem>>, vector<30x128xf32>
    %190 = arith.truncf %189 : vector<30x128xf32> to vector<30x128xbf16>
    %c2_167 = arith.constant 2 : index
    %c0_168 = arith.constant 0 : index
    %c0_169 = arith.constant 0 : index
    %191 = vector.load %arg6[%c2_167, %c0_168, %c0_169] : memref<5x128x128xbf16, #tpu.memory_space<vmem>>, vector<1x128x128xbf16>
    %192 = vector.shape_cast %191 : vector<1x128x128xbf16> to vector<128x128xbf16>
    %cst_170 = arith.constant dense<0.000000e+00> : vector<30x128xf32>
    %193 = tpu.matmul %190, %192, %cst_170 {dimension_numbers = #tpu.dot_dimension_numbers<[1], [0], [0], [1], [0, 0, 1, 1], [], []>} : vector<30x128xbf16>, vector<128x128xbf16>, vector<30x128xf32> -> vector<30x128xf32>
    %194 = arith.addf %188, %193 : vector<30x128xf32>
    %c3_171 = arith.constant 3 : index
    %c0_172 = arith.constant 0 : index
    %195 = vector.load %arg19[%c3_171, %c0_172] : memref<40x128xf32, #tpu.memory_space<vmem>>, vector<30x128xf32>
    %196 = arith.truncf %195 : vector<30x128xf32> to vector<30x128xbf16>
    %c3_173 = arith.constant 3 : index
    %c0_174 = arith.constant 0 : index
    %c0_175 = arith.constant 0 : index
    %197 = vector.load %arg6[%c3_173, %c0_174, %c0_175] : memref<5x128x128xbf16, #tpu.memory_space<vmem>>, vector<1x128x128xbf16>
    %198 = vector.shape_cast %197 : vector<1x128x128xbf16> to vector<128x128xbf16>
    %cst_176 = arith.constant dense<0.000000e+00> : vector<30x128xf32>
    %199 = tpu.matmul %196, %198, %cst_176 {dimension_numbers = #tpu.dot_dimension_numbers<[1], [0], [0], [1], [0, 0, 1, 1], [], []>} : vector<30x128xbf16>, vector<128x128xbf16>, vector<30x128xf32> -> vector<30x128xf32>
    %200 = arith.addf %194, %199 : vector<30x128xf32>
    %c4_177 = arith.constant 4 : index
    %c0_178 = arith.constant 0 : index
    %201 = vector.load %arg19[%c4_177, %c0_178] : memref<40x128xf32, #tpu.memory_space<vmem>>, vector<30x128xf32>
    %202 = arith.truncf %201 : vector<30x128xf32> to vector<30x128xbf16>
    %c4_179 = arith.constant 4 : index
    %c0_180 = arith.constant 0 : index
    %c0_181 = arith.constant 0 : index
    %203 = vector.load %arg6[%c4_179, %c0_180, %c0_181] : memref<5x128x128xbf16, #tpu.memory_space<vmem>>, vector<1x128x128xbf16>
    %204 = vector.shape_cast %203 : vector<1x128x128xbf16> to vector<128x128xbf16>
    %cst_182 = arith.constant dense<0.000000e+00> : vector<30x128xf32>
    %205 = tpu.matmul %202, %204, %cst_182 {dimension_numbers = #tpu.dot_dimension_numbers<[1], [0], [0], [1], [0, 0, 1, 1], [], []>} : vector<30x128xbf16>, vector<128x128xbf16>, vector<30x128xf32> -> vector<30x128xf32>
    %206 = arith.addf %200, %205 : vector<30x128xf32>
    %c0_183 = arith.constant 0 : index
    %c0_184 = arith.constant 0 : index
    %207 = vector.load %arg7[%c0_183, %c0_184] : memref<1x128xf32, #tpu.memory_space<vmem>>, vector<1x128xf32>
    %208 = vector.broadcast %207 : vector<1x128xf32> to vector<30x128xf32>
    %209 = arith.addf %206, %208 : vector<30x128xf32>
    %cst_185 = arith.constant 0.000000e+00 : f32
    %210 = vector.broadcast %cst_185 : f32 to vector<30x128xf32>
    %211 = arith.maximumf %209, %210 : vector<30x128xf32>
    %c0_186 = arith.constant 0 : index
    %c0_187 = arith.constant 0 : index
    %212 = vector.load %arg20[%c0_186, %c0_187] : memref<32x128xf32, #tpu.memory_space<vmem>>, vector<30x128xf32>
    tpu.vector_store %arg20[%c0_186, %c0_187], %211 {strides = array<i32>} : memref<32x128xf32, #tpu.memory_space<vmem>>, vector<30x128xf32>,
    %cst_188 = arith.constant 0.000000e+00 : f32
    %213 = vector.broadcast %cst_188 : f32 to vector<26x128xf32>
    %c0_189 = arith.constant 0 : index
    %c0_190 = arith.constant 0 : index
    %214 = vector.load %arg20[%c0_189, %c0_190] : memref<32x128xf32, #tpu.memory_space<vmem>>, vector<26x128xf32>
    %215 = arith.truncf %214 : vector<26x128xf32> to vector<26x128xbf16>
    %c0_191 = arith.constant 0 : index
    %c0_192 = arith.constant 0 : index
    %c0_193 = arith.constant 0 : index
    %216 = vector.load %arg8[%c0_191, %c0_192, %c0_193] : memref<5x128x128xbf16, #tpu.memory_space<vmem>>, vector<1x128x128xbf16>
    %217 = vector.shape_cast %216 : vector<1x128x128xbf16> to vector<128x128xbf16>
    %cst_194 = arith.constant dense<0.000000e+00> : vector<26x128xf32>
    %218 = tpu.matmul %215, %217, %cst_194 {dimension_numbers = #tpu.dot_dimension_numbers<[1], [0], [0], [1], [0, 0, 1, 1], [], []>} : vector<26x128xbf16>, vector<128x128xbf16>, vector<26x128xf32> -> vector<26x128xf32>
    %219 = arith.addf %213, %218 : vector<26x128xf32>
    %c1_195 = arith.constant 1 : index
    %c0_196 = arith.constant 0 : index
    %220 = vector.load %arg20[%c1_195, %c0_196] : memref<32x128xf32, #tpu.memory_space<vmem>>, vector<26x128xf32>
    %221 = arith.truncf %220 : vector<26x128xf32> to vector<26x128xbf16>
    %c1_197 = arith.constant 1 : index
    %c0_198 = arith.constant 0 : index
    %c0_199 = arith.constant 0 : index
    %222 = vector.load %arg8[%c1_197, %c0_198, %c0_199] : memref<5x128x128xbf16, #tpu.memory_space<vmem>>, vector<1x128x128xbf16>
    %223 = vector.shape_cast %222 : vector<1x128x128xbf16> to vector<128x128xbf16>
    %cst_200 = arith.constant dense<0.000000e+00> : vector<26x128xf32>
    %224 = tpu.matmul %221, %223, %cst_200 {dimension_numbers = #tpu.dot_dimension_numbers<[1], [0], [0], [1], [0, 0, 1, 1], [], []>} : vector<26x128xbf16>, vector<128x128xbf16>, vector<26x128xf32> -> vector<26x128xf32>
    %225 = arith.addf %219, %224 : vector<26x128xf32>
    %c2_201 = arith.constant 2 : index
    %c0_202 = arith.constant 0 : index
    %226 = vector.load %arg20[%c2_201, %c0_202] : memref<32x128xf32, #tpu.memory_space<vmem>>, vector<26x128xf32>
    %227 = arith.truncf %226 : vector<26x128xf32> to vector<26x128xbf16>
    %c2_203 = arith.constant 2 : index
    %c0_204 = arith.constant 0 : index
    %c0_205 = arith.constant 0 : index
    %228 = vector.load %arg8[%c2_203, %c0_204, %c0_205] : memref<5x128x128xbf16, #tpu.memory_space<vmem>>, vector<1x128x128xbf16>
    %229 = vector.shape_cast %228 : vector<1x128x128xbf16> to vector<128x128xbf16>
    %cst_206 = arith.constant dense<0.000000e+00> : vector<26x128xf32>
    %230 = tpu.matmul %227, %229, %cst_206 {dimension_numbers = #tpu.dot_dimension_numbers<[1], [0], [0], [1], [0, 0, 1, 1], [], []>} : vector<26x128xbf16>, vector<128x128xbf16>, vector<26x128xf32> -> vector<26x128xf32>
    %231 = arith.addf %225, %230 : vector<26x128xf32>
    %c3_207 = arith.constant 3 : index
    %c0_208 = arith.constant 0 : index
    %232 = vector.load %arg20[%c3_207, %c0_208] : memref<32x128xf32, #tpu.memory_space<vmem>>, vector<26x128xf32>
    %233 = arith.truncf %232 : vector<26x128xf32> to vector<26x128xbf16>
    %c3_209 = arith.constant 3 : index
    %c0_210 = arith.constant 0 : index
    %c0_211 = arith.constant 0 : index
    %234 = vector.load %arg8[%c3_209, %c0_210, %c0_211] : memref<5x128x128xbf16, #tpu.memory_space<vmem>>, vector<1x128x128xbf16>
    %235 = vector.shape_cast %234 : vector<1x128x128xbf16> to vector<128x128xbf16>
    %cst_212 = arith.constant dense<0.000000e+00> : vector<26x128xf32>
    %236 = tpu.matmul %233, %235, %cst_212 {dimension_numbers = #tpu.dot_dimension_numbers<[1], [0], [0], [1], [0, 0, 1, 1], [], []>} : vector<26x128xbf16>, vector<128x128xbf16>, vector<26x128xf32> -> vector<26x128xf32>
    %237 = arith.addf %231, %236 : vector<26x128xf32>
    %c4_213 = arith.constant 4 : index
    %c0_214 = arith.constant 0 : index
    %238 = vector.load %arg20[%c4_213, %c0_214] : memref<32x128xf32, #tpu.memory_space<vmem>>, vector<26x128xf32>
    %239 = arith.truncf %238 : vector<26x128xf32> to vector<26x128xbf16>
    %c4_215 = arith.constant 4 : index
    %c0_216 = arith.constant 0 : index
    %c0_217 = arith.constant 0 : index
    %240 = vector.load %arg8[%c4_215, %c0_216, %c0_217] : memref<5x128x128xbf16, #tpu.memory_space<vmem>>, vector<1x128x128xbf16>
    %241 = vector.shape_cast %240 : vector<1x128x128xbf16> to vector<128x128xbf16>
    %cst_218 = arith.constant dense<0.000000e+00> : vector<26x128xf32>
    %242 = tpu.matmul %239, %241, %cst_218 {dimension_numbers = #tpu.dot_dimension_numbers<[1], [0], [0], [1], [0, 0, 1, 1], [], []>} : vector<26x128xbf16>, vector<128x128xbf16>, vector<26x128xf32> -> vector<26x128xf32>
    %243 = arith.addf %237, %242 : vector<26x128xf32>
    %c0_219 = arith.constant 0 : index
    %c0_220 = arith.constant 0 : index
    %244 = vector.load %arg9[%c0_219, %c0_220] : memref<1x128xf32, #tpu.memory_space<vmem>>, vector<1x128xf32>
    %245 = vector.broadcast %244 : vector<1x128xf32> to vector<26x128xf32>
    %246 = arith.addf %243, %245 : vector<26x128xf32>
    %cst_221 = arith.constant 0.000000e+00 : f32
    %247 = vector.broadcast %cst_221 : f32 to vector<26x128xf32>
    %248 = arith.maximumf %246, %247 : vector<26x128xf32>
    %c0_222 = arith.constant 0 : index
    %c0_223 = arith.constant 0 : index
    %249 = vector.load %arg21[%c0_222, %c0_223] : memref<32x128xf32, #tpu.memory_space<vmem>>, vector<26x128xf32>
    tpu.vector_store %arg21[%c0_222, %c0_223], %248 {strides = array<i32>} : memref<32x128xf32, #tpu.memory_space<vmem>>, vector<26x128xf32>,
    %c0_224 = arith.constant 0 : index
    %c0_225 = arith.constant 0 : index
    %250 = tpu.strided_load %arg21[%c0_224, %c0_225] {strides = array<i32: 2, 1>} : memref<32x128xf32, #tpu.memory_space<vmem>>, vector<13x128xf32>
    %c1_226 = arith.constant 1 : index
    %c0_227 = arith.constant 0 : index
    %251 = tpu.strided_load %arg21[%c1_226, %c0_227] {strides = array<i32: 2, 1>} : memref<32x128xf32, #tpu.memory_space<vmem>>, vector<13x128xf32>
    %252 = arith.maximumf %250, %251 : vector<13x128xf32>
    %c0_228 = arith.constant 0 : index
    %c0_229 = arith.constant 0 : index
    %253 = vector.load %arg22[%c0_228, %c0_229] : memref<16x128xf32, #tpu.memory_space<vmem>>, vector<13x128xf32>
    tpu.vector_store %arg22[%c0_228, %c0_229], %252 {strides = array<i32>} : memref<16x128xf32, #tpu.memory_space<vmem>>, vector<13x128xf32>,
    %cst_230 = arith.constant 0.000000e+00 : f32
    %254 = vector.broadcast %cst_230 : f32 to vector<8x256xf32>
    %c0_231 = arith.constant 0 : index
    %c0_232 = arith.constant 0 : index
    %255 = vector.load %arg22[%c0_231, %c0_232] : memref<16x128xf32, #tpu.memory_space<vmem>>, vector<8x128xf32>
    %256 = arith.truncf %255 : vector<8x128xf32> to vector<8x128xbf16>
    %c0_233 = arith.constant 0 : index
    %c0_234 = arith.constant 0 : index
    %c0_235 = arith.constant 0 : index
    %257 = vector.load %arg10[%c0_233, %c0_234, %c0_235] : memref<6x128x256xbf16, #tpu.memory_space<vmem>>, vector<1x128x256xbf16>
    %258 = vector.shape_cast %257 : vector<1x128x256xbf16> to vector<128x256xbf16>
    %cst_236 = arith.constant dense<0.000000e+00> : vector<8x256xf32>
    %259 = tpu.matmul %256, %258, %cst_236 {dimension_numbers = #tpu.dot_dimension_numbers<[1], [0], [0], [1], [0, 0, 1, 1], [], []>} : vector<8x128xbf16>, vector<128x256xbf16>, vector<8x256xf32> -> vector<8x256xf32>
    %260 = arith.addf %254, %259 : vector<8x256xf32>
    %c1_237 = arith.constant 1 : index
    %c0_238 = arith.constant 0 : index
    %261 = vector.load %arg22[%c1_237, %c0_238] : memref<16x128xf32, #tpu.memory_space<vmem>>, vector<8x128xf32>
    %262 = arith.truncf %261 : vector<8x128xf32> to vector<8x128xbf16>
    %c1_239 = arith.constant 1 : index
    %c0_240 = arith.constant 0 : index
    %c0_241 = arith.constant 0 : index
    %263 = vector.load %arg10[%c1_239, %c0_240, %c0_241] : memref<6x128x256xbf16, #tpu.memory_space<vmem>>, vector<1x128x256xbf16>
    %264 = vector.shape_cast %263 : vector<1x128x256xbf16> to vector<128x256xbf16>
    %cst_242 = arith.constant dense<0.000000e+00> : vector<8x256xf32>
    %265 = tpu.matmul %262, %264, %cst_242 {dimension_numbers = #tpu.dot_dimension_numbers<[1], [0], [0], [1], [0, 0, 1, 1], [], []>} : vector<8x128xbf16>, vector<128x256xbf16>, vector<8x256xf32> -> vector<8x256xf32>
    %266 = arith.addf %260, %265 : vector<8x256xf32>
    %c2_243 = arith.constant 2 : index
    %c0_244 = arith.constant 0 : index
    %267 = vector.load %arg22[%c2_243, %c0_244] : memref<16x128xf32, #tpu.memory_space<vmem>>, vector<8x128xf32>
    %268 = arith.truncf %267 : vector<8x128xf32> to vector<8x128xbf16>
    %c2_245 = arith.constant 2 : index
    %c0_246 = arith.constant 0 : index
    %c0_247 = arith.constant 0 : index
    %269 = vector.load %arg10[%c2_245, %c0_246, %c0_247] : memref<6x128x256xbf16, #tpu.memory_space<vmem>>, vector<1x128x256xbf16>
    %270 = vector.shape_cast %269 : vector<1x128x256xbf16> to vector<128x256xbf16>
    %cst_248 = arith.constant dense<0.000000e+00> : vector<8x256xf32>
    %271 = tpu.matmul %268, %270, %cst_248 {dimension_numbers = #tpu.dot_dimension_numbers<[1], [0], [0], [1], [0, 0, 1, 1], [], []>} : vector<8x128xbf16>, vector<128x256xbf16>, vector<8x256xf32> -> vector<8x256xf32>
    %272 = arith.addf %266, %271 : vector<8x256xf32>
    %c3_249 = arith.constant 3 : index
    %c0_250 = arith.constant 0 : index
    %273 = vector.load %arg22[%c3_249, %c0_250] : memref<16x128xf32, #tpu.memory_space<vmem>>, vector<8x128xf32>
    %274 = arith.truncf %273 : vector<8x128xf32> to vector<8x128xbf16>
    %c3_251 = arith.constant 3 : index
    %c0_252 = arith.constant 0 : index
    %c0_253 = arith.constant 0 : index
    %275 = vector.load %arg10[%c3_251, %c0_252, %c0_253] : memref<6x128x256xbf16, #tpu.memory_space<vmem>>, vector<1x128x256xbf16>
    %276 = vector.shape_cast %275 : vector<1x128x256xbf16> to vector<128x256xbf16>
    %cst_254 = arith.constant dense<0.000000e+00> : vector<8x256xf32>
    %277 = tpu.matmul %274, %276, %cst_254 {dimension_numbers = #tpu.dot_dimension_numbers<[1], [0], [0], [1], [0, 0, 1, 1], [], []>} : vector<8x128xbf16>, vector<128x256xbf16>, vector<8x256xf32> -> vector<8x256xf32>
    %278 = arith.addf %272, %277 : vector<8x256xf32>
    %c4_255 = arith.constant 4 : index
    %c0_256 = arith.constant 0 : index
    %279 = vector.load %arg22[%c4_255, %c0_256] : memref<16x128xf32, #tpu.memory_space<vmem>>, vector<8x128xf32>
    %280 = arith.truncf %279 : vector<8x128xf32> to vector<8x128xbf16>
    %c4_257 = arith.constant 4 : index
    %c0_258 = arith.constant 0 : index
    %c0_259 = arith.constant 0 : index
    %281 = vector.load %arg10[%c4_257, %c0_258, %c0_259] : memref<6x128x256xbf16, #tpu.memory_space<vmem>>, vector<1x128x256xbf16>
    %282 = vector.shape_cast %281 : vector<1x128x256xbf16> to vector<128x256xbf16>
    %cst_260 = arith.constant dense<0.000000e+00> : vector<8x256xf32>
    %283 = tpu.matmul %280, %282, %cst_260 {dimension_numbers = #tpu.dot_dimension_numbers<[1], [0], [0], [1], [0, 0, 1, 1], [], []>} : vector<8x128xbf16>, vector<128x256xbf16>, vector<8x256xf32> -> vector<8x256xf32>
    %284 = arith.addf %278, %283 : vector<8x256xf32>
    %c5_261 = arith.constant 5 : index
    %c0_262 = arith.constant 0 : index
    %285 = vector.load %arg22[%c5_261, %c0_262] : memref<16x128xf32, #tpu.memory_space<vmem>>, vector<8x128xf32>
    %286 = arith.truncf %285 : vector<8x128xf32> to vector<8x128xbf16>
    %c5_263 = arith.constant 5 : index
    %c0_264 = arith.constant 0 : index
    %c0_265 = arith.constant 0 : index
    %287 = vector.load %arg10[%c5_263, %c0_264, %c0_265] : memref<6x128x256xbf16, #tpu.memory_space<vmem>>, vector<1x128x256xbf16>
    %288 = vector.shape_cast %287 : vector<1x128x256xbf16> to vector<128x256xbf16>
    %cst_266 = arith.constant dense<0.000000e+00> : vector<8x256xf32>
    %289 = tpu.matmul %286, %288, %cst_266 {dimension_numbers = #tpu.dot_dimension_numbers<[1], [0], [0], [1], [0, 0, 1, 1], [], []>} : vector<8x128xbf16>, vector<128x256xbf16>, vector<8x256xf32> -> vector<8x256xf32>
    %290 = arith.addf %284, %289 : vector<8x256xf32>
    %c0_267 = arith.constant 0 : index
    %c0_268 = arith.constant 0 : index
    %291 = vector.load %arg11[%c0_267, %c0_268] : memref<1x256xf32, #tpu.memory_space<vmem>>, vector<1x256xf32>
    %292 = vector.broadcast %291 : vector<1x256xf32> to vector<8x256xf32>
    %293 = arith.addf %290, %292 : vector<8x256xf32>
    %cst_269 = arith.constant 0.000000e+00 : f32
    %294 = vector.broadcast %cst_269 : f32 to vector<8x256xf32>
    %295 = arith.maximumf %293, %294 : vector<8x256xf32>
    %c0_270 = arith.constant 0 : index
    %c0_271 = arith.constant 0 : index
    %296 = vector.load %arg23[%c0_270, %c0_271] : memref<8x256xf32, #tpu.memory_space<vmem>>, vector<8x256xf32>
    tpu.vector_store %arg23[%c0_270, %c0_271], %295 {strides = array<i32>} : memref<8x256xf32, #tpu.memory_space<vmem>>, vector<8x256xf32>,
    %cst_272 = arith.constant 0.000000e+00 : f32
    %297 = vector.broadcast %cst_272 : f32 to vector<3x256xf32>
    %c0_273 = arith.constant 0 : index
    %c0_274 = arith.constant 0 : index
    %298 = vector.load %arg23[%c0_273, %c0_274] : memref<8x256xf32, #tpu.memory_space<vmem>>, vector<3x256xf32>
    %299 = arith.truncf %298 : vector<3x256xf32> to vector<3x256xbf16>
    %c0_275 = arith.constant 0 : index
    %c0_276 = arith.constant 0 : index
    %c0_277 = arith.constant 0 : index
    %300 = vector.load %arg12[%c0_275, %c0_276, %c0_277] : memref<6x256x256xbf16, #tpu.memory_space<vmem>>, vector<1x256x256xbf16>
    %301 = vector.shape_cast %300 : vector<1x256x256xbf16> to vector<256x256xbf16>
    %cst_278 = arith.constant dense<0.000000e+00> : vector<3x256xf32>
    %302 = tpu.matmul %299, %301, %cst_278 {dimension_numbers = #tpu.dot_dimension_numbers<[1], [0], [0], [1], [0, 0, 1, 1], [], []>} : vector<3x256xbf16>, vector<256x256xbf16>, vector<3x256xf32> -> vector<3x256xf32>
    %303 = arith.addf %297, %302 : vector<3x256xf32>
    %c1_279 = arith.constant 1 : index
    %c0_280 = arith.constant 0 : index
    %304 = vector.load %arg23[%c1_279, %c0_280] : memref<8x256xf32, #tpu.memory_space<vmem>>, vector<3x256xf32>
    %305 = arith.truncf %304 : vector<3x256xf32> to vector<3x256xbf16>
    %c1_281 = arith.constant 1 : index
    %c0_282 = arith.constant 0 : index
    %c0_283 = arith.constant 0 : index
    %306 = vector.load %arg12[%c1_281, %c0_282, %c0_283] : memref<6x256x256xbf16, #tpu.memory_space<vmem>>, vector<1x256x256xbf16>
    %307 = vector.shape_cast %306 : vector<1x256x256xbf16> to vector<256x256xbf16>
    %cst_284 = arith.constant dense<0.000000e+00> : vector<3x256xf32>
    %308 = tpu.matmul %305, %307, %cst_284 {dimension_numbers = #tpu.dot_dimension_numbers<[1], [0], [0], [1], [0, 0, 1, 1], [], []>} : vector<3x256xbf16>, vector<256x256xbf16>, vector<3x256xf32> -> vector<3x256xf32>
    %309 = arith.addf %303, %308 : vector<3x256xf32>
    %c2_285 = arith.constant 2 : index
    %c0_286 = arith.constant 0 : index
    %310 = vector.load %arg23[%c2_285, %c0_286] : memref<8x256xf32, #tpu.memory_space<vmem>>, vector<3x256xf32>
    %311 = arith.truncf %310 : vector<3x256xf32> to vector<3x256xbf16>
    %c2_287 = arith.constant 2 : index
    %c0_288 = arith.constant 0 : index
    %c0_289 = arith.constant 0 : index
    %312 = vector.load %arg12[%c2_287, %c0_288, %c0_289] : memref<6x256x256xbf16, #tpu.memory_space<vmem>>, vector<1x256x256xbf16>
    %313 = vector.shape_cast %312 : vector<1x256x256xbf16> to vector<256x256xbf16>
    %cst_290 = arith.constant dense<0.000000e+00> : vector<3x256xf32>
    %314 = tpu.matmul %311, %313, %cst_290 {dimension_numbers = #tpu.dot_dimension_numbers<[1], [0], [0], [1], [0, 0, 1, 1], [], []>} : vector<3x256xbf16>, vector<256x256xbf16>, vector<3x256xf32> -> vector<3x256xf32>
    %315 = arith.addf %309, %314 : vector<3x256xf32>
    %c3_291 = arith.constant 3 : index
    %c0_292 = arith.constant 0 : index
    %316 = vector.load %arg23[%c3_291, %c0_292] : memref<8x256xf32, #tpu.memory_space<vmem>>, vector<3x256xf32>
    %317 = arith.truncf %316 : vector<3x256xf32> to vector<3x256xbf16>
    %c3_293 = arith.constant 3 : index
    %c0_294 = arith.constant 0 : index
    %c0_295 = arith.constant 0 : index
    %318 = vector.load %arg12[%c3_293, %c0_294, %c0_295] : memref<6x256x256xbf16, #tpu.memory_space<vmem>>, vector<1x256x256xbf16>
    %319 = vector.shape_cast %318 : vector<1x256x256xbf16> to vector<256x256xbf16>
    %cst_296 = arith.constant dense<0.000000e+00> : vector<3x256xf32>
    %320 = tpu.matmul %317, %319, %cst_296 {dimension_numbers = #tpu.dot_dimension_numbers<[1], [0], [0], [1], [0, 0, 1, 1], [], []>} : vector<3x256xbf16>, vector<256x256xbf16>, vector<3x256xf32> -> vector<3x256xf32>
    %321 = arith.addf %315, %320 : vector<3x256xf32>
    %c4_297 = arith.constant 4 : index
    %c0_298 = arith.constant 0 : index
    %322 = vector.load %arg23[%c4_297, %c0_298] : memref<8x256xf32, #tpu.memory_space<vmem>>, vector<3x256xf32>
    %323 = arith.truncf %322 : vector<3x256xf32> to vector<3x256xbf16>
    %c4_299 = arith.constant 4 : index
    %c0_300 = arith.constant 0 : index
    %c0_301 = arith.constant 0 : index
    %324 = vector.load %arg12[%c4_299, %c0_300, %c0_301] : memref<6x256x256xbf16, #tpu.memory_space<vmem>>, vector<1x256x256xbf16>
    %325 = vector.shape_cast %324 : vector<1x256x256xbf16> to vector<256x256xbf16>
    %cst_302 = arith.constant dense<0.000000e+00> : vector<3x256xf32>
    %326 = tpu.matmul %323, %325, %cst_302 {dimension_numbers = #tpu.dot_dimension_numbers<[1], [0], [0], [1], [0, 0, 1, 1], [], []>} : vector<3x256xbf16>, vector<256x256xbf16>, vector<3x256xf32> -> vector<3x256xf32>
    %327 = arith.addf %321, %326 : vector<3x256xf32>
    %c5_303 = arith.constant 5 : index
    %c0_304 = arith.constant 0 : index
    %328 = vector.load %arg23[%c5_303, %c0_304] : memref<8x256xf32, #tpu.memory_space<vmem>>, vector<3x256xf32>
    %329 = arith.truncf %328 : vector<3x256xf32> to vector<3x256xbf16>
    %c5_305 = arith.constant 5 : index
    %c0_306 = arith.constant 0 : index
    %c0_307 = arith.constant 0 : index
    %330 = vector.load %arg12[%c5_305, %c0_306, %c0_307] : memref<6x256x256xbf16, #tpu.memory_space<vmem>>, vector<1x256x256xbf16>
    %331 = vector.shape_cast %330 : vector<1x256x256xbf16> to vector<256x256xbf16>
    %cst_308 = arith.constant dense<0.000000e+00> : vector<3x256xf32>
    %332 = tpu.matmul %329, %331, %cst_308 {dimension_numbers = #tpu.dot_dimension_numbers<[1], [0], [0], [1], [0, 0, 1, 1], [], []>} : vector<3x256xbf16>, vector<256x256xbf16>, vector<3x256xf32> -> vector<3x256xf32>
    %333 = arith.addf %327, %332 : vector<3x256xf32>
    %c0_309 = arith.constant 0 : index
    %c0_310 = arith.constant 0 : index
    %334 = vector.load %arg13[%c0_309, %c0_310] : memref<1x256xf32, #tpu.memory_space<vmem>>, vector<1x256xf32>
    %335 = vector.broadcast %334 : vector<1x256xf32> to vector<3x256xf32>
    %336 = arith.addf %333, %335 : vector<3x256xf32>
    %cst_311 = arith.constant 0.000000e+00 : f32
    %337 = vector.broadcast %cst_311 : f32 to vector<3x256xf32>
    %338 = arith.maximumf %336, %337 : vector<3x256xf32>
    %cst_312 = arith.constant dense<0.000000e+00> : vector<256xf32>
    %339 = vector.multi_reduction <add>, %338, %cst_312 [0] : vector<3x256xf32> to vector<256xf32>
    %340 = vector.shape_cast %339 : vector<256xf32> to vector<1x256xf32>
    %cst_313 = arith.constant 0.333333343 : f32
    %341 = vector.broadcast %cst_313 : f32 to vector<1x256xf32>
    %342 = arith.mulf %340, %341 : vector<1x256xf32>
    %343 = arith.truncf %342 : vector<1x256xf32> to vector<1x256xbf16>
    %c0_314 = arith.constant 0 : index
    %c0_315 = arith.constant 0 : index
    %344 = vector.load %arg14[%c0_314, %c0_315] : memref<256x128xbf16, #tpu.memory_space<vmem>>, vector<256x128xbf16>
    %cst_316 = arith.constant dense<0.000000e+00> : vector<1x128xf32>
    %345 = tpu.matmul %343, %344, %cst_316 {dimension_numbers = #tpu.dot_dimension_numbers<[1], [0], [0], [1], [0, 0, 1, 1], [], []>} : vector<1x256xbf16>, vector<256x128xbf16>, vector<1x128xf32> -> vector<1x128xf32>
    %c0_317 = arith.constant 0 : index
    %c0_318 = arith.constant 0 : index
    %346 = vector.load %arg15[%c0_317, %c0_318] : memref<1x128xf32, #tpu.memory_space<vmem>>, vector<1x128xf32>
    %347 = arith.addf %345, %346 : vector<1x128xf32>
    %348 = arith.negf %347 : vector<1x128xf32>
    %349 = math.exp %348 : vector<1x128xf32>
    %cst_319 = arith.constant 1.000000e+00 : f32
    %350 = vector.broadcast %cst_319 : f32 to vector<1x128xf32>
    %351 = arith.addf %350, %349 : vector<1x128xf32>
    %352 = arith.divf %350, %351 : vector<1x128xf32>
    %c0_320 = arith.constant 0 : index
    %c0_321 = arith.constant 0 : index
    %353 = vector.load %arg16[%c0_320, %c0_321] : memref<1x128xf32, #tpu.memory_space<vmem>>, vector<1x128xf32>
    tpu.vector_store %arg16[%c0_320, %c0_321], %352 {strides = array<i32>} : memref<1x128xf32, #tpu.memory_space<vmem>>, vector<1x128xf32>,
    return
  }
  func.func @transform_0(%arg0: i32) -> (i32, i32) {
    %c0_i32 = arith.constant 0 : i32
    %c0_i32_0 = arith.constant 0 : i32
    %c0_i32_1 = arith.constant 0 : i32
    return %c0_i32, %c0_i32_0 : i32, i32
  }
  func.func @transform_1(%arg0: i32) -> (i32, i32, i32) {
    %c0_i32 = arith.constant 0 : i32
    %c0_i32_0 = arith.constant 0 : i32
    %c0_i32_1 = arith.constant 0 : i32
    %c0_i32_2 = arith.constant 0 : i32
    return %c0_i32, %c0_i32_0, %c0_i32_1 : i32, i32, i32
  }
  func.func @transform_2(%arg0: i32) -> (i32, i32) {
    %c0_i32 = arith.constant 0 : i32
    %c0_i32_0 = arith.constant 0 : i32
    %c0_i32_1 = arith.constant 0 : i32
    return %c0_i32, %c0_i32_0 : i32, i32
  }
  func.func @transform_3(%arg0: i32) -> (i32, i32, i32) {
    %c0_i32 = arith.constant 0 : i32
    %c0_i32_0 = arith.constant 0 : i32
    %c0_i32_1 = arith.constant 0 : i32
    %c0_i32_2 = arith.constant 0 : i32
    return %c0_i32, %c0_i32_0, %c0_i32_1 : i32, i32, i32
  }
  func.func @transform_4(%arg0: i32) -> (i32, i32) {
    %c0_i32 = arith.constant 0 : i32
    %c0_i32_0 = arith.constant 0 : i32
    %c0_i32_1 = arith.constant 0 : i32
    return %c0_i32, %c0_i32_0 : i32, i32
  }
  func.func @transform_5(%arg0: i32) -> (i32, i32, i32) {
    %c0_i32 = arith.constant 0 : i32
    %c0_i32_0 = arith.constant 0 : i32
    %c0_i32_1 = arith.constant 0 : i32
    %c0_i32_2 = arith.constant 0 : i32
    return %c0_i32, %c0_i32_0, %c0_i32_1 : i32, i32, i32
  }
  func.func @transform_6(%arg0: i32) -> (i32, i32) {
    %c0_i32 = arith.constant 0 : i32
    %c0_i32_0 = arith.constant 0 : i32
    %c0_i32_1 = arith.constant 0 : i32
    return %c0_i32, %c0_i32_0 : i32, i32
  }
  func.func @transform_7(%arg0: i32) -> (i32, i32, i32) {
    %c0_i32 = arith.constant 0 : i32
    %c0_i32_0 = arith.constant 0 : i32
    %c0_i32_1 = arith.constant 0 : i32
    %c0_i32_2 = arith.constant 0 : i32
    return %c0_i32, %c0_i32_0, %c0_i32_1 : i32, i32, i32
  }
  func.func @transform_8(%arg0: i32) -> (i32, i32) {
    %c0_i32 = arith.constant 0 : i32
    %c0_i32_0 = arith.constant 0 : i32
    %c0_i32_1 = arith.constant 0 : i32
    return %c0_i32, %c0_i32_0 : i32, i32
  }
  func.func @transform_9(%arg0: i32) -> (i32, i32, i32) {
    %c0_i32 = arith.constant 0 : i32
    %c0_i32_0 = arith.constant 0 : i32
    %c0_i32_1 = arith.constant 0 : i32
    %c0_i32_2 = arith.constant 0 : i32
    return %c0_i32, %c0_i32_0, %c0_i32_1 : i32, i32, i32
  }
  func.func @transform_10(%arg0: i32) -> (i32, i32) {
    %c0_i32 = arith.constant 0 : i32
    %c0_i32_0 = arith.constant 0 : i32
    %c0_i32_1 = arith.constant 0 : i32
    return %c0_i32, %c0_i32_0 : i32, i32
  }
  func.func @transform_11(%arg0: i32) -> (i32, i32, i32) {
    %c0_i32 = arith.constant 0 : i32
    %c0_i32_0 = arith.constant 0 : i32
    %c0_i32_1 = arith.constant 0 : i32
    %c0_i32_2 = arith.constant 0 : i32
    return %c0_i32, %c0_i32_0, %c0_i32_1 : i32, i32, i32
  }
  func.func @transform_12(%arg0: i32) -> (i32, i32) {
    %c0_i32 = arith.constant 0 : i32
    %c0_i32_0 = arith.constant 0 : i32
    %c0_i32_1 = arith.constant 0 : i32
    return %c0_i32, %c0_i32_0 : i32, i32
  }
  func.func @transform_13(%arg0: i32) -> (i32, i32) {
    %c0_i32 = arith.constant 0 : i32
    %c0_i32_0 = arith.constant 0 : i32
    %c0_i32_1 = arith.constant 0 : i32
    return %c0_i32, %c0_i32_0 : i32, i32
  }
  func.func @transform_14(%arg0: i32) -> (i32, i32) {
    %c0_i32 = arith.constant 0 : i32
    %c0_i32_0 = arith.constant 0 : i32
    %c0_i32_1 = arith.constant 0 : i32
    return %c0_i32, %c0_i32_0 : i32, i32
  }
  func.func @transform_15(%arg0: i32) -> (i32, i32) {
    %c0_i32 = arith.constant 0 : i32
    %c0_i32_0 = arith.constant 0 : i32
    %c0_i32_1 = arith.constant 0 : i32
    return %c0_i32, %c0_i32_0 : i32, i32
  }
}

</mosaic_0001>

<llo_original>
// kernel: ann_forward.1
$region0: #{ann_forward.1}
  #allocation0 [shape = 'u32[]', space=smem, size = 0x4, offset = 0x4, fixed_abs, tag = 'smem constant byte address 0x4 - core index']
  #allocation1 [shape = 'u32[72,128]{1,0:T(1,128)}', space=vmem, size = 0x9000, scoped, tag = 'internal scratch']
  #allocation2 [shape = 'f32[96,128]{1,0:T(8,128)}', space=vmem, size = 0xc000, scoped, tag = 'scratch operand']
  #allocation3 [shape = 'f32[72,128]{1,0:T(8,128)}', space=vmem, size = 0x9000, scoped, tag = 'scratch operand']
  #allocation4 [shape = 'f32[40,128]{1,0:T(8,128)}', space=vmem, size = 0x5000, scoped, tag = 'scratch operand']
  #allocation5 [shape = 'f32[32,128]{1,0:T(8,128)}', space=vmem, size = 0x4000, scoped, tag = 'scratch operand']
  #allocation6 [shape = 'f32[32,128]{1,0:T(8,128)}', space=vmem, size = 0x4000, scoped, tag = 'scratch operand']
  #allocation7 [shape = 'f32[16,128]{1,0:T(8,128)}', space=vmem, size = 0x2000, scoped, tag = 'scratch operand']
  #allocation8 [shape = 'f32[8,256]{1,0:T(8,128)}', space=vmem, size = 0x2000, scoped, tag = 'scratch operand']
  %s0 = inlined_call_operand.vmem [shape: f32[82,5], index: 0, kind: input, shape index: {}]
  %s1 = inlined_call_operand.vmem [shape: bf16[5,5,128], index: 1, kind: input, shape index: {}]
  %s2 = inlined_call_operand.vmem [shape: f32[1,128], index: 2, kind: input, shape index: {}]
  %s3 = inlined_call_operand.hbm [shape: bf16[21,128,128], index: 3, kind: input, shape index: {}]
  %s4 = inlined_call_operand.vmem [shape: f32[1,128], index: 4, kind: input, shape index: {}]
  %s5 = inlined_call_operand.hbm [shape: bf16[5,128,128], index: 5, kind: input, shape index: {}]
  %s6 = inlined_call_operand.vmem [shape: f32[1,128], index: 6, kind: input, shape index: {}]
  %s7 = inlined_call_operand.hbm [shape: bf16[5,128,128], index: 7, kind: input, shape index: {}]
  %s8 = inlined_call_operand.vmem [shape: f32[1,128], index: 8, kind: input, shape index: {}]
  %s9 = inlined_call_operand.hbm [shape: bf16[6,128,256], index: 9, kind: input, shape index: {}]
  %s10 = inlined_call_operand.vmem [shape: f32[1,256], index: 10, kind: input, shape index: {}]
  %s11 = inlined_call_operand.hbm [shape: bf16[6,256,256], index: 11, kind: input, shape index: {}]
  %s12 = inlined_call_operand.vmem [shape: f32[1,256], index: 12, kind: input, shape index: {}]
  %s13 = inlined_call_operand.hbm [shape: bf16[256,128], index: 13, kind: input, shape index: {}]
  %s14 = inlined_call_operand.vmem [shape: f32[1,128], index: 14, kind: input, shape index: {}]
  %s15 = inlined_call_operand.hbm [shape: f32[1,128], index: 15, kind: output, shape index: {}]
  %s16 = sld [smem:[#allocation0]]
  $region94: #{ann_forward.1} parent=0
    _
  %s18 = ssub.s32 1, %s16
  %s19 = scalar_select 0, %s18, %s16
  $region1: #{ann_forward.1} parent=0
    #allocation9 [shape = 'u8[688128]{0}', space=vmem, size = 0xa8000, scoped, tag = 'input window, operand 3, single buffered']
    #allocation10 [shape = 's32[1]{0}', space=sflag, size = 0x4, scoped, tag = 'scoped memory for ann_forward.1']
    #allocation11 [shape = 's32[1]{0}', space=sflag, size = 0x4, scoped, tag = 'scoped memory for ann_forward.1']
    #allocation12 [shape = 'u8[163840]{0}', space=vmem, size = 0x28000, scoped, tag = 'input window, operand 5, single buffered']
    #allocation13 [shape = 's32[1]{0}', space=sflag, size = 0x4, scoped, tag = 'scoped memory for ann_forward.1']
    #allocation14 [shape = 'u8[163840]{0}', space=vmem, size = 0x28000, scoped, tag = 'input window, operand 7, single buffered']
    #allocation15 [shape = 'u8[393216]{0}', space=vmem, size = 0x60000, scoped, tag = 'input window, operand 9, single buffered']
    #allocation16 [shape = 's32[1]{0}', space=sflag, size = 0x4, scoped, tag = 'scoped memory for ann_forward.1']
    #allocation17 [shape = 'u8[786432]{0}', space=vmem, size = 0xc0000, scoped, tag = 'input window, operand 11, single buffered']
    #allocation18 [shape = 'u8[65536]{0}', space=vmem, size = 0x10000, scoped, tag = 'input window, operand 13, single buffered']
    #allocation19 [shape = 's32[1]{0}', space=sflag, size = 0x4, scoped, tag = 'scoped memory for ann_forward.1']
    #allocation20 [shape = 'u8[512]{0}', space=vmem, size = 0x400, scoped, tag = 'output window, operand 0, single buffered']
    %20 = vsyncpa [#allocation10], 0
    %21 = vsyncpa [#allocation13], 0
    %22 = vsyncpa [#allocation16], 0
    %23 = vsyncpa [#allocation19], 0
    %24 = vsyncpa [#allocation11], 0
    // Predicated region
    $region2: #{ann_forward.1} parent=1 // pred_check
      _
    $region3: #{ann_forward.1} parent=1 // pred_check_branch
      %26 = sbr.rel (0) target = $region5
    $region4: #{ann_forward.1} parent=1 // pred_region
      _
    $region5: #{ann_forward.1} parent=1 // pred_fallthru
      _
    // Predicated region
    $region6: #{ann_forward.1} parent=1 // pred_check
      _
    $region7: #{ann_forward.1} parent=1 // pred_check_branch
      %28 = sbr.rel (0) target = $region9
    $region8: #{ann_forward.1} parent=1 // pred_region
      _
    $region9: #{ann_forward.1} parent=1 // pred_fallthru
      _
    // Predicated region
    $region10: #{ann_forward.1} parent=1 // pred_check
      _
    $region11: #{ann_forward.1} parent=1 // pred_check_branch
      %30 = sbr.rel (0) target = $region13
    $region12: #{ann_forward.1} parent=1 // pred_region
      _
    $region13: #{ann_forward.1} parent=1 // pred_fallthru
      _
    // Predicated region
    $region14: #{ann_forward.1} parent=1 // pred_check
      _
    $region15: #{ann_forward.1} parent=1 // pred_check_branch
      %32 = sbr.rel (0) target = $region17
    $region16: #{ann_forward.1} parent=1 // pred_region
      %34 = vsyncadd [#allocation10], 0
      %s35 = sshll.u32 %s3, 4
      %s36 = int_to_ptr.hbm [resolvable:$true] %s35
      %s37 = sshll.u32 [#allocation9], 4
      %s38 = int_to_ptr.vmem [resolvable:$true] %s37
      %43 = dma.hbm_to_vmem [thread:$0]  %s36, 21504, %s38, [#allocation10], 64, 64, 4
    $region17: #{ann_forward.1} parent=1 // pred_fallthru
      _
    // Predicated region
    $region18: #{ann_forward.1} parent=1 // pred_check
      _
    $region19: #{ann_forward.1} parent=1 // pred_check_branch
      %45 = sbr.rel (0) target = $region21
    $region20: #{ann_forward.1} parent=1 // pred_region
      _
    $region21: #{ann_forward.1} parent=1 // pred_fallthru
      _
    // Predicated region
    $region22: #{ann_forward.1} parent=1 // pred_check
      _
    $region23: #{ann_forward.1} parent=1 // pred_check_branch
      %47 = sbr.rel (0) target = $region25
    $region24: #{ann_forward.1} parent=1 // pred_region
      %49 = vsyncadd [#allocation13], 0
      %s50 = sshll.u32 %s5, 4
      %s51 = int_to_ptr.hbm [resolvable:$true] %s50
      %s52 = sshll.u32 [#allocation12], 4
      %s53 = int_to_ptr.vmem [resolvable:$true] %s52
      %58 = dma.hbm_to_vmem [thread:$0]  %s51, 5120, %s53, [#allocation13], 64, 64, 4
    $region25: #{ann_forward.1} parent=1 // pred_fallthru
      _
    // Predicated region
    $region26: #{ann_forward.1} parent=1 // pred_check
      _
    $region27: #{ann_forward.1} parent=1 // pred_check_branch
      %60 = sbr.rel (0) target = $region29
    $region28: #{ann_forward.1} parent=1 // pred_region
      _
    $region29: #{ann_forward.1} parent=1 // pred_fallthru
      _
    // Predicated region
    $region30: #{ann_forward.1} parent=1 // pred_check
      _
    $region31: #{ann_forward.1} parent=1 // pred_check_branch
      %62 = sbr.rel (0) target = $region33
    $region32: #{ann_forward.1} parent=1 // pred_region
      %64 = vsyncadd [#allocation13], 0
      %s65 = sshll.u32 %s7, 4
      %s66 = int_to_ptr.hbm [resolvable:$true] %s65
      %s67 = sshll.u32 [#allocation14], 4
      %s68 = int_to_ptr.vmem [resolvable:$true] %s67
      %73 = dma.hbm_to_vmem [thread:$0]  %s66, 5120, %s68, [#allocation13], 64, 64, 4
    $region33: #{ann_forward.1} parent=1 // pred_fallthru
      _
    // Predicated region
    $region34: #{ann_forward.1} parent=1 // pred_check
      _
    $region35: #{ann_forward.1} parent=1 // pred_check_branch
      %75 = sbr.rel (0) target = $region37
    $region36: #{ann_forward.1} parent=1 // pred_region
      _
    $region37: #{ann_forward.1} parent=1 // pred_fallthru
      _
    // Predicated region
    $region38: #{ann_forward.1} parent=1 // pred_check
      _
    $region39: #{ann_forward.1} parent=1 // pred_check_branch
      %77 = sbr.rel (0) target = $region41
    $region40: #{ann_forward.1} parent=1 // pred_region
      %79 = vsyncadd [#allocation16], 0
      %s80 = sshll.u32 %s9, 4
      %s81 = int_to_ptr.hbm [resolvable:$true] %s80
      %s82 = sshll.u32 [#allocation15], 4
      %s83 = int_to_ptr.vmem [resolvable:$true] %s82
      %88 = dma.hbm_to_vmem [thread:$0]  %s81, 12288, %s83, [#allocation16], 128, 128, 8
    $region41: #{ann_forward.1} parent=1 // pred_fallthru
      _
    // Predicated region
    $region42: #{ann_forward.1} parent=1 // pred_check
      _
    $region43: #{ann_forward.1} parent=1 // pred_check_branch
      %90 = sbr.rel (0) target = $region45
    $region44: #{ann_forward.1} parent=1 // pred_region
      _
    $region45: #{ann_forward.1} parent=1 // pred_fallthru
      _
    // Predicated region
    $region46: #{ann_forward.1} parent=1 // pred_check
      _
    $region47: #{ann_forward.1} parent=1 // pred_check_branch
      %92 = sbr.rel (0) target = $region49
    $region48: #{ann_forward.1} parent=1 // pred_region
      %94 = vsyncadd [#allocation16], 0
      %s95 = sshll.u32 %s11, 4
      %s96 = int_to_ptr.hbm [resolvable:$true] %s95
      %s97 = sshll.u32 [#allocation17], 4
      %s98 = int_to_ptr.vmem [resolvable:$true] %s97
      %103 = dma.hbm_to_vmem [thread:$0]  %s96, 24576, %s98, [#allocation16], 128, 128, 8
    $region49: #{ann_forward.1} parent=1 // pred_fallthru
      _
    // Predicated region
    $region50: #{ann_forward.1} parent=1 // pred_check
      _
    $region51: #{ann_forward.1} parent=1 // pred_check_branch
      %105 = sbr.rel (0) target = $region53
    $region52: #{ann_forward.1} parent=1 // pred_region
      _
    $region53: #{ann_forward.1} parent=1 // pred_fallthru
      _
    // Predicated region
    $region54: #{ann_forward.1} parent=1 // pred_check
      _
    $region55: #{ann_forward.1} parent=1 // pred_check_branch
      %107 = sbr.rel (0) target = $region57
    $region56: #{ann_forward.1} parent=1 // pred_region
      %109 = vsyncadd [#allocation19], 0
      %s110 = sshll.u32 %s13, 4
      %s111 = int_to_ptr.hbm [resolvable:$true] %s110
      %s112 = sshll.u32 [#allocation18], 4
      %s113 = int_to_ptr.vmem [resolvable:$true] %s112
      %118 = dma.hbm_to_vmem [thread:$0]  %s111, 2048, %s113, [#allocation19], 64, 64, 4
    $region57: #{ann_forward.1} parent=1 // pred_fallthru
      _
    // Predicated region
    $region58: #{ann_forward.1} parent=1 // pred_check
      _
    $region59: #{ann_forward.1} parent=1 // pred_check_branch
      %120 = sbr.rel (0) target = $region61
    $region60: #{ann_forward.1} parent=1 // pred_region
      _
    $region61: #{ann_forward.1} parent=1 // pred_fallthru
      _
    // Predicated region
    $region62: #{ann_forward.1} parent=1 // pred_check
      _
    $region63: #{ann_forward.1} parent=1 // pred_check_branch
      %122 = sbr.rel (0) target = $region65
    $region64: #{ann_forward.1} parent=1 // pred_region
      %124 = dma.done [#allocation10], 21504
    $region65: #{ann_forward.1} parent=1 // pred_fallthru
      _
    // Predicated region
    $region66: #{ann_forward.1} parent=1 // pred_check
      _
    $region67: #{ann_forward.1} parent=1 // pred_check_branch
      %126 = sbr.rel (0) target = $region69
    $region68: #{ann_forward.1} parent=1 // pred_region
      %128 = dma.done [#allocation13], 5120
    $region69: #{ann_forward.1} parent=1 // pred_fallthru
      _
    // Predicated region
    $region70: #{ann_forward.1} parent=1 // pred_check
      _
    $region71: #{ann_forward.1} parent=1 // pred_check_branch
      %130 = sbr.rel (0) target = $region73
    $region72: #{ann_forward.1} parent=1 // pred_region
      %132 = dma.done [#allocation13], 5120
    $region73: #{ann_forward.1} parent=1 // pred_fallthru
      _
    // Predicated region
    $region74: #{ann_forward.1} parent=1 // pred_check
      _
    $region75: #{ann_forward.1} parent=1 // pred_check_branch
      %134 = sbr.rel (0) target = $region77
    $region76: #{ann_forward.1} parent=1 // pred_region
      %136 = dma.done [#allocation16], 12288
    $region77: #{ann_forward.1} parent=1 // pred_fallthru
      _
    // Predicated region
    $region78: #{ann_forward.1} parent=1 // pred_check
      _
    $region79: #{ann_forward.1} parent=1 // pred_check_branch
      %138 = sbr.rel (0) target = $region81
    $region80: #{ann_forward.1} parent=1 // pred_region
      %140 = dma.done [#allocation16], 24576
    $region81: #{ann_forward.1} parent=1 // pred_fallthru
      _
    // Predicated region
    $region82: #{ann_forward.1} parent=1 // pred_check
      _
    $region83: #{ann_forward.1} parent=1 // pred_check_branch
      %142 = sbr.rel (0) target = $region85
    $region84: #{ann_forward.1} parent=1 // pred_region
      %144 = dma.done [#allocation19], 2048
    $region85: #{ann_forward.1} parent=1 // pred_fallthru
      _
    %v146 = vld [vmem:[%s0] sm:$0xff]
    %v147 = vld [vmem:[%s0 + $0x8] sm:$0xff]
    %v148 = vld [vmem:[%s0 + $0x10] sm:$0xff]
    %v149 = vld [vmem:[%s0 + $0x18] sm:$0xff]
    %v150 = vld [vmem:[%s0 + $0x20] sm:$0xff]
    %v151 = vld [vmem:[%s0 + $0x28] sm:$0xff]
    %v152 = vld [vmem:[%s0 + $0x30] sm:$0xff]
    %v153 = vld [vmem:[%s0 + $0x38] sm:$0xff]
    %v154 = vld [vmem:[%s0 + $0x40] sm:$0xff]
    %v155 = vld [vmem:[%s0 + $0x48] sm:$0x3f]
    %v156 = vpack.c.bf16 %v147, %v146
    %v157 = vpack.c.bf16 %v149, %v148
    %v158 = vpack.c.bf16 %v151, %v150
    %v159 = vpack.c.bf16 %v153, %v152
    %v160 = vpack.c.bf16 %v155, %v154
    %v161 = vld [vmem:[%s1] sm:$0x7]
    %v162 = vld [vmem:[%s0 + $0x1] sm:$0xff]
    %v163 = vld [vmem:[%s0 + $0x9] sm:$0xff]
    %v164 = vld [vmem:[%s0 + $0x11] sm:$0xff]
    %v165 = vld [vmem:[%s0 + $0x19] sm:$0xff]
    %v166 = vld [vmem:[%s0 + $0x21] sm:$0xff]
    %v167 = vld [vmem:[%s0 + $0x29] sm:$0xff]
    %v168 = vld [vmem:[%s0 + $0x31] sm:$0xff]
    %v169 = vld [vmem:[%s0 + $0x39] sm:$0xff]
    %v170 = vld [vmem:[%s0 + $0x41] sm:$0xff]
    %v171 = vld [vmem:[%s0 + $0x49] sm:$0x3f]
    %v172 = vpack.c.bf16 %v163, %v162
    %v173 = vpack.c.bf16 %v165, %v164
    %v174 = vpack.c.bf16 %v167, %v166
    %v175 = vpack.c.bf16 %v169, %v168
    %v176 = vpack.c.bf16 %v171, %v170
    %s177 = scalar_lea.vmem %s1, 4
    %v178 = vld [vmem:[%s177] sm:$0x7]
    %vm179 = vcmask 39936
    %v181 = vsel %vm179, %v172, 0
    %v184 = vsel %vm179, %v173, 0
    %v187 = vsel %vm179, %v174, 0
    %v190 = vsel %vm179, %v175, 0
    %v193 = vsel %vm179, %v176, 0
    %vm195 = vcmask 1041408
    %vm196 = vcmask 1042432
    %v197 = vsel %vm195, 4294967295, 65535
    %v198 = vsel %vm196, %v197, 0
    %v200 = vand.u32 %v178, %v198
    %202 = vmatpush.bf16.msra.mxu0 0
    %203 = vmatpush.bf16.msra.mxu0 0
    %204 = vmatpush.bf16.msra.mxu0 0
    %205 = vmatpush.bf16.msra.mxu0 0
    %206 = vmatpush.bf16.msra.mxu0 0
    %207 = vmatpush.bf16.msra.mxu0 0
    %208 = vmatpush.bf16.msra.mxu0 0
    %209 = vmatpush.bf16.msra.mxu0 %v200
    %210 = vmatmul.bf16.gmra.mxu0 %v181
    %v211 = vpop.f32.mrf.mxu0
    %v212 = vadd.f32 0.0, %v211
    %v213 = vpop.f32.mrf.mxu0
    %v214 = vadd.f32 0.0, %v213
    %215 = vmatmul.bf16.gmra.mxu0 %v184
    %v216 = vpop.f32.mrf.mxu0
    %v217 = vadd.f32 0.0, %v216
    %v218 = vpop.f32.mrf.mxu0
    %v219 = vadd.f32 0.0, %v218
    %220 = vmatmul.bf16.gmra.mxu0 %v187
    %v221 = vpop.f32.mrf.mxu0
    %v222 = vadd.f32 0.0, %v221
    %v223 = vpop.f32.mrf.mxu0
    %v224 = vadd.f32 0.0, %v223
    %225 = vmatmul.bf16.gmra.mxu0 %v190
    %v226 = vpop.f32.mrf.mxu0
    %v227 = vadd.f32 0.0, %v226
    %v228 = vpop.f32.mrf.mxu0
    %v229 = vadd.f32 0.0, %v228
    %230 = vmatmul.bf16.gmra.mxu0 %v193
    %v231 = vpop.f32.mrf.mxu0
    %v232 = vadd.f32 0.0, %v231
    %v233 = vpop.f32.mrf.mxu0
    %v234 = vadd.f32 0.0, %v233
    %235 = vdwg.mxu0
    %v237 = vsel %vm179, %v156, 0
    %v240 = vsel %vm179, %v157, 0
    %v243 = vsel %vm179, %v158, 0
    %v246 = vsel %vm179, %v159, 0
    %v249 = vsel %vm179, %v160, 0
    %v252 = vand.u32 %v161, %v198
    %254 = vmatpush.bf16.msra.mxu0 0
    %255 = vmatpush.bf16.msra.mxu0 0
    %256 = vmatpush.bf16.msra.mxu0 0
    %257 = vmatpush.bf16.msra.mxu0 0
    %258 = vmatpush.bf16.msra.mxu0 0
    %259 = vmatpush.bf16.msra.mxu0 0
    %260 = vmatpush.bf16.msra.mxu0 0
    %261 = vmatpush.bf16.msra.mxu0 %v252
    %262 = vmatmul.bf16.gmra.mxu0 %v237
    %v263 = vpop.f32.mrf.mxu0
    %v264 = vadd.f32 %v212, %v263
    %v265 = vpop.f32.mrf.mxu0
    %v266 = vadd.f32 %v214, %v265
    %267 = vmatmul.bf16.gmra.mxu0 %v240
    %v268 = vpop.f32.mrf.mxu0
    %v269 = vadd.f32 %v217, %v268
    %v270 = vpop.f32.mrf.mxu0
    %v271 = vadd.f32 %v219, %v270
    %272 = vmatmul.bf16.gmra.mxu0 %v243
    %v273 = vpop.f32.mrf.mxu0
    %v274 = vadd.f32 %v222, %v273
    %v275 = vpop.f32.mrf.mxu0
    %v276 = vadd.f32 %v224, %v275
    %277 = vmatmul.bf16.gmra.mxu0 %v246
    %v278 = vpop.f32.mrf.mxu0
    %v279 = vadd.f32 %v227, %v278
    %v280 = vpop.f32.mrf.mxu0
    %v281 = vadd.f32 %v229, %v280
    %282 = vmatmul.bf16.gmra.mxu0 %v249
    %v283 = vpop.f32.mrf.mxu0
    %v284 = vadd.f32 %v232, %v283
    %v285 = vpop.f32.mrf.mxu0
    %v286 = vadd.f32 %v234, %v285
    %287 = vdwg.mxu0
    %v288 = vld [vmem:[%s0 + $0x2] sm:$0xff]
    %v289 = vld [vmem:[%s0 + $0xa] sm:$0xff]
    %v290 = vld [vmem:[%s0 + $0x12] sm:$0xff]
    %v291 = vld [vmem:[%s0 + $0x1a] sm:$0xff]
    %v292 = vld [vmem:[%s0 + $0x22] sm:$0xff]
    %v293 = vld [vmem:[%s0 + $0x2a] sm:$0xff]
    %v294 = vld [vmem:[%s0 + $0x32] sm:$0xff]
    %v295 = vld [vmem:[%s0 + $0x3a] sm:$0xff]
    %v296 = vld [vmem:[%s0 + $0x42] sm:$0xff]
    %v297 = vld [vmem:[%s0 + $0x4a] sm:$0x3f]
    %v298 = vpack.c.bf16 %v289, %v288
    %v299 = vpack.c.bf16 %v291, %v290
    %v300 = vpack.c.bf16 %v293, %v292
    %v301 = vpack.c.bf16 %v295, %v294
    %v302 = vpack.c.bf16 %v297, %v296
    %s303 = scalar_lea.vmem %s1, 8
    %v304 = vld [vmem:[%s303] sm:$0x7]
    %v306 = vsel %vm179, %v298, 0
    %v309 = vsel %vm179, %v299, 0
    %v312 = vsel %vm179, %v300, 0
    %v315 = vsel %vm179, %v301, 0
    %v318 = vsel %vm179, %v302, 0
    %v321 = vand.u32 %v304, %v198
    %323 = vmatpush.bf16.msra.mxu0 0
    %324 = vmatpush.bf16.msra.mxu0 0
    %325 = vmatpush.bf16.msra.mxu0 0
    %326 = vmatpush.bf16.msra.mxu0 0
    %327 = vmatpush.bf16.msra.mxu0 0
    %328 = vmatpush.bf16.msra.mxu0 0
    %329 = vmatpush.bf16.msra.mxu0 0
    %330 = vmatpush.bf16.msra.mxu0 %v321
    %331 = vmatmul.bf16.gmra.mxu0 %v306
    %v332 = vpop.f32.mrf.mxu0
    %v333 = vadd.f32 0.0, %v332
    %v334 = vpop.f32.mrf.mxu0
    %v335 = vadd.f32 0.0, %v334
    %336 = vmatmul.bf16.gmra.mxu0 %v309
    %v337 = vpop.f32.mrf.mxu0
    %v338 = vadd.f32 0.0, %v337
    %v339 = vpop.f32.mrf.mxu0
    %v340 = vadd.f32 0.0, %v339
    %341 = vmatmul.bf16.gmra.mxu0 %v312
    %v342 = vpop.f32.mrf.mxu0
    %v343 = vadd.f32 0.0, %v342
    %v344 = vpop.f32.mrf.mxu0
    %v345 = vadd.f32 0.0, %v344
    %346 = vmatmul.bf16.gmra.mxu0 %v315
    %v347 = vpop.f32.mrf.mxu0
    %v348 = vadd.f32 0.0, %v347
    %v349 = vpop.f32.mrf.mxu0
    %v350 = vadd.f32 0.0, %v349
    %351 = vmatmul.bf16.gmra.mxu0 %v318
    %v352 = vpop.f32.mrf.mxu0
    %v353 = vadd.f32 0.0, %v352
    %v354 = vpop.f32.mrf.mxu0
    %v355 = vadd.f32 0.0, %v354
    %356 = vdwg.mxu0
    %v357 = vadd.f32 %v264, %v333
    %v358 = vadd.f32 %v266, %v335
    %v359 = vadd.f32 %v269, %v338
    %v360 = vadd.f32 %v271, %v340
    %v361 = vadd.f32 %v274, %v343
    %v362 = vadd.f32 %v276, %v345
    %v363 = vadd.f32 %v279, %v348
    %v364 = vadd.f32 %v281, %v350
    %v365 = vadd.f32 %v284, %v353
    %v366 = vadd.f32 %v286, %v355
    %v367 = vld [vmem:[%s0 + $0x3] sm:$0xff]
    %v368 = vld [vmem:[%s0 + $0xb] sm:$0xff]
    %v369 = vld [vmem:[%s0 + $0x13] sm:$0xff]
    %v370 = vld [vmem:[%s0 + $0x1b] sm:$0xff]
    %v371 = vld [vmem:[%s0 + $0x23] sm:$0xff]
    %v372 = vld [vmem:[%s0 + $0x2b] sm:$0xff]
    %v373 = vld [vmem:[%s0 + $0x33] sm:$0xff]
    %v374 = vld [vmem:[%s0 + $0x3b] sm:$0xff]
    %v375 = vld [vmem:[%s0 + $0x43] sm:$0xff]
    %v376 = vld [vmem:[%s0 + $0x4b] sm:$0x3f]
    %v377 = vpack.c.bf16 %v368, %v367
    %v378 = vpack.c.bf16 %v370, %v369
    %v379 = vpack.c.bf16 %v372, %v371
    %v380 = vpack.c.bf16 %v374, %v373
    %v381 = vpack.c.bf16 %v376, %v375
    %s382 = scalar_lea.vmem %s1, 12
    %v383 = vld [vmem:[%s382] sm:$0x7]
    %v385 = vsel %vm179, %v377, 0
    %v388 = vsel %vm179, %v378, 0
    %v391 = vsel %vm179, %v379, 0
    %v394 = vsel %vm179, %v380, 0
    %v397 = vsel %vm179, %v381, 0
    %v400 = vand.u32 %v383, %v198
    %402 = vmatpush.bf16.msra.mxu0 0
    %403 = vmatpush.bf16.msra.mxu0 0
    %404 = vmatpush.bf16.msra.mxu0 0
    %405 = vmatpush.bf16.msra.mxu0 0
    %406 = vmatpush.bf16.msra.mxu0 0
    %407 = vmatpush.bf16.msra.mxu0 0
    %408 = vmatpush.bf16.msra.mxu0 0
    %409 = vmatpush.bf16.msra.mxu0 %v400
    %410 = vmatmul.bf16.gmra.mxu0 %v385
    %v411 = vpop.f32.mrf.mxu0
    %v412 = vadd.f32 0.0, %v411
    %v413 = vpop.f32.mrf.mxu0
    %v414 = vadd.f32 0.0, %v413
    %415 = vmatmul.bf16.gmra.mxu0 %v388
    %v416 = vpop.f32.mrf.mxu0
    %v417 = vadd.f32 0.0, %v416
    %v418 = vpop.f32.mrf.mxu0
    %v419 = vadd.f32 0.0, %v418
    %420 = vmatmul.bf16.gmra.mxu0 %v391
    %v421 = vpop.f32.mrf.mxu0
    %v422 = vadd.f32 0.0, %v421
    %v423 = vpop.f32.mrf.mxu0
    %v424 = vadd.f32 0.0, %v423
    %425 = vmatmul.bf16.gmra.mxu0 %v394
    %v426 = vpop.f32.mrf.mxu0
    %v427 = vadd.f32 0.0, %v426
    %v428 = vpop.f32.mrf.mxu0
    %v429 = vadd.f32 0.0, %v428
    %430 = vmatmul.bf16.gmra.mxu0 %v397
    %v431 = vpop.f32.mrf.mxu0
    %v432 = vadd.f32 0.0, %v431
    %v433 = vpop.f32.mrf.mxu0
    %v434 = vadd.f32 0.0, %v433
    %435 = vdwg.mxu0
    %v436 = vadd.f32 %v357, %v412
    %v437 = vadd.f32 %v358, %v414
    %v438 = vadd.f32 %v359, %v417
    %v439 = vadd.f32 %v360, %v419
    %v440 = vadd.f32 %v361, %v422
    %v441 = vadd.f32 %v362, %v424
    %v442 = vadd.f32 %v363, %v427
    %v443 = vadd.f32 %v364, %v429
    %v444 = vadd.f32 %v365, %v432
    %v445 = vadd.f32 %v366, %v434
    %v446 = vld [vmem:[%s0 + $0x4] sm:$0xff]
    %v447 = vld [vmem:[%s0 + $0xc] sm:$0xff]
    %v448 = vld [vmem:[%s0 + $0x14] sm:$0xff]
    %v449 = vld [vmem:[%s0 + $0x1c] sm:$0xff]
    %v450 = vld [vmem:[%s0 + $0x24] sm:$0xff]
    %v451 = vld [vmem:[%s0 + $0x2c] sm:$0xff]
    %v452 = vld [vmem:[%s0 + $0x34] sm:$0xff]
    %v453 = vld [vmem:[%s0 + $0x3c] sm:$0xff]
    %v454 = vld [vmem:[%s0 + $0x44] sm:$0xff]
    %v455 = vld [vmem:[%s0 + $0x4c] sm:$0x3f]
    %v456 = vpack.c.bf16 %v447, %v446
    %v457 = vpack.c.bf16 %v449, %v448
    %v458 = vpack.c.bf16 %v451, %v450
    %v459 = vpack.c.bf16 %v453, %v452
    %v460 = vpack.c.bf16 %v455, %v454
    %s461 = scalar_lea.vmem %s1, 16
    %v462 = vld [vmem:[%s461] sm:$0x7]
    %v464 = vsel %vm179, %v456, 0
    %v467 = vsel %vm179, %v457, 0
    %v470 = vsel %vm179, %v458, 0
    %v473 = vsel %vm179, %v459, 0
    %v476 = vsel %vm179, %v460, 0
    %v479 = vand.u32 %v462, %v198
    %481 = vmatpush.bf16.msra.mxu0 0
    %482 = vmatpush.bf16.msra.mxu0 0
    %483 = vmatpush.bf16.msra.mxu0 0
    %484 = vmatpush.bf16.msra.mxu0 0
    %485 = vmatpush.bf16.msra.mxu0 0
    %486 = vmatpush.bf16.msra.mxu0 0
    %487 = vmatpush.bf16.msra.mxu0 0
    %488 = vmatpush.bf16.msra.mxu0 %v479
    %489 = vmatmul.bf16.gmra.mxu0 %v464
    %v490 = vpop.f32.mrf.mxu0
    %v491 = vadd.f32 0.0, %v490
    %v492 = vpop.f32.mrf.mxu0
    %v493 = vadd.f32 0.0, %v492
    %494 = vmatmul.bf16.gmra.mxu0 %v467
    %v495 = vpop.f32.mrf.mxu0
    %v496 = vadd.f32 0.0, %v495
    %v497 = vpop.f32.mrf.mxu0
    %v498 = vadd.f32 0.0, %v497
    %499 = vmatmul.bf16.gmra.mxu0 %v470
    %v500 = vpop.f32.mrf.mxu0
    %v501 = vadd.f32 0.0, %v500
    %v502 = vpop.f32.mrf.mxu0
    %v503 = vadd.f32 0.0, %v502
    %504 = vmatmul.bf16.gmra.mxu0 %v473
    %v505 = vpop.f32.mrf.mxu0
    %v506 = vadd.f32 0.0, %v505
    %v507 = vpop.f32.mrf.mxu0
    %v508 = vadd.f32 0.0, %v507
    %509 = vmatmul.bf16.gmra.mxu0 %v476
    %v510 = vpop.f32.mrf.mxu0
    %v511 = vadd.f32 0.0, %v510
    %v512 = vpop.f32.mrf.mxu0
    %v513 = vadd.f32 0.0, %v512
    %514 = vdwg.mxu0
    %v515 = vadd.f32 %v436, %v491
    %v516 = vadd.f32 %v437, %v493
    %v517 = vadd.f32 %v438, %v496
    %v518 = vadd.f32 %v439, %v498
    %v519 = vadd.f32 %v440, %v501
    %v520 = vadd.f32 %v441, %v503
    %v521 = vadd.f32 %v442, %v506
    %v522 = vadd.f32 %v443, %v508
    %v523 = vadd.f32 %v444, %v511
    %v524 = vadd.f32 %v445, %v513
    %v525 = vld [vmem:[%s2] sm:$0x1]
    %v527 = vperm.slane %v525, 0
    %v529 = vadd.f32 %v515, %v527
    %v530 = vadd.f32 %v516, %v527
    %v531 = vadd.f32 %v517, %v527
    %v532 = vadd.f32 %v518, %v527
    %v533 = vadd.f32 %v519, %v527
    %v534 = vadd.f32 %v520, %v527
    %v535 = vadd.f32 %v521, %v527
    %v536 = vadd.f32 %v522, %v527
    %v537 = vadd.f32 %v523, %v527
    %v538 = vadd.f32 %v524, %v527
    %v539 = vmax.f32 %v529, 0.0
    %v540 = vmax.f32 %v530, 0.0
    %v541 = vmax.f32 %v531, 0.0
    %v542 = vmax.f32 %v532, 0.0
    %v543 = vmax.f32 %v533, 0.0
    %v544 = vmax.f32 %v534, 0.0
    %v545 = vmax.f32 %v535, 0.0
    %v546 = vmax.f32 %v536, 0.0
    %v547 = vmax.f32 %v537, 0.0
    %v548 = vmax.f32 %v538, 0.0
    %549 = vst [vmem:[#allocation2] sm:$0xff] 0.0
    %550 = vst [vmem:[#allocation2 + $0x8] sm:$0xff] 0.0
    %551 = vst [vmem:[#allocation2 + $0x10] sm:$0xff] 0.0
    %552 = vst [vmem:[#allocation2 + $0x18] sm:$0xff] 0.0
    %553 = vst [vmem:[#allocation2 + $0x20] sm:$0xff] 0.0
    %554 = vst [vmem:[#allocation2 + $0x28] sm:$0xff] 0.0
    %555 = vst [vmem:[#allocation2 + $0x30] sm:$0xff] 0.0
    %556 = vst [vmem:[#allocation2 + $0x38] sm:$0xff] 0.0
    %557 = vst [vmem:[#allocation2 + $0x40] sm:$0xff] 0.0
    %558 = vst [vmem:[#allocation2 + $0x48] sm:$0xff] 0.0
    %559 = vst [vmem:[#allocation2 + $0x50] sm:$0xff] 0.0
    %560 = vst [vmem:[#allocation2 + $0x58] sm:$0xff] 0.0
    %561 = vst [vmem:[#allocation2 + $0x8] sm:$0xff] %v539
    %562 = vst [vmem:[#allocation2 + $0x10] sm:$0xff] %v540
    %563 = vst [vmem:[#allocation2 + $0x18] sm:$0xff] %v541
    %564 = vst [vmem:[#allocation2 + $0x20] sm:$0xff] %v542
    %565 = vst [vmem:[#allocation2 + $0x28] sm:$0xff] %v543
    %566 = vst [vmem:[#allocation2 + $0x30] sm:$0xff] %v544
    %567 = vst [vmem:[#allocation2 + $0x38] sm:$0xff] %v545
    %568 = vst [vmem:[#allocation2 + $0x40] sm:$0xff] %v546
    %569 = vst [vmem:[#allocation2 + $0x48] sm:$0xff] %v547
    %570 = vst [vmem:[#allocation2 + $0x50] sm:$0x3f] %v548
    %v571 = vld [vmem:[#allocation2 + $0x3] sm:$0xff]
    %v572 = vld [vmem:[#allocation2 + $0xb] sm:$0xff]
    %v573 = vld [vmem:[#allocation2 + $0x13] sm:$0xff]
    %v574 = vld [vmem:[#allocation2 + $0x1b] sm:$0xff]
    %v575 = vld [vmem:[#allocation2 + $0x23] sm:$0xff]
    %v576 = vld [vmem:[#allocation2 + $0x2b] sm:$0xff]
    %v577 = vld [vmem:[#allocation2 + $0x33] sm:$0xff]
    %v578 = vld [vmem:[#allocation2 + $0x3b] sm:$0xff]
    %v579 = vld [vmem:[#allocation2 + $0x43] sm:$0xf]
    %v580 = vpack.c.bf16 %v572, %v571
    %v581 = vpack.c.bf16 %v574, %v573
    %v582 = vpack.c.bf16 %v576, %v575
    %v583 = vpack.c.bf16 %v578, %v577
    %v584 = vpack.c.bf16 %v579, %v579
    %v585 = vld [vmem:[#allocation9] sm:$0xf]
    %v586 = vld [vmem:[#allocation9 + $0x4] sm:$0xf]
    %v587 = vld [vmem:[#allocation9 + $0x8] sm:$0xf]
    %v588 = vld [vmem:[#allocation9 + $0xc] sm:$0xf]
    %v589 = vld [vmem:[#allocation9 + $0x10] sm:$0xf]
    %v590 = vld [vmem:[#allocation9 + $0x14] sm:$0xf]
    %v591 = vld [vmem:[#allocation9 + $0x18] sm:$0xf]
    %v592 = vld [vmem:[#allocation9 + $0x1c] sm:$0xf]
    %v593 = vld [vmem:[#allocation9 + $0x20] sm:$0xf]
    %v594 = vld [vmem:[#allocation9 + $0x24] sm:$0xf]
    %v595 = vld [vmem:[#allocation9 + $0x28] sm:$0xf]
    %v596 = vld [vmem:[#allocation9 + $0x2c] sm:$0xf]
    %v597 = vld [vmem:[#allocation9 + $0x30] sm:$0xf]
    %v598 = vld [vmem:[#allocation9 + $0x34] sm:$0xf]
    %v599 = vld [vmem:[#allocation9 + $0x38] sm:$0xf]
    %v600 = vld [vmem:[#allocation9 + $0x3c] sm:$0xf]
    %v601 = vld [vmem:[#allocation2 + $0x4] sm:$0xff]
    %v602 = vld [vmem:[#allocation2 + $0xc] sm:$0xff]
    %v603 = vld [vmem:[#allocation2 + $0x14] sm:$0xff]
    %v604 = vld [vmem:[#allocation2 + $0x1c] sm:$0xff]
    %v605 = vld [vmem:[#allocation2 + $0x24] sm:$0xff]
    %v606 = vld [vmem:[#allocation2 + $0x2c] sm:$0xff]
    %v607 = vld [vmem:[#allocation2 + $0x34] sm:$0xff]
    %v608 = vld [vmem:[#allocation2 + $0x3c] sm:$0xff]
    %v609 = vld [vmem:[#allocation2 + $0x44] sm:$0xf]
    %v610 = vpack.c.bf16 %v602, %v601
    %v611 = vpack.c.bf16 %v604, %v603
    %v612 = vpack.c.bf16 %v606, %v605
    %v613 = vpack.c.bf16 %v608, %v607
    %v614 = vpack.c.bf16 %v609, %v609
    %s615 = scalar_lea.vmem [#allocation9], 64
    %v616 = vld [vmem:[%s615] sm:$0xf]
    %v617 = vld [vmem:[%s615 + $0x4] sm:$0xf]
    %v618 = vld [vmem:[%s615 + $0x8] sm:$0xf]
    %v619 = vld [vmem:[%s615 + $0xc] sm:$0xf]
    %v620 = vld [vmem:[%s615 + $0x10] sm:$0xf]
    %v621 = vld [vmem:[%s615 + $0x14] sm:$0xf]
    %v622 = vld [vmem:[%s615 + $0x18] sm:$0xf]
    %v623 = vld [vmem:[%s615 + $0x1c] sm:$0xf]
    %v624 = vld [vmem:[%s615 + $0x20] sm:$0xf]
    %v625 = vld [vmem:[%s615 + $0x24] sm:$0xf]
    %v626 = vld [vmem:[%s615 + $0x28] sm:$0xf]
    %v627 = vld [vmem:[%s615 + $0x2c] sm:$0xf]
    %v628 = vld [vmem:[%s615 + $0x30] sm:$0xf]
    %v629 = vld [vmem:[%s615 + $0x34] sm:$0xf]
    %v630 = vld [vmem:[%s615 + $0x38] sm:$0xf]
    %v631 = vld [vmem:[%s615 + $0x3c] sm:$0xf]
    %v648 = vunpack.c.l.b16 %v616
    %v649 = vunpack.c.l.b16 %v617
    %v650 = vunpack.c.l.b16 %v618
    %v651 = vunpack.c.l.b16 %v619
    %v652 = vunpack.c.l.b16 %v620
    %v653 = vunpack.c.l.b16 %v621
    %v654 = vunpack.c.l.b16 %v622
    %v655 = vunpack.c.l.b16 %v623
    %v656 = vunpack.c.l.b16 %v624
    %v657 = vunpack.c.l.b16 %v625
    %v658 = vunpack.c.l.b16 %v626
    %v659 = vunpack.c.l.b16 %v627
    %v660 = vunpack.c.l.b16 %v628
    %v661 = vunpack.c.l.b16 %v629
    %v662 = vunpack.c.l.b16 %v630
    %v663 = vunpack.c.l.b16 %v631
    %v664 = vpack.c.b16 %v649, %v648
    %v665 = vpack.c.b16 %v651, %v650
    %v666 = vpack.c.b16 %v653, %v652
    %v667 = vpack.c.b16 %v655, %v654
    %v668 = vpack.c.b16 %v657, %v656
    %v669 = vpack.c.b16 %v659, %v658
    %v670 = vpack.c.b16 %v661, %v660
    %v671 = vpack.c.b16 %v663, %v662
    %680 = vmatpush.bf16.msra.mxu0 %v671
    %681 = vmatpush.bf16.msra.mxu0 %v670
    %682 = vmatpush.bf16.msra.mxu0 %v669
    %683 = vmatpush.bf16.msra.mxu0 %v668
    %684 = vmatpush.bf16.msra.mxu0 %v667
    %685 = vmatpush.bf16.msra.mxu0 %v666
    %686 = vmatpush.bf16.msra.mxu0 %v665
    %687 = vmatpush.bf16.msra.mxu0 %v664
    %688 = vmatmul.bf16.gmra.mxu0 %v610
    %v689 = vpop.f32.mrf.mxu0
    %v690 = vadd.f32 0.0, %v689
    %v691 = vpop.f32.mrf.mxu0
    %v692 = vadd.f32 0.0, %v691
    %693 = vmatmul.bf16.gmra.mxu0 %v611
    %v694 = vpop.f32.mrf.mxu0
    %v695 = vadd.f32 0.0, %v694
    %v696 = vpop.f32.mrf.mxu0
    %v697 = vadd.f32 0.0, %v696
    %698 = vmatmul.bf16.gmra.mxu0 %v612
    %v699 = vpop.f32.mrf.mxu0
    %v700 = vadd.f32 0.0, %v699
    %v701 = vpop.f32.mrf.mxu0
    %v702 = vadd.f32 0.0, %v701
    %703 = vmatmul.bf16.gmra.mxu0 %v613
    %v704 = vpop.f32.mrf.mxu0
    %v705 = vadd.f32 0.0, %v704
    %v706 = vpop.f32.mrf.mxu0
    %v707 = vadd.f32 0.0, %v706
    %708 = vmatmul.bf16.gmra.mxu0 %v614
    %v709 = vpop.f32.mrf.mxu0
    %v710 = vadd.f32 0.0, %v709
    %v711 = vpop.f32.mrf.mxu0
    %712 = vdwg.mxu0
    %v729 = vunpack.c.l.b16 %v585
    %v730 = vunpack.c.l.b16 %v586
    %v731 = vunpack.c.l.b16 %v587
    %v732 = vunpack.c.l.b16 %v588
    %v733 = vunpack.c.l.b16 %v589
    %v734 = vunpack.c.l.b16 %v590
    %v735 = vunpack.c.l.b16 %v591
    %v736 = vunpack.c.l.b16 %v592
    %v737 = vunpack.c.l.b16 %v593
    %v738 = vunpack.c.l.b16 %v594
    %v739 = vunpack.c.l.b16 %v595
    %v740 = vunpack.c.l.b16 %v596
    %v741 = vunpack.c.l.b16 %v597
    %v742 = vunpack.c.l.b16 %v598
    %v743 = vunpack.c.l.b16 %v599
    %v744 = vunpack.c.l.b16 %v600
    %v745 = vpack.c.b16 %v730, %v729
    %v746 = vpack.c.b16 %v732, %v731
    %v747 = vpack.c.b16 %v734, %v733
    %v748 = vpack.c.b16 %v736, %v735
    %v749 = vpack.c.b16 %v738, %v737
    %v750 = vpack.c.b16 %v740, %v739
    %v751 = vpack.c.b16 %v742, %v741
    %v752 = vpack.c.b16 %v744, %v743
    %761 = vmatpush.bf16.msra.mxu0 %v752
    %762 = vmatpush.bf16.msra.mxu0 %v751
    %763 = vmatpush.bf16.msra.mxu0 %v750
    %764 = vmatpush.bf16.msra.mxu0 %v749
    %765 = vmatpush.bf16.msra.mxu0 %v748
    %766 = vmatpush.bf16.msra.mxu0 %v747
    %767 = vmatpush.bf16.msra.mxu0 %v746
    %768 = vmatpush.bf16.msra.mxu0 %v745
    %769 = vmatmul.bf16.gmra.mxu0 %v580
    %v770 = vpop.f32.mrf.mxu0
    %v771 = vadd.f32 %v690, %v770
    %v772 = vpop.f32.mrf.mxu0
    %v773 = vadd.f32 %v692, %v772
    %774 = vmatmul.bf16.gmra.mxu0 %v581
    %v775 = vpop.f32.mrf.mxu0
    %v776 = vadd.f32 %v695, %v775
    %v777 = vpop.f32.mrf.mxu0
    %v778 = vadd.f32 %v697, %v777
    %779 = vmatmul.bf16.gmra.mxu0 %v582
    %v780 = vpop.f32.mrf.mxu0
    %v781 = vadd.f32 %v700, %v780
    %v782 = vpop.f32.mrf.mxu0
    %v783 = vadd.f32 %v702, %v782
    %784 = vmatmul.bf16.gmra.mxu0 %v583
    %v785 = vpop.f32.mrf.mxu0
    %v786 = vadd.f32 %v705, %v785
    %v787 = vpop.f32.mrf.mxu0
    %v788 = vadd.f32 %v707, %v787
    %789 = vmatmul.bf16.gmra.mxu0 %v584
    %v790 = vpop.f32.mrf.mxu0
    %v791 = vadd.f32 %v710, %v790
    %v792 = vpop.f32.mrf.mxu0
    %793 = vdwg.mxu0
    %v794 = vld [vmem:[#allocation2 + $0x5] sm:$0xff]
    %v795 = vld [vmem:[#allocation2 + $0xd] sm:$0xff]
    %v796 = vld [vmem:[#allocation2 + $0x15] sm:$0xff]
    %v797 = vld [vmem:[#allocation2 + $0x1d] sm:$0xff]
    %v798 = vld [vmem:[#allocation2 + $0x25] sm:$0xff]
    %v799 = vld [vmem:[#allocation2 + $0x2d] sm:$0xff]
    %v800 = vld [vmem:[#allocation2 + $0x35] sm:$0xff]
    %v801 = vld [vmem:[#allocation2 + $0x3d] sm:$0xff]
    %v802 = vld [vmem:[#allocation2 + $0x45] sm:$0xf]
    %v803 = vpack.c.bf16 %v795, %v794
    %v804 = vpack.c.bf16 %v797, %v796
    %v805 = vpack.c.bf16 %v799, %v798
    %v806 = vpack.c.bf16 %v801, %v800
    %v807 = vpack.c.bf16 %v802, %v802
    %s808 = scalar_lea.vmem [#allocation9], 128
    %v809 = vld [vmem:[%s808] sm:$0xf]
    %v810 = vld [vmem:[%s808 + $0x4] sm:$0xf]
    %v811 = vld [vmem:[%s808 + $0x8] sm:$0xf]
    %v812 = vld [vmem:[%s808 + $0xc] sm:$0xf]
    %v813 = vld [vmem:[%s808 + $0x10] sm:$0xf]
    %v814 = vld [vmem:[%s808 + $0x14] sm:$0xf]
    %v815 = vld [vmem:[%s808 + $0x18] sm:$0xf]
    %v816 = vld [vmem:[%s808 + $0x1c] sm:$0xf]
    %v817 = vld [vmem:[%s808 + $0x20] sm:$0xf]
    %v818 = vld [vmem:[%s808 + $0x24] sm:$0xf]
    %v819 = vld [vmem:[%s808 + $0x28] sm:$0xf]
    %v820 = vld [vmem:[%s808 + $0x2c] sm:$0xf]
    %v821 = vld [vmem:[%s808 + $0x30] sm:$0xf]
    %v822 = vld [vmem:[%s808 + $0x34] sm:$0xf]
    %v823 = vld [vmem:[%s808 + $0x38] sm:$0xf]
    %v824 = vld [vmem:[%s808 + $0x3c] sm:$0xf]
    %v841 = vunpack.c.l.b16 %v809
    %v842 = vunpack.c.l.b16 %v810
    %v843 = vunpack.c.l.b16 %v811
    %v844 = vunpack.c.l.b16 %v812
    %v845 = vunpack.c.l.b16 %v813
    %v846 = vunpack.c.l.b16 %v814
    %v847 = vunpack.c.l.b16 %v815
    %v848 = vunpack.c.l.b16 %v816
    %v849 = vunpack.c.l.b16 %v817
    %v850 = vunpack.c.l.b16 %v818
    %v851 = vunpack.c.l.b16 %v819
    %v852 = vunpack.c.l.b16 %v820
    %v853 = vunpack.c.l.b16 %v821
    %v854 = vunpack.c.l.b16 %v822
    %v855 = vunpack.c.l.b16 %v823
    %v856 = vunpack.c.l.b16 %v824
    %v857 = vpack.c.b16 %v842, %v841
    %v858 = vpack.c.b16 %v844, %v843
    %v859 = vpack.c.b16 %v846, %v845
    %v860 = vpack.c.b16 %v848, %v847
    %v861 = vpack.c.b16 %v850, %v849
    %v862 = vpack.c.b16 %v852, %v851
    %v863 = vpack.c.b16 %v854, %v853
    %v864 = vpack.c.b16 %v856, %v855
    %873 = vmatpush.bf16.msra.mxu0 %v864
    %874 = vmatpush.bf16.msra.mxu0 %v863
    %875 = vmatpush.bf16.msra.mxu0 %v862
    %876 = vmatpush.bf16.msra.mxu0 %v861
    %877 = vmatpush.bf16.msra.mxu0 %v860
    %878 = vmatpush.bf16.msra.mxu0 %v859
    %879 = vmatpush.bf16.msra.mxu0 %v858
    %880 = vmatpush.bf16.msra.mxu0 %v857
    %881 = vmatmul.bf16.gmra.mxu0 %v803
    %v882 = vpop.f32.mrf.mxu0
    %v883 = vadd.f32 0.0, %v882
    %v884 = vpop.f32.mrf.mxu0
    %v885 = vadd.f32 0.0, %v884
    %886 = vmatmul.bf16.gmra.mxu0 %v804
    %v887 = vpop.f32.mrf.mxu0
    %v888 = vadd.f32 0.0, %v887
    %v889 = vpop.f32.mrf.mxu0
    %v890 = vadd.f32 0.0, %v889
    %891 = vmatmul.bf16.gmra.mxu0 %v805
    %v892 = vpop.f32.mrf.mxu0
    %v893 = vadd.f32 0.0, %v892
    %v894 = vpop.f32.mrf.mxu0
    %v895 = vadd.f32 0.0, %v894
    %896 = vmatmul.bf16.gmra.mxu0 %v806
    %v897 = vpop.f32.mrf.mxu0
    %v898 = vadd.f32 0.0, %v897
    %v899 = vpop.f32.mrf.mxu0
    %v900 = vadd.f32 0.0, %v899
    %901 = vmatmul.bf16.gmra.mxu0 %v807
    %v902 = vpop.f32.mrf.mxu0
    %v903 = vadd.f32 0.0, %v902
    %v904 = vpop.f32.mrf.mxu0
    %905 = vdwg.mxu0
    %v906 = vadd.f32 %v771, %v883
    %v907 = vadd.f32 %v773, %v885
    %v908 = vadd.f32 %v776, %v888
    %v909 = vadd.f32 %v778, %v890
    %v910 = vadd.f32 %v781, %v893
    %v911 = vadd.f32 %v783, %v895
    %v912 = vadd.f32 %v786, %v898
    %v913 = vadd.f32 %v788, %v900
    %v914 = vadd.f32 %v791, %v903
    %v915 = vld [vmem:[#allocation2 + $0x6] sm:$0xff]
    %v916 = vld [vmem:[#allocation2 + $0xe] sm:$0xff]
    %v917 = vld [vmem:[#allocation2 + $0x16] sm:$0xff]
    %v918 = vld [vmem:[#allocation2 + $0x1e] sm:$0xff]
    %v919 = vld [vmem:[#allocation2 + $0x26] sm:$0xff]
    %v920 = vld [vmem:[#allocation2 + $0x2e] sm:$0xff]
    %v921 = vld [vmem:[#allocation2 + $0x36] sm:$0xff]
    %v922 = vld [vmem:[#allocation2 + $0x3e] sm:$0xff]
    %v923 = vld [vmem:[#allocation2 + $0x46] sm:$0xf]
    %v924 = vpack.c.bf16 %v916, %v915
    %v925 = vpack.c.bf16 %v918, %v917
    %v926 = vpack.c.bf16 %v920, %v919
    %v927 = vpack.c.bf16 %v922, %v921
    %v928 = vpack.c.bf16 %v923, %v923
    %s929 = scalar_lea.vmem [#allocation9], 192
    %v930 = vld [vmem:[%s929] sm:$0xf]
    %v931 = vld [vmem:[%s929 + $0x4] sm:$0xf]
    %v932 = vld [vmem:[%s929 + $0x8] sm:$0xf]
    %v933 = vld [vmem:[%s929 + $0xc] sm:$0xf]
    %v934 = vld [vmem:[%s929 + $0x10] sm:$0xf]
    %v935 = vld [vmem:[%s929 + $0x14] sm:$0xf]
    %v936 = vld [vmem:[%s929 + $0x18] sm:$0xf]
    %v937 = vld [vmem:[%s929 + $0x1c] sm:$0xf]
    %v938 = vld [vmem:[%s929 + $0x20] sm:$0xf]
    %v939 = vld [vmem:[%s929 + $0x24] sm:$0xf]
    %v940 = vld [vmem:[%s929 + $0x28] sm:$0xf]
    %v941 = vld [vmem:[%s929 + $0x2c] sm:$0xf]
    %v942 = vld [vmem:[%s929 + $0x30] sm:$0xf]
    %v943 = vld [vmem:[%s929 + $0x34] sm:$0xf]
    %v944 = vld [vmem:[%s929 + $0x38] sm:$0xf]
    %v945 = vld [vmem:[%s929 + $0x3c] sm:$0xf]
    %v962 = vunpack.c.l.b16 %v930
    %v963 = vunpack.c.l.b16 %v931
    %v964 = vunpack.c.l.b16 %v932
    %v965 = vunpack.c.l.b16 %v933
    %v966 = vunpack.c.l.b16 %v934
    %v967 = vunpack.c.l.b16 %v935
    %v968 = vunpack.c.l.b16 %v936
    %v969 = vunpack.c.l.b16 %v937
    %v970 = vunpack.c.l.b16 %v938
    %v971 = vunpack.c.l.b16 %v939
    %v972 = vunpack.c.l.b16 %v940
    %v973 = vunpack.c.l.b16 %v941
    %v974 = vunpack.c.l.b16 %v942
    %v975 = vunpack.c.l.b16 %v943
    %v976 = vunpack.c.l.b16 %v944
    %v977 = vunpack.c.l.b16 %v945
    %v978 = vpack.c.b16 %v963, %v962
    %v979 = vpack.c.b16 %v965, %v964
    %v980 = vpack.c.b16 %v967, %v966
    %v981 = vpack.c.b16 %v969, %v968
    %v982 = vpack.c.b16 %v971, %v970
    %v983 = vpack.c.b16 %v973, %v972
    %v984 = vpack.c.b16 %v975, %v974
    %v985 = vpack.c.b16 %v977, %v976
    %994 = vmatpush.bf16.msra.mxu0 %v985
    %995 = vmatpush.bf16.msra.mxu0 %v984
    %996 = vmatpush.bf16.msra.mxu0 %v983
    %997 = vmatpush.bf16.msra.mxu0 %v982
    %998 = vmatpush.bf16.msra.mxu0 %v981
    %999 = vmatpush.bf16.msra.mxu0 %v980
    %1000 = vmatpush.bf16.msra.mxu0 %v979
    %1001 = vmatpush.bf16.msra.mxu0 %v978
    %1002 = vmatmul.bf16.gmra.mxu0 %v924
    %v1003 = vpop.f32.mrf.mxu0
    %v1004 = vadd.f32 0.0, %v1003
    %v1005 = vpop.f32.mrf.mxu0
    %v1006 = vadd.f32 0.0, %v1005
    %1007 = vmatmul.bf16.gmra.mxu0 %v925
    %v1008 = vpop.f32.mrf.mxu0
    %v1009 = vadd.f32 0.0, %v1008
    %v1010 = vpop.f32.mrf.mxu0
    %v1011 = vadd.f32 0.0, %v1010
    %1012 = vmatmul.bf16.gmra.mxu0 %v926
    %v1013 = vpop.f32.mrf.mxu0
    %v1014 = vadd.f32 0.0, %v1013
    %v1015 = vpop.f32.mrf.mxu0
    %v1016 = vadd.f32 0.0, %v1015
    %1017 = vmatmul.bf16.gmra.mxu0 %v927
    %v1018 = vpop.f32.mrf.mxu0
    %v1019 = vadd.f32 0.0, %v1018
    %v1020 = vpop.f32.mrf.mxu0
    %v1021 = vadd.f32 0.0, %v1020
    %1022 = vmatmul.bf16.gmra.mxu0 %v928
    %v1023 = vpop.f32.mrf.mxu0
    %v1024 = vadd.f32 0.0, %v1023
    %v1025 = vpop.f32.mrf.mxu0
    %1026 = vdwg.mxu0
    %v1027 = vadd.f32 %v906, %v1004
    %v1028 = vadd.f32 %v907, %v1006
    %v1029 = vadd.f32 %v908, %v1009
    %v1030 = vadd.f32 %v909, %v1011
    %v1031 = vadd.f32 %v910, %v1014
    %v1032 = vadd.f32 %v911, %v1016
    %v1033 = vadd.f32 %v912, %v1019
    %v1034 = vadd.f32 %v913, %v1021
    %v1035 = vadd.f32 %v914, %v1024
    %v1036 = vld [vmem:[#allocation2 + $0x7] sm:$0xff]
    %v1037 = vld [vmem:[#allocation2 + $0xf] sm:$0xff]
    %v1038 = vld [vmem:[#allocation2 + $0x17] sm:$0xff]
    %v1039 = vld [vmem:[#allocation2 + $0x1f] sm:$0xff]
    %v1040 = vld [vmem:[#allocation2 + $0x27] sm:$0xff]
    %v1041 = vld [vmem:[#allocation2 + $0x2f] sm:$0xff]
    %v1042 = vld [vmem:[#allocation2 + $0x37] sm:$0xff]
    %v1043 = vld [vmem:[#allocation2 + $0x3f] sm:$0xff]
    %v1044 = vld [vmem:[#allocation2 + $0x47] sm:$0xf]
    %v1045 = vpack.c.bf16 %v1037, %v1036
    %v1046 = vpack.c.bf16 %v1039, %v1038
    %v1047 = vpack.c.bf16 %v1041, %v1040
    %v1048 = vpack.c.bf16 %v1043, %v1042
    %v1049 = vpack.c.bf16 %v1044, %v1044
    %s1050 = scalar_lea.vmem [#allocation9], 256
    %v1051 = vld [vmem:[%s1050] sm:$0xf]
    %v1052 = vld [vmem:[%s1050 + $0x4] sm:$0xf]
    %v1053 = vld [vmem:[%s1050 + $0x8] sm:$0xf]
    %v1054 = vld [vmem:[%s1050 + $0xc] sm:$0xf]
    %v1055 = vld [vmem:[%s1050 + $0x10] sm:$0xf]
    %v1056 = vld [vmem:[%s1050 + $0x14] sm:$0xf]
    %v1057 = vld [vmem:[%s1050 + $0x18] sm:$0xf]
    %v1058 = vld [vmem:[%s1050 + $0x1c] sm:$0xf]
    %v1059 = vld [vmem:[%s1050 + $0x20] sm:$0xf]
    %v1060 = vld [vmem:[%s1050 + $0x24] sm:$0xf]
    %v1061 = vld [vmem:[%s1050 + $0x28] sm:$0xf]
    %v1062 = vld [vmem:[%s1050 + $0x2c] sm:$0xf]
    %v1063 = vld [vmem:[%s1050 + $0x30] sm:$0xf]
    %v1064 = vld [vmem:[%s1050 + $0x34] sm:$0xf]
    %v1065 = vld [vmem:[%s1050 + $0x38] sm:$0xf]
    %v1066 = vld [vmem:[%s1050 + $0x3c] sm:$0xf]
    %v1083 = vunpack.c.l.b16 %v1051
    %v1084 = vunpack.c.l.b16 %v1052
    %v1085 = vunpack.c.l.b16 %v1053
    %v1086 = vunpack.c.l.b16 %v1054
    %v1087 = vunpack.c.l.b16 %v1055
    %v1088 = vunpack.c.l.b16 %v1056
    %v1089 = vunpack.c.l.b16 %v1057
    %v1090 = vunpack.c.l.b16 %v1058
    %v1091 = vunpack.c.l.b16 %v1059
    %v1092 = vunpack.c.l.b16 %v1060
    %v1093 = vunpack.c.l.b16 %v1061
    %v1094 = vunpack.c.l.b16 %v1062
    %v1095 = vunpack.c.l.b16 %v1063
    %v1096 = vunpack.c.l.b16 %v1064
    %v1097 = vunpack.c.l.b16 %v1065
    %v1098 = vunpack.c.l.b16 %v1066
    %v1099 = vpack.c.b16 %v1084, %v1083
    %v1100 = vpack.c.b16 %v1086, %v1085
    %v1101 = vpack.c.b16 %v1088, %v1087
    %v1102 = vpack.c.b16 %v1090, %v1089
    %v1103 = vpack.c.b16 %v1092, %v1091
    %v1104 = vpack.c.b16 %v1094, %v1093
    %v1105 = vpack.c.b16 %v1096, %v1095
    %v1106 = vpack.c.b16 %v1098, %v1097
    %1115 = vmatpush.bf16.msra.mxu0 %v1106
    %1116 = vmatpush.bf16.msra.mxu0 %v1105
    %1117 = vmatpush.bf16.msra.mxu0 %v1104
    %1118 = vmatpush.bf16.msra.mxu0 %v1103
    %1119 = vmatpush.bf16.msra.mxu0 %v1102
    %1120 = vmatpush.bf16.msra.mxu0 %v1101
    %1121 = vmatpush.bf16.msra.mxu0 %v1100
    %1122 = vmatpush.bf16.msra.mxu0 %v1099
    %1123 = vmatmul.bf16.gmra.mxu0 %v1045
    %v1124 = vpop.f32.mrf.mxu0
    %v1125 = vadd.f32 0.0, %v1124
    %v1126 = vpop.f32.mrf.mxu0
    %v1127 = vadd.f32 0.0, %v1126
    %1128 = vmatmul.bf16.gmra.mxu0 %v1046
    %v1129 = vpop.f32.mrf.mxu0
    %v1130 = vadd.f32 0.0, %v1129
    %v1131 = vpop.f32.mrf.mxu0
    %v1132 = vadd.f32 0.0, %v1131
    %1133 = vmatmul.bf16.gmra.mxu0 %v1047
    %v1134 = vpop.f32.mrf.mxu0
    %v1135 = vadd.f32 0.0, %v1134
    %v1136 = vpop.f32.mrf.mxu0
    %v1137 = vadd.f32 0.0, %v1136
    %1138 = vmatmul.bf16.gmra.mxu0 %v1048
    %v1139 = vpop.f32.mrf.mxu0
    %v1140 = vadd.f32 0.0, %v1139
    %v1141 = vpop.f32.mrf.mxu0
    %v1142 = vadd.f32 0.0, %v1141
    %1143 = vmatmul.bf16.gmra.mxu0 %v1049
    %v1144 = vpop.f32.mrf.mxu0
    %v1145 = vadd.f32 0.0, %v1144
    %v1146 = vpop.f32.mrf.mxu0
    %1147 = vdwg.mxu0
    %v1148 = vadd.f32 %v1027, %v1125
    %v1149 = vadd.f32 %v1028, %v1127
    %v1150 = vadd.f32 %v1029, %v1130
    %v1151 = vadd.f32 %v1030, %v1132
    %v1152 = vadd.f32 %v1031, %v1135
    %v1153 = vadd.f32 %v1032, %v1137
    %v1154 = vadd.f32 %v1033, %v1140
    %v1155 = vadd.f32 %v1034, %v1142
    %v1156 = vadd.f32 %v1035, %v1145
    %v1157 = vld [vmem:[#allocation2 + $0x8] sm:$0xff]
    %v1158 = vld [vmem:[#allocation2 + $0x10] sm:$0xff]
    %v1159 = vld [vmem:[#allocation2 + $0x18] sm:$0xff]
    %v1160 = vld [vmem:[#allocation2 + $0x20] sm:$0xff]
    %v1161 = vld [vmem:[#allocation2 + $0x28] sm:$0xff]
    %v1162 = vld [vmem:[#allocation2 + $0x30] sm:$0xff]
    %v1163 = vld [vmem:[#allocation2 + $0x38] sm:$0xff]
    %v1164 = vld [vmem:[#allocation2 + $0x40] sm:$0xff]
    %v1165 = vld [vmem:[#allocation2 + $0x48] sm:$0xf]
    %v1166 = vpack.c.bf16 %v1158, %v1157
    %v1167 = vpack.c.bf16 %v1160, %v1159
    %v1168 = vpack.c.bf16 %v1162, %v1161
    %v1169 = vpack.c.bf16 %v1164, %v1163
    %v1170 = vpack.c.bf16 %v1165, %v1165
    %s1171 = scalar_lea.vmem [#allocation9], 320
    %v1172 = vld [vmem:[%s1171] sm:$0xf]
    %v1173 = vld [vmem:[%s1171 + $0x4] sm:$0xf]
    %v1174 = vld [vmem:[%s1171 + $0x8] sm:$0xf]
    %v1175 = vld [vmem:[%s1171 + $0xc] sm:$0xf]
    %v1176 = vld [vmem:[%s1171 + $0x10] sm:$0xf]
    %v1177 = vld [vmem:[%s1171 + $0x14] sm:$0xf]
    %v1178 = vld [vmem:[%s1171 + $0x18] sm:$0xf]
    %v1179 = vld [vmem:[%s1171 + $0x1c] sm:$0xf]
    %v1180 = vld [vmem:[%s1171 + $0x20] sm:$0xf]
    %v1181 = vld [vmem:[%s1171 + $0x24] sm:$0xf]
    %v1182 = vld [vmem:[%s1171 + $0x28] sm:$0xf]
    %v1183 = vld [vmem:[%s1171 + $0x2c] sm:$0xf]
    %v1184 = vld [vmem:[%s1171 + $0x30] sm:$0xf]
    %v1185 = vld [vmem:[%s1171 + $0x34] sm:$0xf]
    %v1186 = vld [vmem:[%s1171 + $0x38] sm:$0xf]
    %v1187 = vld [vmem:[%s1171 + $0x3c] sm:$0xf]
    %v1204 = vunpack.c.l.b16 %v1172
    %v1205 = vunpack.c.l.b16 %v1173
    %v1206 = vunpack.c.l.b16 %v1174
    %v1207 = vunpack.c.l.b16 %v1175
    %v1208 = vunpack.c.l.b16 %v1176
    %v1209 = vunpack.c.l.b16 %v1177
    %v1210 = vunpack.c.l.b16 %v1178
    %v1211 = vunpack.c.l.b16 %v1179
    %v1212 = vunpack.c.l.b16 %v1180
    %v1213 = vunpack.c.l.b16 %v1181
    %v1214 = vunpack.c.l.b16 %v1182
    %v1215 = vunpack.c.l.b16 %v1183
    %v1216 = vunpack.c.l.b16 %v1184
    %v1217 = vunpack.c.l.b16 %v1185
    %v1218 = vunpack.c.l.b16 %v1186
    %v1219 = vunpack.c.l.b16 %v1187
    %v1220 = vpack.c.b16 %v1205, %v1204
    %v1221 = vpack.c.b16 %v1207, %v1206
    %v1222 = vpack.c.b16 %v1209, %v1208
    %v1223 = vpack.c.b16 %v1211, %v1210
    %v1224 = vpack.c.b16 %v1213, %v1212
    %v1225 = vpack.c.b16 %v1215, %v1214
    %v1226 = vpack.c.b16 %v1217, %v1216
    %v1227 = vpack.c.b16 %v1219, %v1218
    %1236 = vmatpush.bf16.msra.mxu0 %v1227
    %1237 = vmatpush.bf16.msra.mxu0 %v1226
    %1238 = vmatpush.bf16.msra.mxu0 %v1225
    %1239 = vmatpush.bf16.msra.mxu0 %v1224
    %1240 = vmatpush.bf16.msra.mxu0 %v1223
    %1241 = vmatpush.bf16.msra.mxu0 %v1222
    %1242 = vmatpush.bf16.msra.mxu0 %v1221
    %1243 = vmatpush.bf16.msra.mxu0 %v1220
    %1244 = vmatmul.bf16.gmra.mxu0 %v1166
    %v1245 = vpop.f32.mrf.mxu0
    %v1246 = vadd.f32 0.0, %v1245
    %v1247 = vpop.f32.mrf.mxu0
    %v1248 = vadd.f32 0.0, %v1247
    %1249 = vmatmul.bf16.gmra.mxu0 %v1167
    %v1250 = vpop.f32.mrf.mxu0
    %v1251 = vadd.f32 0.0, %v1250
    %v1252 = vpop.f32.mrf.mxu0
    %v1253 = vadd.f32 0.0, %v1252
    %1254 = vmatmul.bf16.gmra.mxu0 %v1168
    %v1255 = vpop.f32.mrf.mxu0
    %v1256 = vadd.f32 0.0, %v1255
    %v1257 = vpop.f32.mrf.mxu0
    %v1258 = vadd.f32 0.0, %v1257
    %1259 = vmatmul.bf16.gmra.mxu0 %v1169
    %v1260 = vpop.f32.mrf.mxu0
    %v1261 = vadd.f32 0.0, %v1260
    %v1262 = vpop.f32.mrf.mxu0
    %v1263 = vadd.f32 0.0, %v1262
    %1264 = vmatmul.bf16.gmra.mxu0 %v1170
    %v1265 = vpop.f32.mrf.mxu0
    %v1266 = vadd.f32 0.0, %v1265
    %v1267 = vpop.f32.mrf.mxu0
    %1268 = vdwg.mxu0
    %v1269 = vadd.f32 %v1148, %v1246
    %v1270 = vadd.f32 %v1149, %v1248
    %v1271 = vadd.f32 %v1150, %v1251
    %v1272 = vadd.f32 %v1151, %v1253
    %v1273 = vadd.f32 %v1152, %v1256
    %v1274 = vadd.f32 %v1153, %v1258
    %v1275 = vadd.f32 %v1154, %v1261
    %v1276 = vadd.f32 %v1155, %v1263
    %v1277 = vadd.f32 %v1156, %v1266
    %v1278 = vld [vmem:[#allocation2 + $0x9] sm:$0xff]
    %v1279 = vld [vmem:[#allocation2 + $0x11] sm:$0xff]
    %v1280 = vld [vmem:[#allocation2 + $0x19] sm:$0xff]
    %v1281 = vld [vmem:[#allocation2 + $0x21] sm:$0xff]
    %v1282 = vld [vmem:[#allocation2 + $0x29] sm:$0xff]
    %v1283 = vld [vmem:[#allocation2 + $0x31] sm:$0xff]
    %v1284 = vld [vmem:[#allocation2 + $0x39] sm:$0xff]
    %v1285 = vld [vmem:[#allocation2 + $0x41] sm:$0xff]
    %v1286 = vld [vmem:[#allocation2 + $0x49] sm:$0xf]
    %v1287 = vpack.c.bf16 %v1279, %v1278
    %v1288 = vpack.c.bf16 %v1281, %v1280
    %v1289 = vpack.c.bf16 %v1283, %v1282
    %v1290 = vpack.c.bf16 %v1285, %v1284
    %v1291 = vpack.c.bf16 %v1286, %v1286
    %s1292 = scalar_lea.vmem [#allocation9], 384
    %v1293 = vld [vmem:[%s1292] sm:$0xf]
    %v1294 = vld [vmem:[%s1292 + $0x4] sm:$0xf]
    %v1295 = vld [vmem:[%s1292 + $0x8] sm:$0xf]
    %v1296 = vld [vmem:[%s1292 + $0xc] sm:$0xf]
    %v1297 = vld [vmem:[%s1292 + $0x10] sm:$0xf]
    %v1298 = vld [vmem:[%s1292 + $0x14] sm:$0xf]
    %v1299 = vld [vmem:[%s1292 + $0x18] sm:$0xf]
    %v1300 = vld [vmem:[%s1292 + $0x1c] sm:$0xf]
    %v1301 = vld [vmem:[%s1292 + $0x20] sm:$0xf]
    %v1302 = vld [vmem:[%s1292 + $0x24] sm:$0xf]
    %v1303 = vld [vmem:[%s1292 + $0x28] sm:$0xf]
    %v1304 = vld [vmem:[%s1292 + $0x2c] sm:$0xf]
    %v1305 = vld [vmem:[%s1292 + $0x30] sm:$0xf]
    %v1306 = vld [vmem:[%s1292 + $0x34] sm:$0xf]
    %v1307 = vld [vmem:[%s1292 + $0x38] sm:$0xf]
    %v1308 = vld [vmem:[%s1292 + $0x3c] sm:$0xf]
    %v1325 = vunpack.c.l.b16 %v1293
    %v1326 = vunpack.c.l.b16 %v1294
    %v1327 = vunpack.c.l.b16 %v1295
    %v1328 = vunpack.c.l.b16 %v1296
    %v1329 = vunpack.c.l.b16 %v1297
    %v1330 = vunpack.c.l.b16 %v1298
    %v1331 = vunpack.c.l.b16 %v1299
    %v1332 = vunpack.c.l.b16 %v1300
    %v1333 = vunpack.c.l.b16 %v1301
    %v1334 = vunpack.c.l.b16 %v1302
    %v1335 = vunpack.c.l.b16 %v1303
    %v1336 = vunpack.c.l.b16 %v1304
    %v1337 = vunpack.c.l.b16 %v1305
    %v1338 = vunpack.c.l.b16 %v1306
    %v1339 = vunpack.c.l.b16 %v1307
    %v1340 = vunpack.c.l.b16 %v1308
    %v1341 = vpack.c.b16 %v1326, %v1325
    %v1342 = vpack.c.b16 %v1328, %v1327
    %v1343 = vpack.c.b16 %v1330, %v1329
    %v1344 = vpack.c.b16 %v1332, %v1331
    %v1345 = vpack.c.b16 %v1334, %v1333
    %v1346 = vpack.c.b16 %v1336, %v1335
    %v1347 = vpack.c.b16 %v1338, %v1337
    %v1348 = vpack.c.b16 %v1340, %v1339
    %1357 = vmatpush.bf16.msra.mxu0 %v1348
    %1358 = vmatpush.bf16.msra.mxu0 %v1347
    %1359 = vmatpush.bf16.msra.mxu0 %v1346
    %1360 = vmatpush.bf16.msra.mxu0 %v1345
    %1361 = vmatpush.bf16.msra.mxu0 %v1344
    %1362 = vmatpush.bf16.msra.mxu0 %v1343
    %1363 = vmatpush.bf16.msra.mxu0 %v1342
    %1364 = vmatpush.bf16.msra.mxu0 %v1341
    %1365 = vmatmul.bf16.gmra.mxu0 %v1287
    %v1366 = vpop.f32.mrf.mxu0
    %v1367 = vadd.f32 0.0, %v1366
    %v1368 = vpop.f32.mrf.mxu0
    %v1369 = vadd.f32 0.0, %v1368
    %1370 = vmatmul.bf16.gmra.mxu0 %v1288
    %v1371 = vpop.f32.mrf.mxu0
    %v1372 = vadd.f32 0.0, %v1371
    %v1373 = vpop.f32.mrf.mxu0
    %v1374 = vadd.f32 0.0, %v1373
    %1375 = vmatmul.bf16.gmra.mxu0 %v1289
    %v1376 = vpop.f32.mrf.mxu0
    %v1377 = vadd.f32 0.0, %v1376
    %v1378 = vpop.f32.mrf.mxu0
    %v1379 = vadd.f32 0.0, %v1378
    %1380 = vmatmul.bf16.gmra.mxu0 %v1290
    %v1381 = vpop.f32.mrf.mxu0
    %v1382 = vadd.f32 0.0, %v1381
    %v1383 = vpop.f32.mrf.mxu0
    %v1384 = vadd.f32 0.0, %v1383
    %1385 = vmatmul.bf16.gmra.mxu0 %v1291
    %v1386 = vpop.f32.mrf.mxu0
    %v1387 = vadd.f32 0.0, %v1386
    %v1388 = vpop.f32.mrf.mxu0
    %1389 = vdwg.mxu0
    %v1390 = vadd.f32 %v1269, %v1367
    %v1391 = vadd.f32 %v1270, %v1369
    %v1392 = vadd.f32 %v1271, %v1372
    %v1393 = vadd.f32 %v1272, %v1374
    %v1394 = vadd.f32 %v1273, %v1377
    %v1395 = vadd.f32 %v1274, %v1379
    %v1396 = vadd.f32 %v1275, %v1382
    %v1397 = vadd.f32 %v1276, %v1384
    %v1398 = vadd.f32 %v1277, %v1387
    %v1399 = vld [vmem:[#allocation2 + $0xa] sm:$0xff]
    %v1400 = vld [vmem:[#allocation2 + $0x12] sm:$0xff]
    %v1401 = vld [vmem:[#allocation2 + $0x1a] sm:$0xff]
    %v1402 = vld [vmem:[#allocation2 + $0x22] sm:$0xff]
    %v1403 = vld [vmem:[#allocation2 + $0x2a] sm:$0xff]
    %v1404 = vld [vmem:[#allocation2 + $0x32] sm:$0xff]
    %v1405 = vld [vmem:[#allocation2 + $0x3a] sm:$0xff]
    %v1406 = vld [vmem:[#allocation2 + $0x42] sm:$0xff]
    %v1407 = vld [vmem:[#allocation2 + $0x4a] sm:$0xf]
    %v1408 = vpack.c.bf16 %v1400, %v1399
    %v1409 = vpack.c.bf16 %v1402, %v1401
    %v1410 = vpack.c.bf16 %v1404, %v1403
    %v1411 = vpack.c.bf16 %v1406, %v1405
    %v1412 = vpack.c.bf16 %v1407, %v1407
    %s1413 = scalar_lea.vmem [#allocation9], 448
    %v1414 = vld [vmem:[%s1413] sm:$0xf]
    %v1415 = vld [vmem:[%s1413 + $0x4] sm:$0xf]
    %v1416 = vld [vmem:[%s1413 + $0x8] sm:$0xf]
    %v1417 = vld [vmem:[%s1413 + $0xc] sm:$0xf]
    %v1418 = vld [vmem:[%s1413 + $0x10] sm:$0xf]
    %v1419 = vld [vmem:[%s1413 + $0x14] sm:$0xf]
    %v1420 = vld [vmem:[%s1413 + $0x18] sm:$0xf]
    %v1421 = vld [vmem:[%s1413 + $0x1c] sm:$0xf]
    %v1422 = vld [vmem:[%s1413 + $0x20] sm:$0xf]
    %v1423 = vld [vmem:[%s1413 + $0x24] sm:$0xf]
    %v1424 = vld [vmem:[%s1413 + $0x28] sm:$0xf]
    %v1425 = vld [vmem:[%s1413 + $0x2c] sm:$0xf]
    %v1426 = vld [vmem:[%s1413 + $0x30] sm:$0xf]
    %v1427 = vld [vmem:[%s1413 + $0x34] sm:$0xf]
    %v1428 = vld [vmem:[%s1413 + $0x38] sm:$0xf]
    %v1429 = vld [vmem:[%s1413 + $0x3c] sm:$0xf]
    %v1446 = vunpack.c.l.b16 %v1414
    %v1447 = vunpack.c.l.b16 %v1415
    %v1448 = vunpack.c.l.b16 %v1416
    %v1449 = vunpack.c.l.b16 %v1417
    %v1450 = vunpack.c.l.b16 %v1418
    %v1451 = vunpack.c.l.b16 %v1419
    %v1452 = vunpack.c.l.b16 %v1420
    %v1453 = vunpack.c.l.b16 %v1421
    %v1454 = vunpack.c.l.b16 %v1422
    %v1455 = vunpack.c.l.b16 %v1423
    %v1456 = vunpack.c.l.b16 %v1424
    %v1457 = vunpack.c.l.b16 %v1425
    %v1458 = vunpack.c.l.b16 %v1426
    %v1459 = vunpack.c.l.b16 %v1427
    %v1460 = vunpack.c.l.b16 %v1428
    %v1461 = vunpack.c.l.b16 %v1429
    %v1462 = vpack.c.b16 %v1447, %v1446
    %v1463 = vpack.c.b16 %v1449, %v1448
    %v1464 = vpack.c.b16 %v1451, %v1450
    %v1465 = vpack.c.b16 %v1453, %v1452
    %v1466 = vpack.c.b16 %v1455, %v1454
    %v1467 = vpack.c.b16 %v1457, %v1456
    %v1468 = vpack.c.b16 %v1459, %v1458
    %v1469 = vpack.c.b16 %v1461, %v1460
    %1478 = vmatpush.bf16.msra.mxu0 %v1469
    %1479 = vmatpush.bf16.msra.mxu0 %v1468
    %1480 = vmatpush.bf16.msra.mxu0 %v1467
    %1481 = vmatpush.bf16.msra.mxu0 %v1466
    %1482 = vmatpush.bf16.msra.mxu0 %v1465
    %1483 = vmatpush.bf16.msra.mxu0 %v1464
    %1484 = vmatpush.bf16.msra.mxu0 %v1463
    %1485 = vmatpush.bf16.msra.mxu0 %v1462
    %1486 = vmatmul.bf16.gmra.mxu0 %v1408
    %v1487 = vpop.f32.mrf.mxu0
    %v1488 = vadd.f32 0.0, %v1487
    %v1489 = vpop.f32.mrf.mxu0
    %v1490 = vadd.f32 0.0, %v1489
    %1491 = vmatmul.bf16.gmra.mxu0 %v1409
    %v1492 = vpop.f32.mrf.mxu0
    %v1493 = vadd.f32 0.0, %v1492
    %v1494 = vpop.f32.mrf.mxu0
    %v1495 = vadd.f32 0.0, %v1494
    %1496 = vmatmul.bf16.gmra.mxu0 %v1410
    %v1497 = vpop.f32.mrf.mxu0
    %v1498 = vadd.f32 0.0, %v1497
    %v1499 = vpop.f32.mrf.mxu0
    %v1500 = vadd.f32 0.0, %v1499
    %1501 = vmatmul.bf16.gmra.mxu0 %v1411
    %v1502 = vpop.f32.mrf.mxu0
    %v1503 = vadd.f32 0.0, %v1502
    %v1504 = vpop.f32.mrf.mxu0
    %v1505 = vadd.f32 0.0, %v1504
    %1506 = vmatmul.bf16.gmra.mxu0 %v1412
    %v1507 = vpop.f32.mrf.mxu0
    %v1508 = vadd.f32 0.0, %v1507
    %v1509 = vpop.f32.mrf.mxu0
    %1510 = vdwg.mxu0
    %v1511 = vadd.f32 %v1390, %v1488
    %v1512 = vadd.f32 %v1391, %v1490
    %v1513 = vadd.f32 %v1392, %v1493
    %v1514 = vadd.f32 %v1393, %v1495
    %v1515 = vadd.f32 %v1394, %v1498
    %v1516 = vadd.f32 %v1395, %v1500
    %v1517 = vadd.f32 %v1396, %v1503
    %v1518 = vadd.f32 %v1397, %v1505
    %v1519 = vadd.f32 %v1398, %v1508
    %v1520 = vld [vmem:[#allocation2 + $0xb] sm:$0xff]
    %v1521 = vld [vmem:[#allocation2 + $0x13] sm:$0xff]
    %v1522 = vld [vmem:[#allocation2 + $0x1b] sm:$0xff]
    %v1523 = vld [vmem:[#allocation2 + $0x23] sm:$0xff]
    %v1524 = vld [vmem:[#allocation2 + $0x2b] sm:$0xff]
    %v1525 = vld [vmem:[#allocation2 + $0x33] sm:$0xff]
    %v1526 = vld [vmem:[#allocation2 + $0x3b] sm:$0xff]
    %v1527 = vld [vmem:[#allocation2 + $0x43] sm:$0xff]
    %v1528 = vld [vmem:[#allocation2 + $0x4b] sm:$0xf]
    %v1529 = vpack.c.bf16 %v1521, %v1520
    %v1530 = vpack.c.bf16 %v1523, %v1522
    %v1531 = vpack.c.bf16 %v1525, %v1524
    %v1532 = vpack.c.bf16 %v1527, %v1526
    %v1533 = vpack.c.bf16 %v1528, %v1528
    %s1534 = scalar_lea.vmem [#allocation9], 512
    %v1535 = vld [vmem:[%s1534] sm:$0xf]
    %v1536 = vld [vmem:[%s1534 + $0x4] sm:$0xf]
    %v1537 = vld [vmem:[%s1534 + $0x8] sm:$0xf]
    %v1538 = vld [vmem:[%s1534 + $0xc] sm:$0xf]
    %v1539 = vld [vmem:[%s1534 + $0x10] sm:$0xf]
    %v1540 = vld [vmem:[%s1534 + $0x14] sm:$0xf]
    %v1541 = vld [vmem:[%s1534 + $0x18] sm:$0xf]
    %v1542 = vld [vmem:[%s1534 + $0x1c] sm:$0xf]
    %v1543 = vld [vmem:[%s1534 + $0x20] sm:$0xf]
    %v1544 = vld [vmem:[%s1534 + $0x24] sm:$0xf]
    %v1545 = vld [vmem:[%s1534 + $0x28] sm:$0xf]
    %v1546 = vld [vmem:[%s1534 + $0x2c] sm:$0xf]
    %v1547 = vld [vmem:[%s1534 + $0x30] sm:$0xf]
    %v1548 = vld [vmem:[%s1534 + $0x34] sm:$0xf]
    %v1549 = vld [vmem:[%s1534 + $0x38] sm:$0xf]
    %v1550 = vld [vmem:[%s1534 + $0x3c] sm:$0xf]
    %v1567 = vunpack.c.l.b16 %v1535
    %v1568 = vunpack.c.l.b16 %v1536
    %v1569 = vunpack.c.l.b16 %v1537
    %v1570 = vunpack.c.l.b16 %v1538
    %v1571 = vunpack.c.l.b16 %v1539
    %v1572 = vunpack.c.l.b16 %v1540
    %v1573 = vunpack.c.l.b16 %v1541
    %v1574 = vunpack.c.l.b16 %v1542
    %v1575 = vunpack.c.l.b16 %v1543
    %v1576 = vunpack.c.l.b16 %v1544
    %v1577 = vunpack.c.l.b16 %v1545
    %v1578 = vunpack.c.l.b16 %v1546
    %v1579 = vunpack.c.l.b16 %v1547
    %v1580 = vunpack.c.l.b16 %v1548
    %v1581 = vunpack.c.l.b16 %v1549
    %v1582 = vunpack.c.l.b16 %v1550
    %v1583 = vpack.c.b16 %v1568, %v1567
    %v1584 = vpack.c.b16 %v1570, %v1569
    %v1585 = vpack.c.b16 %v1572, %v1571
    %v1586 = vpack.c.b16 %v1574, %v1573
    %v1587 = vpack.c.b16 %v1576, %v1575
    %v1588 = vpack.c.b16 %v1578, %v1577
    %v1589 = vpack.c.b16 %v1580, %v1579
    %v1590 = vpack.c.b16 %v1582, %v1581
    %1599 = vmatpush.bf16.msra.mxu0 %v1590
    %1600 = vmatpush.bf16.msra.mxu0 %v1589
    %1601 = vmatpush.bf16.msra.mxu0 %v1588
    %1602 = vmatpush.bf16.msra.mxu0 %v1587
    %1603 = vmatpush.bf16.msra.mxu0 %v1586
    %1604 = vmatpush.bf16.msra.mxu0 %v1585
    %1605 = vmatpush.bf16.msra.mxu0 %v1584
    %1606 = vmatpush.bf16.msra.mxu0 %v1583
    %1607 = vmatmul.bf16.gmra.mxu0 %v1529
    %v1608 = vpop.f32.mrf.mxu0
    %v1609 = vadd.f32 0.0, %v1608
    %v1610 = vpop.f32.mrf.mxu0
    %v1611 = vadd.f32 0.0, %v1610
    %1612 = vmatmul.bf16.gmra.mxu0 %v1530
    %v1613 = vpop.f32.mrf.mxu0
    %v1614 = vadd.f32 0.0, %v1613
    %v1615 = vpop.f32.mrf.mxu0
    %v1616 = vadd.f32 0.0, %v1615
    %1617 = vmatmul.bf16.gmra.mxu0 %v1531
    %v1618 = vpop.f32.mrf.mxu0
    %v1619 = vadd.f32 0.0, %v1618
    %v1620 = vpop.f32.mrf.mxu0
    %v1621 = vadd.f32 0.0, %v1620
    %1622 = vmatmul.bf16.gmra.mxu0 %v1532
    %v1623 = vpop.f32.mrf.mxu0
    %v1624 = vadd.f32 0.0, %v1623
    %v1625 = vpop.f32.mrf.mxu0
    %v1626 = vadd.f32 0.0, %v1625
    %1627 = vmatmul.bf16.gmra.mxu0 %v1533
    %v1628 = vpop.f32.mrf.mxu0
    %v1629 = vadd.f32 0.0, %v1628
    %v1630 = vpop.f32.mrf.mxu0
    %1631 = vdwg.mxu0
    %v1632 = vadd.f32 %v1511, %v1609
    %v1633 = vadd.f32 %v1512, %v1611
    %v1634 = vadd.f32 %v1513, %v1614
    %v1635 = vadd.f32 %v1514, %v1616
    %v1636 = vadd.f32 %v1515, %v1619
    %v1637 = vadd.f32 %v1516, %v1621
    %v1638 = vadd.f32 %v1517, %v1624
    %v1639 = vadd.f32 %v1518, %v1626
    %v1640 = vadd.f32 %v1519, %v1629
    %v1641 = vld [vmem:[#allocation2 + $0xc] sm:$0xff]
    %v1642 = vld [vmem:[#allocation2 + $0x14] sm:$0xff]
    %v1643 = vld [vmem:[#allocation2 + $0x1c] sm:$0xff]
    %v1644 = vld [vmem:[#allocation2 + $0x24] sm:$0xff]
    %v1645 = vld [vmem:[#allocation2 + $0x2c] sm:$0xff]
    %v1646 = vld [vmem:[#allocation2 + $0x34] sm:$0xff]
    %v1647 = vld [vmem:[#allocation2 + $0x3c] sm:$0xff]
    %v1648 = vld [vmem:[#allocation2 + $0x44] sm:$0xff]
    %v1649 = vld [vmem:[#allocation2 + $0x4c] sm:$0xf]
    %v1650 = vpack.c.bf16 %v1642, %v1641
    %v1651 = vpack.c.bf16 %v1644, %v1643
    %v1652 = vpack.c.bf16 %v1646, %v1645
    %v1653 = vpack.c.bf16 %v1648, %v1647
    %v1654 = vpack.c.bf16 %v1649, %v1649
    %s1655 = scalar_lea.vmem [#allocation9], 576
    %v1656 = vld [vmem:[%s1655] sm:$0xf]
    %v1657 = vld [vmem:[%s1655 + $0x4] sm:$0xf]
    %v1658 = vld [vmem:[%s1655 + $0x8] sm:$0xf]
    %v1659 = vld [vmem:[%s1655 + $0xc] sm:$0xf]
    %v1660 = vld [vmem:[%s1655 + $0x10] sm:$0xf]
    %v1661 = vld [vmem:[%s1655 + $0x14] sm:$0xf]
    %v1662 = vld [vmem:[%s1655 + $0x18] sm:$0xf]
    %v1663 = vld [vmem:[%s1655 + $0x1c] sm:$0xf]
    %v1664 = vld [vmem:[%s1655 + $0x20] sm:$0xf]
    %v1665 = vld [vmem:[%s1655 + $0x24] sm:$0xf]
    %v1666 = vld [vmem:[%s1655 + $0x28] sm:$0xf]
    %v1667 = vld [vmem:[%s1655 + $0x2c] sm:$0xf]
    %v1668 = vld [vmem:[%s1655 + $0x30] sm:$0xf]
    %v1669 = vld [vmem:[%s1655 + $0x34] sm:$0xf]
    %v1670 = vld [vmem:[%s1655 + $0x38] sm:$0xf]
    %v1671 = vld [vmem:[%s1655 + $0x3c] sm:$0xf]
    %v1688 = vunpack.c.l.b16 %v1656
    %v1689 = vunpack.c.l.b16 %v1657
    %v1690 = vunpack.c.l.b16 %v1658
    %v1691 = vunpack.c.l.b16 %v1659
    %v1692 = vunpack.c.l.b16 %v1660
    %v1693 = vunpack.c.l.b16 %v1661
    %v1694 = vunpack.c.l.b16 %v1662
    %v1695 = vunpack.c.l.b16 %v1663
    %v1696 = vunpack.c.l.b16 %v1664
    %v1697 = vunpack.c.l.b16 %v1665
    %v1698 = vunpack.c.l.b16 %v1666
    %v1699 = vunpack.c.l.b16 %v1667
    %v1700 = vunpack.c.l.b16 %v1668
    %v1701 = vunpack.c.l.b16 %v1669
    %v1702 = vunpack.c.l.b16 %v1670
    %v1703 = vunpack.c.l.b16 %v1671
    %v1704 = vpack.c.b16 %v1689, %v1688
    %v1705 = vpack.c.b16 %v1691, %v1690
    %v1706 = vpack.c.b16 %v1693, %v1692
    %v1707 = vpack.c.b16 %v1695, %v1694
    %v1708 = vpack.c.b16 %v1697, %v1696
    %v1709 = vpack.c.b16 %v1699, %v1698
    %v1710 = vpack.c.b16 %v1701, %v1700
    %v1711 = vpack.c.b16 %v1703, %v1702
    %1720 = vmatpush.bf16.msra.mxu0 %v1711
    %1721 = vmatpush.bf16.msra.mxu0 %v1710
    %1722 = vmatpush.bf16.msra.mxu0 %v1709
    %1723 = vmatpush.bf16.msra.mxu0 %v1708
    %1724 = vmatpush.bf16.msra.mxu0 %v1707
    %1725 = vmatpush.bf16.msra.mxu0 %v1706
    %1726 = vmatpush.bf16.msra.mxu0 %v1705
    %1727 = vmatpush.bf16.msra.mxu0 %v1704
    %1728 = vmatmul.bf16.gmra.mxu0 %v1650
    %v1729 = vpop.f32.mrf.mxu0
    %v1730 = vadd.f32 0.0, %v1729
    %v1731 = vpop.f32.mrf.mxu0
    %v1732 = vadd.f32 0.0, %v1731
    %1733 = vmatmul.bf16.gmra.mxu0 %v1651
    %v1734 = vpop.f32.mrf.mxu0
    %v1735 = vadd.f32 0.0, %v1734
    %v1736 = vpop.f32.mrf.mxu0
    %v1737 = vadd.f32 0.0, %v1736
    %1738 = vmatmul.bf16.gmra.mxu0 %v1652
    %v1739 = vpop.f32.mrf.mxu0
    %v1740 = vadd.f32 0.0, %v1739
    %v1741 = vpop.f32.mrf.mxu0
    %v1742 = vadd.f32 0.0, %v1741
    %1743 = vmatmul.bf16.gmra.mxu0 %v1653
    %v1744 = vpop.f32.mrf.mxu0
    %v1745 = vadd.f32 0.0, %v1744
    %v1746 = vpop.f32.mrf.mxu0
    %v1747 = vadd.f32 0.0, %v1746
    %1748 = vmatmul.bf16.gmra.mxu0 %v1654
    %v1749 = vpop.f32.mrf.mxu0
    %v1750 = vadd.f32 0.0, %v1749
    %v1751 = vpop.f32.mrf.mxu0
    %1752 = vdwg.mxu0
    %v1753 = vadd.f32 %v1632, %v1730
    %v1754 = vadd.f32 %v1633, %v1732
    %v1755 = vadd.f32 %v1634, %v1735
    %v1756 = vadd.f32 %v1635, %v1737
    %v1757 = vadd.f32 %v1636, %v1740
    %v1758 = vadd.f32 %v1637, %v1742
    %v1759 = vadd.f32 %v1638, %v1745
    %v1760 = vadd.f32 %v1639, %v1747
    %v1761 = vadd.f32 %v1640, %v1750
    %v1762 = vld [vmem:[#allocation2 + $0xd] sm:$0xff]
    %v1763 = vld [vmem:[#allocation2 + $0x15] sm:$0xff]
    %v1764 = vld [vmem:[#allocation2 + $0x1d] sm:$0xff]
    %v1765 = vld [vmem:[#allocation2 + $0x25] sm:$0xff]
    %v1766 = vld [vmem:[#allocation2 + $0x2d] sm:$0xff]
    %v1767 = vld [vmem:[#allocation2 + $0x35] sm:$0xff]
    %v1768 = vld [vmem:[#allocation2 + $0x3d] sm:$0xff]
    %v1769 = vld [vmem:[#allocation2 + $0x45] sm:$0xff]
    %v1770 = vld [vmem:[#allocation2 + $0x4d] sm:$0xf]
    %v1771 = vpack.c.bf16 %v1763, %v1762
    %v1772 = vpack.c.bf16 %v1765, %v1764
    %v1773 = vpack.c.bf16 %v1767, %v1766
    %v1774 = vpack.c.bf16 %v1769, %v1768
    %v1775 = vpack.c.bf16 %v1770, %v1770
    %s1776 = scalar_lea.vmem [#allocation9], 640
    %v1777 = vld [vmem:[%s1776] sm:$0xf]
    %v1778 = vld [vmem:[%s1776 + $0x4] sm:$0xf]
    %v1779 = vld [vmem:[%s1776 + $0x8] sm:$0xf]
    %v1780 = vld [vmem:[%s1776 + $0xc] sm:$0xf]
    %v1781 = vld [vmem:[%s1776 + $0x10] sm:$0xf]
    %v1782 = vld [vmem:[%s1776 + $0x14] sm:$0xf]
    %v1783 = vld [vmem:[%s1776 + $0x18] sm:$0xf]
    %v1784 = vld [vmem:[%s1776 + $0x1c] sm:$0xf]
    %v1785 = vld [vmem:[%s1776 + $0x20] sm:$0xf]
    %v1786 = vld [vmem:[%s1776 + $0x24] sm:$0xf]
    %v1787 = vld [vmem:[%s1776 + $0x28] sm:$0xf]
    %v1788 = vld [vmem:[%s1776 + $0x2c] sm:$0xf]
    %v1789 = vld [vmem:[%s1776 + $0x30] sm:$0xf]
    %v1790 = vld [vmem:[%s1776 + $0x34] sm:$0xf]
    %v1791 = vld [vmem:[%s1776 + $0x38] sm:$0xf]
    %v1792 = vld [vmem:[%s1776 + $0x3c] sm:$0xf]
    %v1809 = vunpack.c.l.b16 %v1777
    %v1810 = vunpack.c.l.b16 %v1778
    %v1811 = vunpack.c.l.b16 %v1779
    %v1812 = vunpack.c.l.b16 %v1780
    %v1813 = vunpack.c.l.b16 %v1781
    %v1814 = vunpack.c.l.b16 %v1782
    %v1815 = vunpack.c.l.b16 %v1783
    %v1816 = vunpack.c.l.b16 %v1784
    %v1817 = vunpack.c.l.b16 %v1785
    %v1818 = vunpack.c.l.b16 %v1786
    %v1819 = vunpack.c.l.b16 %v1787
    %v1820 = vunpack.c.l.b16 %v1788
    %v1821 = vunpack.c.l.b16 %v1789
    %v1822 = vunpack.c.l.b16 %v1790
    %v1823 = vunpack.c.l.b16 %v1791
    %v1824 = vunpack.c.l.b16 %v1792
    %v1825 = vpack.c.b16 %v1810, %v1809
    %v1826 = vpack.c.b16 %v1812, %v1811
    %v1827 = vpack.c.b16 %v1814, %v1813
    %v1828 = vpack.c.b16 %v1816, %v1815
    %v1829 = vpack.c.b16 %v1818, %v1817
    %v1830 = vpack.c.b16 %v1820, %v1819
    %v1831 = vpack.c.b16 %v1822, %v1821
    %v1832 = vpack.c.b16 %v1824, %v1823
    %1841 = vmatpush.bf16.msra.mxu0 %v1832
    %1842 = vmatpush.bf16.msra.mxu0 %v1831
    %1843 = vmatpush.bf16.msra.mxu0 %v1830
    %1844 = vmatpush.bf16.msra.mxu0 %v1829
    %1845 = vmatpush.bf16.msra.mxu0 %v1828
    %1846 = vmatpush.bf16.msra.mxu0 %v1827
    %1847 = vmatpush.bf16.msra.mxu0 %v1826
    %1848 = vmatpush.bf16.msra.mxu0 %v1825
    %1849 = vmatmul.bf16.gmra.mxu0 %v1771
    %v1850 = vpop.f32.mrf.mxu0
    %v1851 = vadd.f32 0.0, %v1850
    %v1852 = vpop.f32.mrf.mxu0
    %v1853 = vadd.f32 0.0, %v1852
    %1854 = vmatmul.bf16.gmra.mxu0 %v1772
    %v1855 = vpop.f32.mrf.mxu0
    %v1856 = vadd.f32 0.0, %v1855
    %v1857 = vpop.f32.mrf.mxu0
    %v1858 = vadd.f32 0.0, %v1857
    %1859 = vmatmul.bf16.gmra.mxu0 %v1773
    %v1860 = vpop.f32.mrf.mxu0
    %v1861 = vadd.f32 0.0, %v1860
    %v1862 = vpop.f32.mrf.mxu0
    %v1863 = vadd.f32 0.0, %v1862
    %1864 = vmatmul.bf16.gmra.mxu0 %v1774
    %v1865 = vpop.f32.mrf.mxu0
    %v1866 = vadd.f32 0.0, %v1865
    %v1867 = vpop.f32.mrf.mxu0
    %v1868 = vadd.f32 0.0, %v1867
    %1869 = vmatmul.bf16.gmra.mxu0 %v1775
    %v1870 = vpop.f32.mrf.mxu0
    %v1871 = vadd.f32 0.0, %v1870
    %v1872 = vpop.f32.mrf.mxu0
    %1873 = vdwg.mxu0
    %v1874 = vadd.f32 %v1753, %v1851
    %v1875 = vadd.f32 %v1754, %v1853
    %v1876 = vadd.f32 %v1755, %v1856
    %v1877 = vadd.f32 %v1756, %v1858
    %v1878 = vadd.f32 %v1757, %v1861
    %v1879 = vadd.f32 %v1758, %v1863
    %v1880 = vadd.f32 %v1759, %v1866
    %v1881 = vadd.f32 %v1760, %v1868
    %v1882 = vadd.f32 %v1761, %v1871
    %v1883 = vld [vmem:[#allocation2 + $0xe] sm:$0xff]
    %v1884 = vld [vmem:[#allocation2 + $0x16] sm:$0xff]
    %v1885 = vld [vmem:[#allocation2 + $0x1e] sm:$0xff]
    %v1886 = vld [vmem:[#allocation2 + $0x26] sm:$0xff]
    %v1887 = vld [vmem:[#allocation2 + $0x2e] sm:$0xff]
    %v1888 = vld [vmem:[#allocation2 + $0x36] sm:$0xff]
    %v1889 = vld [vmem:[#allocation2 + $0x3e] sm:$0xff]
    %v1890 = vld [vmem:[#allocation2 + $0x46] sm:$0xff]
    %v1891 = vld [vmem:[#allocation2 + $0x4e] sm:$0xf]
    %v1892 = vpack.c.bf16 %v1884, %v1883
    %v1893 = vpack.c.bf16 %v1886, %v1885
    %v1894 = vpack.c.bf16 %v1888, %v1887
    %v1895 = vpack.c.bf16 %v1890, %v1889
    %v1896 = vpack.c.bf16 %v1891, %v1891
    %s1897 = scalar_lea.vmem [#allocation9], 704
    %v1898 = vld [vmem:[%s1897] sm:$0xf]
    %v1899 = vld [vmem:[%s1897 + $0x4] sm:$0xf]
    %v1900 = vld [vmem:[%s1897 + $0x8] sm:$0xf]
    %v1901 = vld [vmem:[%s1897 + $0xc] sm:$0xf]
    %v1902 = vld [vmem:[%s1897 + $0x10] sm:$0xf]
    %v1903 = vld [vmem:[%s1897 + $0x14] sm:$0xf]
    %v1904 = vld [vmem:[%s1897 + $0x18] sm:$0xf]
    %v1905 = vld [vmem:[%s1897 + $0x1c] sm:$0xf]
    %v1906 = vld [vmem:[%s1897 + $0x20] sm:$0xf]
    %v1907 = vld [vmem:[%s1897 + $0x24] sm:$0xf]
    %v1908 = vld [vmem:[%s1897 + $0x28] sm:$0xf]
    %v1909 = vld [vmem:[%s1897 + $0x2c] sm:$0xf]
    %v1910 = vld [vmem:[%s1897 + $0x30] sm:$0xf]
    %v1911 = vld [vmem:[%s1897 + $0x34] sm:$0xf]
    %v1912 = vld [vmem:[%s1897 + $0x38] sm:$0xf]
    %v1913 = vld [vmem:[%s1897 + $0x3c] sm:$0xf]
    %v1930 = vunpack.c.l.b16 %v1898
    %v1931 = vunpack.c.l.b16 %v1899
    %v1932 = vunpack.c.l.b16 %v1900
    %v1933 = vunpack.c.l.b16 %v1901
    %v1934 = vunpack.c.l.b16 %v1902
    %v1935 = vunpack.c.l.b16 %v1903
    %v1936 = vunpack.c.l.b16 %v1904
    %v1937 = vunpack.c.l.b16 %v1905
    %v1938 = vunpack.c.l.b16 %v1906
    %v1939 = vunpack.c.l.b16 %v1907
    %v1940 = vunpack.c.l.b16 %v1908
    %v1941 = vunpack.c.l.b16 %v1909
    %v1942 = vunpack.c.l.b16 %v1910
    %v1943 = vunpack.c.l.b16 %v1911
    %v1944 = vunpack.c.l.b16 %v1912
    %v1945 = vunpack.c.l.b16 %v1913
    %v1946 = vpack.c.b16 %v1931, %v1930
    %v1947 = vpack.c.b16 %v1933, %v1932
    %v1948 = vpack.c.b16 %v1935, %v1934
    %v1949 = vpack.c.b16 %v1937, %v1936
    %v1950 = vpack.c.b16 %v1939, %v1938
    %v1951 = vpack.c.b16 %v1941, %v1940
    %v1952 = vpack.c.b16 %v1943, %v1942
    %v1953 = vpack.c.b16 %v1945, %v1944
    %1962 = vmatpush.bf16.msra.mxu0 %v1953
    %1963 = vmatpush.bf16.msra.mxu0 %v1952
    %1964 = vmatpush.bf16.msra.mxu0 %v1951
    %1965 = vmatpush.bf16.msra.mxu0 %v1950
    %1966 = vmatpush.bf16.msra.mxu0 %v1949
    %1967 = vmatpush.bf16.msra.mxu0 %v1948
    %1968 = vmatpush.bf16.msra.mxu0 %v1947
    %1969 = vmatpush.bf16.msra.mxu0 %v1946
    %1970 = vmatmul.bf16.gmra.mxu0 %v1892
    %v1971 = vpop.f32.mrf.mxu0
    %v1972 = vadd.f32 0.0, %v1971
    %v1973 = vpop.f32.mrf.mxu0
    %v1974 = vadd.f32 0.0, %v1973
    %1975 = vmatmul.bf16.gmra.mxu0 %v1893
    %v1976 = vpop.f32.mrf.mxu0
    %v1977 = vadd.f32 0.0, %v1976
    %v1978 = vpop.f32.mrf.mxu0
    %v1979 = vadd.f32 0.0, %v1978
    %1980 = vmatmul.bf16.gmra.mxu0 %v1894
    %v1981 = vpop.f32.mrf.mxu0
    %v1982 = vadd.f32 0.0, %v1981
    %v1983 = vpop.f32.mrf.mxu0
    %v1984 = vadd.f32 0.0, %v1983
    %1985 = vmatmul.bf16.gmra.mxu0 %v1895
    %v1986 = vpop.f32.mrf.mxu0
    %v1987 = vadd.f32 0.0, %v1986
    %v1988 = vpop.f32.mrf.mxu0
    %v1989 = vadd.f32 0.0, %v1988
    %1990 = vmatmul.bf16.gmra.mxu0 %v1896
    %v1991 = vpop.f32.mrf.mxu0
    %v1992 = vadd.f32 0.0, %v1991
    %v1993 = vpop.f32.mrf.mxu0
    %1994 = vdwg.mxu0
    %v1995 = vadd.f32 %v1874, %v1972
    %v1996 = vadd.f32 %v1875, %v1974
    %v1997 = vadd.f32 %v1876, %v1977
    %v1998 = vadd.f32 %v1877, %v1979
    %v1999 = vadd.f32 %v1878, %v1982
    %v2000 = vadd.f32 %v1879, %v1984
    %v2001 = vadd.f32 %v1880, %v1987
    %v2002 = vadd.f32 %v1881, %v1989
    %v2003 = vadd.f32 %v1882, %v1992
    %v2004 = vld [vmem:[#allocation2 + $0xf] sm:$0xff]
    %v2005 = vld [vmem:[#allocation2 + $0x17] sm:$0xff]
    %v2006 = vld [vmem:[#allocation2 + $0x1f] sm:$0xff]
    %v2007 = vld [vmem:[#allocation2 + $0x27] sm:$0xff]
    %v2008 = vld [vmem:[#allocation2 + $0x2f] sm:$0xff]
    %v2009 = vld [vmem:[#allocation2 + $0x37] sm:$0xff]
    %v2010 = vld [vmem:[#allocation2 + $0x3f] sm:$0xff]
    %v2011 = vld [vmem:[#allocation2 + $0x47] sm:$0xff]
    %v2012 = vld [vmem:[#allocation2 + $0x4f] sm:$0xf]
    %v2013 = vpack.c.bf16 %v2005, %v2004
    %v2014 = vpack.c.bf16 %v2007, %v2006
    %v2015 = vpack.c.bf16 %v2009, %v2008
    %v2016 = vpack.c.bf16 %v2011, %v2010
    %v2017 = vpack.c.bf16 %v2012, %v2012
    %s2018 = scalar_lea.vmem [#allocation9], 768
    %v2019 = vld [vmem:[%s2018] sm:$0xf]
    %v2020 = vld [vmem:[%s2018 + $0x4] sm:$0xf]
    %v2021 = vld [vmem:[%s2018 + $0x8] sm:$0xf]
    %v2022 = vld [vmem:[%s2018 + $0xc] sm:$0xf]
    %v2023 = vld [vmem:[%s2018 + $0x10] sm:$0xf]
    %v2024 = vld [vmem:[%s2018 + $0x14] sm:$0xf]
    %v2025 = vld [vmem:[%s2018 + $0x18] sm:$0xf]
    %v2026 = vld [vmem:[%s2018 + $0x1c] sm:$0xf]
    %v2027 = vld [vmem:[%s2018 + $0x20] sm:$0xf]
    %v2028 = vld [vmem:[%s2018 + $0x24] sm:$0xf]
    %v2029 = vld [vmem:[%s2018 + $0x28] sm:$0xf]
    %v2030 = vld [vmem:[%s2018 + $0x2c] sm:$0xf]
    %v2031 = vld [vmem:[%s2018 + $0x30] sm:$0xf]
    %v2032 = vld [vmem:[%s2018 + $0x34] sm:$0xf]
    %v2033 = vld [vmem:[%s2018 + $0x38] sm:$0xf]
    %v2034 = vld [vmem:[%s2018 + $0x3c] sm:$0xf]
    %v2051 = vunpack.c.l.b16 %v2019
    %v2052 = vunpack.c.l.b16 %v2020
    %v2053 = vunpack.c.l.b16 %v2021
    %v2054 = vunpack.c.l.b16 %v2022
    %v2055 = vunpack.c.l.b16 %v2023
    %v2056 = vunpack.c.l.b16 %v2024
    %v2057 = vunpack.c.l.b16 %v2025
    %v2058 = vunpack.c.l.b16 %v2026
    %v2059 = vunpack.c.l.b16 %v2027
    %v2060 = vunpack.c.l.b16 %v2028
    %v2061 = vunpack.c.l.b16 %v2029
    %v2062 = vunpack.c.l.b16 %v2030
    %v2063 = vunpack.c.l.b16 %v2031
    %v2064 = vunpack.c.l.b16 %v2032
    %v2065 = vunpack.c.l.b16 %v2033
    %v2066 = vunpack.c.l.b16 %v2034
    %v2067 = vpack.c.b16 %v2052, %v2051
    %v2068 = vpack.c.b16 %v2054, %v2053
    %v2069 = vpack.c.b16 %v2056, %v2055
    %v2070 = vpack.c.b16 %v2058, %v2057
    %v2071 = vpack.c.b16 %v2060, %v2059
    %v2072 = vpack.c.b16 %v2062, %v2061
    %v2073 = vpack.c.b16 %v2064, %v2063
    %v2074 = vpack.c.b16 %v2066, %v2065
    %2083 = vmatpush.bf16.msra.mxu0 %v2074
    %2084 = vmatpush.bf16.msra.mxu0 %v2073
    %2085 = vmatpush.bf16.msra.mxu0 %v2072
    %2086 = vmatpush.bf16.msra.mxu0 %v2071
    %2087 = vmatpush.bf16.msra.mxu0 %v2070
    %2088 = vmatpush.bf16.msra.mxu0 %v2069
    %2089 = vmatpush.bf16.msra.mxu0 %v2068
    %2090 = vmatpush.bf16.msra.mxu0 %v2067
    %2091 = vmatmul.bf16.gmra.mxu0 %v2013
    %v2092 = vpop.f32.mrf.mxu0
    %v2093 = vadd.f32 0.0, %v2092
    %v2094 = vpop.f32.mrf.mxu0
    %v2095 = vadd.f32 0.0, %v2094
    %2096 = vmatmul.bf16.gmra.mxu0 %v2014
    %v2097 = vpop.f32.mrf.mxu0
    %v2098 = vadd.f32 0.0, %v2097
    %v2099 = vpop.f32.mrf.mxu0
    %v2100 = vadd.f32 0.0, %v2099
    %2101 = vmatmul.bf16.gmra.mxu0 %v2015
    %v2102 = vpop.f32.mrf.mxu0
    %v2103 = vadd.f32 0.0, %v2102
    %v2104 = vpop.f32.mrf.mxu0
    %v2105 = vadd.f32 0.0, %v2104
    %2106 = vmatmul.bf16.gmra.mxu0 %v2016
    %v2107 = vpop.f32.mrf.mxu0
    %v2108 = vadd.f32 0.0, %v2107
    %v2109 = vpop.f32.mrf.mxu0
    %v2110 = vadd.f32 0.0, %v2109
    %2111 = vmatmul.bf16.gmra.mxu0 %v2017
    %v2112 = vpop.f32.mrf.mxu0
    %v2113 = vadd.f32 0.0, %v2112
    %v2114 = vpop.f32.mrf.mxu0
    %2115 = vdwg.mxu0
    %v2116 = vadd.f32 %v1995, %v2093
    %v2117 = vadd.f32 %v1996, %v2095
    %v2118 = vadd.f32 %v1997, %v2098
    %v2119 = vadd.f32 %v1998, %v2100
    %v2120 = vadd.f32 %v1999, %v2103
    %v2121 = vadd.f32 %v2000, %v2105
    %v2122 = vadd.f32 %v2001, %v2108
    %v2123 = vadd.f32 %v2002, %v2110
    %v2124 = vadd.f32 %v2003, %v2113
    %v2125 = vld [vmem:[#allocation2 + $0x10] sm:$0xff]
    %v2126 = vld [vmem:[#allocation2 + $0x18] sm:$0xff]
    %v2127 = vld [vmem:[#allocation2 + $0x20] sm:$0xff]
    %v2128 = vld [vmem:[#allocation2 + $0x28] sm:$0xff]
    %v2129 = vld [vmem:[#allocation2 + $0x30] sm:$0xff]
    %v2130 = vld [vmem:[#allocation2 + $0x38] sm:$0xff]
    %v2131 = vld [vmem:[#allocation2 + $0x40] sm:$0xff]
    %v2132 = vld [vmem:[#allocation2 + $0x48] sm:$0xff]
    %v2133 = vld [vmem:[#allocation2 + $0x50] sm:$0xf]
    %v2134 = vpack.c.bf16 %v2126, %v2125
    %v2135 = vpack.c.bf16 %v2128, %v2127
    %v2136 = vpack.c.bf16 %v2130, %v2129
    %v2137 = vpack.c.bf16 %v2132, %v2131
    %v2138 = vpack.c.bf16 %v2133, %v2133
    %s2139 = scalar_lea.vmem [#allocation9], 832
    %v2140 = vld [vmem:[%s2139] sm:$0xf]
    %v2141 = vld [vmem:[%s2139 + $0x4] sm:$0xf]
    %v2142 = vld [vmem:[%s2139 + $0x8] sm:$0xf]
    %v2143 = vld [vmem:[%s2139 + $0xc] sm:$0xf]
    %v2144 = vld [vmem:[%s2139 + $0x10] sm:$0xf]
    %v2145 = vld [vmem:[%s2139 + $0x14] sm:$0xf]
    %v2146 = vld [vmem:[%s2139 + $0x18] sm:$0xf]
    %v2147 = vld [vmem:[%s2139 + $0x1c] sm:$0xf]
    %v2148 = vld [vmem:[%s2139 + $0x20] sm:$0xf]
    %v2149 = vld [vmem:[%s2139 + $0x24] sm:$0xf]
    %v2150 = vld [vmem:[%s2139 + $0x28] sm:$0xf]
    %v2151 = vld [vmem:[%s2139 + $0x2c] sm:$0xf]
    %v2152 = vld [vmem:[%s2139 + $0x30] sm:$0xf]
    %v2153 = vld [vmem:[%s2139 + $0x34] sm:$0xf]
    %v2154 = vld [vmem:[%s2139 + $0x38] sm:$0xf]
    %v2155 = vld [vmem:[%s2139 + $0x3c] sm:$0xf]
    %v2172 = vunpack.c.l.b16 %v2140
    %v2173 = vunpack.c.l.b16 %v2141
    %v2174 = vunpack.c.l.b16 %v2142
    %v2175 = vunpack.c.l.b16 %v2143
    %v2176 = vunpack.c.l.b16 %v2144
    %v2177 = vunpack.c.l.b16 %v2145
    %v2178 = vunpack.c.l.b16 %v2146
    %v2179 = vunpack.c.l.b16 %v2147
    %v2180 = vunpack.c.l.b16 %v2148
    %v2181 = vunpack.c.l.b16 %v2149
    %v2182 = vunpack.c.l.b16 %v2150
    %v2183 = vunpack.c.l.b16 %v2151
    %v2184 = vunpack.c.l.b16 %v2152
    %v2185 = vunpack.c.l.b16 %v2153
    %v2186 = vunpack.c.l.b16 %v2154
    %v2187 = vunpack.c.l.b16 %v2155
    %v2188 = vpack.c.b16 %v2173, %v2172
    %v2189 = vpack.c.b16 %v2175, %v2174
    %v2190 = vpack.c.b16 %v2177, %v2176
    %v2191 = vpack.c.b16 %v2179, %v2178
    %v2192 = vpack.c.b16 %v2181, %v2180
    %v2193 = vpack.c.b16 %v2183, %v2182
    %v2194 = vpack.c.b16 %v2185, %v2184
    %v2195 = vpack.c.b16 %v2187, %v2186
    %2204 = vmatpush.bf16.msra.mxu0 %v2195
    %2205 = vmatpush.bf16.msra.mxu0 %v2194
    %2206 = vmatpush.bf16.msra.mxu0 %v2193
    %2207 = vmatpush.bf16.msra.mxu0 %v2192
    %2208 = vmatpush.bf16.msra.mxu0 %v2191
    %2209 = vmatpush.bf16.msra.mxu0 %v2190
    %2210 = vmatpush.bf16.msra.mxu0 %v2189
    %2211 = vmatpush.bf16.msra.mxu0 %v2188
    %2212 = vmatmul.bf16.gmra.mxu0 %v2134
    %v2213 = vpop.f32.mrf.mxu0
    %v2214 = vadd.f32 0.0, %v2213
    %v2215 = vpop.f32.mrf.mxu0
    %v2216 = vadd.f32 0.0, %v2215
    %2217 = vmatmul.bf16.gmra.mxu0 %v2135
    %v2218 = vpop.f32.mrf.mxu0
    %v2219 = vadd.f32 0.0, %v2218
    %v2220 = vpop.f32.mrf.mxu0
    %v2221 = vadd.f32 0.0, %v2220
    %2222 = vmatmul.bf16.gmra.mxu0 %v2136
    %v2223 = vpop.f32.mrf.mxu0
    %v2224 = vadd.f32 0.0, %v2223
    %v2225 = vpop.f32.mrf.mxu0
    %v2226 = vadd.f32 0.0, %v2225
    %2227 = vmatmul.bf16.gmra.mxu0 %v2137
    %v2228 = vpop.f32.mrf.mxu0
    %v2229 = vadd.f32 0.0, %v2228
    %v2230 = vpop.f32.mrf.mxu0
    %v2231 = vadd.f32 0.0, %v2230
    %2232 = vmatmul.bf16.gmra.mxu0 %v2138
    %v2233 = vpop.f32.mrf.mxu0
    %v2234 = vadd.f32 0.0, %v2233
    %v2235 = vpop.f32.mrf.mxu0
    %2236 = vdwg.mxu0
    %v2237 = vadd.f32 %v2116, %v2214
    %v2238 = vadd.f32 %v2117, %v2216
    %v2239 = vadd.f32 %v2118, %v2219
    %v2240 = vadd.f32 %v2119, %v2221
    %v2241 = vadd.f32 %v2120, %v2224
    %v2242 = vadd.f32 %v2121, %v2226
    %v2243 = vadd.f32 %v2122, %v2229
    %v2244 = vadd.f32 %v2123, %v2231
    %v2245 = vadd.f32 %v2124, %v2234
    %v2246 = vld [vmem:[#allocation2 + $0x11] sm:$0xff]
    %v2247 = vld [vmem:[#allocation2 + $0x19] sm:$0xff]
    %v2248 = vld [vmem:[#allocation2 + $0x21] sm:$0xff]
    %v2249 = vld [vmem:[#allocation2 + $0x29] sm:$0xff]
    %v2250 = vld [vmem:[#allocation2 + $0x31] sm:$0xff]
    %v2251 = vld [vmem:[#allocation2 + $0x39] sm:$0xff]
    %v2252 = vld [vmem:[#allocation2 + $0x41] sm:$0xff]
    %v2253 = vld [vmem:[#allocation2 + $0x49] sm:$0xff]
    %v2254 = vld [vmem:[#allocation2 + $0x51] sm:$0xf]
    %v2255 = vpack.c.bf16 %v2247, %v2246
    %v2256 = vpack.c.bf16 %v2249, %v2248
    %v2257 = vpack.c.bf16 %v2251, %v2250
    %v2258 = vpack.c.bf16 %v2253, %v2252
    %v2259 = vpack.c.bf16 %v2254, %v2254
    %s2260 = scalar_lea.vmem [#allocation9], 896
    %v2261 = vld [vmem:[%s2260] sm:$0xf]
    %v2262 = vld [vmem:[%s2260 + $0x4] sm:$0xf]
    %v2263 = vld [vmem:[%s2260 + $0x8] sm:$0xf]
    %v2264 = vld [vmem:[%s2260 + $0xc] sm:$0xf]
    %v2265 = vld [vmem:[%s2260 + $0x10] sm:$0xf]
    %v2266 = vld [vmem:[%s2260 + $0x14] sm:$0xf]
    %v2267 = vld [vmem:[%s2260 + $0x18] sm:$0xf]
    %v2268 = vld [vmem:[%s2260 + $0x1c] sm:$0xf]
    %v2269 = vld [vmem:[%s2260 + $0x20] sm:$0xf]
    %v2270 = vld [vmem:[%s2260 + $0x24] sm:$0xf]
    %v2271 = vld [vmem:[%s2260 + $0x28] sm:$0xf]
    %v2272 = vld [vmem:[%s2260 + $0x2c] sm:$0xf]
    %v2273 = vld [vmem:[%s2260 + $0x30] sm:$0xf]
    %v2274 = vld [vmem:[%s2260 + $0x34] sm:$0xf]
    %v2275 = vld [vmem:[%s2260 + $0x38] sm:$0xf]
    %v2276 = vld [vmem:[%s2260 + $0x3c] sm:$0xf]
    %v2293 = vunpack.c.l.b16 %v2261
    %v2294 = vunpack.c.l.b16 %v2262
    %v2295 = vunpack.c.l.b16 %v2263
    %v2296 = vunpack.c.l.b16 %v2264
    %v2297 = vunpack.c.l.b16 %v2265
    %v2298 = vunpack.c.l.b16 %v2266
    %v2299 = vunpack.c.l.b16 %v2267
    %v2300 = vunpack.c.l.b16 %v2268
    %v2301 = vunpack.c.l.b16 %v2269
    %v2302 = vunpack.c.l.b16 %v2270
    %v2303 = vunpack.c.l.b16 %v2271
    %v2304 = vunpack.c.l.b16 %v2272
    %v2305 = vunpack.c.l.b16 %v2273
    %v2306 = vunpack.c.l.b16 %v2274
    %v2307 = vunpack.c.l.b16 %v2275
    %v2308 = vunpack.c.l.b16 %v2276
    %v2309 = vpack.c.b16 %v2294, %v2293
    %v2310 = vpack.c.b16 %v2296, %v2295
    %v2311 = vpack.c.b16 %v2298, %v2297
    %v2312 = vpack.c.b16 %v2300, %v2299
    %v2313 = vpack.c.b16 %v2302, %v2301
    %v2314 = vpack.c.b16 %v2304, %v2303
    %v2315 = vpack.c.b16 %v2306, %v2305
    %v2316 = vpack.c.b16 %v2308, %v2307
    %2325 = vmatpush.bf16.msra.mxu0 %v2316
    %2326 = vmatpush.bf16.msra.mxu0 %v2315
    %2327 = vmatpush.bf16.msra.mxu0 %v2314
    %2328 = vmatpush.bf16.msra.mxu0 %v2313
    %2329 = vmatpush.bf16.msra.mxu0 %v2312
    %2330 = vmatpush.bf16.msra.mxu0 %v2311
    %2331 = vmatpush.bf16.msra.mxu0 %v2310
    %2332 = vmatpush.bf16.msra.mxu0 %v2309
    %2333 = vmatmul.bf16.gmra.mxu0 %v2255
    %v2334 = vpop.f32.mrf.mxu0
    %v2335 = vadd.f32 0.0, %v2334
    %v2336 = vpop.f32.mrf.mxu0
    %v2337 = vadd.f32 0.0, %v2336
    %2338 = vmatmul.bf16.gmra.mxu0 %v2256
    %v2339 = vpop.f32.mrf.mxu0
    %v2340 = vadd.f32 0.0, %v2339
    %v2341 = vpop.f32.mrf.mxu0
    %v2342 = vadd.f32 0.0, %v2341
    %2343 = vmatmul.bf16.gmra.mxu0 %v2257
    %v2344 = vpop.f32.mrf.mxu0
    %v2345 = vadd.f32 0.0, %v2344
    %v2346 = vpop.f32.mrf.mxu0
    %v2347 = vadd.f32 0.0, %v2346
    %2348 = vmatmul.bf16.gmra.mxu0 %v2258
    %v2349 = vpop.f32.mrf.mxu0
    %v2350 = vadd.f32 0.0, %v2349
    %v2351 = vpop.f32.mrf.mxu0
    %v2352 = vadd.f32 0.0, %v2351
    %2353 = vmatmul.bf16.gmra.mxu0 %v2259
    %v2354 = vpop.f32.mrf.mxu0
    %v2355 = vadd.f32 0.0, %v2354
    %v2356 = vpop.f32.mrf.mxu0
    %2357 = vdwg.mxu0
    %v2358 = vadd.f32 %v2237, %v2335
    %v2359 = vadd.f32 %v2238, %v2337
    %v2360 = vadd.f32 %v2239, %v2340
    %v2361 = vadd.f32 %v2240, %v2342
    %v2362 = vadd.f32 %v2241, %v2345
    %v2363 = vadd.f32 %v2242, %v2347
    %v2364 = vadd.f32 %v2243, %v2350
    %v2365 = vadd.f32 %v2244, %v2352
    %v2366 = vadd.f32 %v2245, %v2355
    %v2367 = vld [vmem:[#allocation2 + $0x12] sm:$0xff]
    %v2368 = vld [vmem:[#allocation2 + $0x1a] sm:$0xff]
    %v2369 = vld [vmem:[#allocation2 + $0x22] sm:$0xff]
    %v2370 = vld [vmem:[#allocation2 + $0x2a] sm:$0xff]
    %v2371 = vld [vmem:[#allocation2 + $0x32] sm:$0xff]
    %v2372 = vld [vmem:[#allocation2 + $0x3a] sm:$0xff]
    %v2373 = vld [vmem:[#allocation2 + $0x42] sm:$0xff]
    %v2374 = vld [vmem:[#allocation2 + $0x4a] sm:$0xff]
    %v2375 = vld [vmem:[#allocation2 + $0x52] sm:$0xf]
    %v2376 = vpack.c.bf16 %v2368, %v2367
    %v2377 = vpack.c.bf16 %v2370, %v2369
    %v2378 = vpack.c.bf16 %v2372, %v2371
    %v2379 = vpack.c.bf16 %v2374, %v2373
    %v2380 = vpack.c.bf16 %v2375, %v2375
    %s2381 = scalar_lea.vmem [#allocation9], 960
    %v2382 = vld [vmem:[%s2381] sm:$0xf]
    %v2383 = vld [vmem:[%s2381 + $0x4] sm:$0xf]
    %v2384 = vld [vmem:[%s2381 + $0x8] sm:$0xf]
    %v2385 = vld [vmem:[%s2381 + $0xc] sm:$0xf]
    %v2386 = vld [vmem:[%s2381 + $0x10] sm:$0xf]
    %v2387 = vld [vmem:[%s2381 + $0x14] sm:$0xf]
    %v2388 = vld [vmem:[%s2381 + $0x18] sm:$0xf]
    %v2389 = vld [vmem:[%s2381 + $0x1c] sm:$0xf]
    %v2390 = vld [vmem:[%s2381 + $0x20] sm:$0xf]
    %v2391 = vld [vmem:[%s2381 + $0x24] sm:$0xf]
    %v2392 = vld [vmem:[%s2381 + $0x28] sm:$0xf]
    %v2393 = vld [vmem:[%s2381 + $0x2c] sm:$0xf]
    %v2394 = vld [vmem:[%s2381 + $0x30] sm:$0xf]
    %v2395 = vld [vmem:[%s2381 + $0x34] sm:$0xf]
    %v2396 = vld [vmem:[%s2381 + $0x38] sm:$0xf]
    %v2397 = vld [vmem:[%s2381 + $0x3c] sm:$0xf]
    %v2414 = vunpack.c.l.b16 %v2382
    %v2415 = vunpack.c.l.b16 %v2383
    %v2416 = vunpack.c.l.b16 %v2384
    %v2417 = vunpack.c.l.b16 %v2385
    %v2418 = vunpack.c.l.b16 %v2386
    %v2419 = vunpack.c.l.b16 %v2387
    %v2420 = vunpack.c.l.b16 %v2388
    %v2421 = vunpack.c.l.b16 %v2389
    %v2422 = vunpack.c.l.b16 %v2390
    %v2423 = vunpack.c.l.b16 %v2391
    %v2424 = vunpack.c.l.b16 %v2392
    %v2425 = vunpack.c.l.b16 %v2393
    %v2426 = vunpack.c.l.b16 %v2394
    %v2427 = vunpack.c.l.b16 %v2395
    %v2428 = vunpack.c.l.b16 %v2396
    %v2429 = vunpack.c.l.b16 %v2397
    %v2430 = vpack.c.b16 %v2415, %v2414
    %v2431 = vpack.c.b16 %v2417, %v2416
    %v2432 = vpack.c.b16 %v2419, %v2418
    %v2433 = vpack.c.b16 %v2421, %v2420
    %v2434 = vpack.c.b16 %v2423, %v2422
    %v2435 = vpack.c.b16 %v2425, %v2424
    %v2436 = vpack.c.b16 %v2427, %v2426
    %v2437 = vpack.c.b16 %v2429, %v2428
    %2446 = vmatpush.bf16.msra.mxu0 %v2437
    %2447 = vmatpush.bf16.msra.mxu0 %v2436
    %2448 = vmatpush.bf16.msra.mxu0 %v2435
    %2449 = vmatpush.bf16.msra.mxu0 %v2434
    %2450 = vmatpush.bf16.msra.mxu0 %v2433
    %2451 = vmatpush.bf16.msra.mxu0 %v2432
    %2452 = vmatpush.bf16.msra.mxu0 %v2431
    %2453 = vmatpush.bf16.msra.mxu0 %v2430
    %2454 = vmatmul.bf16.gmra.mxu0 %v2376
    %v2455 = vpop.f32.mrf.mxu0
    %v2456 = vadd.f32 0.0, %v2455
    %v2457 = vpop.f32.mrf.mxu0
    %v2458 = vadd.f32 0.0, %v2457
    %2459 = vmatmul.bf16.gmra.mxu0 %v2377
    %v2460 = vpop.f32.mrf.mxu0
    %v2461 = vadd.f32 0.0, %v2460
    %v2462 = vpop.f32.mrf.mxu0
    %v2463 = vadd.f32 0.0, %v2462
    %2464 = vmatmul.bf16.gmra.mxu0 %v2378
    %v2465 = vpop.f32.mrf.mxu0
    %v2466 = vadd.f32 0.0, %v2465
    %v2467 = vpop.f32.mrf.mxu0
    %v2468 = vadd.f32 0.0, %v2467
    %2469 = vmatmul.bf16.gmra.mxu0 %v2379
    %v2470 = vpop.f32.mrf.mxu0
    %v2471 = vadd.f32 0.0, %v2470
    %v2472 = vpop.f32.mrf.mxu0
    %v2473 = vadd.f32 0.0, %v2472
    %2474 = vmatmul.bf16.gmra.mxu0 %v2380
    %v2475 = vpop.f32.mrf.mxu0
    %v2476 = vadd.f32 0.0, %v2475
    %v2477 = vpop.f32.mrf.mxu0
    %2478 = vdwg.mxu0
    %v2479 = vadd.f32 %v2358, %v2456
    %v2480 = vadd.f32 %v2359, %v2458
    %v2481 = vadd.f32 %v2360, %v2461
    %v2482 = vadd.f32 %v2361, %v2463
    %v2483 = vadd.f32 %v2362, %v2466
    %v2484 = vadd.f32 %v2363, %v2468
    %v2485 = vadd.f32 %v2364, %v2471
    %v2486 = vadd.f32 %v2365, %v2473
    %v2487 = vadd.f32 %v2366, %v2476
    %v2488 = vld [vmem:[#allocation2 + $0x13] sm:$0xff]
    %v2489 = vld [vmem:[#allocation2 + $0x1b] sm:$0xff]
    %v2490 = vld [vmem:[#allocation2 + $0x23] sm:$0xff]
    %v2491 = vld [vmem:[#allocation2 + $0x2b] sm:$0xff]
    %v2492 = vld [vmem:[#allocation2 + $0x33] sm:$0xff]
    %v2493 = vld [vmem:[#allocation2 + $0x3b] sm:$0xff]
    %v2494 = vld [vmem:[#allocation2 + $0x43] sm:$0xff]
    %v2495 = vld [vmem:[#allocation2 + $0x4b] sm:$0xff]
    %v2496 = vld [vmem:[#allocation2 + $0x53] sm:$0xf]
    %v2497 = vpack.c.bf16 %v2489, %v2488
    %v2498 = vpack.c.bf16 %v2491, %v2490
    %v2499 = vpack.c.bf16 %v2493, %v2492
    %v2500 = vpack.c.bf16 %v2495, %v2494
    %v2501 = vpack.c.bf16 %v2496, %v2496
    %s2502 = scalar_lea.vmem [#allocation9], 1024
    %v2503 = vld [vmem:[%s2502] sm:$0xf]
    %v2504 = vld [vmem:[%s2502 + $0x4] sm:$0xf]
    %v2505 = vld [vmem:[%s2502 + $0x8] sm:$0xf]
    %v2506 = vld [vmem:[%s2502 + $0xc] sm:$0xf]
    %v2507 = vld [vmem:[%s2502 + $0x10] sm:$0xf]
    %v2508 = vld [vmem:[%s2502 + $0x14] sm:$0xf]
    %v2509 = vld [vmem:[%s2502 + $0x18] sm:$0xf]
    %v2510 = vld [vmem:[%s2502 + $0x1c] sm:$0xf]
    %v2511 = vld [vmem:[%s2502 + $0x20] sm:$0xf]
    %v2512 = vld [vmem:[%s2502 + $0x24] sm:$0xf]
    %v2513 = vld [vmem:[%s2502 + $0x28] sm:$0xf]
    %v2514 = vld [vmem:[%s2502 + $0x2c] sm:$0xf]
    %v2515 = vld [vmem:[%s2502 + $0x30] sm:$0xf]
    %v2516 = vld [vmem:[%s2502 + $0x34] sm:$0xf]
    %v2517 = vld [vmem:[%s2502 + $0x38] sm:$0xf]
    %v2518 = vld [vmem:[%s2502 + $0x3c] sm:$0xf]
    %v2535 = vunpack.c.l.b16 %v2503
    %v2536 = vunpack.c.l.b16 %v2504
    %v2537 = vunpack.c.l.b16 %v2505
    %v2538 = vunpack.c.l.b16 %v2506
    %v2539 = vunpack.c.l.b16 %v2507
    %v2540 = vunpack.c.l.b16 %v2508
    %v2541 = vunpack.c.l.b16 %v2509
    %v2542 = vunpack.c.l.b16 %v2510
    %v2543 = vunpack.c.l.b16 %v2511
    %v2544 = vunpack.c.l.b16 %v2512
    %v2545 = vunpack.c.l.b16 %v2513
    %v2546 = vunpack.c.l.b16 %v2514
    %v2547 = vunpack.c.l.b16 %v2515
    %v2548 = vunpack.c.l.b16 %v2516
    %v2549 = vunpack.c.l.b16 %v2517
    %v2550 = vunpack.c.l.b16 %v2518
    %v2551 = vpack.c.b16 %v2536, %v2535
    %v2552 = vpack.c.b16 %v2538, %v2537
    %v2553 = vpack.c.b16 %v2540, %v2539
    %v2554 = vpack.c.b16 %v2542, %v2541
    %v2555 = vpack.c.b16 %v2544, %v2543
    %v2556 = vpack.c.b16 %v2546, %v2545
    %v2557 = vpack.c.b16 %v2548, %v2547
    %v2558 = vpack.c.b16 %v2550, %v2549
    %2567 = vmatpush.bf16.msra.mxu0 %v2558
    %2568 = vmatpush.bf16.msra.mxu0 %v2557
    %2569 = vmatpush.bf16.msra.mxu0 %v2556
    %2570 = vmatpush.bf16.msra.mxu0 %v2555
    %2571 = vmatpush.bf16.msra.mxu0 %v2554
    %2572 = vmatpush.bf16.msra.mxu0 %v2553
    %2573 = vmatpush.bf16.msra.mxu0 %v2552
    %2574 = vmatpush.bf16.msra.mxu0 %v2551
    %2575 = vmatmul.bf16.gmra.mxu0 %v2497
    %v2576 = vpop.f32.mrf.mxu0
    %v2577 = vadd.f32 0.0, %v2576
    %v2578 = vpop.f32.mrf.mxu0
    %v2579 = vadd.f32 0.0, %v2578
    %2580 = vmatmul.bf16.gmra.mxu0 %v2498
    %v2581 = vpop.f32.mrf.mxu0
    %v2582 = vadd.f32 0.0, %v2581
    %v2583 = vpop.f32.mrf.mxu0
    %v2584 = vadd.f32 0.0, %v2583
    %2585 = vmatmul.bf16.gmra.mxu0 %v2499
    %v2586 = vpop.f32.mrf.mxu0
    %v2587 = vadd.f32 0.0, %v2586
    %v2588 = vpop.f32.mrf.mxu0
    %v2589 = vadd.f32 0.0, %v2588
    %2590 = vmatmul.bf16.gmra.mxu0 %v2500
    %v2591 = vpop.f32.mrf.mxu0
    %v2592 = vadd.f32 0.0, %v2591
    %v2593 = vpop.f32.mrf.mxu0
    %v2594 = vadd.f32 0.0, %v2593
    %2595 = vmatmul.bf16.gmra.mxu0 %v2501
    %v2596 = vpop.f32.mrf.mxu0
    %v2597 = vadd.f32 0.0, %v2596
    %v2598 = vpop.f32.mrf.mxu0
    %2599 = vdwg.mxu0
    %v2600 = vadd.f32 %v2479, %v2577
    %v2601 = vadd.f32 %v2480, %v2579
    %v2602 = vadd.f32 %v2481, %v2582
    %v2603 = vadd.f32 %v2482, %v2584
    %v2604 = vadd.f32 %v2483, %v2587
    %v2605 = vadd.f32 %v2484, %v2589
    %v2606 = vadd.f32 %v2485, %v2592
    %v2607 = vadd.f32 %v2486, %v2594
    %v2608 = vadd.f32 %v2487, %v2597
    %v2609 = vld [vmem:[#allocation2 + $0x14] sm:$0xff]
    %v2610 = vld [vmem:[#allocation2 + $0x1c] sm:$0xff]
    %v2611 = vld [vmem:[#allocation2 + $0x24] sm:$0xff]
    %v2612 = vld [vmem:[#allocation2 + $0x2c] sm:$0xff]
    %v2613 = vld [vmem:[#allocation2 + $0x34] sm:$0xff]
    %v2614 = vld [vmem:[#allocation2 + $0x3c] sm:$0xff]
    %v2615 = vld [vmem:[#allocation2 + $0x44] sm:$0xff]
    %v2616 = vld [vmem:[#allocation2 + $0x4c] sm:$0xff]
    %v2617 = vld [vmem:[#allocation2 + $0x54] sm:$0xf]
    %v2618 = vpack.c.bf16 %v2610, %v2609
    %v2619 = vpack.c.bf16 %v2612, %v2611
    %v2620 = vpack.c.bf16 %v2614, %v2613
    %v2621 = vpack.c.bf16 %v2616, %v2615
    %v2622 = vpack.c.bf16 %v2617, %v2617
    %s2623 = scalar_lea.vmem [#allocation9], 1088
    %v2624 = vld [vmem:[%s2623] sm:$0xf]
    %v2625 = vld [vmem:[%s2623 + $0x4] sm:$0xf]
    %v2626 = vld [vmem:[%s2623 + $0x8] sm:$0xf]
    %v2627 = vld [vmem:[%s2623 + $0xc] sm:$0xf]
    %v2628 = vld [vmem:[%s2623 + $0x10] sm:$0xf]
    %v2629 = vld [vmem:[%s2623 + $0x14] sm:$0xf]
    %v2630 = vld [vmem:[%s2623 + $0x18] sm:$0xf]
    %v2631 = vld [vmem:[%s2623 + $0x1c] sm:$0xf]
    %v2632 = vld [vmem:[%s2623 + $0x20] sm:$0xf]
    %v2633 = vld [vmem:[%s2623 + $0x24] sm:$0xf]
    %v2634 = vld [vmem:[%s2623 + $0x28] sm:$0xf]
    %v2635 = vld [vmem:[%s2623 + $0x2c] sm:$0xf]
    %v2636 = vld [vmem:[%s2623 + $0x30] sm:$0xf]
    %v2637 = vld [vmem:[%s2623 + $0x34] sm:$0xf]
    %v2638 = vld [vmem:[%s2623 + $0x38] sm:$0xf]
    %v2639 = vld [vmem:[%s2623 + $0x3c] sm:$0xf]
    %v2656 = vunpack.c.l.b16 %v2624
    %v2657 = vunpack.c.l.b16 %v2625
    %v2658 = vunpack.c.l.b16 %v2626
    %v2659 = vunpack.c.l.b16 %v2627
    %v2660 = vunpack.c.l.b16 %v2628
    %v2661 = vunpack.c.l.b16 %v2629
    %v2662 = vunpack.c.l.b16 %v2630
    %v2663 = vunpack.c.l.b16 %v2631
    %v2664 = vunpack.c.l.b16 %v2632
    %v2665 = vunpack.c.l.b16 %v2633
    %v2666 = vunpack.c.l.b16 %v2634
    %v2667 = vunpack.c.l.b16 %v2635
    %v2668 = vunpack.c.l.b16 %v2636
    %v2669 = vunpack.c.l.b16 %v2637
    %v2670 = vunpack.c.l.b16 %v2638
    %v2671 = vunpack.c.l.b16 %v2639
    %v2672 = vpack.c.b16 %v2657, %v2656
    %v2673 = vpack.c.b16 %v2659, %v2658
    %v2674 = vpack.c.b16 %v2661, %v2660
    %v2675 = vpack.c.b16 %v2663, %v2662
    %v2676 = vpack.c.b16 %v2665, %v2664
    %v2677 = vpack.c.b16 %v2667, %v2666
    %v2678 = vpack.c.b16 %v2669, %v2668
    %v2679 = vpack.c.b16 %v2671, %v2670
    %2688 = vmatpush.bf16.msra.mxu0 %v2679
    %2689 = vmatpush.bf16.msra.mxu0 %v2678
    %2690 = vmatpush.bf16.msra.mxu0 %v2677
    %2691 = vmatpush.bf16.msra.mxu0 %v2676
    %2692 = vmatpush.bf16.msra.mxu0 %v2675
    %2693 = vmatpush.bf16.msra.mxu0 %v2674
    %2694 = vmatpush.bf16.msra.mxu0 %v2673
    %2695 = vmatpush.bf16.msra.mxu0 %v2672
    %2696 = vmatmul.bf16.gmra.mxu0 %v2618
    %v2697 = vpop.f32.mrf.mxu0
    %v2698 = vadd.f32 0.0, %v2697
    %v2699 = vpop.f32.mrf.mxu0
    %v2700 = vadd.f32 0.0, %v2699
    %2701 = vmatmul.bf16.gmra.mxu0 %v2619
    %v2702 = vpop.f32.mrf.mxu0
    %v2703 = vadd.f32 0.0, %v2702
    %v2704 = vpop.f32.mrf.mxu0
    %v2705 = vadd.f32 0.0, %v2704
    %2706 = vmatmul.bf16.gmra.mxu0 %v2620
    %v2707 = vpop.f32.mrf.mxu0
    %v2708 = vadd.f32 0.0, %v2707
    %v2709 = vpop.f32.mrf.mxu0
    %v2710 = vadd.f32 0.0, %v2709
    %2711 = vmatmul.bf16.gmra.mxu0 %v2621
    %v2712 = vpop.f32.mrf.mxu0
    %v2713 = vadd.f32 0.0, %v2712
    %v2714 = vpop.f32.mrf.mxu0
    %v2715 = vadd.f32 0.0, %v2714
    %2716 = vmatmul.bf16.gmra.mxu0 %v2622
    %v2717 = vpop.f32.mrf.mxu0
    %v2718 = vadd.f32 0.0, %v2717
    %v2719 = vpop.f32.mrf.mxu0
    %2720 = vdwg.mxu0
    %v2721 = vadd.f32 %v2600, %v2698
    %v2722 = vadd.f32 %v2601, %v2700
    %v2723 = vadd.f32 %v2602, %v2703
    %v2724 = vadd.f32 %v2603, %v2705
    %v2725 = vadd.f32 %v2604, %v2708
    %v2726 = vadd.f32 %v2605, %v2710
    %v2727 = vadd.f32 %v2606, %v2713
    %v2728 = vadd.f32 %v2607, %v2715
    %v2729 = vadd.f32 %v2608, %v2718
    %v2730 = vld [vmem:[#allocation2 + $0x15] sm:$0xff]
    %v2731 = vld [vmem:[#allocation2 + $0x1d] sm:$0xff]
    %v2732 = vld [vmem:[#allocation2 + $0x25] sm:$0xff]
    %v2733 = vld [vmem:[#allocation2 + $0x2d] sm:$0xff]
    %v2734 = vld [vmem:[#allocation2 + $0x35] sm:$0xff]
    %v2735 = vld [vmem:[#allocation2 + $0x3d] sm:$0xff]
    %v2736 = vld [vmem:[#allocation2 + $0x45] sm:$0xff]
    %v2737 = vld [vmem:[#allocation2 + $0x4d] sm:$0xff]
    %v2738 = vld [vmem:[#allocation2 + $0x55] sm:$0xf]
    %v2739 = vpack.c.bf16 %v2731, %v2730
    %v2740 = vpack.c.bf16 %v2733, %v2732
    %v2741 = vpack.c.bf16 %v2735, %v2734
    %v2742 = vpack.c.bf16 %v2737, %v2736
    %v2743 = vpack.c.bf16 %v2738, %v2738
    %s2744 = scalar_lea.vmem [#allocation9], 1152
    %v2745 = vld [vmem:[%s2744] sm:$0xf]
    %v2746 = vld [vmem:[%s2744 + $0x4] sm:$0xf]
    %v2747 = vld [vmem:[%s2744 + $0x8] sm:$0xf]
    %v2748 = vld [vmem:[%s2744 + $0xc] sm:$0xf]
    %v2749 = vld [vmem:[%s2744 + $0x10] sm:$0xf]
    %v2750 = vld [vmem:[%s2744 + $0x14] sm:$0xf]
    %v2751 = vld [vmem:[%s2744 + $0x18] sm:$0xf]
    %v2752 = vld [vmem:[%s2744 + $0x1c] sm:$0xf]
    %v2753 = vld [vmem:[%s2744 + $0x20] sm:$0xf]
    %v2754 = vld [vmem:[%s2744 + $0x24] sm:$0xf]
    %v2755 = vld [vmem:[%s2744 + $0x28] sm:$0xf]
    %v2756 = vld [vmem:[%s2744 + $0x2c] sm:$0xf]
    %v2757 = vld [vmem:[%s2744 + $0x30] sm:$0xf]
    %v2758 = vld [vmem:[%s2744 + $0x34] sm:$0xf]
    %v2759 = vld [vmem:[%s2744 + $0x38] sm:$0xf]
    %v2760 = vld [vmem:[%s2744 + $0x3c] sm:$0xf]
    %v2777 = vunpack.c.l.b16 %v2745
    %v2778 = vunpack.c.l.b16 %v2746
    %v2779 = vunpack.c.l.b16 %v2747
    %v2780 = vunpack.c.l.b16 %v2748
    %v2781 = vunpack.c.l.b16 %v2749
    %v2782 = vunpack.c.l.b16 %v2750
    %v2783 = vunpack.c.l.b16 %v2751
    %v2784 = vunpack.c.l.b16 %v2752
    %v2785 = vunpack.c.l.b16 %v2753
    %v2786 = vunpack.c.l.b16 %v2754
    %v2787 = vunpack.c.l.b16 %v2755
    %v2788 = vunpack.c.l.b16 %v2756
    %v2789 = vunpack.c.l.b16 %v2757
    %v2790 = vunpack.c.l.b16 %v2758
    %v2791 = vunpack.c.l.b16 %v2759
    %v2792 = vunpack.c.l.b16 %v2760
    %v2793 = vpack.c.b16 %v2778, %v2777
    %v2794 = vpack.c.b16 %v2780, %v2779
    %v2795 = vpack.c.b16 %v2782, %v2781
    %v2796 = vpack.c.b16 %v2784, %v2783
    %v2797 = vpack.c.b16 %v2786, %v2785
    %v2798 = vpack.c.b16 %v2788, %v2787
    %v2799 = vpack.c.b16 %v2790, %v2789
    %v2800 = vpack.c.b16 %v2792, %v2791
    %2809 = vmatpush.bf16.msra.mxu0 %v2800
    %2810 = vmatpush.bf16.msra.mxu0 %v2799
    %2811 = vmatpush.bf16.msra.mxu0 %v2798
    %2812 = vmatpush.bf16.msra.mxu0 %v2797
    %2813 = vmatpush.bf16.msra.mxu0 %v2796
    %2814 = vmatpush.bf16.msra.mxu0 %v2795
    %2815 = vmatpush.bf16.msra.mxu0 %v2794
    %2816 = vmatpush.bf16.msra.mxu0 %v2793
    %2817 = vmatmul.bf16.gmra.mxu0 %v2739
    %v2818 = vpop.f32.mrf.mxu0
    %v2819 = vadd.f32 0.0, %v2818
    %v2820 = vpop.f32.mrf.mxu0
    %v2821 = vadd.f32 0.0, %v2820
    %2822 = vmatmul.bf16.gmra.mxu0 %v2740
    %v2823 = vpop.f32.mrf.mxu0
    %v2824 = vadd.f32 0.0, %v2823
    %v2825 = vpop.f32.mrf.mxu0
    %v2826 = vadd.f32 0.0, %v2825
    %2827 = vmatmul.bf16.gmra.mxu0 %v2741
    %v2828 = vpop.f32.mrf.mxu0
    %v2829 = vadd.f32 0.0, %v2828
    %v2830 = vpop.f32.mrf.mxu0
    %v2831 = vadd.f32 0.0, %v2830
    %2832 = vmatmul.bf16.gmra.mxu0 %v2742
    %v2833 = vpop.f32.mrf.mxu0
    %v2834 = vadd.f32 0.0, %v2833
    %v2835 = vpop.f32.mrf.mxu0
    %v2836 = vadd.f32 0.0, %v2835
    %2837 = vmatmul.bf16.gmra.mxu0 %v2743
    %v2838 = vpop.f32.mrf.mxu0
    %v2839 = vadd.f32 0.0, %v2838
    %v2840 = vpop.f32.mrf.mxu0
    %2841 = vdwg.mxu0
    %v2842 = vadd.f32 %v2721, %v2819
    %v2843 = vadd.f32 %v2722, %v2821
    %v2844 = vadd.f32 %v2723, %v2824
    %v2845 = vadd.f32 %v2724, %v2826
    %v2846 = vadd.f32 %v2725, %v2829
    %v2847 = vadd.f32 %v2726, %v2831
    %v2848 = vadd.f32 %v2727, %v2834
    %v2849 = vadd.f32 %v2728, %v2836
    %v2850 = vadd.f32 %v2729, %v2839
    %v2851 = vld [vmem:[#allocation2 + $0x16] sm:$0xff]
    %v2852 = vld [vmem:[#allocation2 + $0x1e] sm:$0xff]
    %v2853 = vld [vmem:[#allocation2 + $0x26] sm:$0xff]
    %v2854 = vld [vmem:[#allocation2 + $0x2e] sm:$0xff]
    %v2855 = vld [vmem:[#allocation2 + $0x36] sm:$0xff]
    %v2856 = vld [vmem:[#allocation2 + $0x3e] sm:$0xff]
    %v2857 = vld [vmem:[#allocation2 + $0x46] sm:$0xff]
    %v2858 = vld [vmem:[#allocation2 + $0x4e] sm:$0xff]
    %v2859 = vld [vmem:[#allocation2 + $0x56] sm:$0xf]
    %v2860 = vpack.c.bf16 %v2852, %v2851
    %v2861 = vpack.c.bf16 %v2854, %v2853
    %v2862 = vpack.c.bf16 %v2856, %v2855
    %v2863 = vpack.c.bf16 %v2858, %v2857
    %v2864 = vpack.c.bf16 %v2859, %v2859
    %s2865 = scalar_lea.vmem [#allocation9], 1216
    %v2866 = vld [vmem:[%s2865] sm:$0xf]
    %v2867 = vld [vmem:[%s2865 + $0x4] sm:$0xf]
    %v2868 = vld [vmem:[%s2865 + $0x8] sm:$0xf]
    %v2869 = vld [vmem:[%s2865 + $0xc] sm:$0xf]
    %v2870 = vld [vmem:[%s2865 + $0x10] sm:$0xf]
    %v2871 = vld [vmem:[%s2865 + $0x14] sm:$0xf]
    %v2872 = vld [vmem:[%s2865 + $0x18] sm:$0xf]
    %v2873 = vld [vmem:[%s2865 + $0x1c] sm:$0xf]
    %v2874 = vld [vmem:[%s2865 + $0x20] sm:$0xf]
    %v2875 = vld [vmem:[%s2865 + $0x24] sm:$0xf]
    %v2876 = vld [vmem:[%s2865 + $0x28] sm:$0xf]
    %v2877 = vld [vmem:[%s2865 + $0x2c] sm:$0xf]
    %v2878 = vld [vmem:[%s2865 + $0x30] sm:$0xf]
    %v2879 = vld [vmem:[%s2865 + $0x34] sm:$0xf]
    %v2880 = vld [vmem:[%s2865 + $0x38] sm:$0xf]
    %v2881 = vld [vmem:[%s2865 + $0x3c] sm:$0xf]
    %v2898 = vunpack.c.l.b16 %v2866
    %v2899 = vunpack.c.l.b16 %v2867
    %v2900 = vunpack.c.l.b16 %v2868
    %v2901 = vunpack.c.l.b16 %v2869
    %v2902 = vunpack.c.l.b16 %v2870
    %v2903 = vunpack.c.l.b16 %v2871
    %v2904 = vunpack.c.l.b16 %v2872
    %v2905 = vunpack.c.l.b16 %v2873
    %v2906 = vunpack.c.l.b16 %v2874
    %v2907 = vunpack.c.l.b16 %v2875
    %v2908 = vunpack.c.l.b16 %v2876
    %v2909 = vunpack.c.l.b16 %v2877
    %v2910 = vunpack.c.l.b16 %v2878
    %v2911 = vunpack.c.l.b16 %v2879
    %v2912 = vunpack.c.l.b16 %v2880
    %v2913 = vunpack.c.l.b16 %v2881
    %v2914 = vpack.c.b16 %v2899, %v2898
    %v2915 = vpack.c.b16 %v2901, %v2900
    %v2916 = vpack.c.b16 %v2903, %v2902
    %v2917 = vpack.c.b16 %v2905, %v2904
    %v2918 = vpack.c.b16 %v2907, %v2906
    %v2919 = vpack.c.b16 %v2909, %v2908
    %v2920 = vpack.c.b16 %v2911, %v2910
    %v2921 = vpack.c.b16 %v2913, %v2912
    %2930 = vmatpush.bf16.msra.mxu0 %v2921
    %2931 = vmatpush.bf16.msra.mxu0 %v2920
    %2932 = vmatpush.bf16.msra.mxu0 %v2919
    %2933 = vmatpush.bf16.msra.mxu0 %v2918
    %2934 = vmatpush.bf16.msra.mxu0 %v2917
    %2935 = vmatpush.bf16.msra.mxu0 %v2916
    %2936 = vmatpush.bf16.msra.mxu0 %v2915
    %2937 = vmatpush.bf16.msra.mxu0 %v2914
    %2938 = vmatmul.bf16.gmra.mxu0 %v2860
    %v2939 = vpop.f32.mrf.mxu0
    %v2940 = vadd.f32 0.0, %v2939
    %v2941 = vpop.f32.mrf.mxu0
    %v2942 = vadd.f32 0.0, %v2941
    %2943 = vmatmul.bf16.gmra.mxu0 %v2861
    %v2944 = vpop.f32.mrf.mxu0
    %v2945 = vadd.f32 0.0, %v2944
    %v2946 = vpop.f32.mrf.mxu0
    %v2947 = vadd.f32 0.0, %v2946
    %2948 = vmatmul.bf16.gmra.mxu0 %v2862
    %v2949 = vpop.f32.mrf.mxu0
    %v2950 = vadd.f32 0.0, %v2949
    %v2951 = vpop.f32.mrf.mxu0
    %v2952 = vadd.f32 0.0, %v2951
    %2953 = vmatmul.bf16.gmra.mxu0 %v2863
    %v2954 = vpop.f32.mrf.mxu0
    %v2955 = vadd.f32 0.0, %v2954
    %v2956 = vpop.f32.mrf.mxu0
    %v2957 = vadd.f32 0.0, %v2956
    %2958 = vmatmul.bf16.gmra.mxu0 %v2864
    %v2959 = vpop.f32.mrf.mxu0
    %v2960 = vadd.f32 0.0, %v2959
    %v2961 = vpop.f32.mrf.mxu0
    %2962 = vdwg.mxu0
    %v2963 = vadd.f32 %v2842, %v2940
    %v2964 = vadd.f32 %v2843, %v2942
    %v2965 = vadd.f32 %v2844, %v2945
    %v2966 = vadd.f32 %v2845, %v2947
    %v2967 = vadd.f32 %v2846, %v2950
    %v2968 = vadd.f32 %v2847, %v2952
    %v2969 = vadd.f32 %v2848, %v2955
    %v2970 = vadd.f32 %v2849, %v2957
    %v2971 = vadd.f32 %v2850, %v2960
    %v2972 = vld [vmem:[#allocation2 + $0x17] sm:$0xff]
    %v2973 = vld [vmem:[#allocation2 + $0x1f] sm:$0xff]
    %v2974 = vld [vmem:[#allocation2 + $0x27] sm:$0xff]
    %v2975 = vld [vmem:[#allocation2 + $0x2f] sm:$0xff]
    %v2976 = vld [vmem:[#allocation2 + $0x37] sm:$0xff]
    %v2977 = vld [vmem:[#allocation2 + $0x3f] sm:$0xff]
    %v2978 = vld [vmem:[#allocation2 + $0x47] sm:$0xff]
    %v2979 = vld [vmem:[#allocation2 + $0x4f] sm:$0xff]
    %v2980 = vld [vmem:[#allocation2 + $0x57] sm:$0xf]
    %v2981 = vpack.c.bf16 %v2973, %v2972
    %v2982 = vpack.c.bf16 %v2975, %v2974
    %v2983 = vpack.c.bf16 %v2977, %v2976
    %v2984 = vpack.c.bf16 %v2979, %v2978
    %v2985 = vpack.c.bf16 %v2980, %v2980
    %s2986 = scalar_lea.vmem [#allocation9], 1280
    %v2987 = vld [vmem:[%s2986] sm:$0xf]
    %v2988 = vld [vmem:[%s2986 + $0x4] sm:$0xf]
    %v2989 = vld [vmem:[%s2986 + $0x8] sm:$0xf]
    %v2990 = vld [vmem:[%s2986 + $0xc] sm:$0xf]
    %v2991 = vld [vmem:[%s2986 + $0x10] sm:$0xf]
    %v2992 = vld [vmem:[%s2986 + $0x14] sm:$0xf]
    %v2993 = vld [vmem:[%s2986 + $0x18] sm:$0xf]
    %v2994 = vld [vmem:[%s2986 + $0x1c] sm:$0xf]
    %v2995 = vld [vmem:[%s2986 + $0x20] sm:$0xf]
    %v2996 = vld [vmem:[%s2986 + $0x24] sm:$0xf]
    %v2997 = vld [vmem:[%s2986 + $0x28] sm:$0xf]
    %v2998 = vld [vmem:[%s2986 + $0x2c] sm:$0xf]
    %v2999 = vld [vmem:[%s2986 + $0x30] sm:$0xf]
    %v3000 = vld [vmem:[%s2986 + $0x34] sm:$0xf]
    %v3001 = vld [vmem:[%s2986 + $0x38] sm:$0xf]
    %v3002 = vld [vmem:[%s2986 + $0x3c] sm:$0xf]
    %v3019 = vunpack.c.l.b16 %v2987
    %v3020 = vunpack.c.l.b16 %v2988
    %v3021 = vunpack.c.l.b16 %v2989
    %v3022 = vunpack.c.l.b16 %v2990
    %v3023 = vunpack.c.l.b16 %v2991
    %v3024 = vunpack.c.l.b16 %v2992
    %v3025 = vunpack.c.l.b16 %v2993
    %v3026 = vunpack.c.l.b16 %v2994
    %v3027 = vunpack.c.l.b16 %v2995
    %v3028 = vunpack.c.l.b16 %v2996
    %v3029 = vunpack.c.l.b16 %v2997
    %v3030 = vunpack.c.l.b16 %v2998
    %v3031 = vunpack.c.l.b16 %v2999
    %v3032 = vunpack.c.l.b16 %v3000
    %v3033 = vunpack.c.l.b16 %v3001
    %v3034 = vunpack.c.l.b16 %v3002
    %v3035 = vpack.c.b16 %v3020, %v3019
    %v3036 = vpack.c.b16 %v3022, %v3021
    %v3037 = vpack.c.b16 %v3024, %v3023
    %v3038 = vpack.c.b16 %v3026, %v3025
    %v3039 = vpack.c.b16 %v3028, %v3027
    %v3040 = vpack.c.b16 %v3030, %v3029
    %v3041 = vpack.c.b16 %v3032, %v3031
    %v3042 = vpack.c.b16 %v3034, %v3033
    %3051 = vmatpush.bf16.msra.mxu0 %v3042
    %3052 = vmatpush.bf16.msra.mxu0 %v3041
    %3053 = vmatpush.bf16.msra.mxu0 %v3040
    %3054 = vmatpush.bf16.msra.mxu0 %v3039
    %3055 = vmatpush.bf16.msra.mxu0 %v3038
    %3056 = vmatpush.bf16.msra.mxu0 %v3037
    %3057 = vmatpush.bf16.msra.mxu0 %v3036
    %3058 = vmatpush.bf16.msra.mxu0 %v3035
    %3059 = vmatmul.bf16.gmra.mxu0 %v2981
    %v3060 = vpop.f32.mrf.mxu0
    %v3061 = vadd.f32 0.0, %v3060
    %v3062 = vpop.f32.mrf.mxu0
    %v3063 = vadd.f32 0.0, %v3062
    %3064 = vmatmul.bf16.gmra.mxu0 %v2982
    %v3065 = vpop.f32.mrf.mxu0
    %v3066 = vadd.f32 0.0, %v3065
    %v3067 = vpop.f32.mrf.mxu0
    %v3068 = vadd.f32 0.0, %v3067
    %3069 = vmatmul.bf16.gmra.mxu0 %v2983
    %v3070 = vpop.f32.mrf.mxu0
    %v3071 = vadd.f32 0.0, %v3070
    %v3072 = vpop.f32.mrf.mxu0
    %v3073 = vadd.f32 0.0, %v3072
    %3074 = vmatmul.bf16.gmra.mxu0 %v2984
    %v3075 = vpop.f32.mrf.mxu0
    %v3076 = vadd.f32 0.0, %v3075
    %v3077 = vpop.f32.mrf.mxu0
    %v3078 = vadd.f32 0.0, %v3077
    %3079 = vmatmul.bf16.gmra.mxu0 %v2985
    %v3080 = vpop.f32.mrf.mxu0
    %v3081 = vadd.f32 0.0, %v3080
    %v3082 = vpop.f32.mrf.mxu0
    %3083 = vdwg.mxu0
    %v3084 = vadd.f32 %v2963, %v3061
    %v3085 = vadd.f32 %v2964, %v3063
    %v3086 = vadd.f32 %v2965, %v3066
    %v3087 = vadd.f32 %v2966, %v3068
    %v3088 = vadd.f32 %v2967, %v3071
    %v3089 = vadd.f32 %v2968, %v3073
    %v3090 = vadd.f32 %v2969, %v3076
    %v3091 = vadd.f32 %v2970, %v3078
    %v3092 = vadd.f32 %v2971, %v3081
    %v3093 = vld [vmem:[%s4] sm:$0x1]
    %v3095 = vperm.slane %v3093, 0
    %v3097 = vadd.f32 %v3084, %v3095
    %v3098 = vadd.f32 %v3085, %v3095
    %v3099 = vadd.f32 %v3086, %v3095
    %v3100 = vadd.f32 %v3087, %v3095
    %v3101 = vadd.f32 %v3088, %v3095
    %v3102 = vadd.f32 %v3089, %v3095
    %v3103 = vadd.f32 %v3090, %v3095
    %v3104 = vadd.f32 %v3091, %v3095
    %v3105 = vadd.f32 %v3092, %v3095
    %v3106 = vmax.f32 %v3097, 0.0
    %v3107 = vmax.f32 %v3098, 0.0
    %v3108 = vmax.f32 %v3099, 0.0
    %v3109 = vmax.f32 %v3100, 0.0
    %v3110 = vmax.f32 %v3101, 0.0
    %v3111 = vmax.f32 %v3102, 0.0
    %v3112 = vmax.f32 %v3103, 0.0
    %v3113 = vmax.f32 %v3104, 0.0
    %v3114 = vmax.f32 %v3105, 0.0
    %3115 = vst [vmem:[#allocation3] sm:$0xff] %v3106
    %3116 = vst [vmem:[#allocation3 + $0x8] sm:$0xff] %v3107
    %3117 = vst [vmem:[#allocation3 + $0x10] sm:$0xff] %v3108
    %3118 = vst [vmem:[#allocation3 + $0x18] sm:$0xff] %v3109
    %3119 = vst [vmem:[#allocation3 + $0x20] sm:$0xff] %v3110
    %3120 = vst [vmem:[#allocation3 + $0x28] sm:$0xff] %v3111
    %3121 = vst [vmem:[#allocation3 + $0x30] sm:$0xff] %v3112
    %3122 = vst [vmem:[#allocation3 + $0x38] sm:$0xff] %v3113
    %3123 = vst [vmem:[#allocation3 + $0x40] sm:$0xf] %v3114
    %v3124 = vld [vmem:[#allocation3] ss:$2 sm:$0xff]
    %s3125 = scalar_lea.vmem [#allocation3], 16
    %v3126 = vld [vmem:[%s3125] ss:$2 sm:$0xff]
    %s3127 = scalar_lea.vmem [#allocation3], 32
    %v3128 = vld [vmem:[%s3127] ss:$2 sm:$0xff]
    %s3129 = scalar_lea.vmem [#allocation3], 48
    %v3130 = vld [vmem:[%s3129] ss:$2 sm:$0xff]
    %s3131 = scalar_lea.vmem [#allocation3], 64
    %v3132 = vld [vmem:[%s3131] ss:$2 sm:$0x3]
    %s3133 = scalar_lea.vmem [#allocation3], 1
    %v3134 = vld [vmem:[%s3133] ss:$2 sm:$0xff]
    %s3135 = scalar_lea.vmem [#allocation3], 17
    %v3136 = vld [vmem:[%s3135] ss:$2 sm:$0xff]
    %s3137 = scalar_lea.vmem [#allocation3], 33
    %v3138 = vld [vmem:[%s3137] ss:$2 sm:$0xff]
    %s3139 = scalar_lea.vmem [#allocation3], 49
    %v3140 = vld [vmem:[%s3139] ss:$2 sm:$0xff]
    %s3141 = scalar_lea.vmem [#allocation3], 65
    %v3142 = vld [vmem:[%s3141] ss:$2 sm:$0x3]
    %v3143 = vmax.f32 %v3124, %v3134
    %v3144 = vmax.f32 %v3126, %v3136
    %v3145 = vmax.f32 %v3128, %v3138
    %v3146 = vmax.f32 %v3130, %v3140
    %v3147 = vmax.f32 %v3132, %v3142
    %3148 = vst [vmem:[#allocation4] sm:$0xff] %v3143
    %3149 = vst [vmem:[#allocation4 + $0x8] sm:$0xff] %v3144
    %3150 = vst [vmem:[#allocation4 + $0x10] sm:$0xff] %v3145
    %3151 = vst [vmem:[#allocation4 + $0x18] sm:$0xff] %v3146
    %3152 = vst [vmem:[#allocation4 + $0x20] sm:$0x3] %v3147
    %v3153 = vld [vmem:[#allocation4] sm:$0xff]
    %v3154 = vld [vmem:[#allocation4 + $0x8] sm:$0xff]
    %v3155 = vld [vmem:[#allocation4 + $0x10] sm:$0xff]
    %v3156 = vld [vmem:[#allocation4 + $0x18] sm:$0x3f]
    %v3157 = vpack.c.bf16 %v3154, %v3153
    %v3158 = vpack.c.bf16 %v3156, %v3155
    %v3159 = vld [vmem:[#allocation12] sm:$0xf]
    %v3160 = vld [vmem:[#allocation12 + $0x4] sm:$0xf]
    %v3161 = vld [vmem:[#allocation12 + $0x8] sm:$0xf]
    %v3162 = vld [vmem:[#allocation12 + $0xc] sm:$0xf]
    %v3163 = vld [vmem:[#allocation12 + $0x10] sm:$0xf]
    %v3164 = vld [vmem:[#allocation12 + $0x14] sm:$0xf]
    %v3165 = vld [vmem:[#allocation12 + $0x18] sm:$0xf]
    %v3166 = vld [vmem:[#allocation12 + $0x1c] sm:$0xf]
    %v3167 = vld [vmem:[#allocation12 + $0x20] sm:$0xf]
    %v3168 = vld [vmem:[#allocation12 + $0x24] sm:$0xf]
    %v3169 = vld [vmem:[#allocation12 + $0x28] sm:$0xf]
    %v3170 = vld [vmem:[#allocation12 + $0x2c] sm:$0xf]
    %v3171 = vld [vmem:[#allocation12 + $0x30] sm:$0xf]
    %v3172 = vld [vmem:[#allocation12 + $0x34] sm:$0xf]
    %v3173 = vld [vmem:[#allocation12 + $0x38] sm:$0xf]
    %v3174 = vld [vmem:[#allocation12 + $0x3c] sm:$0xf]
    %v3175 = vld [vmem:[#allocation4 + $0x1] sm:$0xff]
    %v3176 = vld [vmem:[#allocation4 + $0x9] sm:$0xff]
    %v3177 = vld [vmem:[#allocation4 + $0x11] sm:$0xff]
    %v3178 = vld [vmem:[#allocation4 + $0x19] sm:$0x3f]
    %v3179 = vpack.c.bf16 %v3176, %v3175
    %v3180 = vpack.c.bf16 %v3178, %v3177
    %s3181 = scalar_lea.vmem [#allocation12], 64
    %v3182 = vld [vmem:[%s3181] sm:$0xf]
    %v3183 = vld [vmem:[%s3181 + $0x4] sm:$0xf]
    %v3184 = vld [vmem:[%s3181 + $0x8] sm:$0xf]
    %v3185 = vld [vmem:[%s3181 + $0xc] sm:$0xf]
    %v3186 = vld [vmem:[%s3181 + $0x10] sm:$0xf]
    %v3187 = vld [vmem:[%s3181 + $0x14] sm:$0xf]
    %v3188 = vld [vmem:[%s3181 + $0x18] sm:$0xf]
    %v3189 = vld [vmem:[%s3181 + $0x1c] sm:$0xf]
    %v3190 = vld [vmem:[%s3181 + $0x20] sm:$0xf]
    %v3191 = vld [vmem:[%s3181 + $0x24] sm:$0xf]
    %v3192 = vld [vmem:[%s3181 + $0x28] sm:$0xf]
    %v3193 = vld [vmem:[%s3181 + $0x2c] sm:$0xf]
    %v3194 = vld [vmem:[%s3181 + $0x30] sm:$0xf]
    %v3195 = vld [vmem:[%s3181 + $0x34] sm:$0xf]
    %v3196 = vld [vmem:[%s3181 + $0x38] sm:$0xf]
    %v3197 = vld [vmem:[%s3181 + $0x3c] sm:$0xf]
    %v3214 = vunpack.c.l.b16 %v3182
    %v3215 = vunpack.c.l.b16 %v3183
    %v3216 = vunpack.c.l.b16 %v3184
    %v3217 = vunpack.c.l.b16 %v3185
    %v3218 = vunpack.c.l.b16 %v3186
    %v3219 = vunpack.c.l.b16 %v3187
    %v3220 = vunpack.c.l.b16 %v3188
    %v3221 = vunpack.c.l.b16 %v3189
    %v3222 = vunpack.c.l.b16 %v3190
    %v3223 = vunpack.c.l.b16 %v3191
    %v3224 = vunpack.c.l.b16 %v3192
    %v3225 = vunpack.c.l.b16 %v3193
    %v3226 = vunpack.c.l.b16 %v3194
    %v3227 = vunpack.c.l.b16 %v3195
    %v3228 = vunpack.c.l.b16 %v3196
    %v3229 = vunpack.c.l.b16 %v3197
    %v3230 = vpack.c.b16 %v3215, %v3214
    %v3231 = vpack.c.b16 %v3217, %v3216
    %v3232 = vpack.c.b16 %v3219, %v3218
    %v3233 = vpack.c.b16 %v3221, %v3220
    %v3234 = vpack.c.b16 %v3223, %v3222
    %v3235 = vpack.c.b16 %v3225, %v3224
    %v3236 = vpack.c.b16 %v3227, %v3226
    %v3237 = vpack.c.b16 %v3229, %v3228
    %3246 = vmatpush.bf16.msra.mxu0 %v3237
    %3247 = vmatpush.bf16.msra.mxu0 %v3236
    %3248 = vmatpush.bf16.msra.mxu0 %v3235
    %3249 = vmatpush.bf16.msra.mxu0 %v3234
    %3250 = vmatpush.bf16.msra.mxu0 %v3233
    %3251 = vmatpush.bf16.msra.mxu0 %v3232
    %3252 = vmatpush.bf16.msra.mxu0 %v3231
    %3253 = vmatpush.bf16.msra.mxu0 %v3230
    %3254 = vmatmul.bf16.gmra.mxu0 %v3179
    %v3255 = vpop.f32.mrf.mxu0
    %v3256 = vadd.f32 0.0, %v3255
    %v3257 = vpop.f32.mrf.mxu0
    %v3258 = vadd.f32 0.0, %v3257
    %3259 = vmatmul.bf16.gmra.mxu0 %v3180
    %v3260 = vpop.f32.mrf.mxu0
    %v3261 = vadd.f32 0.0, %v3260
    %v3262 = vpop.f32.mrf.mxu0
    %v3263 = vadd.f32 0.0, %v3262
    %3264 = vdwg.mxu0
    %v3281 = vunpack.c.l.b16 %v3159
    %v3282 = vunpack.c.l.b16 %v3160
    %v3283 = vunpack.c.l.b16 %v3161
    %v3284 = vunpack.c.l.b16 %v3162
    %v3285 = vunpack.c.l.b16 %v3163
    %v3286 = vunpack.c.l.b16 %v3164
    %v3287 = vunpack.c.l.b16 %v3165
    %v3288 = vunpack.c.l.b16 %v3166
    %v3289 = vunpack.c.l.b16 %v3167
    %v3290 = vunpack.c.l.b16 %v3168
    %v3291 = vunpack.c.l.b16 %v3169
    %v3292 = vunpack.c.l.b16 %v3170
    %v3293 = vunpack.c.l.b16 %v3171
    %v3294 = vunpack.c.l.b16 %v3172
    %v3295 = vunpack.c.l.b16 %v3173
    %v3296 = vunpack.c.l.b16 %v3174
    %v3297 = vpack.c.b16 %v3282, %v3281
    %v3298 = vpack.c.b16 %v3284, %v3283
    %v3299 = vpack.c.b16 %v3286, %v3285
    %v3300 = vpack.c.b16 %v3288, %v3287
    %v3301 = vpack.c.b16 %v3290, %v3289
    %v3302 = vpack.c.b16 %v3292, %v3291
    %v3303 = vpack.c.b16 %v3294, %v3293
    %v3304 = vpack.c.b16 %v3296, %v3295
    %3313 = vmatpush.bf16.msra.mxu0 %v3304
    %3314 = vmatpush.bf16.msra.mxu0 %v3303
    %3315 = vmatpush.bf16.msra.mxu0 %v3302
    %3316 = vmatpush.bf16.msra.mxu0 %v3301
    %3317 = vmatpush.bf16.msra.mxu0 %v3300
    %3318 = vmatpush.bf16.msra.mxu0 %v3299
    %3319 = vmatpush.bf16.msra.mxu0 %v3298
    %3320 = vmatpush.bf16.msra.mxu0 %v3297
    %3321 = vmatmul.bf16.gmra.mxu0 %v3157
    %v3322 = vpop.f32.mrf.mxu0
    %v3323 = vadd.f32 %v3256, %v3322
    %v3324 = vpop.f32.mrf.mxu0
    %v3325 = vadd.f32 %v3258, %v3324
    %3326 = vmatmul.bf16.gmra.mxu0 %v3158
    %v3327 = vpop.f32.mrf.mxu0
    %v3328 = vadd.f32 %v3261, %v3327
    %v3329 = vpop.f32.mrf.mxu0
    %v3330 = vadd.f32 %v3263, %v3329
    %3331 = vdwg.mxu0
    %v3332 = vld [vmem:[#allocation4 + $0x2] sm:$0xff]
    %v3333 = vld [vmem:[#allocation4 + $0xa] sm:$0xff]
    %v3334 = vld [vmem:[#allocation4 + $0x12] sm:$0xff]
    %v3335 = vld [vmem:[#allocation4 + $0x1a] sm:$0x3f]
    %v3336 = vpack.c.bf16 %v3333, %v3332
    %v3337 = vpack.c.bf16 %v3335, %v3334
    %s3338 = scalar_lea.vmem [#allocation12], 128
    %v3339 = vld [vmem:[%s3338] sm:$0xf]
    %v3340 = vld [vmem:[%s3338 + $0x4] sm:$0xf]
    %v3341 = vld [vmem:[%s3338 + $0x8] sm:$0xf]
    %v3342 = vld [vmem:[%s3338 + $0xc] sm:$0xf]
    %v3343 = vld [vmem:[%s3338 + $0x10] sm:$0xf]
    %v3344 = vld [vmem:[%s3338 + $0x14] sm:$0xf]
    %v3345 = vld [vmem:[%s3338 + $0x18] sm:$0xf]
    %v3346 = vld [vmem:[%s3338 + $0x1c] sm:$0xf]
    %v3347 = vld [vmem:[%s3338 + $0x20] sm:$0xf]
    %v3348 = vld [vmem:[%s3338 + $0x24] sm:$0xf]
    %v3349 = vld [vmem:[%s3338 + $0x28] sm:$0xf]
    %v3350 = vld [vmem:[%s3338 + $0x2c] sm:$0xf]
    %v3351 = vld [vmem:[%s3338 + $0x30] sm:$0xf]
    %v3352 = vld [vmem:[%s3338 + $0x34] sm:$0xf]
    %v3353 = vld [vmem:[%s3338 + $0x38] sm:$0xf]
    %v3354 = vld [vmem:[%s3338 + $0x3c] sm:$0xf]
    %v3371 = vunpack.c.l.b16 %v3339
    %v3372 = vunpack.c.l.b16 %v3340
    %v3373 = vunpack.c.l.b16 %v3341
    %v3374 = vunpack.c.l.b16 %v3342
    %v3375 = vunpack.c.l.b16 %v3343
    %v3376 = vunpack.c.l.b16 %v3344
    %v3377 = vunpack.c.l.b16 %v3345
    %v3378 = vunpack.c.l.b16 %v3346
    %v3379 = vunpack.c.l.b16 %v3347
    %v3380 = vunpack.c.l.b16 %v3348
    %v3381 = vunpack.c.l.b16 %v3349
    %v3382 = vunpack.c.l.b16 %v3350
    %v3383 = vunpack.c.l.b16 %v3351
    %v3384 = vunpack.c.l.b16 %v3352
    %v3385 = vunpack.c.l.b16 %v3353
    %v3386 = vunpack.c.l.b16 %v3354
    %v3387 = vpack.c.b16 %v3372, %v3371
    %v3388 = vpack.c.b16 %v3374, %v3373
    %v3389 = vpack.c.b16 %v3376, %v3375
    %v3390 = vpack.c.b16 %v3378, %v3377
    %v3391 = vpack.c.b16 %v3380, %v3379
    %v3392 = vpack.c.b16 %v3382, %v3381
    %v3393 = vpack.c.b16 %v3384, %v3383
    %v3394 = vpack.c.b16 %v3386, %v3385
    %3403 = vmatpush.bf16.msra.mxu0 %v3394
    %3404 = vmatpush.bf16.msra.mxu0 %v3393
    %3405 = vmatpush.bf16.msra.mxu0 %v3392
    %3406 = vmatpush.bf16.msra.mxu0 %v3391
    %3407 = vmatpush.bf16.msra.mxu0 %v3390
    %3408 = vmatpush.bf16.msra.mxu0 %v3389
    %3409 = vmatpush.bf16.msra.mxu0 %v3388
    %3410 = vmatpush.bf16.msra.mxu0 %v3387
    %3411 = vmatmul.bf16.gmra.mxu0 %v3336
    %v3412 = vpop.f32.mrf.mxu0
    %v3413 = vadd.f32 0.0, %v3412
    %v3414 = vpop.f32.mrf.mxu0
    %v3415 = vadd.f32 0.0, %v3414
    %3416 = vmatmul.bf16.gmra.mxu0 %v3337
    %v3417 = vpop.f32.mrf.mxu0
    %v3418 = vadd.f32 0.0, %v3417
    %v3419 = vpop.f32.mrf.mxu0
    %v3420 = vadd.f32 0.0, %v3419
    %3421 = vdwg.mxu0
    %v3422 = vadd.f32 %v3323, %v3413
    %v3423 = vadd.f32 %v3325, %v3415
    %v3424 = vadd.f32 %v3328, %v3418
    %v3425 = vadd.f32 %v3330, %v3420
    %v3426 = vld [vmem:[#allocation4 + $0x3] sm:$0xff]
    %v3427 = vld [vmem:[#allocation4 + $0xb] sm:$0xff]
    %v3428 = vld [vmem:[#allocation4 + $0x13] sm:$0xff]
    %v3429 = vld [vmem:[#allocation4 + $0x1b] sm:$0x3f]
    %v3430 = vpack.c.bf16 %v3427, %v3426
    %v3431 = vpack.c.bf16 %v3429, %v3428
    %s3432 = scalar_lea.vmem [#allocation12], 192
    %v3433 = vld [vmem:[%s3432] sm:$0xf]
    %v3434 = vld [vmem:[%s3432 + $0x4] sm:$0xf]
    %v3435 = vld [vmem:[%s3432 + $0x8] sm:$0xf]
    %v3436 = vld [vmem:[%s3432 + $0xc] sm:$0xf]
    %v3437 = vld [vmem:[%s3432 + $0x10] sm:$0xf]
    %v3438 = vld [vmem:[%s3432 + $0x14] sm:$0xf]
    %v3439 = vld [vmem:[%s3432 + $0x18] sm:$0xf]
    %v3440 = vld [vmem:[%s3432 + $0x1c] sm:$0xf]
    %v3441 = vld [vmem:[%s3432 + $0x20] sm:$0xf]
    %v3442 = vld [vmem:[%s3432 + $0x24] sm:$0xf]
    %v3443 = vld [vmem:[%s3432 + $0x28] sm:$0xf]
    %v3444 = vld [vmem:[%s3432 + $0x2c] sm:$0xf]
    %v3445 = vld [vmem:[%s3432 + $0x30] sm:$0xf]
    %v3446 = vld [vmem:[%s3432 + $0x34] sm:$0xf]
    %v3447 = vld [vmem:[%s3432 + $0x38] sm:$0xf]
    %v3448 = vld [vmem:[%s3432 + $0x3c] sm:$0xf]
    %v3465 = vunpack.c.l.b16 %v3433
    %v3466 = vunpack.c.l.b16 %v3434
    %v3467 = vunpack.c.l.b16 %v3435
    %v3468 = vunpack.c.l.b16 %v3436
    %v3469 = vunpack.c.l.b16 %v3437
    %v3470 = vunpack.c.l.b16 %v3438
    %v3471 = vunpack.c.l.b16 %v3439
    %v3472 = vunpack.c.l.b16 %v3440
    %v3473 = vunpack.c.l.b16 %v3441
    %v3474 = vunpack.c.l.b16 %v3442
    %v3475 = vunpack.c.l.b16 %v3443
    %v3476 = vunpack.c.l.b16 %v3444
    %v3477 = vunpack.c.l.b16 %v3445
    %v3478 = vunpack.c.l.b16 %v3446
    %v3479 = vunpack.c.l.b16 %v3447
    %v3480 = vunpack.c.l.b16 %v3448
    %v3481 = vpack.c.b16 %v3466, %v3465
    %v3482 = vpack.c.b16 %v3468, %v3467
    %v3483 = vpack.c.b16 %v3470, %v3469
    %v3484 = vpack.c.b16 %v3472, %v3471
    %v3485 = vpack.c.b16 %v3474, %v3473
    %v3486 = vpack.c.b16 %v3476, %v3475
    %v3487 = vpack.c.b16 %v3478, %v3477
    %v3488 = vpack.c.b16 %v3480, %v3479
    %3497 = vmatpush.bf16.msra.mxu0 %v3488
    %3498 = vmatpush.bf16.msra.mxu0 %v3487
    %3499 = vmatpush.bf16.msra.mxu0 %v3486
    %3500 = vmatpush.bf16.msra.mxu0 %v3485
    %3501 = vmatpush.bf16.msra.mxu0 %v3484
    %3502 = vmatpush.bf16.msra.mxu0 %v3483
    %3503 = vmatpush.bf16.msra.mxu0 %v3482
    %3504 = vmatpush.bf16.msra.mxu0 %v3481
    %3505 = vmatmul.bf16.gmra.mxu0 %v3430
    %v3506 = vpop.f32.mrf.mxu0
    %v3507 = vadd.f32 0.0, %v3506
    %v3508 = vpop.f32.mrf.mxu0
    %v3509 = vadd.f32 0.0, %v3508
    %3510 = vmatmul.bf16.gmra.mxu0 %v3431
    %v3511 = vpop.f32.mrf.mxu0
    %v3512 = vadd.f32 0.0, %v3511
    %v3513 = vpop.f32.mrf.mxu0
    %v3514 = vadd.f32 0.0, %v3513
    %3515 = vdwg.mxu0
    %v3516 = vadd.f32 %v3422, %v3507
    %v3517 = vadd.f32 %v3423, %v3509
    %v3518 = vadd.f32 %v3424, %v3512
    %v3519 = vadd.f32 %v3425, %v3514
    %v3520 = vld [vmem:[#allocation4 + $0x4] sm:$0xff]
    %v3521 = vld [vmem:[#allocation4 + $0xc] sm:$0xff]
    %v3522 = vld [vmem:[#allocation4 + $0x14] sm:$0xff]
    %v3523 = vld [vmem:[#allocation4 + $0x1c] sm:$0x3f]
    %v3524 = vpack.c.bf16 %v3521, %v3520
    %v3525 = vpack.c.bf16 %v3523, %v3522
    %s3526 = scalar_lea.vmem [#allocation12], 256
    %v3527 = vld [vmem:[%s3526] sm:$0xf]
    %v3528 = vld [vmem:[%s3526 + $0x4] sm:$0xf]
    %v3529 = vld [vmem:[%s3526 + $0x8] sm:$0xf]
    %v3530 = vld [vmem:[%s3526 + $0xc] sm:$0xf]
    %v3531 = vld [vmem:[%s3526 + $0x10] sm:$0xf]
    %v3532 = vld [vmem:[%s3526 + $0x14] sm:$0xf]
    %v3533 = vld [vmem:[%s3526 + $0x18] sm:$0xf]
    %v3534 = vld [vmem:[%s3526 + $0x1c] sm:$0xf]
    %v3535 = vld [vmem:[%s3526 + $0x20] sm:$0xf]
    %v3536 = vld [vmem:[%s3526 + $0x24] sm:$0xf]
    %v3537 = vld [vmem:[%s3526 + $0x28] sm:$0xf]
    %v3538 = vld [vmem:[%s3526 + $0x2c] sm:$0xf]
    %v3539 = vld [vmem:[%s3526 + $0x30] sm:$0xf]
    %v3540 = vld [vmem:[%s3526 + $0x34] sm:$0xf]
    %v3541 = vld [vmem:[%s3526 + $0x38] sm:$0xf]
    %v3542 = vld [vmem:[%s3526 + $0x3c] sm:$0xf]
    %v3559 = vunpack.c.l.b16 %v3527
    %v3560 = vunpack.c.l.b16 %v3528
    %v3561 = vunpack.c.l.b16 %v3529
    %v3562 = vunpack.c.l.b16 %v3530
    %v3563 = vunpack.c.l.b16 %v3531
    %v3564 = vunpack.c.l.b16 %v3532
    %v3565 = vunpack.c.l.b16 %v3533
    %v3566 = vunpack.c.l.b16 %v3534
    %v3567 = vunpack.c.l.b16 %v3535
    %v3568 = vunpack.c.l.b16 %v3536
    %v3569 = vunpack.c.l.b16 %v3537
    %v3570 = vunpack.c.l.b16 %v3538
    %v3571 = vunpack.c.l.b16 %v3539
    %v3572 = vunpack.c.l.b16 %v3540
    %v3573 = vunpack.c.l.b16 %v3541
    %v3574 = vunpack.c.l.b16 %v3542
    %v3575 = vpack.c.b16 %v3560, %v3559
    %v3576 = vpack.c.b16 %v3562, %v3561
    %v3577 = vpack.c.b16 %v3564, %v3563
    %v3578 = vpack.c.b16 %v3566, %v3565
    %v3579 = vpack.c.b16 %v3568, %v3567
    %v3580 = vpack.c.b16 %v3570, %v3569
    %v3581 = vpack.c.b16 %v3572, %v3571
    %v3582 = vpack.c.b16 %v3574, %v3573
    %3591 = vmatpush.bf16.msra.mxu0 %v3582
    %3592 = vmatpush.bf16.msra.mxu0 %v3581
    %3593 = vmatpush.bf16.msra.mxu0 %v3580
    %3594 = vmatpush.bf16.msra.mxu0 %v3579
    %3595 = vmatpush.bf16.msra.mxu0 %v3578
    %3596 = vmatpush.bf16.msra.mxu0 %v3577
    %3597 = vmatpush.bf16.msra.mxu0 %v3576
    %3598 = vmatpush.bf16.msra.mxu0 %v3575
    %3599 = vmatmul.bf16.gmra.mxu0 %v3524
    %v3600 = vpop.f32.mrf.mxu0
    %v3601 = vadd.f32 0.0, %v3600
    %v3602 = vpop.f32.mrf.mxu0
    %v3603 = vadd.f32 0.0, %v3602
    %3604 = vmatmul.bf16.gmra.mxu0 %v3525
    %v3605 = vpop.f32.mrf.mxu0
    %v3606 = vadd.f32 0.0, %v3605
    %v3607 = vpop.f32.mrf.mxu0
    %v3608 = vadd.f32 0.0, %v3607
    %3609 = vdwg.mxu0
    %v3610 = vadd.f32 %v3516, %v3601
    %v3611 = vadd.f32 %v3517, %v3603
    %v3612 = vadd.f32 %v3518, %v3606
    %v3613 = vadd.f32 %v3519, %v3608
    %v3614 = vld [vmem:[%s6] sm:$0x1]
    %v3616 = vperm.slane %v3614, 0
    %v3618 = vadd.f32 %v3610, %v3616
    %v3619 = vadd.f32 %v3611, %v3616
    %v3620 = vadd.f32 %v3612, %v3616
    %v3621 = vadd.f32 %v3613, %v3616
    %v3622 = vmax.f32 %v3618, 0.0
    %v3623 = vmax.f32 %v3619, 0.0
    %v3624 = vmax.f32 %v3620, 0.0
    %v3625 = vmax.f32 %v3621, 0.0
    %3626 = vst [vmem:[#allocation5] sm:$0xff] %v3622
    %3627 = vst [vmem:[#allocation5 + $0x8] sm:$0xff] %v3623
    %3628 = vst [vmem:[#allocation5 + $0x10] sm:$0xff] %v3624
    %3629 = vst [vmem:[#allocation5 + $0x18] sm:$0x3f] %v3625
    %v3630 = vld [vmem:[#allocation5] sm:$0xff]
    %v3631 = vld [vmem:[#allocation5 + $0x8] sm:$0xff]
    %v3632 = vld [vmem:[#allocation5 + $0x10] sm:$0xff]
    %v3633 = vld [vmem:[#allocation5 + $0x18] sm:$0x3]
    %v3634 = vpack.c.bf16 %v3631, %v3630
    %v3635 = vpack.c.bf16 %v3633, %v3632
    %v3636 = vld [vmem:[#allocation14] sm:$0xf]
    %v3637 = vld [vmem:[#allocation14 + $0x4] sm:$0xf]
    %v3638 = vld [vmem:[#allocation14 + $0x8] sm:$0xf]
    %v3639 = vld [vmem:[#allocation14 + $0xc] sm:$0xf]
    %v3640 = vld [vmem:[#allocation14 + $0x10] sm:$0xf]
    %v3641 = vld [vmem:[#allocation14 + $0x14] sm:$0xf]
    %v3642 = vld [vmem:[#allocation14 + $0x18] sm:$0xf]
    %v3643 = vld [vmem:[#allocation14 + $0x1c] sm:$0xf]
    %v3644 = vld [vmem:[#allocation14 + $0x20] sm:$0xf]
    %v3645 = vld [vmem:[#allocation14 + $0x24] sm:$0xf]
    %v3646 = vld [vmem:[#allocation14 + $0x28] sm:$0xf]
    %v3647 = vld [vmem:[#allocation14 + $0x2c] sm:$0xf]
    %v3648 = vld [vmem:[#allocation14 + $0x30] sm:$0xf]
    %v3649 = vld [vmem:[#allocation14 + $0x34] sm:$0xf]
    %v3650 = vld [vmem:[#allocation14 + $0x38] sm:$0xf]
    %v3651 = vld [vmem:[#allocation14 + $0x3c] sm:$0xf]
    %v3652 = vld [vmem:[#allocation5 + $0x1] sm:$0xff]
    %v3653 = vld [vmem:[#allocation5 + $0x9] sm:$0xff]
    %v3654 = vld [vmem:[#allocation5 + $0x11] sm:$0xff]
    %v3655 = vld [vmem:[#allocation5 + $0x19] sm:$0x3]
    %v3656 = vpack.c.bf16 %v3653, %v3652
    %v3657 = vpack.c.bf16 %v3655, %v3654
    %s3658 = scalar_lea.vmem [#allocation14], 64
    %v3659 = vld [vmem:[%s3658] sm:$0xf]
    %v3660 = vld [vmem:[%s3658 + $0x4] sm:$0xf]
    %v3661 = vld [vmem:[%s3658 + $0x8] sm:$0xf]
    %v3662 = vld [vmem:[%s3658 + $0xc] sm:$0xf]
    %v3663 = vld [vmem:[%s3658 + $0x10] sm:$0xf]
    %v3664 = vld [vmem:[%s3658 + $0x14] sm:$0xf]
    %v3665 = vld [vmem:[%s3658 + $0x18] sm:$0xf]
    %v3666 = vld [vmem:[%s3658 + $0x1c] sm:$0xf]
    %v3667 = vld [vmem:[%s3658 + $0x20] sm:$0xf]
    %v3668 = vld [vmem:[%s3658 + $0x24] sm:$0xf]
    %v3669 = vld [vmem:[%s3658 + $0x28] sm:$0xf]
    %v3670 = vld [vmem:[%s3658 + $0x2c] sm:$0xf]
    %v3671 = vld [vmem:[%s3658 + $0x30] sm:$0xf]
    %v3672 = vld [vmem:[%s3658 + $0x34] sm:$0xf]
    %v3673 = vld [vmem:[%s3658 + $0x38] sm:$0xf]
    %v3674 = vld [vmem:[%s3658 + $0x3c] sm:$0xf]
    %v3691 = vunpack.c.l.b16 %v3659
    %v3692 = vunpack.c.l.b16 %v3660
    %v3693 = vunpack.c.l.b16 %v3661
    %v3694 = vunpack.c.l.b16 %v3662
    %v3695 = vunpack.c.l.b16 %v3663
    %v3696 = vunpack.c.l.b16 %v3664
    %v3697 = vunpack.c.l.b16 %v3665
    %v3698 = vunpack.c.l.b16 %v3666
    %v3699 = vunpack.c.l.b16 %v3667
    %v3700 = vunpack.c.l.b16 %v3668
    %v3701 = vunpack.c.l.b16 %v3669
    %v3702 = vunpack.c.l.b16 %v3670
    %v3703 = vunpack.c.l.b16 %v3671
    %v3704 = vunpack.c.l.b16 %v3672
    %v3705 = vunpack.c.l.b16 %v3673
    %v3706 = vunpack.c.l.b16 %v3674
    %v3707 = vpack.c.b16 %v3692, %v3691
    %v3708 = vpack.c.b16 %v3694, %v3693
    %v3709 = vpack.c.b16 %v3696, %v3695
    %v3710 = vpack.c.b16 %v3698, %v3697
    %v3711 = vpack.c.b16 %v3700, %v3699
    %v3712 = vpack.c.b16 %v3702, %v3701
    %v3713 = vpack.c.b16 %v3704, %v3703
    %v3714 = vpack.c.b16 %v3706, %v3705
    %3723 = vmatpush.bf16.msra.mxu0 %v3714
    %3724 = vmatpush.bf16.msra.mxu0 %v3713
    %3725 = vmatpush.bf16.msra.mxu0 %v3712
    %3726 = vmatpush.bf16.msra.mxu0 %v3711
    %3727 = vmatpush.bf16.msra.mxu0 %v3710
    %3728 = vmatpush.bf16.msra.mxu0 %v3709
    %3729 = vmatpush.bf16.msra.mxu0 %v3708
    %3730 = vmatpush.bf16.msra.mxu0 %v3707
    %3731 = vmatmul.bf16.gmra.mxu0 %v3656
    %v3732 = vpop.f32.mrf.mxu0
    %v3733 = vadd.f32 0.0, %v3732
    %v3734 = vpop.f32.mrf.mxu0
    %v3735 = vadd.f32 0.0, %v3734
    %3736 = vmatmul.bf16.gmra.mxu0 %v3657
    %v3737 = vpop.f32.mrf.mxu0
    %v3738 = vadd.f32 0.0, %v3737
    %v3739 = vpop.f32.mrf.mxu0
    %v3740 = vadd.f32 0.0, %v3739
    %3741 = vdwg.mxu0
    %v3758 = vunpack.c.l.b16 %v3636
    %v3759 = vunpack.c.l.b16 %v3637
    %v3760 = vunpack.c.l.b16 %v3638
    %v3761 = vunpack.c.l.b16 %v3639
    %v3762 = vunpack.c.l.b16 %v3640
    %v3763 = vunpack.c.l.b16 %v3641
    %v3764 = vunpack.c.l.b16 %v3642
    %v3765 = vunpack.c.l.b16 %v3643
    %v3766 = vunpack.c.l.b16 %v3644
    %v3767 = vunpack.c.l.b16 %v3645
    %v3768 = vunpack.c.l.b16 %v3646
    %v3769 = vunpack.c.l.b16 %v3647
    %v3770 = vunpack.c.l.b16 %v3648
    %v3771 = vunpack.c.l.b16 %v3649
    %v3772 = vunpack.c.l.b16 %v3650
    %v3773 = vunpack.c.l.b16 %v3651
    %v3774 = vpack.c.b16 %v3759, %v3758
    %v3775 = vpack.c.b16 %v3761, %v3760
    %v3776 = vpack.c.b16 %v3763, %v3762
    %v3777 = vpack.c.b16 %v3765, %v3764
    %v3778 = vpack.c.b16 %v3767, %v3766
    %v3779 = vpack.c.b16 %v3769, %v3768
    %v3780 = vpack.c.b16 %v3771, %v3770
    %v3781 = vpack.c.b16 %v3773, %v3772
    %3790 = vmatpush.bf16.msra.mxu0 %v3781
    %3791 = vmatpush.bf16.msra.mxu0 %v3780
    %3792 = vmatpush.bf16.msra.mxu0 %v3779
    %3793 = vmatpush.bf16.msra.mxu0 %v3778
    %3794 = vmatpush.bf16.msra.mxu0 %v3777
    %3795 = vmatpush.bf16.msra.mxu0 %v3776
    %3796 = vmatpush.bf16.msra.mxu0 %v3775
    %3797 = vmatpush.bf16.msra.mxu0 %v3774
    %3798 = vmatmul.bf16.gmra.mxu0 %v3634
    %v3799 = vpop.f32.mrf.mxu0
    %v3800 = vadd.f32 %v3733, %v3799
    %v3801 = vpop.f32.mrf.mxu0
    %v3802 = vadd.f32 %v3735, %v3801
    %3803 = vmatmul.bf16.gmra.mxu0 %v3635
    %v3804 = vpop.f32.mrf.mxu0
    %v3805 = vadd.f32 %v3738, %v3804
    %v3806 = vpop.f32.mrf.mxu0
    %v3807 = vadd.f32 %v3740, %v3806
    %3808 = vdwg.mxu0
    %v3809 = vld [vmem:[#allocation5 + $0x2] sm:$0xff]
    %v3810 = vld [vmem:[#allocation5 + $0xa] sm:$0xff]
    %v3811 = vld [vmem:[#allocation5 + $0x12] sm:$0xff]
    %v3812 = vld [vmem:[#allocation5 + $0x1a] sm:$0x3]
    %v3813 = vpack.c.bf16 %v3810, %v3809
    %v3814 = vpack.c.bf16 %v3812, %v3811
    %s3815 = scalar_lea.vmem [#allocation14], 128
    %v3816 = vld [vmem:[%s3815] sm:$0xf]
    %v3817 = vld [vmem:[%s3815 + $0x4] sm:$0xf]
    %v3818 = vld [vmem:[%s3815 + $0x8] sm:$0xf]
    %v3819 = vld [vmem:[%s3815 + $0xc] sm:$0xf]
    %v3820 = vld [vmem:[%s3815 + $0x10] sm:$0xf]
    %v3821 = vld [vmem:[%s3815 + $0x14] sm:$0xf]
    %v3822 = vld [vmem:[%s3815 + $0x18] sm:$0xf]
    %v3823 = vld [vmem:[%s3815 + $0x1c] sm:$0xf]
    %v3824 = vld [vmem:[%s3815 + $0x20] sm:$0xf]
    %v3825 = vld [vmem:[%s3815 + $0x24] sm:$0xf]
    %v3826 = vld [vmem:[%s3815 + $0x28] sm:$0xf]
    %v3827 = vld [vmem:[%s3815 + $0x2c] sm:$0xf]
    %v3828 = vld [vmem:[%s3815 + $0x30] sm:$0xf]
    %v3829 = vld [vmem:[%s3815 + $0x34] sm:$0xf]
    %v3830 = vld [vmem:[%s3815 + $0x38] sm:$0xf]
    %v3831 = vld [vmem:[%s3815 + $0x3c] sm:$0xf]
    %v3848 = vunpack.c.l.b16 %v3816
    %v3849 = vunpack.c.l.b16 %v3817
    %v3850 = vunpack.c.l.b16 %v3818
    %v3851 = vunpack.c.l.b16 %v3819
    %v3852 = vunpack.c.l.b16 %v3820
    %v3853 = vunpack.c.l.b16 %v3821
    %v3854 = vunpack.c.l.b16 %v3822
    %v3855 = vunpack.c.l.b16 %v3823
    %v3856 = vunpack.c.l.b16 %v3824
    %v3857 = vunpack.c.l.b16 %v3825
    %v3858 = vunpack.c.l.b16 %v3826
    %v3859 = vunpack.c.l.b16 %v3827
    %v3860 = vunpack.c.l.b16 %v3828
    %v3861 = vunpack.c.l.b16 %v3829
    %v3862 = vunpack.c.l.b16 %v3830
    %v3863 = vunpack.c.l.b16 %v3831
    %v3864 = vpack.c.b16 %v3849, %v3848
    %v3865 = vpack.c.b16 %v3851, %v3850
    %v3866 = vpack.c.b16 %v3853, %v3852
    %v3867 = vpack.c.b16 %v3855, %v3854
    %v3868 = vpack.c.b16 %v3857, %v3856
    %v3869 = vpack.c.b16 %v3859, %v3858
    %v3870 = vpack.c.b16 %v3861, %v3860
    %v3871 = vpack.c.b16 %v3863, %v3862
    %3880 = vmatpush.bf16.msra.mxu0 %v3871
    %3881 = vmatpush.bf16.msra.mxu0 %v3870
    %3882 = vmatpush.bf16.msra.mxu0 %v3869
    %3883 = vmatpush.bf16.msra.mxu0 %v3868
    %3884 = vmatpush.bf16.msra.mxu0 %v3867
    %3885 = vmatpush.bf16.msra.mxu0 %v3866
    %3886 = vmatpush.bf16.msra.mxu0 %v3865
    %3887 = vmatpush.bf16.msra.mxu0 %v3864
    %3888 = vmatmul.bf16.gmra.mxu0 %v3813
    %v3889 = vpop.f32.mrf.mxu0
    %v3890 = vadd.f32 0.0, %v3889
    %v3891 = vpop.f32.mrf.mxu0
    %v3892 = vadd.f32 0.0, %v3891
    %3893 = vmatmul.bf16.gmra.mxu0 %v3814
    %v3894 = vpop.f32.mrf.mxu0
    %v3895 = vadd.f32 0.0, %v3894
    %v3896 = vpop.f32.mrf.mxu0
    %v3897 = vadd.f32 0.0, %v3896
    %3898 = vdwg.mxu0
    %v3899 = vadd.f32 %v3800, %v3890
    %v3900 = vadd.f32 %v3802, %v3892
    %v3901 = vadd.f32 %v3805, %v3895
    %v3902 = vadd.f32 %v3807, %v3897
    %v3903 = vld [vmem:[#allocation5 + $0x3] sm:$0xff]
    %v3904 = vld [vmem:[#allocation5 + $0xb] sm:$0xff]
    %v3905 = vld [vmem:[#allocation5 + $0x13] sm:$0xff]
    %v3906 = vld [vmem:[#allocation5 + $0x1b] sm:$0x3]
    %v3907 = vpack.c.bf16 %v3904, %v3903
    %v3908 = vpack.c.bf16 %v3906, %v3905
    %s3909 = scalar_lea.vmem [#allocation14], 192
    %v3910 = vld [vmem:[%s3909] sm:$0xf]
    %v3911 = vld [vmem:[%s3909 + $0x4] sm:$0xf]
    %v3912 = vld [vmem:[%s3909 + $0x8] sm:$0xf]
    %v3913 = vld [vmem:[%s3909 + $0xc] sm:$0xf]
    %v3914 = vld [vmem:[%s3909 + $0x10] sm:$0xf]
    %v3915 = vld [vmem:[%s3909 + $0x14] sm:$0xf]
    %v3916 = vld [vmem:[%s3909 + $0x18] sm:$0xf]
    %v3917 = vld [vmem:[%s3909 + $0x1c] sm:$0xf]
    %v3918 = vld [vmem:[%s3909 + $0x20] sm:$0xf]
    %v3919 = vld [vmem:[%s3909 + $0x24] sm:$0xf]
    %v3920 = vld [vmem:[%s3909 + $0x28] sm:$0xf]
    %v3921 = vld [vmem:[%s3909 + $0x2c] sm:$0xf]
    %v3922 = vld [vmem:[%s3909 + $0x30] sm:$0xf]
    %v3923 = vld [vmem:[%s3909 + $0x34] sm:$0xf]
    %v3924 = vld [vmem:[%s3909 + $0x38] sm:$0xf]
    %v3925 = vld [vmem:[%s3909 + $0x3c] sm:$0xf]
    %v3942 = vunpack.c.l.b16 %v3910
    %v3943 = vunpack.c.l.b16 %v3911
    %v3944 = vunpack.c.l.b16 %v3912
    %v3945 = vunpack.c.l.b16 %v3913
    %v3946 = vunpack.c.l.b16 %v3914
    %v3947 = vunpack.c.l.b16 %v3915
    %v3948 = vunpack.c.l.b16 %v3916
    %v3949 = vunpack.c.l.b16 %v3917
    %v3950 = vunpack.c.l.b16 %v3918
    %v3951 = vunpack.c.l.b16 %v3919
    %v3952 = vunpack.c.l.b16 %v3920
    %v3953 = vunpack.c.l.b16 %v3921
    %v3954 = vunpack.c.l.b16 %v3922
    %v3955 = vunpack.c.l.b16 %v3923
    %v3956 = vunpack.c.l.b16 %v3924
    %v3957 = vunpack.c.l.b16 %v3925
    %v3958 = vpack.c.b16 %v3943, %v3942
    %v3959 = vpack.c.b16 %v3945, %v3944
    %v3960 = vpack.c.b16 %v3947, %v3946
    %v3961 = vpack.c.b16 %v3949, %v3948
    %v3962 = vpack.c.b16 %v3951, %v3950
    %v3963 = vpack.c.b16 %v3953, %v3952
    %v3964 = vpack.c.b16 %v3955, %v3954
    %v3965 = vpack.c.b16 %v3957, %v3956
    %3974 = vmatpush.bf16.msra.mxu0 %v3965
    %3975 = vmatpush.bf16.msra.mxu0 %v3964
    %3976 = vmatpush.bf16.msra.mxu0 %v3963
    %3977 = vmatpush.bf16.msra.mxu0 %v3962
    %3978 = vmatpush.bf16.msra.mxu0 %v3961
    %3979 = vmatpush.bf16.msra.mxu0 %v3960
    %3980 = vmatpush.bf16.msra.mxu0 %v3959
    %3981 = vmatpush.bf16.msra.mxu0 %v3958
    %3982 = vmatmul.bf16.gmra.mxu0 %v3907
    %v3983 = vpop.f32.mrf.mxu0
    %v3984 = vadd.f32 0.0, %v3983
    %v3985 = vpop.f32.mrf.mxu0
    %v3986 = vadd.f32 0.0, %v3985
    %3987 = vmatmul.bf16.gmra.mxu0 %v3908
    %v3988 = vpop.f32.mrf.mxu0
    %v3989 = vadd.f32 0.0, %v3988
    %v3990 = vpop.f32.mrf.mxu0
    %v3991 = vadd.f32 0.0, %v3990
    %3992 = vdwg.mxu0
    %v3993 = vadd.f32 %v3899, %v3984
    %v3994 = vadd.f32 %v3900, %v3986
    %v3995 = vadd.f32 %v3901, %v3989
    %v3996 = vadd.f32 %v3902, %v3991
    %v3997 = vld [vmem:[#allocation5 + $0x4] sm:$0xff]
    %v3998 = vld [vmem:[#allocation5 + $0xc] sm:$0xff]
    %v3999 = vld [vmem:[#allocation5 + $0x14] sm:$0xff]
    %v4000 = vld [vmem:[#allocation5 + $0x1c] sm:$0x3]
    %v4001 = vpack.c.bf16 %v3998, %v3997
    %v4002 = vpack.c.bf16 %v4000, %v3999
    %s4003 = scalar_lea.vmem [#allocation14], 256
    %v4004 = vld [vmem:[%s4003] sm:$0xf]
    %v4005 = vld [vmem:[%s4003 + $0x4] sm:$0xf]
    %v4006 = vld [vmem:[%s4003 + $0x8] sm:$0xf]
    %v4007 = vld [vmem:[%s4003 + $0xc] sm:$0xf]
    %v4008 = vld [vmem:[%s4003 + $0x10] sm:$0xf]
    %v4009 = vld [vmem:[%s4003 + $0x14] sm:$0xf]
    %v4010 = vld [vmem:[%s4003 + $0x18] sm:$0xf]
    %v4011 = vld [vmem:[%s4003 + $0x1c] sm:$0xf]
    %v4012 = vld [vmem:[%s4003 + $0x20] sm:$0xf]
    %v4013 = vld [vmem:[%s4003 + $0x24] sm:$0xf]
    %v4014 = vld [vmem:[%s4003 + $0x28] sm:$0xf]
    %v4015 = vld [vmem:[%s4003 + $0x2c] sm:$0xf]
    %v4016 = vld [vmem:[%s4003 + $0x30] sm:$0xf]
    %v4017 = vld [vmem:[%s4003 + $0x34] sm:$0xf]
    %v4018 = vld [vmem:[%s4003 + $0x38] sm:$0xf]
    %v4019 = vld [vmem:[%s4003 + $0x3c] sm:$0xf]
    %v4036 = vunpack.c.l.b16 %v4004
    %v4037 = vunpack.c.l.b16 %v4005
    %v4038 = vunpack.c.l.b16 %v4006
    %v4039 = vunpack.c.l.b16 %v4007
    %v4040 = vunpack.c.l.b16 %v4008
    %v4041 = vunpack.c.l.b16 %v4009
    %v4042 = vunpack.c.l.b16 %v4010
    %v4043 = vunpack.c.l.b16 %v4011
    %v4044 = vunpack.c.l.b16 %v4012
    %v4045 = vunpack.c.l.b16 %v4013
    %v4046 = vunpack.c.l.b16 %v4014
    %v4047 = vunpack.c.l.b16 %v4015
    %v4048 = vunpack.c.l.b16 %v4016
    %v4049 = vunpack.c.l.b16 %v4017
    %v4050 = vunpack.c.l.b16 %v4018
    %v4051 = vunpack.c.l.b16 %v4019
    %v4052 = vpack.c.b16 %v4037, %v4036
    %v4053 = vpack.c.b16 %v4039, %v4038
    %v4054 = vpack.c.b16 %v4041, %v4040
    %v4055 = vpack.c.b16 %v4043, %v4042
    %v4056 = vpack.c.b16 %v4045, %v4044
    %v4057 = vpack.c.b16 %v4047, %v4046
    %v4058 = vpack.c.b16 %v4049, %v4048
    %v4059 = vpack.c.b16 %v4051, %v4050
    %4068 = vmatpush.bf16.msra.mxu0 %v4059
    %4069 = vmatpush.bf16.msra.mxu0 %v4058
    %4070 = vmatpush.bf16.msra.mxu0 %v4057
    %4071 = vmatpush.bf16.msra.mxu0 %v4056
    %4072 = vmatpush.bf16.msra.mxu0 %v4055
    %4073 = vmatpush.bf16.msra.mxu0 %v4054
    %4074 = vmatpush.bf16.msra.mxu0 %v4053
    %4075 = vmatpush.bf16.msra.mxu0 %v4052
    %4076 = vmatmul.bf16.gmra.mxu0 %v4001
    %v4077 = vpop.f32.mrf.mxu0
    %v4078 = vadd.f32 0.0, %v4077
    %v4079 = vpop.f32.mrf.mxu0
    %v4080 = vadd.f32 0.0, %v4079
    %4081 = vmatmul.bf16.gmra.mxu0 %v4002
    %v4082 = vpop.f32.mrf.mxu0
    %v4083 = vadd.f32 0.0, %v4082
    %v4084 = vpop.f32.mrf.mxu0
    %v4085 = vadd.f32 0.0, %v4084
    %4086 = vdwg.mxu0
    %v4087 = vadd.f32 %v3993, %v4078
    %v4088 = vadd.f32 %v3994, %v4080
    %v4089 = vadd.f32 %v3995, %v4083
    %v4090 = vadd.f32 %v3996, %v4085
    %v4091 = vld [vmem:[%s8] sm:$0x1]
    %v4093 = vperm.slane %v4091, 0
    %v4095 = vadd.f32 %v4087, %v4093
    %v4096 = vadd.f32 %v4088, %v4093
    %v4097 = vadd.f32 %v4089, %v4093
    %v4098 = vadd.f32 %v4090, %v4093
    %v4099 = vmax.f32 %v4095, 0.0
    %v4100 = vmax.f32 %v4096, 0.0
    %v4101 = vmax.f32 %v4097, 0.0
    %v4102 = vmax.f32 %v4098, 0.0
    %4103 = vst [vmem:[#allocation6] sm:$0xff] %v4099
    %4104 = vst [vmem:[#allocation6 + $0x8] sm:$0xff] %v4100
    %4105 = vst [vmem:[#allocation6 + $0x10] sm:$0xff] %v4101
    %4106 = vst [vmem:[#allocation6 + $0x18] sm:$0x3] %v4102
    %v4107 = vld [vmem:[#allocation6] ss:$2 sm:$0xff]
    %s4108 = scalar_lea.vmem [#allocation6], 16
    %v4109 = vld [vmem:[%s4108] ss:$2 sm:$0x1f]
    %s4110 = scalar_lea.vmem [#allocation6], 1
    %v4111 = vld [vmem:[%s4110] ss:$2 sm:$0xff]
    %s4112 = scalar_lea.vmem [#allocation6], 17
    %v4113 = vld [vmem:[%s4112] ss:$2 sm:$0x1f]
    %v4114 = vmax.f32 %v4107, %v4111
    %v4115 = vmax.f32 %v4109, %v4113
    %4116 = vst [vmem:[#allocation7] sm:$0xff] %v4114
    %4117 = vst [vmem:[#allocation7 + $0x8] sm:$0x1f] %v4115
    %v4118 = vld [vmem:[#allocation7] sm:$0xff]
    %v4119 = vpack.c.bf16 %v4118, %v4118
    %v4120 = vld [vmem:[#allocation15] sm:$0xff]
    %v4121 = vld [vmem:[#allocation15 + $0x8] sm:$0xff]
    %v4122 = vld [vmem:[#allocation15 + $0x10] sm:$0xff]
    %v4123 = vld [vmem:[#allocation15 + $0x18] sm:$0xff]
    %v4124 = vld [vmem:[#allocation15 + $0x20] sm:$0xff]
    %v4125 = vld [vmem:[#allocation15 + $0x28] sm:$0xff]
    %v4126 = vld [vmem:[#allocation15 + $0x30] sm:$0xff]
    %v4127 = vld [vmem:[#allocation15 + $0x38] sm:$0xff]
    %v4128 = vld [vmem:[#allocation15 + $0x40] sm:$0xff]
    %v4129 = vld [vmem:[#allocation15 + $0x48] sm:$0xff]
    %v4130 = vld [vmem:[#allocation15 + $0x50] sm:$0xff]
    %v4131 = vld [vmem:[#allocation15 + $0x58] sm:$0xff]
    %v4132 = vld [vmem:[#allocation15 + $0x60] sm:$0xff]
    %v4133 = vld [vmem:[#allocation15 + $0x68] sm:$0xff]
    %v4134 = vld [vmem:[#allocation15 + $0x70] sm:$0xff]
    %v4135 = vld [vmem:[#allocation15 + $0x78] sm:$0xff]
    %v4136 = vld [vmem:[#allocation7 + $0x1] sm:$0xff]
    %v4137 = vpack.c.bf16 %v4136, %v4136
    %s4138 = scalar_lea.vmem [#allocation15], 128
    %v4139 = vld [vmem:[%s4138] sm:$0xff]
    %v4140 = vld [vmem:[%s4138 + $0x8] sm:$0xff]
    %v4141 = vld [vmem:[%s4138 + $0x10] sm:$0xff]
    %v4142 = vld [vmem:[%s4138 + $0x18] sm:$0xff]
    %v4143 = vld [vmem:[%s4138 + $0x20] sm:$0xff]
    %v4144 = vld [vmem:[%s4138 + $0x28] sm:$0xff]
    %v4145 = vld [vmem:[%s4138 + $0x30] sm:$0xff]
    %v4146 = vld [vmem:[%s4138 + $0x38] sm:$0xff]
    %v4147 = vld [vmem:[%s4138 + $0x40] sm:$0xff]
    %v4148 = vld [vmem:[%s4138 + $0x48] sm:$0xff]
    %v4149 = vld [vmem:[%s4138 + $0x50] sm:$0xff]
    %v4150 = vld [vmem:[%s4138 + $0x58] sm:$0xff]
    %v4151 = vld [vmem:[%s4138 + $0x60] sm:$0xff]
    %v4152 = vld [vmem:[%s4138 + $0x68] sm:$0xff]
    %v4153 = vld [vmem:[%s4138 + $0x70] sm:$0xff]
    %v4154 = vld [vmem:[%s4138 + $0x78] sm:$0xff]
    %v4171 = vunpack.c.l.b16 %v4139
    %v4172 = vunpack.c.h.b16 %v4139
    %v4173 = vunpack.c.l.b16 %v4140
    %v4174 = vunpack.c.h.b16 %v4140
    %v4175 = vunpack.c.l.b16 %v4141
    %v4176 = vunpack.c.h.b16 %v4141
    %v4177 = vunpack.c.l.b16 %v4142
    %v4178 = vunpack.c.h.b16 %v4142
    %v4179 = vunpack.c.l.b16 %v4143
    %v4180 = vunpack.c.h.b16 %v4143
    %v4181 = vunpack.c.l.b16 %v4144
    %v4182 = vunpack.c.h.b16 %v4144
    %v4183 = vunpack.c.l.b16 %v4145
    %v4184 = vunpack.c.h.b16 %v4145
    %v4185 = vunpack.c.l.b16 %v4146
    %v4186 = vunpack.c.h.b16 %v4146
    %v4187 = vunpack.c.l.b16 %v4147
    %v4188 = vunpack.c.h.b16 %v4147
    %v4189 = vunpack.c.l.b16 %v4148
    %v4190 = vunpack.c.h.b16 %v4148
    %v4191 = vunpack.c.l.b16 %v4149
    %v4192 = vunpack.c.h.b16 %v4149
    %v4193 = vunpack.c.l.b16 %v4150
    %v4194 = vunpack.c.h.b16 %v4150
    %v4195 = vunpack.c.l.b16 %v4151
    %v4196 = vunpack.c.h.b16 %v4151
    %v4197 = vunpack.c.l.b16 %v4152
    %v4198 = vunpack.c.h.b16 %v4152
    %v4199 = vunpack.c.l.b16 %v4153
    %v4200 = vunpack.c.h.b16 %v4153
    %v4201 = vunpack.c.l.b16 %v4154
    %v4202 = vunpack.c.h.b16 %v4154
    %v4203 = vpack.c.b16 %v4173, %v4171
    %v4204 = vpack.c.b16 %v4174, %v4172
    %v4205 = vpack.c.b16 %v4177, %v4175
    %v4206 = vpack.c.b16 %v4178, %v4176
    %v4207 = vpack.c.b16 %v4181, %v4179
    %v4208 = vpack.c.b16 %v4182, %v4180
    %v4209 = vpack.c.b16 %v4185, %v4183
    %v4210 = vpack.c.b16 %v4186, %v4184
    %v4211 = vpack.c.b16 %v4189, %v4187
    %v4212 = vpack.c.b16 %v4190, %v4188
    %v4213 = vpack.c.b16 %v4193, %v4191
    %v4214 = vpack.c.b16 %v4194, %v4192
    %v4215 = vpack.c.b16 %v4197, %v4195
    %v4216 = vpack.c.b16 %v4198, %v4196
    %v4217 = vpack.c.b16 %v4201, %v4199
    %v4218 = vpack.c.b16 %v4202, %v4200
    %4235 = vmatpush.bf16.msra.mxu0 %v4217
    %4236 = vmatpush.bf16.msra.mxu0 %v4215
    %4237 = vmatpush.bf16.msra.mxu0 %v4213
    %4238 = vmatpush.bf16.msra.mxu0 %v4211
    %4239 = vmatpush.bf16.msra.mxu0 %v4209
    %4240 = vmatpush.bf16.msra.mxu0 %v4207
    %4241 = vmatpush.bf16.msra.mxu0 %v4205
    %4242 = vmatpush.bf16.msra.mxu0 %v4203
    %4243 = vmatmul.bf16.gmra.mxu0 %v4137
    %v4244 = vpop.f32.mrf.mxu0
    %v4245 = vadd.f32 0.0, %v4244
    %v4246 = vpop.f32.mrf.mxu0
    %4247 = vdwg.mxu0
    %4248 = vmatpush.bf16.msra.mxu0 %v4218
    %4249 = vmatpush.bf16.msra.mxu0 %v4216
    %4250 = vmatpush.bf16.msra.mxu0 %v4214
    %4251 = vmatpush.bf16.msra.mxu0 %v4212
    %4252 = vmatpush.bf16.msra.mxu0 %v4210
    %4253 = vmatpush.bf16.msra.mxu0 %v4208
    %4254 = vmatpush.bf16.msra.mxu0 %v4206
    %4255 = vmatpush.bf16.msra.mxu0 %v4204
    %4256 = vmatmul.bf16.gmra.mxu0 %v4137
    %v4257 = vpop.f32.mrf.mxu0
    %v4258 = vadd.f32 0.0, %v4257
    %v4259 = vpop.f32.mrf.mxu0
    %4260 = vdwg.mxu0
    %v4277 = vunpack.c.l.b16 %v4120
    %v4278 = vunpack.c.h.b16 %v4120
    %v4279 = vunpack.c.l.b16 %v4121
    %v4280 = vunpack.c.h.b16 %v4121
    %v4281 = vunpack.c.l.b16 %v4122
    %v4282 = vunpack.c.h.b16 %v4122
    %v4283 = vunpack.c.l.b16 %v4123
    %v4284 = vunpack.c.h.b16 %v4123
    %v4285 = vunpack.c.l.b16 %v4124
    %v4286 = vunpack.c.h.b16 %v4124
    %v4287 = vunpack.c.l.b16 %v4125
    %v4288 = vunpack.c.h.b16 %v4125
    %v4289 = vunpack.c.l.b16 %v4126
    %v4290 = vunpack.c.h.b16 %v4126
    %v4291 = vunpack.c.l.b16 %v4127
    %v4292 = vunpack.c.h.b16 %v4127
    %v4293 = vunpack.c.l.b16 %v4128
    %v4294 = vunpack.c.h.b16 %v4128
    %v4295 = vunpack.c.l.b16 %v4129
    %v4296 = vunpack.c.h.b16 %v4129
    %v4297 = vunpack.c.l.b16 %v4130
    %v4298 = vunpack.c.h.b16 %v4130
    %v4299 = vunpack.c.l.b16 %v4131
    %v4300 = vunpack.c.h.b16 %v4131
    %v4301 = vunpack.c.l.b16 %v4132
    %v4302 = vunpack.c.h.b16 %v4132
    %v4303 = vunpack.c.l.b16 %v4133
    %v4304 = vunpack.c.h.b16 %v4133
    %v4305 = vunpack.c.l.b16 %v4134
    %v4306 = vunpack.c.h.b16 %v4134
    %v4307 = vunpack.c.l.b16 %v4135
    %v4308 = vunpack.c.h.b16 %v4135
    %v4309 = vpack.c.b16 %v4279, %v4277
    %v4310 = vpack.c.b16 %v4280, %v4278
    %v4311 = vpack.c.b16 %v4283, %v4281
    %v4312 = vpack.c.b16 %v4284, %v4282
    %v4313 = vpack.c.b16 %v4287, %v4285
    %v4314 = vpack.c.b16 %v4288, %v4286
    %v4315 = vpack.c.b16 %v4291, %v4289
    %v4316 = vpack.c.b16 %v4292, %v4290
    %v4317 = vpack.c.b16 %v4295, %v4293
    %v4318 = vpack.c.b16 %v4296, %v4294
    %v4319 = vpack.c.b16 %v4299, %v4297
    %v4320 = vpack.c.b16 %v4300, %v4298
    %v4321 = vpack.c.b16 %v4303, %v4301
    %v4322 = vpack.c.b16 %v4304, %v4302
    %v4323 = vpack.c.b16 %v4307, %v4305
    %v4324 = vpack.c.b16 %v4308, %v4306
    %4341 = vmatpush.bf16.msra.mxu0 %v4323
    %4342 = vmatpush.bf16.msra.mxu0 %v4321
    %4343 = vmatpush.bf16.msra.mxu0 %v4319
    %4344 = vmatpush.bf16.msra.mxu0 %v4317
    %4345 = vmatpush.bf16.msra.mxu0 %v4315
    %4346 = vmatpush.bf16.msra.mxu0 %v4313
    %4347 = vmatpush.bf16.msra.mxu0 %v4311
    %4348 = vmatpush.bf16.msra.mxu0 %v4309
    %4349 = vmatmul.bf16.gmra.mxu0 %v4119
    %v4350 = vpop.f32.mrf.mxu0
    %v4351 = vadd.f32 %v4245, %v4350
    %v4352 = vpop.f32.mrf.mxu0
    %4353 = vdwg.mxu0
    %4354 = vmatpush.bf16.msra.mxu0 %v4324
    %4355 = vmatpush.bf16.msra.mxu0 %v4322
    %4356 = vmatpush.bf16.msra.mxu0 %v4320
    %4357 = vmatpush.bf16.msra.mxu0 %v4318
    %4358 = vmatpush.bf16.msra.mxu0 %v4316
    %4359 = vmatpush.bf16.msra.mxu0 %v4314
    %4360 = vmatpush.bf16.msra.mxu0 %v4312
    %4361 = vmatpush.bf16.msra.mxu0 %v4310
    %4362 = vmatmul.bf16.gmra.mxu0 %v4119
    %v4363 = vpop.f32.mrf.mxu0
    %v4364 = vadd.f32 %v4258, %v4363
    %v4365 = vpop.f32.mrf.mxu0
    %4366 = vdwg.mxu0
    %v4367 = vld [vmem:[#allocation7 + $0x2] sm:$0xff]
    %v4368 = vpack.c.bf16 %v4367, %v4367
    %s4369 = scalar_lea.vmem [#allocation15], 256
    %v4370 = vld [vmem:[%s4369] sm:$0xff]
    %v4371 = vld [vmem:[%s4369 + $0x8] sm:$0xff]
    %v4372 = vld [vmem:[%s4369 + $0x10] sm:$0xff]
    %v4373 = vld [vmem:[%s4369 + $0x18] sm:$0xff]
    %v4374 = vld [vmem:[%s4369 + $0x20] sm:$0xff]
    %v4375 = vld [vmem:[%s4369 + $0x28] sm:$0xff]
    %v4376 = vld [vmem:[%s4369 + $0x30] sm:$0xff]
    %v4377 = vld [vmem:[%s4369 + $0x38] sm:$0xff]
    %v4378 = vld [vmem:[%s4369 + $0x40] sm:$0xff]
    %v4379 = vld [vmem:[%s4369 + $0x48] sm:$0xff]
    %v4380 = vld [vmem:[%s4369 + $0x50] sm:$0xff]
    %v4381 = vld [vmem:[%s4369 + $0x58] sm:$0xff]
    %v4382 = vld [vmem:[%s4369 + $0x60] sm:$0xff]
    %v4383 = vld [vmem:[%s4369 + $0x68] sm:$0xff]
    %v4384 = vld [vmem:[%s4369 + $0x70] sm:$0xff]
    %v4385 = vld [vmem:[%s4369 + $0x78] sm:$0xff]
    %v4402 = vunpack.c.l.b16 %v4370
    %v4403 = vunpack.c.h.b16 %v4370
    %v4404 = vunpack.c.l.b16 %v4371
    %v4405 = vunpack.c.h.b16 %v4371
    %v4406 = vunpack.c.l.b16 %v4372
    %v4407 = vunpack.c.h.b16 %v4372
    %v4408 = vunpack.c.l.b16 %v4373
    %v4409 = vunpack.c.h.b16 %v4373
    %v4410 = vunpack.c.l.b16 %v4374
    %v4411 = vunpack.c.h.b16 %v4374
    %v4412 = vunpack.c.l.b16 %v4375
    %v4413 = vunpack.c.h.b16 %v4375
    %v4414 = vunpack.c.l.b16 %v4376
    %v4415 = vunpack.c.h.b16 %v4376
    %v4416 = vunpack.c.l.b16 %v4377
    %v4417 = vunpack.c.h.b16 %v4377
    %v4418 = vunpack.c.l.b16 %v4378
    %v4419 = vunpack.c.h.b16 %v4378
    %v4420 = vunpack.c.l.b16 %v4379
    %v4421 = vunpack.c.h.b16 %v4379
    %v4422 = vunpack.c.l.b16 %v4380
    %v4423 = vunpack.c.h.b16 %v4380
    %v4424 = vunpack.c.l.b16 %v4381
    %v4425 = vunpack.c.h.b16 %v4381
    %v4426 = vunpack.c.l.b16 %v4382
    %v4427 = vunpack.c.h.b16 %v4382
    %v4428 = vunpack.c.l.b16 %v4383
    %v4429 = vunpack.c.h.b16 %v4383
    %v4430 = vunpack.c.l.b16 %v4384
    %v4431 = vunpack.c.h.b16 %v4384
    %v4432 = vunpack.c.l.b16 %v4385
    %v4433 = vunpack.c.h.b16 %v4385
    %v4434 = vpack.c.b16 %v4404, %v4402
    %v4435 = vpack.c.b16 %v4405, %v4403
    %v4436 = vpack.c.b16 %v4408, %v4406
    %v4437 = vpack.c.b16 %v4409, %v4407
    %v4438 = vpack.c.b16 %v4412, %v4410
    %v4439 = vpack.c.b16 %v4413, %v4411
    %v4440 = vpack.c.b16 %v4416, %v4414
    %v4441 = vpack.c.b16 %v4417, %v4415
    %v4442 = vpack.c.b16 %v4420, %v4418
    %v4443 = vpack.c.b16 %v4421, %v4419
    %v4444 = vpack.c.b16 %v4424, %v4422
    %v4445 = vpack.c.b16 %v4425, %v4423
    %v4446 = vpack.c.b16 %v4428, %v4426
    %v4447 = vpack.c.b16 %v4429, %v4427
    %v4448 = vpack.c.b16 %v4432, %v4430
    %v4449 = vpack.c.b16 %v4433, %v4431
    %4466 = vmatpush.bf16.msra.mxu0 %v4448
    %4467 = vmatpush.bf16.msra.mxu0 %v4446
    %4468 = vmatpush.bf16.msra.mxu0 %v4444
    %4469 = vmatpush.bf16.msra.mxu0 %v4442
    %4470 = vmatpush.bf16.msra.mxu0 %v4440
    %4471 = vmatpush.bf16.msra.mxu0 %v4438
    %4472 = vmatpush.bf16.msra.mxu0 %v4436
    %4473 = vmatpush.bf16.msra.mxu0 %v4434
    %4474 = vmatmul.bf16.gmra.mxu0 %v4368
    %v4475 = vpop.f32.mrf.mxu0
    %v4476 = vadd.f32 0.0, %v4475
    %v4477 = vpop.f32.mrf.mxu0
    %4478 = vdwg.mxu0
    %4479 = vmatpush.bf16.msra.mxu0 %v4449
    %4480 = vmatpush.bf16.msra.mxu0 %v4447
    %4481 = vmatpush.bf16.msra.mxu0 %v4445
    %4482 = vmatpush.bf16.msra.mxu0 %v4443
    %4483 = vmatpush.bf16.msra.mxu0 %v4441
    %4484 = vmatpush.bf16.msra.mxu0 %v4439
    %4485 = vmatpush.bf16.msra.mxu0 %v4437
    %4486 = vmatpush.bf16.msra.mxu0 %v4435
    %4487 = vmatmul.bf16.gmra.mxu0 %v4368
    %v4488 = vpop.f32.mrf.mxu0
    %v4489 = vadd.f32 0.0, %v4488
    %v4490 = vpop.f32.mrf.mxu0
    %4491 = vdwg.mxu0
    %v4492 = vadd.f32 %v4351, %v4476
    %v4493 = vadd.f32 %v4364, %v4489
    %v4494 = vld [vmem:[#allocation7 + $0x3] sm:$0xff]
    %v4495 = vpack.c.bf16 %v4494, %v4494
    %s4496 = scalar_lea.vmem [#allocation15], 384
    %v4497 = vld [vmem:[%s4496] sm:$0xff]
    %v4498 = vld [vmem:[%s4496 + $0x8] sm:$0xff]
    %v4499 = vld [vmem:[%s4496 + $0x10] sm:$0xff]
    %v4500 = vld [vmem:[%s4496 + $0x18] sm:$0xff]
    %v4501 = vld [vmem:[%s4496 + $0x20] sm:$0xff]
    %v4502 = vld [vmem:[%s4496 + $0x28] sm:$0xff]
    %v4503 = vld [vmem:[%s4496 + $0x30] sm:$0xff]
    %v4504 = vld [vmem:[%s4496 + $0x38] sm:$0xff]
    %v4505 = vld [vmem:[%s4496 + $0x40] sm:$0xff]
    %v4506 = vld [vmem:[%s4496 + $0x48] sm:$0xff]
    %v4507 = vld [vmem:[%s4496 + $0x50] sm:$0xff]
    %v4508 = vld [vmem:[%s4496 + $0x58] sm:$0xff]
    %v4509 = vld [vmem:[%s4496 + $0x60] sm:$0xff]
    %v4510 = vld [vmem:[%s4496 + $0x68] sm:$0xff]
    %v4511 = vld [vmem:[%s4496 + $0x70] sm:$0xff]
    %v4512 = vld [vmem:[%s4496 + $0x78] sm:$0xff]
    %v4529 = vunpack.c.l.b16 %v4497
    %v4530 = vunpack.c.h.b16 %v4497
    %v4531 = vunpack.c.l.b16 %v4498
    %v4532 = vunpack.c.h.b16 %v4498
    %v4533 = vunpack.c.l.b16 %v4499
    %v4534 = vunpack.c.h.b16 %v4499
    %v4535 = vunpack.c.l.b16 %v4500
    %v4536 = vunpack.c.h.b16 %v4500
    %v4537 = vunpack.c.l.b16 %v4501
    %v4538 = vunpack.c.h.b16 %v4501
    %v4539 = vunpack.c.l.b16 %v4502
    %v4540 = vunpack.c.h.b16 %v4502
    %v4541 = vunpack.c.l.b16 %v4503
    %v4542 = vunpack.c.h.b16 %v4503
    %v4543 = vunpack.c.l.b16 %v4504
    %v4544 = vunpack.c.h.b16 %v4504
    %v4545 = vunpack.c.l.b16 %v4505
    %v4546 = vunpack.c.h.b16 %v4505
    %v4547 = vunpack.c.l.b16 %v4506
    %v4548 = vunpack.c.h.b16 %v4506
    %v4549 = vunpack.c.l.b16 %v4507
    %v4550 = vunpack.c.h.b16 %v4507
    %v4551 = vunpack.c.l.b16 %v4508
    %v4552 = vunpack.c.h.b16 %v4508
    %v4553 = vunpack.c.l.b16 %v4509
    %v4554 = vunpack.c.h.b16 %v4509
    %v4555 = vunpack.c.l.b16 %v4510
    %v4556 = vunpack.c.h.b16 %v4510
    %v4557 = vunpack.c.l.b16 %v4511
    %v4558 = vunpack.c.h.b16 %v4511
    %v4559 = vunpack.c.l.b16 %v4512
    %v4560 = vunpack.c.h.b16 %v4512
    %v4561 = vpack.c.b16 %v4531, %v4529
    %v4562 = vpack.c.b16 %v4532, %v4530
    %v4563 = vpack.c.b16 %v4535, %v4533
    %v4564 = vpack.c.b16 %v4536, %v4534
    %v4565 = vpack.c.b16 %v4539, %v4537
    %v4566 = vpack.c.b16 %v4540, %v4538
    %v4567 = vpack.c.b16 %v4543, %v4541
    %v4568 = vpack.c.b16 %v4544, %v4542
    %v4569 = vpack.c.b16 %v4547, %v4545
    %v4570 = vpack.c.b16 %v4548, %v4546
    %v4571 = vpack.c.b16 %v4551, %v4549
    %v4572 = vpack.c.b16 %v4552, %v4550
    %v4573 = vpack.c.b16 %v4555, %v4553
    %v4574 = vpack.c.b16 %v4556, %v4554
    %v4575 = vpack.c.b16 %v4559, %v4557
    %v4576 = vpack.c.b16 %v4560, %v4558
    %4593 = vmatpush.bf16.msra.mxu0 %v4575
    %4594 = vmatpush.bf16.msra.mxu0 %v4573
    %4595 = vmatpush.bf16.msra.mxu0 %v4571
    %4596 = vmatpush.bf16.msra.mxu0 %v4569
    %4597 = vmatpush.bf16.msra.mxu0 %v4567
    %4598 = vmatpush.bf16.msra.mxu0 %v4565
    %4599 = vmatpush.bf16.msra.mxu0 %v4563
    %4600 = vmatpush.bf16.msra.mxu0 %v4561
    %4601 = vmatmul.bf16.gmra.mxu0 %v4495
    %v4602 = vpop.f32.mrf.mxu0
    %v4603 = vadd.f32 0.0, %v4602
    %v4604 = vpop.f32.mrf.mxu0
    %4605 = vdwg.mxu0
    %4606 = vmatpush.bf16.msra.mxu0 %v4576
    %4607 = vmatpush.bf16.msra.mxu0 %v4574
    %4608 = vmatpush.bf16.msra.mxu0 %v4572
    %4609 = vmatpush.bf16.msra.mxu0 %v4570
    %4610 = vmatpush.bf16.msra.mxu0 %v4568
    %4611 = vmatpush.bf16.msra.mxu0 %v4566
    %4612 = vmatpush.bf16.msra.mxu0 %v4564
    %4613 = vmatpush.bf16.msra.mxu0 %v4562
    %4614 = vmatmul.bf16.gmra.mxu0 %v4495
    %v4615 = vpop.f32.mrf.mxu0
    %v4616 = vadd.f32 0.0, %v4615
    %v4617 = vpop.f32.mrf.mxu0
    %4618 = vdwg.mxu0
    %v4619 = vadd.f32 %v4492, %v4603
    %v4620 = vadd.f32 %v4493, %v4616
    %v4621 = vld [vmem:[#allocation7 + $0x4] sm:$0xff]
    %v4622 = vpack.c.bf16 %v4621, %v4621
    %s4623 = scalar_lea.vmem [#allocation15], 512
    %v4624 = vld [vmem:[%s4623] sm:$0xff]
    %v4625 = vld [vmem:[%s4623 + $0x8] sm:$0xff]
    %v4626 = vld [vmem:[%s4623 + $0x10] sm:$0xff]
    %v4627 = vld [vmem:[%s4623 + $0x18] sm:$0xff]
    %v4628 = vld [vmem:[%s4623 + $0x20] sm:$0xff]
    %v4629 = vld [vmem:[%s4623 + $0x28] sm:$0xff]
    %v4630 = vld [vmem:[%s4623 + $0x30] sm:$0xff]
    %v4631 = vld [vmem:[%s4623 + $0x38] sm:$0xff]
    %v4632 = vld [vmem:[%s4623 + $0x40] sm:$0xff]
    %v4633 = vld [vmem:[%s4623 + $0x48] sm:$0xff]
    %v4634 = vld [vmem:[%s4623 + $0x50] sm:$0xff]
    %v4635 = vld [vmem:[%s4623 + $0x58] sm:$0xff]
    %v4636 = vld [vmem:[%s4623 + $0x60] sm:$0xff]
    %v4637 = vld [vmem:[%s4623 + $0x68] sm:$0xff]
    %v4638 = vld [vmem:[%s4623 + $0x70] sm:$0xff]
    %v4639 = vld [vmem:[%s4623 + $0x78] sm:$0xff]
    %v4656 = vunpack.c.l.b16 %v4624
    %v4657 = vunpack.c.h.b16 %v4624
    %v4658 = vunpack.c.l.b16 %v4625
    %v4659 = vunpack.c.h.b16 %v4625
    %v4660 = vunpack.c.l.b16 %v4626
    %v4661 = vunpack.c.h.b16 %v4626
    %v4662 = vunpack.c.l.b16 %v4627
    %v4663 = vunpack.c.h.b16 %v4627
    %v4664 = vunpack.c.l.b16 %v4628
    %v4665 = vunpack.c.h.b16 %v4628
    %v4666 = vunpack.c.l.b16 %v4629
    %v4667 = vunpack.c.h.b16 %v4629
    %v4668 = vunpack.c.l.b16 %v4630
    %v4669 = vunpack.c.h.b16 %v4630
    %v4670 = vunpack.c.l.b16 %v4631
    %v4671 = vunpack.c.h.b16 %v4631
    %v4672 = vunpack.c.l.b16 %v4632
    %v4673 = vunpack.c.h.b16 %v4632
    %v4674 = vunpack.c.l.b16 %v4633
    %v4675 = vunpack.c.h.b16 %v4633
    %v4676 = vunpack.c.l.b16 %v4634
    %v4677 = vunpack.c.h.b16 %v4634
    %v4678 = vunpack.c.l.b16 %v4635
    %v4679 = vunpack.c.h.b16 %v4635
    %v4680 = vunpack.c.l.b16 %v4636
    %v4681 = vunpack.c.h.b16 %v4636
    %v4682 = vunpack.c.l.b16 %v4637
    %v4683 = vunpack.c.h.b16 %v4637
    %v4684 = vunpack.c.l.b16 %v4638
    %v4685 = vunpack.c.h.b16 %v4638
    %v4686 = vunpack.c.l.b16 %v4639
    %v4687 = vunpack.c.h.b16 %v4639
    %v4688 = vpack.c.b16 %v4658, %v4656
    %v4689 = vpack.c.b16 %v4659, %v4657
    %v4690 = vpack.c.b16 %v4662, %v4660
    %v4691 = vpack.c.b16 %v4663, %v4661
    %v4692 = vpack.c.b16 %v4666, %v4664
    %v4693 = vpack.c.b16 %v4667, %v4665
    %v4694 = vpack.c.b16 %v4670, %v4668
    %v4695 = vpack.c.b16 %v4671, %v4669
    %v4696 = vpack.c.b16 %v4674, %v4672
    %v4697 = vpack.c.b16 %v4675, %v4673
    %v4698 = vpack.c.b16 %v4678, %v4676
    %v4699 = vpack.c.b16 %v4679, %v4677
    %v4700 = vpack.c.b16 %v4682, %v4680
    %v4701 = vpack.c.b16 %v4683, %v4681
    %v4702 = vpack.c.b16 %v4686, %v4684
    %v4703 = vpack.c.b16 %v4687, %v4685
    %4720 = vmatpush.bf16.msra.mxu0 %v4702
    %4721 = vmatpush.bf16.msra.mxu0 %v4700
    %4722 = vmatpush.bf16.msra.mxu0 %v4698
    %4723 = vmatpush.bf16.msra.mxu0 %v4696
    %4724 = vmatpush.bf16.msra.mxu0 %v4694
    %4725 = vmatpush.bf16.msra.mxu0 %v4692
    %4726 = vmatpush.bf16.msra.mxu0 %v4690
    %4727 = vmatpush.bf16.msra.mxu0 %v4688
    %4728 = vmatmul.bf16.gmra.mxu0 %v4622
    %v4729 = vpop.f32.mrf.mxu0
    %v4730 = vadd.f32 0.0, %v4729
    %v4731 = vpop.f32.mrf.mxu0
    %4732 = vdwg.mxu0
    %4733 = vmatpush.bf16.msra.mxu0 %v4703
    %4734 = vmatpush.bf16.msra.mxu0 %v4701
    %4735 = vmatpush.bf16.msra.mxu0 %v4699
    %4736 = vmatpush.bf16.msra.mxu0 %v4697
    %4737 = vmatpush.bf16.msra.mxu0 %v4695
    %4738 = vmatpush.bf16.msra.mxu0 %v4693
    %4739 = vmatpush.bf16.msra.mxu0 %v4691
    %4740 = vmatpush.bf16.msra.mxu0 %v4689
    %4741 = vmatmul.bf16.gmra.mxu0 %v4622
    %v4742 = vpop.f32.mrf.mxu0
    %v4743 = vadd.f32 0.0, %v4742
    %v4744 = vpop.f32.mrf.mxu0
    %4745 = vdwg.mxu0
    %v4746 = vadd.f32 %v4619, %v4730
    %v4747 = vadd.f32 %v4620, %v4743
    %v4748 = vld [vmem:[#allocation7 + $0x5] sm:$0xff]
    %v4749 = vpack.c.bf16 %v4748, %v4748
    %s4750 = scalar_lea.vmem [#allocation15], 640
    %v4751 = vld [vmem:[%s4750] sm:$0xff]
    %v4752 = vld [vmem:[%s4750 + $0x8] sm:$0xff]
    %v4753 = vld [vmem:[%s4750 + $0x10] sm:$0xff]
    %v4754 = vld [vmem:[%s4750 + $0x18] sm:$0xff]
    %v4755 = vld [vmem:[%s4750 + $0x20] sm:$0xff]
    %v4756 = vld [vmem:[%s4750 + $0x28] sm:$0xff]
    %v4757 = vld [vmem:[%s4750 + $0x30] sm:$0xff]
    %v4758 = vld [vmem:[%s4750 + $0x38] sm:$0xff]
    %v4759 = vld [vmem:[%s4750 + $0x40] sm:$0xff]
    %v4760 = vld [vmem:[%s4750 + $0x48] sm:$0xff]
    %v4761 = vld [vmem:[%s4750 + $0x50] sm:$0xff]
    %v4762 = vld [vmem:[%s4750 + $0x58] sm:$0xff]
    %v4763 = vld [vmem:[%s4750 + $0x60] sm:$0xff]
    %v4764 = vld [vmem:[%s4750 + $0x68] sm:$0xff]
    %v4765 = vld [vmem:[%s4750 + $0x70] sm:$0xff]
    %v4766 = vld [vmem:[%s4750 + $0x78] sm:$0xff]
    %v4783 = vunpack.c.l.b16 %v4751
    %v4784 = vunpack.c.h.b16 %v4751
    %v4785 = vunpack.c.l.b16 %v4752
    %v4786 = vunpack.c.h.b16 %v4752
    %v4787 = vunpack.c.l.b16 %v4753
    %v4788 = vunpack.c.h.b16 %v4753
    %v4789 = vunpack.c.l.b16 %v4754
    %v4790 = vunpack.c.h.b16 %v4754
    %v4791 = vunpack.c.l.b16 %v4755
    %v4792 = vunpack.c.h.b16 %v4755
    %v4793 = vunpack.c.l.b16 %v4756
    %v4794 = vunpack.c.h.b16 %v4756
    %v4795 = vunpack.c.l.b16 %v4757
    %v4796 = vunpack.c.h.b16 %v4757
    %v4797 = vunpack.c.l.b16 %v4758
    %v4798 = vunpack.c.h.b16 %v4758
    %v4799 = vunpack.c.l.b16 %v4759
    %v4800 = vunpack.c.h.b16 %v4759
    %v4801 = vunpack.c.l.b16 %v4760
    %v4802 = vunpack.c.h.b16 %v4760
    %v4803 = vunpack.c.l.b16 %v4761
    %v4804 = vunpack.c.h.b16 %v4761
    %v4805 = vunpack.c.l.b16 %v4762
    %v4806 = vunpack.c.h.b16 %v4762
    %v4807 = vunpack.c.l.b16 %v4763
    %v4808 = vunpack.c.h.b16 %v4763
    %v4809 = vunpack.c.l.b16 %v4764
    %v4810 = vunpack.c.h.b16 %v4764
    %v4811 = vunpack.c.l.b16 %v4765
    %v4812 = vunpack.c.h.b16 %v4765
    %v4813 = vunpack.c.l.b16 %v4766
    %v4814 = vunpack.c.h.b16 %v4766
    %v4815 = vpack.c.b16 %v4785, %v4783
    %v4816 = vpack.c.b16 %v4786, %v4784
    %v4817 = vpack.c.b16 %v4789, %v4787
    %v4818 = vpack.c.b16 %v4790, %v4788
    %v4819 = vpack.c.b16 %v4793, %v4791
    %v4820 = vpack.c.b16 %v4794, %v4792
    %v4821 = vpack.c.b16 %v4797, %v4795
    %v4822 = vpack.c.b16 %v4798, %v4796
    %v4823 = vpack.c.b16 %v4801, %v4799
    %v4824 = vpack.c.b16 %v4802, %v4800
    %v4825 = vpack.c.b16 %v4805, %v4803
    %v4826 = vpack.c.b16 %v4806, %v4804
    %v4827 = vpack.c.b16 %v4809, %v4807
    %v4828 = vpack.c.b16 %v4810, %v4808
    %v4829 = vpack.c.b16 %v4813, %v4811
    %v4830 = vpack.c.b16 %v4814, %v4812
    %4847 = vmatpush.bf16.msra.mxu0 %v4829
    %4848 = vmatpush.bf16.msra.mxu0 %v4827
    %4849 = vmatpush.bf16.msra.mxu0 %v4825
    %4850 = vmatpush.bf16.msra.mxu0 %v4823
    %4851 = vmatpush.bf16.msra.mxu0 %v4821
    %4852 = vmatpush.bf16.msra.mxu0 %v4819
    %4853 = vmatpush.bf16.msra.mxu0 %v4817
    %4854 = vmatpush.bf16.msra.mxu0 %v4815
    %4855 = vmatmul.bf16.gmra.mxu0 %v4749
    %v4856 = vpop.f32.mrf.mxu0
    %v4857 = vadd.f32 0.0, %v4856
    %v4858 = vpop.f32.mrf.mxu0
    %4859 = vdwg.mxu0
    %4860 = vmatpush.bf16.msra.mxu0 %v4830
    %4861 = vmatpush.bf16.msra.mxu0 %v4828
    %4862 = vmatpush.bf16.msra.mxu0 %v4826
    %4863 = vmatpush.bf16.msra.mxu0 %v4824
    %4864 = vmatpush.bf16.msra.mxu0 %v4822
    %4865 = vmatpush.bf16.msra.mxu0 %v4820
    %4866 = vmatpush.bf16.msra.mxu0 %v4818
    %4867 = vmatpush.bf16.msra.mxu0 %v4816
    %4868 = vmatmul.bf16.gmra.mxu0 %v4749
    %v4869 = vpop.f32.mrf.mxu0
    %v4870 = vadd.f32 0.0, %v4869
    %v4871 = vpop.f32.mrf.mxu0
    %4872 = vdwg.mxu0
    %v4873 = vadd.f32 %v4746, %v4857
    %v4874 = vadd.f32 %v4747, %v4870
    %v4875 = vld [vmem:[%s10] sm:$0x3]
    %v4877 = vperm.slane %v4875, 0
    %v4878 = vperm.slane %v4875, 1
    %v4881 = vadd.f32 %v4873, %v4877
    %v4882 = vadd.f32 %v4874, %v4878
    %v4883 = vmax.f32 %v4881, 0.0
    %v4884 = vmax.f32 %v4882, 0.0
    %4885 = vst [vmem:[#allocation8] sm:$0xff] %v4883
    %4886 = vst [vmem:[#allocation8 + $0x8] sm:$0xff] %v4884
    %v4887 = vld [vmem:[#allocation8] sm:$0x7]
    %v4888 = vld [vmem:[#allocation8 + $0x8] sm:$0x7]
    %v4889 = vpack.c.bf16 %v4887, %v4887
    %v4890 = vpack.c.bf16 %v4888, %v4888
    %v4891 = vld [vmem:[#allocation17] sm:$0xff]
    %v4892 = vld [vmem:[#allocation17 + $0x8] sm:$0xff]
    %v4893 = vld [vmem:[#allocation17 + $0x10] sm:$0xff]
    %v4894 = vld [vmem:[#allocation17 + $0x18] sm:$0xff]
    %v4895 = vld [vmem:[#allocation17 + $0x20] sm:$0xff]
    %v4896 = vld [vmem:[#allocation17 + $0x28] sm:$0xff]
    %v4897 = vld [vmem:[#allocation17 + $0x30] sm:$0xff]
    %v4898 = vld [vmem:[#allocation17 + $0x38] sm:$0xff]
    %v4899 = vld [vmem:[#allocation17 + $0x40] sm:$0xff]
    %v4900 = vld [vmem:[#allocation17 + $0x48] sm:$0xff]
    %v4901 = vld [vmem:[#allocation17 + $0x50] sm:$0xff]
    %v4902 = vld [vmem:[#allocation17 + $0x58] sm:$0xff]
    %v4903 = vld [vmem:[#allocation17 + $0x60] sm:$0xff]
    %v4904 = vld [vmem:[#allocation17 + $0x68] sm:$0xff]
    %v4905 = vld [vmem:[#allocation17 + $0x70] sm:$0xff]
    %v4906 = vld [vmem:[#allocation17 + $0x78] sm:$0xff]
    %v4907 = vld [vmem:[#allocation17 + $0x80] sm:$0xff]
    %v4908 = vld [vmem:[#allocation17 + $0x88] sm:$0xff]
    %v4909 = vld [vmem:[#allocation17 + $0x90] sm:$0xff]
    %v4910 = vld [vmem:[#allocation17 + $0x98] sm:$0xff]
    %v4911 = vld [vmem:[#allocation17 + $0xa0] sm:$0xff]
    %v4912 = vld [vmem:[#allocation17 + $0xa8] sm:$0xff]
    %v4913 = vld [vmem:[#allocation17 + $0xb0] sm:$0xff]
    %v4914 = vld [vmem:[#allocation17 + $0xb8] sm:$0xff]
    %v4915 = vld [vmem:[#allocation17 + $0xc0] sm:$0xff]
    %v4916 = vld [vmem:[#allocation17 + $0xc8] sm:$0xff]
    %v4917 = vld [vmem:[#allocation17 + $0xd0] sm:$0xff]
    %v4918 = vld [vmem:[#allocation17 + $0xd8] sm:$0xff]
    %v4919 = vld [vmem:[#allocation17 + $0xe0] sm:$0xff]
    %v4920 = vld [vmem:[#allocation17 + $0xe8] sm:$0xff]
    %v4921 = vld [vmem:[#allocation17 + $0xf0] sm:$0xff]
    %v4922 = vld [vmem:[#allocation17 + $0xf8] sm:$0xff]
    %v4923 = vld [vmem:[#allocation8] sm:$0xe]
    %v4924 = vld [vmem:[#allocation8 + $0x8] sm:$0xe]
    %v4925 = vpack.c.bf16 %v4923, %v4923
    %v4926 = vpack.c.bf16 %v4924, %v4924
    %s4927 = scalar_lea.vmem [#allocation17], 256
    %v4928 = vld [vmem:[%s4927] sm:$0xff]
    %v4929 = vld [vmem:[%s4927 + $0x8] sm:$0xff]
    %v4930 = vld [vmem:[%s4927 + $0x10] sm:$0xff]
    %v4931 = vld [vmem:[%s4927 + $0x18] sm:$0xff]
    %v4932 = vld [vmem:[%s4927 + $0x20] sm:$0xff]
    %v4933 = vld [vmem:[%s4927 + $0x28] sm:$0xff]
    %v4934 = vld [vmem:[%s4927 + $0x30] sm:$0xff]
    %v4935 = vld [vmem:[%s4927 + $0x38] sm:$0xff]
    %v4936 = vld [vmem:[%s4927 + $0x40] sm:$0xff]
    %v4937 = vld [vmem:[%s4927 + $0x48] sm:$0xff]
    %v4938 = vld [vmem:[%s4927 + $0x50] sm:$0xff]
    %v4939 = vld [vmem:[%s4927 + $0x58] sm:$0xff]
    %v4940 = vld [vmem:[%s4927 + $0x60] sm:$0xff]
    %v4941 = vld [vmem:[%s4927 + $0x68] sm:$0xff]
    %v4942 = vld [vmem:[%s4927 + $0x70] sm:$0xff]
    %v4943 = vld [vmem:[%s4927 + $0x78] sm:$0xff]
    %v4944 = vld [vmem:[%s4927 + $0x80] sm:$0xff]
    %v4945 = vld [vmem:[%s4927 + $0x88] sm:$0xff]
    %v4946 = vld [vmem:[%s4927 + $0x90] sm:$0xff]
    %v4947 = vld [vmem:[%s4927 + $0x98] sm:$0xff]
    %v4948 = vld [vmem:[%s4927 + $0xa0] sm:$0xff]
    %v4949 = vld [vmem:[%s4927 + $0xa8] sm:$0xff]
    %v4950 = vld [vmem:[%s4927 + $0xb0] sm:$0xff]
    %v4951 = vld [vmem:[%s4927 + $0xb8] sm:$0xff]
    %v4952 = vld [vmem:[%s4927 + $0xc0] sm:$0xff]
    %v4953 = vld [vmem:[%s4927 + $0xc8] sm:$0xff]
    %v4954 = vld [vmem:[%s4927 + $0xd0] sm:$0xff]
    %v4955 = vld [vmem:[%s4927 + $0xd8] sm:$0xff]
    %v4956 = vld [vmem:[%s4927 + $0xe0] sm:$0xff]
    %v4957 = vld [vmem:[%s4927 + $0xe8] sm:$0xff]
    %v4958 = vld [vmem:[%s4927 + $0xf0] sm:$0xff]
    %v4959 = vld [vmem:[%s4927 + $0xf8] sm:$0xff]
    %v4961 = vshrl.u32 %v4925, 16
    %v4963 = vshll.u32 %v4925, 16
    %v4965 = vrot.slane %v4963, 1
    %v4966 = vor.u32 %v4961, %v4965
    %v4968 = vshrl.u32 %v4926, 16
    %v4970 = vshll.u32 %v4926, 16
    %v4972 = vrot.slane %v4970, 1
    %v4973 = vor.u32 %v4968, %v4972
    %v5008 = vunpack.c.l.b16 %v4928
    %v5009 = vunpack.c.h.b16 %v4928
    %v5010 = vunpack.c.l.b16 %v4929
    %v5011 = vunpack.c.h.b16 %v4929
    %v5012 = vunpack.c.l.b16 %v4930
    %v5013 = vunpack.c.h.b16 %v4930
    %v5014 = vunpack.c.l.b16 %v4931
    %v5015 = vunpack.c.h.b16 %v4931
    %v5016 = vunpack.c.l.b16 %v4932
    %v5017 = vunpack.c.h.b16 %v4932
    %v5018 = vunpack.c.l.b16 %v4933
    %v5019 = vunpack.c.h.b16 %v4933
    %v5020 = vunpack.c.l.b16 %v4934
    %v5021 = vunpack.c.h.b16 %v4934
    %v5022 = vunpack.c.l.b16 %v4935
    %v5023 = vunpack.c.h.b16 %v4935
    %v5024 = vunpack.c.l.b16 %v4936
    %v5025 = vunpack.c.h.b16 %v4936
    %v5026 = vunpack.c.l.b16 %v4937
    %v5027 = vunpack.c.h.b16 %v4937
    %v5028 = vunpack.c.l.b16 %v4938
    %v5029 = vunpack.c.h.b16 %v4938
    %v5030 = vunpack.c.l.b16 %v4939
    %v5031 = vunpack.c.h.b16 %v4939
    %v5032 = vunpack.c.l.b16 %v4940
    %v5033 = vunpack.c.h.b16 %v4940
    %v5034 = vunpack.c.l.b16 %v4941
    %v5035 = vunpack.c.h.b16 %v4941
    %v5036 = vunpack.c.l.b16 %v4942
    %v5037 = vunpack.c.h.b16 %v4942
    %v5038 = vunpack.c.l.b16 %v4943
    %v5039 = vunpack.c.h.b16 %v4943
    %v5040 = vunpack.c.l.b16 %v4944
    %v5041 = vunpack.c.h.b16 %v4944
    %v5042 = vunpack.c.l.b16 %v4945
    %v5043 = vunpack.c.h.b16 %v4945
    %v5044 = vunpack.c.l.b16 %v4946
    %v5045 = vunpack.c.h.b16 %v4946
    %v5046 = vunpack.c.l.b16 %v4947
    %v5047 = vunpack.c.h.b16 %v4947
    %v5048 = vunpack.c.l.b16 %v4948
    %v5049 = vunpack.c.h.b16 %v4948
    %v5050 = vunpack.c.l.b16 %v4949
    %v5051 = vunpack.c.h.b16 %v4949
    %v5052 = vunpack.c.l.b16 %v4950
    %v5053 = vunpack.c.h.b16 %v4950
    %v5054 = vunpack.c.l.b16 %v4951
    %v5055 = vunpack.c.h.b16 %v4951
    %v5056 = vunpack.c.l.b16 %v4952
    %v5057 = vunpack.c.h.b16 %v4952
    %v5058 = vunpack.c.l.b16 %v4953
    %v5059 = vunpack.c.h.b16 %v4953
    %v5060 = vunpack.c.l.b16 %v4954
    %v5061 = vunpack.c.h.b16 %v4954
    %v5062 = vunpack.c.l.b16 %v4955
    %v5063 = vunpack.c.h.b16 %v4955
    %v5064 = vunpack.c.l.b16 %v4956
    %v5065 = vunpack.c.h.b16 %v4956
    %v5066 = vunpack.c.l.b16 %v4957
    %v5067 = vunpack.c.h.b16 %v4957
    %v5068 = vunpack.c.l.b16 %v4958
    %v5069 = vunpack.c.h.b16 %v4958
    %v5070 = vunpack.c.l.b16 %v4959
    %v5071 = vunpack.c.h.b16 %v4959
    %v5072 = vpack.c.b16 %v5010, %v5008
    %v5073 = vpack.c.b16 %v5011, %v5009
    %v5074 = vpack.c.b16 %v5014, %v5012
    %v5075 = vpack.c.b16 %v5015, %v5013
    %v5076 = vpack.c.b16 %v5018, %v5016
    %v5077 = vpack.c.b16 %v5019, %v5017
    %v5078 = vpack.c.b16 %v5022, %v5020
    %v5079 = vpack.c.b16 %v5023, %v5021
    %v5080 = vpack.c.b16 %v5026, %v5024
    %v5081 = vpack.c.b16 %v5027, %v5025
    %v5082 = vpack.c.b16 %v5030, %v5028
    %v5083 = vpack.c.b16 %v5031, %v5029
    %v5084 = vpack.c.b16 %v5034, %v5032
    %v5085 = vpack.c.b16 %v5035, %v5033
    %v5086 = vpack.c.b16 %v5038, %v5036
    %v5087 = vpack.c.b16 %v5039, %v5037
    %v5088 = vpack.c.b16 %v5042, %v5040
    %v5089 = vpack.c.b16 %v5043, %v5041
    %v5090 = vpack.c.b16 %v5046, %v5044
    %v5091 = vpack.c.b16 %v5047, %v5045
    %v5092 = vpack.c.b16 %v5050, %v5048
    %v5093 = vpack.c.b16 %v5051, %v5049
    %v5094 = vpack.c.b16 %v5054, %v5052
    %v5095 = vpack.c.b16 %v5055, %v5053
    %v5096 = vpack.c.b16 %v5058, %v5056
    %v5097 = vpack.c.b16 %v5059, %v5057
    %v5098 = vpack.c.b16 %v5062, %v5060
    %v5099 = vpack.c.b16 %v5063, %v5061
    %v5100 = vpack.c.b16 %v5066, %v5064
    %v5101 = vpack.c.b16 %v5067, %v5065
    %v5102 = vpack.c.b16 %v5070, %v5068
    %v5103 = vpack.c.b16 %v5071, %v5069
    %5136 = vmatpush.bf16.msra.mxu0 %v5086
    %5137 = vmatpush.bf16.msra.mxu0 %v5084
    %5138 = vmatpush.bf16.msra.mxu0 %v5082
    %5139 = vmatpush.bf16.msra.mxu0 %v5080
    %5140 = vmatpush.bf16.msra.mxu0 %v5078
    %5141 = vmatpush.bf16.msra.mxu0 %v5076
    %5142 = vmatpush.bf16.msra.mxu0 %v5074
    %5143 = vmatpush.bf16.msra.mxu0 %v5072
    %5144 = vmatmul.bf16.gmra.mxu0 %v4966
    %v5145 = vpop.f32.mrf.mxu0
    %v5146 = vadd.f32 0.0, %v5145
    %v5147 = vpop.f32.mrf.mxu0
    %5148 = vdwg.mxu0
    %5149 = vmatpush.bf16.msra.mxu0 %v5102
    %5150 = vmatpush.bf16.msra.mxu0 %v5100
    %5151 = vmatpush.bf16.msra.mxu0 %v5098
    %5152 = vmatpush.bf16.msra.mxu0 %v5096
    %5153 = vmatpush.bf16.msra.mxu0 %v5094
    %5154 = vmatpush.bf16.msra.mxu0 %v5092
    %5155 = vmatpush.bf16.msra.mxu0 %v5090
    %5156 = vmatpush.bf16.msra.mxu0 %v5088
    %5157 = vmatmul.bf16.gmra.mxu0 %v4973
    %v5158 = vpop.f32.mrf.mxu0
    %v5159 = vadd.f32 %v5146, %v5158
    %v5160 = vpop.f32.mrf.mxu0
    %5161 = vdwg.mxu0
    %5162 = vmatpush.bf16.msra.mxu0 %v5087
    %5163 = vmatpush.bf16.msra.mxu0 %v5085
    %5164 = vmatpush.bf16.msra.mxu0 %v5083
    %5165 = vmatpush.bf16.msra.mxu0 %v5081
    %5166 = vmatpush.bf16.msra.mxu0 %v5079
    %5167 = vmatpush.bf16.msra.mxu0 %v5077
    %5168 = vmatpush.bf16.msra.mxu0 %v5075
    %5169 = vmatpush.bf16.msra.mxu0 %v5073
    %5170 = vmatmul.bf16.gmra.mxu0 %v4966
    %v5171 = vpop.f32.mrf.mxu0
    %v5172 = vadd.f32 0.0, %v5171
    %v5173 = vpop.f32.mrf.mxu0
    %5174 = vdwg.mxu0
    %5175 = vmatpush.bf16.msra.mxu0 %v5103
    %5176 = vmatpush.bf16.msra.mxu0 %v5101
    %5177 = vmatpush.bf16.msra.mxu0 %v5099
    %5178 = vmatpush.bf16.msra.mxu0 %v5097
    %5179 = vmatpush.bf16.msra.mxu0 %v5095
    %5180 = vmatpush.bf16.msra.mxu0 %v5093
    %5181 = vmatpush.bf16.msra.mxu0 %v5091
    %5182 = vmatpush.bf16.msra.mxu0 %v5089
    %5183 = vmatmul.bf16.gmra.mxu0 %v4973
    %v5184 = vpop.f32.mrf.mxu0
    %v5185 = vadd.f32 %v5172, %v5184
    %v5186 = vpop.f32.mrf.mxu0
    %5187 = vdwg.mxu0
    %v5220 = vunpack.c.l.b16 %v4891
    %v5221 = vunpack.c.h.b16 %v4891
    %v5222 = vunpack.c.l.b16 %v4892
    %v5223 = vunpack.c.h.b16 %v4892
    %v5224 = vunpack.c.l.b16 %v4893
    %v5225 = vunpack.c.h.b16 %v4893
    %v5226 = vunpack.c.l.b16 %v4894
    %v5227 = vunpack.c.h.b16 %v4894
    %v5228 = vunpack.c.l.b16 %v4895
    %v5229 = vunpack.c.h.b16 %v4895
    %v5230 = vunpack.c.l.b16 %v4896
    %v5231 = vunpack.c.h.b16 %v4896
    %v5232 = vunpack.c.l.b16 %v4897
    %v5233 = vunpack.c.h.b16 %v4897
    %v5234 = vunpack.c.l.b16 %v4898
    %v5235 = vunpack.c.h.b16 %v4898
    %v5236 = vunpack.c.l.b16 %v4899
    %v5237 = vunpack.c.h.b16 %v4899
    %v5238 = vunpack.c.l.b16 %v4900
    %v5239 = vunpack.c.h.b16 %v4900
    %v5240 = vunpack.c.l.b16 %v4901
    %v5241 = vunpack.c.h.b16 %v4901
    %v5242 = vunpack.c.l.b16 %v4902
    %v5243 = vunpack.c.h.b16 %v4902
    %v5244 = vunpack.c.l.b16 %v4903
    %v5245 = vunpack.c.h.b16 %v4903
    %v5246 = vunpack.c.l.b16 %v4904
    %v5247 = vunpack.c.h.b16 %v4904
    %v5248 = vunpack.c.l.b16 %v4905
    %v5249 = vunpack.c.h.b16 %v4905
    %v5250 = vunpack.c.l.b16 %v4906
    %v5251 = vunpack.c.h.b16 %v4906
    %v5252 = vunpack.c.l.b16 %v4907
    %v5253 = vunpack.c.h.b16 %v4907
    %v5254 = vunpack.c.l.b16 %v4908
    %v5255 = vunpack.c.h.b16 %v4908
    %v5256 = vunpack.c.l.b16 %v4909
    %v5257 = vunpack.c.h.b16 %v4909
    %v5258 = vunpack.c.l.b16 %v4910
    %v5259 = vunpack.c.h.b16 %v4910
    %v5260 = vunpack.c.l.b16 %v4911
    %v5261 = vunpack.c.h.b16 %v4911
    %v5262 = vunpack.c.l.b16 %v4912
    %v5263 = vunpack.c.h.b16 %v4912
    %v5264 = vunpack.c.l.b16 %v4913
    %v5265 = vunpack.c.h.b16 %v4913
    %v5266 = vunpack.c.l.b16 %v4914
    %v5267 = vunpack.c.h.b16 %v4914
    %v5268 = vunpack.c.l.b16 %v4915
    %v5269 = vunpack.c.h.b16 %v4915
    %v5270 = vunpack.c.l.b16 %v4916
    %v5271 = vunpack.c.h.b16 %v4916
    %v5272 = vunpack.c.l.b16 %v4917
    %v5273 = vunpack.c.h.b16 %v4917
    %v5274 = vunpack.c.l.b16 %v4918
    %v5275 = vunpack.c.h.b16 %v4918
    %v5276 = vunpack.c.l.b16 %v4919
    %v5277 = vunpack.c.h.b16 %v4919
    %v5278 = vunpack.c.l.b16 %v4920
    %v5279 = vunpack.c.h.b16 %v4920
    %v5280 = vunpack.c.l.b16 %v4921
    %v5281 = vunpack.c.h.b16 %v4921
    %v5282 = vunpack.c.l.b16 %v4922
    %v5283 = vunpack.c.h.b16 %v4922
    %v5284 = vpack.c.b16 %v5222, %v5220
    %v5285 = vpack.c.b16 %v5223, %v5221
    %v5286 = vpack.c.b16 %v5226, %v5224
    %v5287 = vpack.c.b16 %v5227, %v5225
    %v5288 = vpack.c.b16 %v5230, %v5228
    %v5289 = vpack.c.b16 %v5231, %v5229
    %v5290 = vpack.c.b16 %v5234, %v5232
    %v5291 = vpack.c.b16 %v5235, %v5233
    %v5292 = vpack.c.b16 %v5238, %v5236
    %v5293 = vpack.c.b16 %v5239, %v5237
    %v5294 = vpack.c.b16 %v5242, %v5240
    %v5295 = vpack.c.b16 %v5243, %v5241
    %v5296 = vpack.c.b16 %v5246, %v5244
    %v5297 = vpack.c.b16 %v5247, %v5245
    %v5298 = vpack.c.b16 %v5250, %v5248
    %v5299 = vpack.c.b16 %v5251, %v5249
    %v5300 = vpack.c.b16 %v5254, %v5252
    %v5301 = vpack.c.b16 %v5255, %v5253
    %v5302 = vpack.c.b16 %v5258, %v5256
    %v5303 = vpack.c.b16 %v5259, %v5257
    %v5304 = vpack.c.b16 %v5262, %v5260
    %v5305 = vpack.c.b16 %v5263, %v5261
    %v5306 = vpack.c.b16 %v5266, %v5264
    %v5307 = vpack.c.b16 %v5267, %v5265
    %v5308 = vpack.c.b16 %v5270, %v5268
    %v5309 = vpack.c.b16 %v5271, %v5269
    %v5310 = vpack.c.b16 %v5274, %v5272
    %v5311 = vpack.c.b16 %v5275, %v5273
    %v5312 = vpack.c.b16 %v5278, %v5276
    %v5313 = vpack.c.b16 %v5279, %v5277
    %v5314 = vpack.c.b16 %v5282, %v5280
    %v5315 = vpack.c.b16 %v5283, %v5281
    %5348 = vmatpush.bf16.msra.mxu0 %v5298
    %5349 = vmatpush.bf16.msra.mxu0 %v5296
    %5350 = vmatpush.bf16.msra.mxu0 %v5294
    %5351 = vmatpush.bf16.msra.mxu0 %v5292
    %5352 = vmatpush.bf16.msra.mxu0 %v5290
    %5353 = vmatpush.bf16.msra.mxu0 %v5288
    %5354 = vmatpush.bf16.msra.mxu0 %v5286
    %5355 = vmatpush.bf16.msra.mxu0 %v5284
    %5356 = vmatmul.bf16.gmra.mxu0 %v4889
    %v5357 = vpop.f32.mrf.mxu0
    %v5358 = vadd.f32 %v5159, %v5357
    %v5359 = vpop.f32.mrf.mxu0
    %5360 = vdwg.mxu0
    %5361 = vmatpush.bf16.msra.mxu0 %v5314
    %5362 = vmatpush.bf16.msra.mxu0 %v5312
    %5363 = vmatpush.bf16.msra.mxu0 %v5310
    %5364 = vmatpush.bf16.msra.mxu0 %v5308
    %5365 = vmatpush.bf16.msra.mxu0 %v5306
    %5366 = vmatpush.bf16.msra.mxu0 %v5304
    %5367 = vmatpush.bf16.msra.mxu0 %v5302
    %5368 = vmatpush.bf16.msra.mxu0 %v5300
    %5369 = vmatmul.bf16.gmra.mxu0 %v4890
    %v5370 = vpop.f32.mrf.mxu0
    %v5371 = vadd.f32 %v5358, %v5370
    %v5372 = vpop.f32.mrf.mxu0
    %5373 = vdwg.mxu0
    %5374 = vmatpush.bf16.msra.mxu0 %v5299
    %5375 = vmatpush.bf16.msra.mxu0 %v5297
    %5376 = vmatpush.bf16.msra.mxu0 %v5295
    %5377 = vmatpush.bf16.msra.mxu0 %v5293
    %5378 = vmatpush.bf16.msra.mxu0 %v5291
    %5379 = vmatpush.bf16.msra.mxu0 %v5289
    %5380 = vmatpush.bf16.msra.mxu0 %v5287
    %5381 = vmatpush.bf16.msra.mxu0 %v5285
    %5382 = vmatmul.bf16.gmra.mxu0 %v4889
    %v5383 = vpop.f32.mrf.mxu0
    %v5384 = vadd.f32 %v5185, %v5383
    %v5385 = vpop.f32.mrf.mxu0
    %5386 = vdwg.mxu0
    %5387 = vmatpush.bf16.msra.mxu0 %v5315
    %5388 = vmatpush.bf16.msra.mxu0 %v5313
    %5389 = vmatpush.bf16.msra.mxu0 %v5311
    %5390 = vmatpush.bf16.msra.mxu0 %v5309
    %5391 = vmatpush.bf16.msra.mxu0 %v5307
    %5392 = vmatpush.bf16.msra.mxu0 %v5305
    %5393 = vmatpush.bf16.msra.mxu0 %v5303
    %5394 = vmatpush.bf16.msra.mxu0 %v5301
    %5395 = vmatmul.bf16.gmra.mxu0 %v4890
    %v5396 = vpop.f32.mrf.mxu0
    %v5397 = vadd.f32 %v5384, %v5396
    %v5398 = vpop.f32.mrf.mxu0
    %5399 = vdwg.mxu0
    %v5400 = vld [vmem:[#allocation8] sm:$0x1c]
    %v5401 = vld [vmem:[#allocation8 + $0x8] sm:$0x1c]
    %v5402 = vpack.c.bf16 %v5400, %v5400
    %v5403 = vpack.c.bf16 %v5401, %v5401
    %s5404 = scalar_lea.vmem [#allocation17], 512
    %v5405 = vld [vmem:[%s5404] sm:$0xff]
    %v5406 = vld [vmem:[%s5404 + $0x8] sm:$0xff]
    %v5407 = vld [vmem:[%s5404 + $0x10] sm:$0xff]
    %v5408 = vld [vmem:[%s5404 + $0x18] sm:$0xff]
    %v5409 = vld [vmem:[%s5404 + $0x20] sm:$0xff]
    %v5410 = vld [vmem:[%s5404 + $0x28] sm:$0xff]
    %v5411 = vld [vmem:[%s5404 + $0x30] sm:$0xff]
    %v5412 = vld [vmem:[%s5404 + $0x38] sm:$0xff]
    %v5413 = vld [vmem:[%s5404 + $0x40] sm:$0xff]
    %v5414 = vld [vmem:[%s5404 + $0x48] sm:$0xff]
    %v5415 = vld [vmem:[%s5404 + $0x50] sm:$0xff]
    %v5416 = vld [vmem:[%s5404 + $0x58] sm:$0xff]
    %v5417 = vld [vmem:[%s5404 + $0x60] sm:$0xff]
    %v5418 = vld [vmem:[%s5404 + $0x68] sm:$0xff]
    %v5419 = vld [vmem:[%s5404 + $0x70] sm:$0xff]
    %v5420 = vld [vmem:[%s5404 + $0x78] sm:$0xff]
    %v5421 = vld [vmem:[%s5404 + $0x80] sm:$0xff]
    %v5422 = vld [vmem:[%s5404 + $0x88] sm:$0xff]
    %v5423 = vld [vmem:[%s5404 + $0x90] sm:$0xff]
    %v5424 = vld [vmem:[%s5404 + $0x98] sm:$0xff]
    %v5425 = vld [vmem:[%s5404 + $0xa0] sm:$0xff]
    %v5426 = vld [vmem:[%s5404 + $0xa8] sm:$0xff]
    %v5427 = vld [vmem:[%s5404 + $0xb0] sm:$0xff]
    %v5428 = vld [vmem:[%s5404 + $0xb8] sm:$0xff]
    %v5429 = vld [vmem:[%s5404 + $0xc0] sm:$0xff]
    %v5430 = vld [vmem:[%s5404 + $0xc8] sm:$0xff]
    %v5431 = vld [vmem:[%s5404 + $0xd0] sm:$0xff]
    %v5432 = vld [vmem:[%s5404 + $0xd8] sm:$0xff]
    %v5433 = vld [vmem:[%s5404 + $0xe0] sm:$0xff]
    %v5434 = vld [vmem:[%s5404 + $0xe8] sm:$0xff]
    %v5435 = vld [vmem:[%s5404 + $0xf0] sm:$0xff]
    %v5436 = vld [vmem:[%s5404 + $0xf8] sm:$0xff]
    %v5439 = vrot.slane %v5402, 1
    %v5440 = vrot.slane %v5403, 1
    %v5475 = vunpack.c.l.b16 %v5405
    %v5476 = vunpack.c.h.b16 %v5405
    %v5477 = vunpack.c.l.b16 %v5406
    %v5478 = vunpack.c.h.b16 %v5406
    %v5479 = vunpack.c.l.b16 %v5407
    %v5480 = vunpack.c.h.b16 %v5407
    %v5481 = vunpack.c.l.b16 %v5408
    %v5482 = vunpack.c.h.b16 %v5408
    %v5483 = vunpack.c.l.b16 %v5409
    %v5484 = vunpack.c.h.b16 %v5409
    %v5485 = vunpack.c.l.b16 %v5410
    %v5486 = vunpack.c.h.b16 %v5410
    %v5487 = vunpack.c.l.b16 %v5411
    %v5488 = vunpack.c.h.b16 %v5411
    %v5489 = vunpack.c.l.b16 %v5412
    %v5490 = vunpack.c.h.b16 %v5412
    %v5491 = vunpack.c.l.b16 %v5413
    %v5492 = vunpack.c.h.b16 %v5413
    %v5493 = vunpack.c.l.b16 %v5414
    %v5494 = vunpack.c.h.b16 %v5414
    %v5495 = vunpack.c.l.b16 %v5415
    %v5496 = vunpack.c.h.b16 %v5415
    %v5497 = vunpack.c.l.b16 %v5416
    %v5498 = vunpack.c.h.b16 %v5416
    %v5499 = vunpack.c.l.b16 %v5417
    %v5500 = vunpack.c.h.b16 %v5417
    %v5501 = vunpack.c.l.b16 %v5418
    %v5502 = vunpack.c.h.b16 %v5418
    %v5503 = vunpack.c.l.b16 %v5419
    %v5504 = vunpack.c.h.b16 %v5419
    %v5505 = vunpack.c.l.b16 %v5420
    %v5506 = vunpack.c.h.b16 %v5420
    %v5507 = vunpack.c.l.b16 %v5421
    %v5508 = vunpack.c.h.b16 %v5421
    %v5509 = vunpack.c.l.b16 %v5422
    %v5510 = vunpack.c.h.b16 %v5422
    %v5511 = vunpack.c.l.b16 %v5423
    %v5512 = vunpack.c.h.b16 %v5423
    %v5513 = vunpack.c.l.b16 %v5424
    %v5514 = vunpack.c.h.b16 %v5424
    %v5515 = vunpack.c.l.b16 %v5425
    %v5516 = vunpack.c.h.b16 %v5425
    %v5517 = vunpack.c.l.b16 %v5426
    %v5518 = vunpack.c.h.b16 %v5426
    %v5519 = vunpack.c.l.b16 %v5427
    %v5520 = vunpack.c.h.b16 %v5427
    %v5521 = vunpack.c.l.b16 %v5428
    %v5522 = vunpack.c.h.b16 %v5428
    %v5523 = vunpack.c.l.b16 %v5429
    %v5524 = vunpack.c.h.b16 %v5429
    %v5525 = vunpack.c.l.b16 %v5430
    %v5526 = vunpack.c.h.b16 %v5430
    %v5527 = vunpack.c.l.b16 %v5431
    %v5528 = vunpack.c.h.b16 %v5431
    %v5529 = vunpack.c.l.b16 %v5432
    %v5530 = vunpack.c.h.b16 %v5432
    %v5531 = vunpack.c.l.b16 %v5433
    %v5532 = vunpack.c.h.b16 %v5433
    %v5533 = vunpack.c.l.b16 %v5434
    %v5534 = vunpack.c.h.b16 %v5434
    %v5535 = vunpack.c.l.b16 %v5435
    %v5536 = vunpack.c.h.b16 %v5435
    %v5537 = vunpack.c.l.b16 %v5436
    %v5538 = vunpack.c.h.b16 %v5436
    %v5539 = vpack.c.b16 %v5477, %v5475
    %v5540 = vpack.c.b16 %v5478, %v5476
    %v5541 = vpack.c.b16 %v5481, %v5479
    %v5542 = vpack.c.b16 %v5482, %v5480
    %v5543 = vpack.c.b16 %v5485, %v5483
    %v5544 = vpack.c.b16 %v5486, %v5484
    %v5545 = vpack.c.b16 %v5489, %v5487
    %v5546 = vpack.c.b16 %v5490, %v5488
    %v5547 = vpack.c.b16 %v5493, %v5491
    %v5548 = vpack.c.b16 %v5494, %v5492
    %v5549 = vpack.c.b16 %v5497, %v5495
    %v5550 = vpack.c.b16 %v5498, %v5496
    %v5551 = vpack.c.b16 %v5501, %v5499
    %v5552 = vpack.c.b16 %v5502, %v5500
    %v5553 = vpack.c.b16 %v5505, %v5503
    %v5554 = vpack.c.b16 %v5506, %v5504
    %v5555 = vpack.c.b16 %v5509, %v5507
    %v5556 = vpack.c.b16 %v5510, %v5508
    %v5557 = vpack.c.b16 %v5513, %v5511
    %v5558 = vpack.c.b16 %v5514, %v5512
    %v5559 = vpack.c.b16 %v5517, %v5515
    %v5560 = vpack.c.b16 %v5518, %v5516
    %v5561 = vpack.c.b16 %v5521, %v5519
    %v5562 = vpack.c.b16 %v5522, %v5520
    %v5563 = vpack.c.b16 %v5525, %v5523
    %v5564 = vpack.c.b16 %v5526, %v5524
    %v5565 = vpack.c.b16 %v5529, %v5527
    %v5566 = vpack.c.b16 %v5530, %v5528
    %v5567 = vpack.c.b16 %v5533, %v5531
    %v5568 = vpack.c.b16 %v5534, %v5532
    %v5569 = vpack.c.b16 %v5537, %v5535
    %v5570 = vpack.c.b16 %v5538, %v5536
    %5603 = vmatpush.bf16.msra.mxu0 %v5553
    %5604 = vmatpush.bf16.msra.mxu0 %v5551
    %5605 = vmatpush.bf16.msra.mxu0 %v5549
    %5606 = vmatpush.bf16.msra.mxu0 %v5547
    %5607 = vmatpush.bf16.msra.mxu0 %v5545
    %5608 = vmatpush.bf16.msra.mxu0 %v5543
    %5609 = vmatpush.bf16.msra.mxu0 %v5541
    %5610 = vmatpush.bf16.msra.mxu0 %v5539
    %5611 = vmatmul.bf16.gmra.mxu0 %v5439
    %v5612 = vpop.f32.mrf.mxu0
    %v5613 = vadd.f32 0.0, %v5612
    %v5614 = vpop.f32.mrf.mxu0
    %5615 = vdwg.mxu0
    %5616 = vmatpush.bf16.msra.mxu0 %v5569
    %5617 = vmatpush.bf16.msra.mxu0 %v5567
    %5618 = vmatpush.bf16.msra.mxu0 %v5565
    %5619 = vmatpush.bf16.msra.mxu0 %v5563
    %5620 = vmatpush.bf16.msra.mxu0 %v5561
    %5621 = vmatpush.bf16.msra.mxu0 %v5559
    %5622 = vmatpush.bf16.msra.mxu0 %v5557
    %5623 = vmatpush.bf16.msra.mxu0 %v5555
    %5624 = vmatmul.bf16.gmra.mxu0 %v5440
    %v5625 = vpop.f32.mrf.mxu0
    %v5626 = vadd.f32 %v5613, %v5625
    %v5627 = vpop.f32.mrf.mxu0
    %5628 = vdwg.mxu0
    %5629 = vmatpush.bf16.msra.mxu0 %v5554
    %5630 = vmatpush.bf16.msra.mxu0 %v5552
    %5631 = vmatpush.bf16.msra.mxu0 %v5550
    %5632 = vmatpush.bf16.msra.mxu0 %v5548
    %5633 = vmatpush.bf16.msra.mxu0 %v5546
    %5634 = vmatpush.bf16.msra.mxu0 %v5544
    %5635 = vmatpush.bf16.msra.mxu0 %v5542
    %5636 = vmatpush.bf16.msra.mxu0 %v5540
    %5637 = vmatmul.bf16.gmra.mxu0 %v5439
    %v5638 = vpop.f32.mrf.mxu0
    %v5639 = vadd.f32 0.0, %v5638
    %v5640 = vpop.f32.mrf.mxu0
    %5641 = vdwg.mxu0
    %5642 = vmatpush.bf16.msra.mxu0 %v5570
    %5643 = vmatpush.bf16.msra.mxu0 %v5568
    %5644 = vmatpush.bf16.msra.mxu0 %v5566
    %5645 = vmatpush.bf16.msra.mxu0 %v5564
    %5646 = vmatpush.bf16.msra.mxu0 %v5562
    %5647 = vmatpush.bf16.msra.mxu0 %v5560
    %5648 = vmatpush.bf16.msra.mxu0 %v5558
    %5649 = vmatpush.bf16.msra.mxu0 %v5556
    %5650 = vmatmul.bf16.gmra.mxu0 %v5440
    %v5651 = vpop.f32.mrf.mxu0
    %v5652 = vadd.f32 %v5639, %v5651
    %v5653 = vpop.f32.mrf.mxu0
    %5654 = vdwg.mxu0
    %v5655 = vadd.f32 %v5371, %v5626
    %v5656 = vadd.f32 %v5397, %v5652
    %v5657 = vld [vmem:[#allocation8] sm:$0x38]
    %v5658 = vld [vmem:[#allocation8 + $0x8] sm:$0x38]
    %v5659 = vpack.c.bf16 %v5657, %v5657
    %v5660 = vpack.c.bf16 %v5658, %v5658
    %s5661 = scalar_lea.vmem [#allocation17], 768
    %v5662 = vld [vmem:[%s5661] sm:$0xff]
    %v5663 = vld [vmem:[%s5661 + $0x8] sm:$0xff]
    %v5664 = vld [vmem:[%s5661 + $0x10] sm:$0xff]
    %v5665 = vld [vmem:[%s5661 + $0x18] sm:$0xff]
    %v5666 = vld [vmem:[%s5661 + $0x20] sm:$0xff]
    %v5667 = vld [vmem:[%s5661 + $0x28] sm:$0xff]
    %v5668 = vld [vmem:[%s5661 + $0x30] sm:$0xff]
    %v5669 = vld [vmem:[%s5661 + $0x38] sm:$0xff]
    %v5670 = vld [vmem:[%s5661 + $0x40] sm:$0xff]
    %v5671 = vld [vmem:[%s5661 + $0x48] sm:$0xff]
    %v5672 = vld [vmem:[%s5661 + $0x50] sm:$0xff]
    %v5673 = vld [vmem:[%s5661 + $0x58] sm:$0xff]
    %v5674 = vld [vmem:[%s5661 + $0x60] sm:$0xff]
    %v5675 = vld [vmem:[%s5661 + $0x68] sm:$0xff]
    %v5676 = vld [vmem:[%s5661 + $0x70] sm:$0xff]
    %v5677 = vld [vmem:[%s5661 + $0x78] sm:$0xff]
    %v5678 = vld [vmem:[%s5661 + $0x80] sm:$0xff]
    %v5679 = vld [vmem:[%s5661 + $0x88] sm:$0xff]
    %v5680 = vld [vmem:[%s5661 + $0x90] sm:$0xff]
    %v5681 = vld [vmem:[%s5661 + $0x98] sm:$0xff]
    %v5682 = vld [vmem:[%s5661 + $0xa0] sm:$0xff]
    %v5683 = vld [vmem:[%s5661 + $0xa8] sm:$0xff]
    %v5684 = vld [vmem:[%s5661 + $0xb0] sm:$0xff]
    %v5685 = vld [vmem:[%s5661 + $0xb8] sm:$0xff]
    %v5686 = vld [vmem:[%s5661 + $0xc0] sm:$0xff]
    %v5687 = vld [vmem:[%s5661 + $0xc8] sm:$0xff]
    %v5688 = vld [vmem:[%s5661 + $0xd0] sm:$0xff]
    %v5689 = vld [vmem:[%s5661 + $0xd8] sm:$0xff]
    %v5690 = vld [vmem:[%s5661 + $0xe0] sm:$0xff]
    %v5691 = vld [vmem:[%s5661 + $0xe8] sm:$0xff]
    %v5692 = vld [vmem:[%s5661 + $0xf0] sm:$0xff]
    %v5693 = vld [vmem:[%s5661 + $0xf8] sm:$0xff]
    %v5695 = vshrl.u32 %v5659, 16
    %v5697 = vrot.slane %v5695, 1
    %v5698 = vshll.u32 %v5659, 16
    %v5700 = vrot.slane %v5698, 2
    %v5701 = vor.u32 %v5697, %v5700
    %v5703 = vshrl.u32 %v5660, 16
    %v5705 = vrot.slane %v5703, 1
    %v5706 = vshll.u32 %v5660, 16
    %v5708 = vrot.slane %v5706, 2
    %v5709 = vor.u32 %v5705, %v5708
    %v5744 = vunpack.c.l.b16 %v5662
    %v5745 = vunpack.c.h.b16 %v5662
    %v5746 = vunpack.c.l.b16 %v5663
    %v5747 = vunpack.c.h.b16 %v5663
    %v5748 = vunpack.c.l.b16 %v5664
    %v5749 = vunpack.c.h.b16 %v5664
    %v5750 = vunpack.c.l.b16 %v5665
    %v5751 = vunpack.c.h.b16 %v5665
    %v5752 = vunpack.c.l.b16 %v5666
    %v5753 = vunpack.c.h.b16 %v5666
    %v5754 = vunpack.c.l.b16 %v5667
    %v5755 = vunpack.c.h.b16 %v5667
    %v5756 = vunpack.c.l.b16 %v5668
    %v5757 = vunpack.c.h.b16 %v5668
    %v5758 = vunpack.c.l.b16 %v5669
    %v5759 = vunpack.c.h.b16 %v5669
    %v5760 = vunpack.c.l.b16 %v5670
    %v5761 = vunpack.c.h.b16 %v5670
    %v5762 = vunpack.c.l.b16 %v5671
    %v5763 = vunpack.c.h.b16 %v5671
    %v5764 = vunpack.c.l.b16 %v5672
    %v5765 = vunpack.c.h.b16 %v5672
    %v5766 = vunpack.c.l.b16 %v5673
    %v5767 = vunpack.c.h.b16 %v5673
    %v5768 = vunpack.c.l.b16 %v5674
    %v5769 = vunpack.c.h.b16 %v5674
    %v5770 = vunpack.c.l.b16 %v5675
    %v5771 = vunpack.c.h.b16 %v5675
    %v5772 = vunpack.c.l.b16 %v5676
    %v5773 = vunpack.c.h.b16 %v5676
    %v5774 = vunpack.c.l.b16 %v5677
    %v5775 = vunpack.c.h.b16 %v5677
    %v5776 = vunpack.c.l.b16 %v5678
    %v5777 = vunpack.c.h.b16 %v5678
    %v5778 = vunpack.c.l.b16 %v5679
    %v5779 = vunpack.c.h.b16 %v5679
    %v5780 = vunpack.c.l.b16 %v5680
    %v5781 = vunpack.c.h.b16 %v5680
    %v5782 = vunpack.c.l.b16 %v5681
    %v5783 = vunpack.c.h.b16 %v5681
    %v5784 = vunpack.c.l.b16 %v5682
    %v5785 = vunpack.c.h.b16 %v5682
    %v5786 = vunpack.c.l.b16 %v5683
    %v5787 = vunpack.c.h.b16 %v5683
    %v5788 = vunpack.c.l.b16 %v5684
    %v5789 = vunpack.c.h.b16 %v5684
    %v5790 = vunpack.c.l.b16 %v5685
    %v5791 = vunpack.c.h.b16 %v5685
    %v5792 = vunpack.c.l.b16 %v5686
    %v5793 = vunpack.c.h.b16 %v5686
    %v5794 = vunpack.c.l.b16 %v5687
    %v5795 = vunpack.c.h.b16 %v5687
    %v5796 = vunpack.c.l.b16 %v5688
    %v5797 = vunpack.c.h.b16 %v5688
    %v5798 = vunpack.c.l.b16 %v5689
    %v5799 = vunpack.c.h.b16 %v5689
    %v5800 = vunpack.c.l.b16 %v5690
    %v5801 = vunpack.c.h.b16 %v5690
    %v5802 = vunpack.c.l.b16 %v5691
    %v5803 = vunpack.c.h.b16 %v5691
    %v5804 = vunpack.c.l.b16 %v5692
    %v5805 = vunpack.c.h.b16 %v5692
    %v5806 = vunpack.c.l.b16 %v5693
    %v5807 = vunpack.c.h.b16 %v5693
    %v5808 = vpack.c.b16 %v5746, %v5744
    %v5809 = vpack.c.b16 %v5747, %v5745
    %v5810 = vpack.c.b16 %v5750, %v5748
    %v5811 = vpack.c.b16 %v5751, %v5749
    %v5812 = vpack.c.b16 %v5754, %v5752
    %v5813 = vpack.c.b16 %v5755, %v5753
    %v5814 = vpack.c.b16 %v5758, %v5756
    %v5815 = vpack.c.b16 %v5759, %v5757
    %v5816 = vpack.c.b16 %v5762, %v5760
    %v5817 = vpack.c.b16 %v5763, %v5761
    %v5818 = vpack.c.b16 %v5766, %v5764
    %v5819 = vpack.c.b16 %v5767, %v5765
    %v5820 = vpack.c.b16 %v5770, %v5768
    %v5821 = vpack.c.b16 %v5771, %v5769
    %v5822 = vpack.c.b16 %v5774, %v5772
    %v5823 = vpack.c.b16 %v5775, %v5773
    %v5824 = vpack.c.b16 %v5778, %v5776
    %v5825 = vpack.c.b16 %v5779, %v5777
    %v5826 = vpack.c.b16 %v5782, %v5780
    %v5827 = vpack.c.b16 %v5783, %v5781
    %v5828 = vpack.c.b16 %v5786, %v5784
    %v5829 = vpack.c.b16 %v5787, %v5785
    %v5830 = vpack.c.b16 %v5790, %v5788
    %v5831 = vpack.c.b16 %v5791, %v5789
    %v5832 = vpack.c.b16 %v5794, %v5792
    %v5833 = vpack.c.b16 %v5795, %v5793
    %v5834 = vpack.c.b16 %v5798, %v5796
    %v5835 = vpack.c.b16 %v5799, %v5797
    %v5836 = vpack.c.b16 %v5802, %v5800
    %v5837 = vpack.c.b16 %v5803, %v5801
    %v5838 = vpack.c.b16 %v5806, %v5804
    %v5839 = vpack.c.b16 %v5807, %v5805
    %5872 = vmatpush.bf16.msra.mxu0 %v5822
    %5873 = vmatpush.bf16.msra.mxu0 %v5820
    %5874 = vmatpush.bf16.msra.mxu0 %v5818
    %5875 = vmatpush.bf16.msra.mxu0 %v5816
    %5876 = vmatpush.bf16.msra.mxu0 %v5814
    %5877 = vmatpush.bf16.msra.mxu0 %v5812
    %5878 = vmatpush.bf16.msra.mxu0 %v5810
    %5879 = vmatpush.bf16.msra.mxu0 %v5808
    %5880 = vmatmul.bf16.gmra.mxu0 %v5701
    %v5881 = vpop.f32.mrf.mxu0
    %v5882 = vadd.f32 0.0, %v5881
    %v5883 = vpop.f32.mrf.mxu0
    %5884 = vdwg.mxu0
    %5885 = vmatpush.bf16.msra.mxu0 %v5838
    %5886 = vmatpush.bf16.msra.mxu0 %v5836
    %5887 = vmatpush.bf16.msra.mxu0 %v5834
    %5888 = vmatpush.bf16.msra.mxu0 %v5832
    %5889 = vmatpush.bf16.msra.mxu0 %v5830
    %5890 = vmatpush.bf16.msra.mxu0 %v5828
    %5891 = vmatpush.bf16.msra.mxu0 %v5826
    %5892 = vmatpush.bf16.msra.mxu0 %v5824
    %5893 = vmatmul.bf16.gmra.mxu0 %v5709
    %v5894 = vpop.f32.mrf.mxu0
    %v5895 = vadd.f32 %v5882, %v5894
    %v5896 = vpop.f32.mrf.mxu0
    %5897 = vdwg.mxu0
    %5898 = vmatpush.bf16.msra.mxu0 %v5823
    %5899 = vmatpush.bf16.msra.mxu0 %v5821
    %5900 = vmatpush.bf16.msra.mxu0 %v5819
    %5901 = vmatpush.bf16.msra.mxu0 %v5817
    %5902 = vmatpush.bf16.msra.mxu0 %v5815
    %5903 = vmatpush.bf16.msra.mxu0 %v5813
    %5904 = vmatpush.bf16.msra.mxu0 %v5811
    %5905 = vmatpush.bf16.msra.mxu0 %v5809
    %5906 = vmatmul.bf16.gmra.mxu0 %v5701
    %v5907 = vpop.f32.mrf.mxu0
    %v5908 = vadd.f32 0.0, %v5907
    %v5909 = vpop.f32.mrf.mxu0
    %5910 = vdwg.mxu0
    %5911 = vmatpush.bf16.msra.mxu0 %v5839
    %5912 = vmatpush.bf16.msra.mxu0 %v5837
    %5913 = vmatpush.bf16.msra.mxu0 %v5835
    %5914 = vmatpush.bf16.msra.mxu0 %v5833
    %5915 = vmatpush.bf16.msra.mxu0 %v5831
    %5916 = vmatpush.bf16.msra.mxu0 %v5829
    %5917 = vmatpush.bf16.msra.mxu0 %v5827
    %5918 = vmatpush.bf16.msra.mxu0 %v5825
    %5919 = vmatmul.bf16.gmra.mxu0 %v5709
    %v5920 = vpop.f32.mrf.mxu0
    %v5921 = vadd.f32 %v5908, %v5920
    %v5922 = vpop.f32.mrf.mxu0
    %5923 = vdwg.mxu0
    %v5924 = vadd.f32 %v5655, %v5895
    %v5925 = vadd.f32 %v5656, %v5921
    %v5926 = vld [vmem:[#allocation8] sm:$0x70]
    %v5927 = vld [vmem:[#allocation8 + $0x8] sm:$0x70]
    %v5928 = vpack.c.bf16 %v5926, %v5926
    %v5929 = vpack.c.bf16 %v5927, %v5927
    %s5930 = scalar_lea.vmem [#allocation17], 1024
    %v5931 = vld [vmem:[%s5930] sm:$0xff]
    %v5932 = vld [vmem:[%s5930 + $0x8] sm:$0xff]
    %v5933 = vld [vmem:[%s5930 + $0x10] sm:$0xff]
    %v5934 = vld [vmem:[%s5930 + $0x18] sm:$0xff]
    %v5935 = vld [vmem:[%s5930 + $0x20] sm:$0xff]
    %v5936 = vld [vmem:[%s5930 + $0x28] sm:$0xff]
    %v5937 = vld [vmem:[%s5930 + $0x30] sm:$0xff]
    %v5938 = vld [vmem:[%s5930 + $0x38] sm:$0xff]
    %v5939 = vld [vmem:[%s5930 + $0x40] sm:$0xff]
    %v5940 = vld [vmem:[%s5930 + $0x48] sm:$0xff]
    %v5941 = vld [vmem:[%s5930 + $0x50] sm:$0xff]
    %v5942 = vld [vmem:[%s5930 + $0x58] sm:$0xff]
    %v5943 = vld [vmem:[%s5930 + $0x60] sm:$0xff]
    %v5944 = vld [vmem:[%s5930 + $0x68] sm:$0xff]
    %v5945 = vld [vmem:[%s5930 + $0x70] sm:$0xff]
    %v5946 = vld [vmem:[%s5930 + $0x78] sm:$0xff]
    %v5947 = vld [vmem:[%s5930 + $0x80] sm:$0xff]
    %v5948 = vld [vmem:[%s5930 + $0x88] sm:$0xff]
    %v5949 = vld [vmem:[%s5930 + $0x90] sm:$0xff]
    %v5950 = vld [vmem:[%s5930 + $0x98] sm:$0xff]
    %v5951 = vld [vmem:[%s5930 + $0xa0] sm:$0xff]
    %v5952 = vld [vmem:[%s5930 + $0xa8] sm:$0xff]
    %v5953 = vld [vmem:[%s5930 + $0xb0] sm:$0xff]
    %v5954 = vld [vmem:[%s5930 + $0xb8] sm:$0xff]
    %v5955 = vld [vmem:[%s5930 + $0xc0] sm:$0xff]
    %v5956 = vld [vmem:[%s5930 + $0xc8] sm:$0xff]
    %v5957 = vld [vmem:[%s5930 + $0xd0] sm:$0xff]
    %v5958 = vld [vmem:[%s5930 + $0xd8] sm:$0xff]
    %v5959 = vld [vmem:[%s5930 + $0xe0] sm:$0xff]
    %v5960 = vld [vmem:[%s5930 + $0xe8] sm:$0xff]
    %v5961 = vld [vmem:[%s5930 + $0xf0] sm:$0xff]
    %v5962 = vld [vmem:[%s5930 + $0xf8] sm:$0xff]
    %v5965 = vrot.slane %v5928, 2
    %v5966 = vrot.slane %v5929, 2
    %v6001 = vunpack.c.l.b16 %v5931
    %v6002 = vunpack.c.h.b16 %v5931
    %v6003 = vunpack.c.l.b16 %v5932
    %v6004 = vunpack.c.h.b16 %v5932
    %v6005 = vunpack.c.l.b16 %v5933
    %v6006 = vunpack.c.h.b16 %v5933
    %v6007 = vunpack.c.l.b16 %v5934
    %v6008 = vunpack.c.h.b16 %v5934
    %v6009 = vunpack.c.l.b16 %v5935
    %v6010 = vunpack.c.h.b16 %v5935
    %v6011 = vunpack.c.l.b16 %v5936
    %v6012 = vunpack.c.h.b16 %v5936
    %v6013 = vunpack.c.l.b16 %v5937
    %v6014 = vunpack.c.h.b16 %v5937
    %v6015 = vunpack.c.l.b16 %v5938
    %v6016 = vunpack.c.h.b16 %v5938
    %v6017 = vunpack.c.l.b16 %v5939
    %v6018 = vunpack.c.h.b16 %v5939
    %v6019 = vunpack.c.l.b16 %v5940
    %v6020 = vunpack.c.h.b16 %v5940
    %v6021 = vunpack.c.l.b16 %v5941
    %v6022 = vunpack.c.h.b16 %v5941
    %v6023 = vunpack.c.l.b16 %v5942
    %v6024 = vunpack.c.h.b16 %v5942
    %v6025 = vunpack.c.l.b16 %v5943
    %v6026 = vunpack.c.h.b16 %v5943
    %v6027 = vunpack.c.l.b16 %v5944
    %v6028 = vunpack.c.h.b16 %v5944
    %v6029 = vunpack.c.l.b16 %v5945
    %v6030 = vunpack.c.h.b16 %v5945
    %v6031 = vunpack.c.l.b16 %v5946
    %v6032 = vunpack.c.h.b16 %v5946
    %v6033 = vunpack.c.l.b16 %v5947
    %v6034 = vunpack.c.h.b16 %v5947
    %v6035 = vunpack.c.l.b16 %v5948
    %v6036 = vunpack.c.h.b16 %v5948
    %v6037 = vunpack.c.l.b16 %v5949
    %v6038 = vunpack.c.h.b16 %v5949
    %v6039 = vunpack.c.l.b16 %v5950
    %v6040 = vunpack.c.h.b16 %v5950
    %v6041 = vunpack.c.l.b16 %v5951
    %v6042 = vunpack.c.h.b16 %v5951
    %v6043 = vunpack.c.l.b16 %v5952
    %v6044 = vunpack.c.h.b16 %v5952
    %v6045 = vunpack.c.l.b16 %v5953
    %v6046 = vunpack.c.h.b16 %v5953
    %v6047 = vunpack.c.l.b16 %v5954
    %v6048 = vunpack.c.h.b16 %v5954
    %v6049 = vunpack.c.l.b16 %v5955
    %v6050 = vunpack.c.h.b16 %v5955
    %v6051 = vunpack.c.l.b16 %v5956
    %v6052 = vunpack.c.h.b16 %v5956
    %v6053 = vunpack.c.l.b16 %v5957
    %v6054 = vunpack.c.h.b16 %v5957
    %v6055 = vunpack.c.l.b16 %v5958
    %v6056 = vunpack.c.h.b16 %v5958
    %v6057 = vunpack.c.l.b16 %v5959
    %v6058 = vunpack.c.h.b16 %v5959
    %v6059 = vunpack.c.l.b16 %v5960
    %v6060 = vunpack.c.h.b16 %v5960
    %v6061 = vunpack.c.l.b16 %v5961
    %v6062 = vunpack.c.h.b16 %v5961
    %v6063 = vunpack.c.l.b16 %v5962
    %v6064 = vunpack.c.h.b16 %v5962
    %v6065 = vpack.c.b16 %v6003, %v6001
    %v6066 = vpack.c.b16 %v6004, %v6002
    %v6067 = vpack.c.b16 %v6007, %v6005
    %v6068 = vpack.c.b16 %v6008, %v6006
    %v6069 = vpack.c.b16 %v6011, %v6009
    %v6070 = vpack.c.b16 %v6012, %v6010
    %v6071 = vpack.c.b16 %v6015, %v6013
    %v6072 = vpack.c.b16 %v6016, %v6014
    %v6073 = vpack.c.b16 %v6019, %v6017
    %v6074 = vpack.c.b16 %v6020, %v6018
    %v6075 = vpack.c.b16 %v6023, %v6021
    %v6076 = vpack.c.b16 %v6024, %v6022
    %v6077 = vpack.c.b16 %v6027, %v6025
    %v6078 = vpack.c.b16 %v6028, %v6026
    %v6079 = vpack.c.b16 %v6031, %v6029
    %v6080 = vpack.c.b16 %v6032, %v6030
    %v6081 = vpack.c.b16 %v6035, %v6033
    %v6082 = vpack.c.b16 %v6036, %v6034
    %v6083 = vpack.c.b16 %v6039, %v6037
    %v6084 = vpack.c.b16 %v6040, %v6038
    %v6085 = vpack.c.b16 %v6043, %v6041
    %v6086 = vpack.c.b16 %v6044, %v6042
    %v6087 = vpack.c.b16 %v6047, %v6045
    %v6088 = vpack.c.b16 %v6048, %v6046
    %v6089 = vpack.c.b16 %v6051, %v6049
    %v6090 = vpack.c.b16 %v6052, %v6050
    %v6091 = vpack.c.b16 %v6055, %v6053
    %v6092 = vpack.c.b16 %v6056, %v6054
    %v6093 = vpack.c.b16 %v6059, %v6057
    %v6094 = vpack.c.b16 %v6060, %v6058
    %v6095 = vpack.c.b16 %v6063, %v6061
    %v6096 = vpack.c.b16 %v6064, %v6062
    %6129 = vmatpush.bf16.msra.mxu0 %v6079
    %6130 = vmatpush.bf16.msra.mxu0 %v6077
    %6131 = vmatpush.bf16.msra.mxu0 %v6075
    %6132 = vmatpush.bf16.msra.mxu0 %v6073
    %6133 = vmatpush.bf16.msra.mxu0 %v6071
    %6134 = vmatpush.bf16.msra.mxu0 %v6069
    %6135 = vmatpush.bf16.msra.mxu0 %v6067
    %6136 = vmatpush.bf16.msra.mxu0 %v6065
    %6137 = vmatmul.bf16.gmra.mxu0 %v5965
    %v6138 = vpop.f32.mrf.mxu0
    %v6139 = vadd.f32 0.0, %v6138
    %v6140 = vpop.f32.mrf.mxu0
    %6141 = vdwg.mxu0
    %6142 = vmatpush.bf16.msra.mxu0 %v6095
    %6143 = vmatpush.bf16.msra.mxu0 %v6093
    %6144 = vmatpush.bf16.msra.mxu0 %v6091
    %6145 = vmatpush.bf16.msra.mxu0 %v6089
    %6146 = vmatpush.bf16.msra.mxu0 %v6087
    %6147 = vmatpush.bf16.msra.mxu0 %v6085
    %6148 = vmatpush.bf16.msra.mxu0 %v6083
    %6149 = vmatpush.bf16.msra.mxu0 %v6081
    %6150 = vmatmul.bf16.gmra.mxu0 %v5966
    %v6151 = vpop.f32.mrf.mxu0
    %v6152 = vadd.f32 %v6139, %v6151
    %v6153 = vpop.f32.mrf.mxu0
    %6154 = vdwg.mxu0
    %6155 = vmatpush.bf16.msra.mxu0 %v6080
    %6156 = vmatpush.bf16.msra.mxu0 %v6078
    %6157 = vmatpush.bf16.msra.mxu0 %v6076
    %6158 = vmatpush.bf16.msra.mxu0 %v6074
    %6159 = vmatpush.bf16.msra.mxu0 %v6072
    %6160 = vmatpush.bf16.msra.mxu0 %v6070
    %6161 = vmatpush.bf16.msra.mxu0 %v6068
    %6162 = vmatpush.bf16.msra.mxu0 %v6066
    %6163 = vmatmul.bf16.gmra.mxu0 %v5965
    %v6164 = vpop.f32.mrf.mxu0
    %v6165 = vadd.f32 0.0, %v6164
    %v6166 = vpop.f32.mrf.mxu0
    %6167 = vdwg.mxu0
    %6168 = vmatpush.bf16.msra.mxu0 %v6096
    %6169 = vmatpush.bf16.msra.mxu0 %v6094
    %6170 = vmatpush.bf16.msra.mxu0 %v6092
    %6171 = vmatpush.bf16.msra.mxu0 %v6090
    %6172 = vmatpush.bf16.msra.mxu0 %v6088
    %6173 = vmatpush.bf16.msra.mxu0 %v6086
    %6174 = vmatpush.bf16.msra.mxu0 %v6084
    %6175 = vmatpush.bf16.msra.mxu0 %v6082
    %6176 = vmatmul.bf16.gmra.mxu0 %v5966
    %v6177 = vpop.f32.mrf.mxu0
    %v6178 = vadd.f32 %v6165, %v6177
    %v6179 = vpop.f32.mrf.mxu0
    %6180 = vdwg.mxu0
    %v6181 = vadd.f32 %v5924, %v6152
    %v6182 = vadd.f32 %v5925, %v6178
    %v6183 = vld [vmem:[#allocation8] sm:$0xe0]
    %v6184 = vld [vmem:[#allocation8 + $0x8] sm:$0xe0]
    %v6185 = vpack.c.bf16 %v6183, %v6183
    %v6186 = vpack.c.bf16 %v6184, %v6184
    %s6187 = scalar_lea.vmem [#allocation17], 1280
    %v6188 = vld [vmem:[%s6187] sm:$0xff]
    %v6189 = vld [vmem:[%s6187 + $0x8] sm:$0xff]
    %v6190 = vld [vmem:[%s6187 + $0x10] sm:$0xff]
    %v6191 = vld [vmem:[%s6187 + $0x18] sm:$0xff]
    %v6192 = vld [vmem:[%s6187 + $0x20] sm:$0xff]
    %v6193 = vld [vmem:[%s6187 + $0x28] sm:$0xff]
    %v6194 = vld [vmem:[%s6187 + $0x30] sm:$0xff]
    %v6195 = vld [vmem:[%s6187 + $0x38] sm:$0xff]
    %v6196 = vld [vmem:[%s6187 + $0x40] sm:$0xff]
    %v6197 = vld [vmem:[%s6187 + $0x48] sm:$0xff]
    %v6198 = vld [vmem:[%s6187 + $0x50] sm:$0xff]
    %v6199 = vld [vmem:[%s6187 + $0x58] sm:$0xff]
    %v6200 = vld [vmem:[%s6187 + $0x60] sm:$0xff]
    %v6201 = vld [vmem:[%s6187 + $0x68] sm:$0xff]
    %v6202 = vld [vmem:[%s6187 + $0x70] sm:$0xff]
    %v6203 = vld [vmem:[%s6187 + $0x78] sm:$0xff]
    %v6204 = vld [vmem:[%s6187 + $0x80] sm:$0xff]
    %v6205 = vld [vmem:[%s6187 + $0x88] sm:$0xff]
    %v6206 = vld [vmem:[%s6187 + $0x90] sm:$0xff]
    %v6207 = vld [vmem:[%s6187 + $0x98] sm:$0xff]
    %v6208 = vld [vmem:[%s6187 + $0xa0] sm:$0xff]
    %v6209 = vld [vmem:[%s6187 + $0xa8] sm:$0xff]
    %v6210 = vld [vmem:[%s6187 + $0xb0] sm:$0xff]
    %v6211 = vld [vmem:[%s6187 + $0xb8] sm:$0xff]
    %v6212 = vld [vmem:[%s6187 + $0xc0] sm:$0xff]
    %v6213 = vld [vmem:[%s6187 + $0xc8] sm:$0xff]
    %v6214 = vld [vmem:[%s6187 + $0xd0] sm:$0xff]
    %v6215 = vld [vmem:[%s6187 + $0xd8] sm:$0xff]
    %v6216 = vld [vmem:[%s6187 + $0xe0] sm:$0xff]
    %v6217 = vld [vmem:[%s6187 + $0xe8] sm:$0xff]
    %v6218 = vld [vmem:[%s6187 + $0xf0] sm:$0xff]
    %v6219 = vld [vmem:[%s6187 + $0xf8] sm:$0xff]
    %v6221 = vshrl.u32 %v6185, 16
    %v6223 = vrot.slane %v6221, 2
    %v6224 = vshll.u32 %v6185, 16
    %v6226 = vrot.slane %v6224, 3
    %v6227 = vor.u32 %v6223, %v6226
    %v6229 = vshrl.u32 %v6186, 16
    %v6231 = vrot.slane %v6229, 2
    %v6232 = vshll.u32 %v6186, 16
    %v6234 = vrot.slane %v6232, 3
    %v6235 = vor.u32 %v6231, %v6234
    %v6270 = vunpack.c.l.b16 %v6188
    %v6271 = vunpack.c.h.b16 %v6188
    %v6272 = vunpack.c.l.b16 %v6189
    %v6273 = vunpack.c.h.b16 %v6189
    %v6274 = vunpack.c.l.b16 %v6190
    %v6275 = vunpack.c.h.b16 %v6190
    %v6276 = vunpack.c.l.b16 %v6191
    %v6277 = vunpack.c.h.b16 %v6191
    %v6278 = vunpack.c.l.b16 %v6192
    %v6279 = vunpack.c.h.b16 %v6192
    %v6280 = vunpack.c.l.b16 %v6193
    %v6281 = vunpack.c.h.b16 %v6193
    %v6282 = vunpack.c.l.b16 %v6194
    %v6283 = vunpack.c.h.b16 %v6194
    %v6284 = vunpack.c.l.b16 %v6195
    %v6285 = vunpack.c.h.b16 %v6195
    %v6286 = vunpack.c.l.b16 %v6196
    %v6287 = vunpack.c.h.b16 %v6196
    %v6288 = vunpack.c.l.b16 %v6197
    %v6289 = vunpack.c.h.b16 %v6197
    %v6290 = vunpack.c.l.b16 %v6198
    %v6291 = vunpack.c.h.b16 %v6198
    %v6292 = vunpack.c.l.b16 %v6199
    %v6293 = vunpack.c.h.b16 %v6199
    %v6294 = vunpack.c.l.b16 %v6200
    %v6295 = vunpack.c.h.b16 %v6200
    %v6296 = vunpack.c.l.b16 %v6201
    %v6297 = vunpack.c.h.b16 %v6201
    %v6298 = vunpack.c.l.b16 %v6202
    %v6299 = vunpack.c.h.b16 %v6202
    %v6300 = vunpack.c.l.b16 %v6203
    %v6301 = vunpack.c.h.b16 %v6203
    %v6302 = vunpack.c.l.b16 %v6204
    %v6303 = vunpack.c.h.b16 %v6204
    %v6304 = vunpack.c.l.b16 %v6205
    %v6305 = vunpack.c.h.b16 %v6205
    %v6306 = vunpack.c.l.b16 %v6206
    %v6307 = vunpack.c.h.b16 %v6206
    %v6308 = vunpack.c.l.b16 %v6207
    %v6309 = vunpack.c.h.b16 %v6207
    %v6310 = vunpack.c.l.b16 %v6208
    %v6311 = vunpack.c.h.b16 %v6208
    %v6312 = vunpack.c.l.b16 %v6209
    %v6313 = vunpack.c.h.b16 %v6209
    %v6314 = vunpack.c.l.b16 %v6210
    %v6315 = vunpack.c.h.b16 %v6210
    %v6316 = vunpack.c.l.b16 %v6211
    %v6317 = vunpack.c.h.b16 %v6211
    %v6318 = vunpack.c.l.b16 %v6212
    %v6319 = vunpack.c.h.b16 %v6212
    %v6320 = vunpack.c.l.b16 %v6213
    %v6321 = vunpack.c.h.b16 %v6213
    %v6322 = vunpack.c.l.b16 %v6214
    %v6323 = vunpack.c.h.b16 %v6214
    %v6324 = vunpack.c.l.b16 %v6215
    %v6325 = vunpack.c.h.b16 %v6215
    %v6326 = vunpack.c.l.b16 %v6216
    %v6327 = vunpack.c.h.b16 %v6216
    %v6328 = vunpack.c.l.b16 %v6217
    %v6329 = vunpack.c.h.b16 %v6217
    %v6330 = vunpack.c.l.b16 %v6218
    %v6331 = vunpack.c.h.b16 %v6218
    %v6332 = vunpack.c.l.b16 %v6219
    %v6333 = vunpack.c.h.b16 %v6219
    %v6334 = vpack.c.b16 %v6272, %v6270
    %v6335 = vpack.c.b16 %v6273, %v6271
    %v6336 = vpack.c.b16 %v6276, %v6274
    %v6337 = vpack.c.b16 %v6277, %v6275
    %v6338 = vpack.c.b16 %v6280, %v6278
    %v6339 = vpack.c.b16 %v6281, %v6279
    %v6340 = vpack.c.b16 %v6284, %v6282
    %v6341 = vpack.c.b16 %v6285, %v6283
    %v6342 = vpack.c.b16 %v6288, %v6286
    %v6343 = vpack.c.b16 %v6289, %v6287
    %v6344 = vpack.c.b16 %v6292, %v6290
    %v6345 = vpack.c.b16 %v6293, %v6291
    %v6346 = vpack.c.b16 %v6296, %v6294
    %v6347 = vpack.c.b16 %v6297, %v6295
    %v6348 = vpack.c.b16 %v6300, %v6298
    %v6349 = vpack.c.b16 %v6301, %v6299
    %v6350 = vpack.c.b16 %v6304, %v6302
    %v6351 = vpack.c.b16 %v6305, %v6303
    %v6352 = vpack.c.b16 %v6308, %v6306
    %v6353 = vpack.c.b16 %v6309, %v6307
    %v6354 = vpack.c.b16 %v6312, %v6310
    %v6355 = vpack.c.b16 %v6313, %v6311
    %v6356 = vpack.c.b16 %v6316, %v6314
    %v6357 = vpack.c.b16 %v6317, %v6315
    %v6358 = vpack.c.b16 %v6320, %v6318
    %v6359 = vpack.c.b16 %v6321, %v6319
    %v6360 = vpack.c.b16 %v6324, %v6322
    %v6361 = vpack.c.b16 %v6325, %v6323
    %v6362 = vpack.c.b16 %v6328, %v6326
    %v6363 = vpack.c.b16 %v6329, %v6327
    %v6364 = vpack.c.b16 %v6332, %v6330
    %v6365 = vpack.c.b16 %v6333, %v6331
    %6398 = vmatpush.bf16.msra.mxu0 %v6348
    %6399 = vmatpush.bf16.msra.mxu0 %v6346
    %6400 = vmatpush.bf16.msra.mxu0 %v6344
    %6401 = vmatpush.bf16.msra.mxu0 %v6342
    %6402 = vmatpush.bf16.msra.mxu0 %v6340
    %6403 = vmatpush.bf16.msra.mxu0 %v6338
    %6404 = vmatpush.bf16.msra.mxu0 %v6336
    %6405 = vmatpush.bf16.msra.mxu0 %v6334
    %6406 = vmatmul.bf16.gmra.mxu0 %v6227
    %v6407 = vpop.f32.mrf.mxu0
    %v6408 = vadd.f32 0.0, %v6407
    %v6409 = vpop.f32.mrf.mxu0
    %6410 = vdwg.mxu0
    %6411 = vmatpush.bf16.msra.mxu0 %v6364
    %6412 = vmatpush.bf16.msra.mxu0 %v6362
    %6413 = vmatpush.bf16.msra.mxu0 %v6360
    %6414 = vmatpush.bf16.msra.mxu0 %v6358
    %6415 = vmatpush.bf16.msra.mxu0 %v6356
    %6416 = vmatpush.bf16.msra.mxu0 %v6354
    %6417 = vmatpush.bf16.msra.mxu0 %v6352
    %6418 = vmatpush.bf16.msra.mxu0 %v6350
    %6419 = vmatmul.bf16.gmra.mxu0 %v6235
    %v6420 = vpop.f32.mrf.mxu0
    %v6421 = vadd.f32 %v6408, %v6420
    %v6422 = vpop.f32.mrf.mxu0
    %6423 = vdwg.mxu0
    %6424 = vmatpush.bf16.msra.mxu0 %v6349
    %6425 = vmatpush.bf16.msra.mxu0 %v6347
    %6426 = vmatpush.bf16.msra.mxu0 %v6345
    %6427 = vmatpush.bf16.msra.mxu0 %v6343
    %6428 = vmatpush.bf16.msra.mxu0 %v6341
    %6429 = vmatpush.bf16.msra.mxu0 %v6339
    %6430 = vmatpush.bf16.msra.mxu0 %v6337
    %6431 = vmatpush.bf16.msra.mxu0 %v6335
    %6432 = vmatmul.bf16.gmra.mxu0 %v6227
    %v6433 = vpop.f32.mrf.mxu0
    %v6434 = vadd.f32 0.0, %v6433
    %v6435 = vpop.f32.mrf.mxu0
    %6436 = vdwg.mxu0
    %6437 = vmatpush.bf16.msra.mxu0 %v6365
    %6438 = vmatpush.bf16.msra.mxu0 %v6363
    %6439 = vmatpush.bf16.msra.mxu0 %v6361
    %6440 = vmatpush.bf16.msra.mxu0 %v6359
    %6441 = vmatpush.bf16.msra.mxu0 %v6357
    %6442 = vmatpush.bf16.msra.mxu0 %v6355
    %6443 = vmatpush.bf16.msra.mxu0 %v6353
    %6444 = vmatpush.bf16.msra.mxu0 %v6351
    %6445 = vmatmul.bf16.gmra.mxu0 %v6235
    %v6446 = vpop.f32.mrf.mxu0
    %v6447 = vadd.f32 %v6434, %v6446
    %v6448 = vpop.f32.mrf.mxu0
    %6449 = vdwg.mxu0
    %v6450 = vadd.f32 %v6181, %v6421
    %v6451 = vadd.f32 %v6182, %v6447
    %v6452 = vld [vmem:[%s12] sm:$0x3]
    %v6454 = vperm.slane %v6452, 0
    %v6455 = vperm.slane %v6452, 1
    %v6458 = vadd.f32 %v6450, %v6454
    %v6459 = vadd.f32 %v6451, %v6455
    %v6460 = vmax.f32 %v6458, 0.0
    %v6461 = vmax.f32 %v6459, 0.0
    %v6462 = vsel %vm196, %v6460, 0.0
    %v6463 = vrot.slane %v6462, 4
    %v6464 = vadd.f32 %v6462, %v6463
    %v6465 = vrot.slane %v6464, 2
    %v6466 = vadd.f32 %v6464, %v6465
    %v6467 = vrot.slane %v6466, 1
    %v6468 = vadd.f32 %v6466, %v6467
    %v6469 = vsel %vm196, %v6461, 0.0
    %v6470 = vrot.slane %v6469, 4
    %v6471 = vadd.f32 %v6469, %v6470
    %v6472 = vrot.slane %v6471, 2
    %v6473 = vadd.f32 %v6471, %v6472
    %v6474 = vrot.slane %v6473, 1
    %v6475 = vadd.f32 %v6473, %v6474
    %v6476 = vmul.f32 %v6468, 0.33333334
    %v6477 = vmul.f32 %v6475, 0.33333334
    %v6478 = vpack.c.bf16 %v6476, %v6476
    %v6479 = vpack.c.bf16 %v6477, %v6477
    %v6480 = vld [vmem:[#allocation18] sm:$0xf]
    %v6481 = vld [vmem:[#allocation18 + $0x4] sm:$0xf]
    %v6482 = vld [vmem:[#allocation18 + $0x8] sm:$0xf]
    %v6483 = vld [vmem:[#allocation18 + $0xc] sm:$0xf]
    %v6484 = vld [vmem:[#allocation18 + $0x10] sm:$0xf]
    %v6485 = vld [vmem:[#allocation18 + $0x14] sm:$0xf]
    %v6486 = vld [vmem:[#allocation18 + $0x18] sm:$0xf]
    %v6487 = vld [vmem:[#allocation18 + $0x1c] sm:$0xf]
    %v6488 = vld [vmem:[#allocation18 + $0x20] sm:$0xf]
    %v6489 = vld [vmem:[#allocation18 + $0x24] sm:$0xf]
    %v6490 = vld [vmem:[#allocation18 + $0x28] sm:$0xf]
    %v6491 = vld [vmem:[#allocation18 + $0x2c] sm:$0xf]
    %v6492 = vld [vmem:[#allocation18 + $0x30] sm:$0xf]
    %v6493 = vld [vmem:[#allocation18 + $0x34] sm:$0xf]
    %v6494 = vld [vmem:[#allocation18 + $0x38] sm:$0xf]
    %v6495 = vld [vmem:[#allocation18 + $0x3c] sm:$0xf]
    %v6496 = vld [vmem:[#allocation18 + $0x40] sm:$0xf]
    %v6497 = vld [vmem:[#allocation18 + $0x44] sm:$0xf]
    %v6498 = vld [vmem:[#allocation18 + $0x48] sm:$0xf]
    %v6499 = vld [vmem:[#allocation18 + $0x4c] sm:$0xf]
    %v6500 = vld [vmem:[#allocation18 + $0x50] sm:$0xf]
    %v6501 = vld [vmem:[#allocation18 + $0x54] sm:$0xf]
    %v6502 = vld [vmem:[#allocation18 + $0x58] sm:$0xf]
    %v6503 = vld [vmem:[#allocation18 + $0x5c] sm:$0xf]
    %v6504 = vld [vmem:[#allocation18 + $0x60] sm:$0xf]
    %v6505 = vld [vmem:[#allocation18 + $0x64] sm:$0xf]
    %v6506 = vld [vmem:[#allocation18 + $0x68] sm:$0xf]
    %v6507 = vld [vmem:[#allocation18 + $0x6c] sm:$0xf]
    %v6508 = vld [vmem:[#allocation18 + $0x70] sm:$0xf]
    %v6509 = vld [vmem:[#allocation18 + $0x74] sm:$0xf]
    %v6510 = vld [vmem:[#allocation18 + $0x78] sm:$0xf]
    %v6511 = vld [vmem:[#allocation18 + $0x7c] sm:$0xf]
    %v6512 = vld [vmem:[%s14] sm:$0x1]
    %v6545 = vunpack.c.l.b16 %v6480
    %v6546 = vunpack.c.l.b16 %v6481
    %v6547 = vunpack.c.l.b16 %v6482
    %v6548 = vunpack.c.l.b16 %v6483
    %v6549 = vunpack.c.l.b16 %v6484
    %v6550 = vunpack.c.l.b16 %v6485
    %v6551 = vunpack.c.l.b16 %v6486
    %v6552 = vunpack.c.l.b16 %v6487
    %v6553 = vunpack.c.l.b16 %v6488
    %v6554 = vunpack.c.l.b16 %v6489
    %v6555 = vunpack.c.l.b16 %v6490
    %v6556 = vunpack.c.l.b16 %v6491
    %v6557 = vunpack.c.l.b16 %v6492
    %v6558 = vunpack.c.l.b16 %v6493
    %v6559 = vunpack.c.l.b16 %v6494
    %v6560 = vunpack.c.l.b16 %v6495
    %v6561 = vunpack.c.l.b16 %v6496
    %v6562 = vunpack.c.l.b16 %v6497
    %v6563 = vunpack.c.l.b16 %v6498
    %v6564 = vunpack.c.l.b16 %v6499
    %v6565 = vunpack.c.l.b16 %v6500
    %v6566 = vunpack.c.l.b16 %v6501
    %v6567 = vunpack.c.l.b16 %v6502
    %v6568 = vunpack.c.l.b16 %v6503
    %v6569 = vunpack.c.l.b16 %v6504
    %v6570 = vunpack.c.l.b16 %v6505
    %v6571 = vunpack.c.l.b16 %v6506
    %v6572 = vunpack.c.l.b16 %v6507
    %v6573 = vunpack.c.l.b16 %v6508
    %v6574 = vunpack.c.l.b16 %v6509
    %v6575 = vunpack.c.l.b16 %v6510
    %v6576 = vunpack.c.l.b16 %v6511
    %v6577 = vpack.c.b16 %v6546, %v6545
    %v6578 = vpack.c.b16 %v6548, %v6547
    %v6579 = vpack.c.b16 %v6550, %v6549
    %v6580 = vpack.c.b16 %v6552, %v6551
    %v6581 = vpack.c.b16 %v6554, %v6553
    %v6582 = vpack.c.b16 %v6556, %v6555
    %v6583 = vpack.c.b16 %v6558, %v6557
    %v6584 = vpack.c.b16 %v6560, %v6559
    %v6585 = vpack.c.b16 %v6562, %v6561
    %v6586 = vpack.c.b16 %v6564, %v6563
    %v6587 = vpack.c.b16 %v6566, %v6565
    %v6588 = vpack.c.b16 %v6568, %v6567
    %v6589 = vpack.c.b16 %v6570, %v6569
    %v6590 = vpack.c.b16 %v6572, %v6571
    %v6591 = vpack.c.b16 %v6574, %v6573
    %v6592 = vpack.c.b16 %v6576, %v6575
    %6609 = vmatpush.bf16.msra.mxu0 %v6584
    %6610 = vmatpush.bf16.msra.mxu0 %v6583
    %6611 = vmatpush.bf16.msra.mxu0 %v6582
    %6612 = vmatpush.bf16.msra.mxu0 %v6581
    %6613 = vmatpush.bf16.msra.mxu0 %v6580
    %6614 = vmatpush.bf16.msra.mxu0 %v6579
    %6615 = vmatpush.bf16.msra.mxu0 %v6578
    %6616 = vmatpush.bf16.msra.mxu0 %v6577
    %6617 = vmatmul.bf16.gmra.mxu0 %v6478
    %v6618 = vpop.f32.mrf.mxu0
    %v6619 = vadd.f32 %v6512, %v6618
    %v6620 = vpop.f32.mrf.mxu0
    %6621 = vdwg.mxu0
    %6622 = vmatpush.bf16.msra.mxu0 %v6592
    %6623 = vmatpush.bf16.msra.mxu0 %v6591
    %6624 = vmatpush.bf16.msra.mxu0 %v6590
    %6625 = vmatpush.bf16.msra.mxu0 %v6589
    %6626 = vmatpush.bf16.msra.mxu0 %v6588
    %6627 = vmatpush.bf16.msra.mxu0 %v6587
    %6628 = vmatpush.bf16.msra.mxu0 %v6586
    %6629 = vmatpush.bf16.msra.mxu0 %v6585
    %6630 = vmatmul.bf16.gmra.mxu0 %v6479
    %v6631 = vpop.f32.mrf.mxu0
    %v6632 = vadd.f32 %v6619, %v6631
    %v6633 = vpop.f32.mrf.mxu0
    %6634 = vdwg.mxu0
    %v6635 = vxor.u32 %v6632, 2147483648
    %v6636 = vmul.f32 %v6635, 1.442695
    %v6637 = vpow.pop %v6636
    %v6638 = vadd.f32 %v6637, 1.0
    %v6639 = vrcp.pop %v6638
    %v6640 = vmul.f32 %v6638, %v6639
    %v6641 = vsub.f32 1.0, %v6640
    %v6642 = vmul.f32 %v6639, %v6641
    %v6643 = vadd.f32 %v6639, %v6642
    %vm6644 = vweird.f32 %v6638
    %vm6645 = vweird.f32 %v6639
    %vm6646 = vmor %vm6644, %vm6645
    %v6647 = vsel %vm6646, %v6639, %v6643
    %v6648 = vand.u32 2147483647, %v6638
    %vm6649 = vcmp.eq.f32.partialorder %v6648, 8.507059e+37
    %v6650 = vand.u32 %v6638, 2147483648
    %v6651 = vor.u32 1.1754944e-38, %v6650
    %v6652 = vsel %vm6649, %v6651, %v6647
    %v6653 = vmul.f32 1.0, %v6652
    %6654 = vst [vmem:[#allocation20] sm:$0x1] %v6653
    // Predicated region
    $region86: #{ann_forward.1} parent=1 // pred_check
      _
    $region87: #{ann_forward.1} parent=1 // pred_check_branch
      %6656 = sbr.rel (0) target = $region89
    $region88: #{ann_forward.1} parent=1 // pred_region
      %6658 = vsyncadd [#allocation11], 0
      %s6660 = sshll.u32 [#allocation20], 4
      %s6661 = int_to_ptr.vmem [resolvable:$true] %s6660
      %s6662 = sshll.u32 %s15, 4
      %s6663 = int_to_ptr.hbm [resolvable:$true] %s6662
      %6665 = dma.vmem_to_hbm [thread:$0]  %s6661, 16, %s6663, [#allocation11]
    $region89: #{ann_forward.1} parent=1 // pred_fallthru
      _
    // Predicated region
    $region90: #{ann_forward.1} parent=1 // pred_check
      _
    $region91: #{ann_forward.1} parent=1 // pred_check_branch
      %6667 = sbr.rel (0) target = $region93
    $region92: #{ann_forward.1} parent=1 // pred_region
      %6669 = dma.done [#allocation11], 16
    $region93: #{ann_forward.1} parent=1 // pred_fallthru
      _
    %6670 = vsyncpa [#allocation10], 1
    %6671 = vsyncpa [#allocation13], 1
    %6672 = vsyncpa [#allocation16], 1
    %6673 = vsyncpa [#allocation19], 1
    %6674 = vsyncpa [#allocation11], 1

</llo_original>
